<compile_context>
chip_gen: v7x
topology: tpu7x:2x2x1
jax: 0.10.0
libtpu: 0.0.40
codegen_flags: <defaults>
</compile_context>

<pallas_src>
import functools

import jax
import jax.numpy as jnp
from jax.experimental import pallas as pl
from jax.experimental.pallas import tpu as pltpu
import numpy as np

PAD = 128  # per-gate / per-feature padded width: one full vreg lane group

# Packed gate order (i, f, o, g); PyTorch source order is (i, f, g, o).
_GATE_ORDER = (0, 1, 3, 2)   # target slot k <- source gate _GATE_ORDER[k]


# ----------------------------------------------------------------------------
# Fused forward kernel: 3 LSTM layers (wavefront-interleaved) + Linear projection.
#   i = sigmoid(.) f = sigmoid(.) o = sigmoid(.) g = tanh(.)
#   c = f*c + i*g ;  h = o*tanh(c)
# Padded lanes stay exactly 0: zero weight columns/bias => gate preact 0 =>
#   c_pad = 0.5*0 + 0.5*tanh(0) = 0, h_pad = 0.5*tanh(0) = 0.
# ----------------------------------------------------------------------------
def _fused_forward_kernel(x_ref,
                          wih0_ref, whh0_ref, b0_ref,
                          wih1_ref, whh1_ref, b1_ref,
                          wih2_ref, whh2_ref, b2_ref,
                          pw_ref, pb_ref,
                          o_ref):
    B, T, Ep = x_ref.shape
    P = whh0_ref.shape[0]
    Cp = o_ref.shape[-1]
    f32 = jnp.float32
    bf16 = jnp.bfloat16

    # Hoisted resident weight loads (bf16 -> single-pass MXU) and broadcast biases.
    whh0 = whh0_ref[...]
    wih1 = wih1_ref[...]
    whh1 = whh1_ref[...]
    wih2 = wih2_ref[...]
    whh2 = whh2_ref[...]
    pw = pw_ref[...]
    b1 = jnp.broadcast_to(b1_ref[...], (B, 4 * P))
    b2 = jnp.broadcast_to(b2_ref[...], (B, 4 * P))
    pb = jnp.broadcast_to(pb_ref[...], (B, Cp))

    # Layer-0 non-recurrent input projection for ALL timesteps: one MXU matmul.
    x2d = x_ref[...].reshape(B * T, Ep).astype(bf16)
    xg0 = (jnp.dot(x2d, wih0_ref[...], preferred_element_type=f32)
           + b0_ref[...]).reshape(B, T, 4 * P)

    def cell(gates, c):
        # gate order (i, f, o, g): single contiguous sigmoid over 3*P lanes.
        sig = jax.nn.sigmoid(gates[:, :3 * P])
        i = sig[:, 0 * P:1 * P]
        f = sig[:, 1 * P:2 * P]
        o = sig[:, 2 * P:3 * P]
        g = jnp.tanh(gates[:, 3 * P:])
        c_new = f * c + i * g
        h_new = o * jnp.tanh(c_new)
        return h_new, c_new

    zeros = jnp.zeros((B, P), f32)
    h0 = c0 = h1 = c1 = h2 = c2 = zeros

    # Wavefront: step s -> layer0@t=s, layer1@t=s-1, layer2@t=s-2, all computed from the
    # states held *before* this step, so the three cells are mutually independent.
    for s in range(T + 2):
        n_h0, n_c0, n_h1, n_c1, n_h2, n_c2 = h0, c0, h1, c1, h2, c2
        if s < T:
            g0 = xg0[:, s, :] + jnp.dot(h0.astype(bf16), whh0,
                                        preferred_element_type=f32)
            n_h0, n_c0 = cell(g0, c0)
        if 1 <= s <= T:
            g1 = (jnp.dot(h0.astype(bf16), wih1, preferred_element_type=f32)
                  + jnp.dot(h1.astype(bf16), whh1, preferred_element_type=f32) + b1)
            n_h1, n_c1 = cell(g1, c1)
        if 2 <= s <= T + 1:
            g2 = (jnp.dot(h1.astype(bf16), wih2, preferred_element_type=f32)
                  + jnp.dot(h2.astype(bf16), whh2, preferred_element_type=f32) + b2)
            n_h2, n_c2 = cell(g2, c2)
            # Final Linear for finished timestep t=s-2: independent side branch,
            # lane-dense (Cp=128) store, not on the recurrence critical path.
            t = s - 2
            logits_t = jnp.dot(n_h2.astype(bf16), pw, preferred_element_type=f32) + pb
            o_ref[:, pl.ds(t, 1), :] = logits_t.reshape(B, 1, Cp)
        h0, c0, h1, c1, h2, c2 = n_h0, n_c0, n_h1, n_c1, n_h2, n_c2


def _tc_per_chip():
    """2 TensorCores per chip on v7x, else 1 (string check is best-effort and safe)."""
    try:
        kind = jax.devices()[0].device_kind.lower().replace(" ", "")
    except Exception:
        return 1
    return 2 if ("v7" in kind or "tpu7" in kind) else 1


def _fused_forward(x_emb, packed):
    """x_emb: (B, T, PAD) embedded tokens; returns padded logits (B, T, PAD)."""
    B, T, Ep = x_emb.shape
    Cp = packed["proj_b"].shape[-1]

    splits = _tc_per_chip()
    if B % splits != 0:
        splits = 1
    Bblk = B // splits

    weights = []
    for (wih, whh, b) in packed["lstms"]:
        weights += [wih, whh, b]
    weights += [packed["proj_w"], packed["proj_b"]]

    def w_spec(a):
        return pl.BlockSpec(a.shape, lambda i: (0,) * a.ndim)

    return pl.pallas_call(
        _fused_forward_kernel,
        out_shape=jax.ShapeDtypeStruct((B, T, Cp), jnp.float32),
        grid=(splits,),
        in_specs=[pl.BlockSpec((Bblk, T, Ep), lambda i: (i, 0, 0))]
                 + [w_spec(a) for a in weights],
        out_specs=pl.BlockSpec((Bblk, T, Cp), lambda i: (i, 0, 0)),
        compiler_params=pltpu.CompilerParams(dimension_semantics=("parallel",)),
    )(x_emb, *weights)


def text_model_forward(packed, tokens):
    # Embedding gather (lane-dense padded table): plain-JAX glue feeding the kernel.
    x = jnp.take(packed["embedding"], tokens, axis=0)       # (B, T, PAD) f32
    logits_p = _fused_forward(x, packed)                    # (B, T, PAD)
    return logits_p[:, :, :packed["charcount"]]             # (B, T, charcount)


# ----------------------------------------------------------------------------
# Parameter packing (run once): pad every gate / feature dim to 128 lanes,
# reorder gates to (i, f, o, g), cast matmul weights to bf16, zero-fill pads.
# ----------------------------------------------------------------------------
def _pad_gate_cols(w, H, P=PAD):
    """(rows, 4H) PyTorch order (i,f,g,o) -> (rows, 4P) packed order (i,f,o,g)."""
    rows = w.shape[0]
    out = jnp.zeros((rows, 4 * P), w.dtype)
    for k, src in enumerate(_GATE_ORDER):
        out = out.at[:, k * P:k * P + H].set(w[:, src * H:(src + 1) * H])
    return out


def _pad_rows(w, rows_pad):
    if w.shape[0] == rows_pad:
        return w
    return jnp.zeros((rows_pad, w.shape[1]), w.dtype).at[:w.shape[0], :].set(w)


def pack_params(params):
    emb = params["embedding"]                               # (V, E) f32
    V, E = emb.shape
    emb_p = jnp.zeros((V, PAD), jnp.float32).at[:, :E].set(emb)

    lstms = []
    for (w_ih, w_hh, b) in params["lstms"]:
        H = w_hh.shape[0]
        wih_p = _pad_rows(_pad_gate_cols(w_ih, H), PAD).astype(jnp.bfloat16)  # (P,4P)
        whh_p = _pad_rows(_pad_gate_cols(w_hh, H), PAD).astype(jnp.bfloat16)  # (P,4P)
        b_p = _pad_gate_cols(b.reshape(1, 4 * H), H)                          # (1,4P) f32
        lstms.append((wih_p, whh_p, b_p))

    C = params["proj_b"].shape[0]
    pw = _pad_rows(params["proj_w"], PAD)                                     # (P, C)
    pw_p = jnp.zeros((PAD, PAD), jnp.float32).at[:, :C].set(pw).astype(jnp.bfloat16)
    pb_p = jnp.zeros((1, PAD), jnp.float32).at[:, :C].set(params["proj_b"].reshape(1, -1))

    return {"embedding": emb_p, "lstms": lstms, "proj_w": pw_p, "proj_b": pb_p,
            "charcount": C}


# ----------------------------------------------------------------------------
# Pure-JAX f32 reference (unpadded params, PyTorch gate order) for correctness.
# ----------------------------------------------------------------------------
def _lstm_layer_ref(x, w_ih, w_hh, b):
    B, T, _ = x.shape
    H = w_hh.shape[0]
    h = jnp.zeros((B, H), jnp.float32)
    c = jnp.zeros((B, H), jnp.float32)
    outs = []
    for t in range(T):
        g = x[:, t] @ w_ih + h @ w_hh + b
        i = jax.nn.sigmoid(g[:, 0 * H:1 * H])
        f = jax.nn.sigmoid(g[:, 1 * H:2 * H])
        gg = jnp.tanh(g[:, 2 * H:3 * H])
        o = jax.nn.sigmoid(g[:, 3 * H:4 * H])
        c = f * c + i * gg
        h = o * jnp.tanh(c)
        outs.append(h)
    return jnp.stack(outs, axis=1)


def text_model_forward_ref(params, tokens):
    h = jnp.take(params["embedding"], tokens, axis=0)
    for (w_ih, w_hh, b) in params["lstms"]:
        h = _lstm_layer_ref(h, w_ih, w_hh, b)
    return h @ params["proj_w"] + params["proj_b"]


# ----------------------------------------------------------------------------
# Deterministic synthetic parameter init (shapes follow TextModel.__init__)
# ----------------------------------------------------------------------------
def init_params(key, charcount, embedding_dim, hidden_dim):
    ks = jax.random.split(key, 16)
    kit = iter(ks)

    def nrm(shape, scale=0.1):
        return scale * jax.random.normal(next(kit), shape, dtype=jnp.float32)

    # LSTM stack: E->H, H->H, H->E  (weights stored pre-transposed: (D_in,4H),(H,4H))
    dims = [(embedding_dim, hidden_dim), (hidden_dim, hidden_dim),
            (hidden_dim, embedding_dim)]
    lstms = []
    for d_in, h in dims:
        w_ih = nrm((d_in, 4 * h))
        w_hh = nrm((h, 4 * h))
        b = nrm((4 * h,))            # combined b_ih + b_hh
        lstms.append((w_ih, w_hh, b))

    return {
        "embedding": nrm((charcount + 1, embedding_dim)),
        "lstms": lstms,
        "proj_w": nrm((embedding_dim, charcount)),   # Linear stored as (E, C)
        "proj_b": nrm((charcount,)),
    }


if __name__ == "__main__":
    charcount = 30
    embedding_dim = 32
    hidden_dim = 64
    B, T = 2, 8   # NOTE: B>=8 would fill all 8 sublanes; kept at 2 per the module spec.

    key = jax.random.PRNGKey(0)
    k_param, k_tok = jax.random.split(key)
    params = init_params(k_param, charcount, embedding_dim, hidden_dim)
    packed = pack_params(params)                                  # packed once
    tokens = jax.random.randint(k_tok, (B, T), 0, charcount + 1, dtype=jnp.int32)

    fwd = jax.jit(functools.partial(text_model_forward, packed))
    logits = fwd(tokens)
    jax.block_until_ready(logits)

    logits_ref = text_model_forward_ref(params, tokens)
    assert logits.shape == (B, T, charcount)
    # Tolerance accounts for bf16 MXU inputs (state math stays f32).
    np.testing.assert_allclose(np.asarray(logits), np.asarray(logits_ref),
                               rtol=2e-2, atol=2e-2)
    print("KERNEL_OK")
</pallas_src>

<mosaic_0001>
module attributes {stable_mosaic.version = 11 : i64} {
  func.func @_fused_forward_kernel(%arg0: i32, %arg1: memref<2x8x128xf32, #tpu.memory_space<vmem>>, %arg2: memref<128x512xbf16, #tpu.memory_space<vmem>>, %arg3: memref<128x512xbf16, #tpu.memory_space<vmem>>, %arg4: memref<1x512xf32, #tpu.memory_space<vmem>>, %arg5: memref<128x512xbf16, #tpu.memory_space<vmem>>, %arg6: memref<128x512xbf16, #tpu.memory_space<vmem>>, %arg7: memref<1x512xf32, #tpu.memory_space<vmem>>, %arg8: memref<128x512xbf16, #tpu.memory_space<vmem>>, %arg9: memref<128x512xbf16, #tpu.memory_space<vmem>>, %arg10: memref<1x512xf32, #tpu.memory_space<vmem>>, %arg11: memref<128x128xbf16, #tpu.memory_space<vmem>>, %arg12: memref<1x128xf32, #tpu.memory_space<vmem>>, %arg13: memref<2x8x128xf32, #tpu.memory_space<vmem>>) attributes {dimension_semantics = [#tpu.dimension_semantics<parallel>], iteration_bounds = array<i64: 1>, scalar_prefetch = 0 : i64, scratch_operands = 0 : i64, tpu.core_type = #tpu.core_type<tc>, window_params = [{transform_indices = @transform_0, window_bounds = array<i64: 2, 8, 128>}, {pipeline_mode = #tpu.pipeline_mode<synchronous>, transform_indices = @transform_1, window_bounds = array<i64: 128, 512>}, {pipeline_mode = #tpu.pipeline_mode<synchronous>, transform_indices = @transform_2, window_bounds = array<i64: 128, 512>}, {pipeline_mode = #tpu.pipeline_mode<synchronous>, transform_indices = @transform_3, window_bounds = array<i64: 1, 512>}, {pipeline_mode = #tpu.pipeline_mode<synchronous>, transform_indices = @transform_4, window_bounds = array<i64: 128, 512>}, {pipeline_mode = #tpu.pipeline_mode<synchronous>, transform_indices = @transform_5, window_bounds = array<i64: 128, 512>}, {pipeline_mode = #tpu.pipeline_mode<synchronous>, transform_indices = @transform_6, window_bounds = array<i64: 1, 512>}, {pipeline_mode = #tpu.pipeline_mode<synchronous>, transform_indices = @transform_7, window_bounds = array<i64: 128, 512>}, {pipeline_mode = #tpu.pipeline_mode<synchronous>, transform_indices = @transform_8, window_bounds = array<i64: 128, 512>}, {pipeline_mode = #tpu.pipeline_mode<synchronous>, transform_indices = @transform_9, window_bounds = array<i64: 1, 512>}, {pipeline_mode = #tpu.pipeline_mode<synchronous>, transform_indices = @transform_10, window_bounds = array<i64: 128, 128>}, {pipeline_mode = #tpu.pipeline_mode<synchronous>, transform_indices = @transform_11, window_bounds = array<i64: 1, 128>}, {transform_indices = @transform_12, window_bounds = array<i64: 2, 8, 128>}]} {
    %c0 = arith.constant 0 : index
    %c0_0 = arith.constant 0 : index
    %0 = vector.load %arg3[%c0, %c0_0] : memref<128x512xbf16, #tpu.memory_space<vmem>>, vector<128x512xbf16>
    %c0_1 = arith.constant 0 : index
    %c0_2 = arith.constant 0 : index
    %1 = vector.load %arg5[%c0_1, %c0_2] : memref<128x512xbf16, #tpu.memory_space<vmem>>, vector<128x512xbf16>
    %c0_3 = arith.constant 0 : index
    %c0_4 = arith.constant 0 : index
    %2 = vector.load %arg6[%c0_3, %c0_4] : memref<128x512xbf16, #tpu.memory_space<vmem>>, vector<128x512xbf16>
    %c0_5 = arith.constant 0 : index
    %c0_6 = arith.constant 0 : index
    %3 = vector.load %arg8[%c0_5, %c0_6] : memref<128x512xbf16, #tpu.memory_space<vmem>>, vector<128x512xbf16>
    %c0_7 = arith.constant 0 : index
    %c0_8 = arith.constant 0 : index
    %4 = vector.load %arg9[%c0_7, %c0_8] : memref<128x512xbf16, #tpu.memory_space<vmem>>, vector<128x512xbf16>
    %c0_9 = arith.constant 0 : index
    %c0_10 = arith.constant 0 : index
    %5 = vector.load %arg11[%c0_9, %c0_10] : memref<128x128xbf16, #tpu.memory_space<vmem>>, vector<128x128xbf16>
    %c0_11 = arith.constant 0 : index
    %c0_12 = arith.constant 0 : index
    %6 = vector.load %arg7[%c0_11, %c0_12] : memref<1x512xf32, #tpu.memory_space<vmem>>, vector<1x512xf32>
    %7 = vector.shape_cast %6 : vector<1x512xf32> to vector<1x512xf32>
    %8 = vector.broadcast %7 : vector<1x512xf32> to vector<2x512xf32>
    %c0_13 = arith.constant 0 : index
    %c0_14 = arith.constant 0 : index
    %9 = vector.load %arg10[%c0_13, %c0_14] : memref<1x512xf32, #tpu.memory_space<vmem>>, vector<1x512xf32>
    %10 = vector.shape_cast %9 : vector<1x512xf32> to vector<1x512xf32>
    %11 = vector.broadcast %10 : vector<1x512xf32> to vector<2x512xf32>
    %c0_15 = arith.constant 0 : index
    %c0_16 = arith.constant 0 : index
    %12 = vector.load %arg12[%c0_15, %c0_16] : memref<1x128xf32, #tpu.memory_space<vmem>>, vector<1x128xf32>
    %13 = vector.shape_cast %12 : vector<1x128xf32> to vector<1x128xf32>
    %14 = vector.broadcast %13 : vector<1x128xf32> to vector<2x128xf32>
    %c0_17 = arith.constant 0 : index
    %c0_18 = arith.constant 0 : index
    %c0_19 = arith.constant 0 : index
    %15 = vector.load %arg1[%c0_17, %c0_18, %c0_19] : memref<2x8x128xf32, #tpu.memory_space<vmem>>, vector<2x8x128xf32>
    %16 = vector.shape_cast %15 : vector<2x8x128xf32> to vector<16x128xf32>
    %17 = arith.truncf %16 : vector<16x128xf32> to vector<16x128xbf16>
    %c0_20 = arith.constant 0 : index
    %c0_21 = arith.constant 0 : index
    %18 = vector.load %arg2[%c0_20, %c0_21] : memref<128x512xbf16, #tpu.memory_space<vmem>>, vector<128x512xbf16>
    %cst = arith.constant dense<0.000000e+00> : vector<16x512xf32>
    %19 = tpu.matmul %17, %18, %cst {dimension_numbers = #tpu.dot_dimension_numbers<[1], [0], [0], [1], [0, 0, 1, 1], [], []>} : vector<16x128xbf16>, vector<128x512xbf16>, vector<16x512xf32> -> vector<16x512xf32>
    %c0_22 = arith.constant 0 : index
    %c0_23 = arith.constant 0 : index
    %20 = vector.load %arg4[%c0_22, %c0_23] : memref<1x512xf32, #tpu.memory_space<vmem>>, vector<1x512xf32>
    %21 = vector.broadcast %20 : vector<1x512xf32> to vector<16x512xf32>
    %22 = arith.addf %19, %21 : vector<16x512xf32>
    %23 = vector.shape_cast %22 : vector<16x512xf32> to vector<2x8x512xf32>
    %cst_24 = arith.constant 0.000000e+00 : f32
    %24 = vector.broadcast %cst_24 : f32 to vector<2x128xf32>
    %25 = vector.extract_strided_slice %23 {offsets = [0, 0, 0], sizes = [2, 1, 512], strides = [1, 1, 1]} : vector<2x8x512xf32> to vector<2x1x512xf32>
    %26 = vector.shape_cast %25 : vector<2x1x512xf32> to vector<2x512xf32>
    %27 = arith.truncf %24 : vector<2x128xf32> to vector<2x128xbf16>
    %cst_25 = arith.constant dense<0.000000e+00> : vector<2x512xf32>
    %28 = tpu.matmul %27, %0, %cst_25 {dimension_numbers = #tpu.dot_dimension_numbers<[1], [0], [0], [1], [0, 0, 1, 1], [], []>} : vector<2x128xbf16>, vector<128x512xbf16>, vector<2x512xf32> -> vector<2x512xf32>
    %29 = arith.addf %26, %28 : vector<2x512xf32>
    %30 = vector.extract_strided_slice %29 {offsets = [0, 0], sizes = [2, 384], strides = [1, 1]} : vector<2x512xf32> to vector<2x384xf32>
    %31 = arith.negf %30 : vector<2x384xf32>
    %32 = math.exp %31 : vector<2x384xf32>
    %cst_26 = arith.constant 1.000000e+00 : f32
    %33 = vector.broadcast %cst_26 : f32 to vector<2x384xf32>
    %34 = arith.addf %33, %32 : vector<2x384xf32>
    %35 = arith.divf %33, %34 : vector<2x384xf32>
    %36 = vector.extract_strided_slice %35 {offsets = [0, 0], sizes = [2, 128], strides = [1, 1]} : vector<2x384xf32> to vector<2x128xf32>
    %37 = vector.extract_strided_slice %35 {offsets = [0, 128], sizes = [2, 128], strides = [1, 1]} : vector<2x384xf32> to vector<2x128xf32>
    %38 = vector.extract_strided_slice %35 {offsets = [0, 256], sizes = [2, 128], strides = [1, 1]} : vector<2x384xf32> to vector<2x128xf32>
    %39 = vector.extract_strided_slice %29 {offsets = [0, 384], sizes = [2, 128], strides = [1, 1]} : vector<2x512xf32> to vector<2x128xf32>
    %40 = math.tanh %39 : vector<2x128xf32>
    %41 = arith.mulf %37, %24 : vector<2x128xf32>
    %42 = arith.mulf %36, %40 : vector<2x128xf32>
    %43 = arith.addf %41, %42 : vector<2x128xf32>
    %44 = math.tanh %43 : vector<2x128xf32>
    %45 = arith.mulf %38, %44 : vector<2x128xf32>
    %46 = vector.extract_strided_slice %23 {offsets = [0, 1, 0], sizes = [2, 1, 512], strides = [1, 1, 1]} : vector<2x8x512xf32> to vector<2x1x512xf32>
    %47 = vector.shape_cast %46 : vector<2x1x512xf32> to vector<2x512xf32>
    %48 = arith.truncf %45 : vector<2x128xf32> to vector<2x128xbf16>
    %cst_27 = arith.constant dense<0.000000e+00> : vector<2x512xf32>
    %49 = tpu.matmul %48, %0, %cst_27 {dimension_numbers = #tpu.dot_dimension_numbers<[1], [0], [0], [1], [0, 0, 1, 1], [], []>} : vector<2x128xbf16>, vector<128x512xbf16>, vector<2x512xf32> -> vector<2x512xf32>
    %50 = arith.addf %47, %49 : vector<2x512xf32>
    %51 = vector.extract_strided_slice %50 {offsets = [0, 0], sizes = [2, 384], strides = [1, 1]} : vector<2x512xf32> to vector<2x384xf32>
    %52 = arith.negf %51 : vector<2x384xf32>
    %53 = math.exp %52 : vector<2x384xf32>
    %cst_28 = arith.constant 1.000000e+00 : f32
    %54 = vector.broadcast %cst_28 : f32 to vector<2x384xf32>
    %55 = arith.addf %54, %53 : vector<2x384xf32>
    %56 = arith.divf %54, %55 : vector<2x384xf32>
    %57 = vector.extract_strided_slice %56 {offsets = [0, 0], sizes = [2, 128], strides = [1, 1]} : vector<2x384xf32> to vector<2x128xf32>
    %58 = vector.extract_strided_slice %56 {offsets = [0, 128], sizes = [2, 128], strides = [1, 1]} : vector<2x384xf32> to vector<2x128xf32>
    %59 = vector.extract_strided_slice %56 {offsets = [0, 256], sizes = [2, 128], strides = [1, 1]} : vector<2x384xf32> to vector<2x128xf32>
    %60 = vector.extract_strided_slice %50 {offsets = [0, 384], sizes = [2, 128], strides = [1, 1]} : vector<2x512xf32> to vector<2x128xf32>
    %61 = math.tanh %60 : vector<2x128xf32>
    %62 = arith.mulf %58, %43 : vector<2x128xf32>
    %63 = arith.mulf %57, %61 : vector<2x128xf32>
    %64 = arith.addf %62, %63 : vector<2x128xf32>
    %65 = math.tanh %64 : vector<2x128xf32>
    %66 = arith.mulf %59, %65 : vector<2x128xf32>
    %67 = arith.truncf %45 : vector<2x128xf32> to vector<2x128xbf16>
    %cst_29 = arith.constant dense<0.000000e+00> : vector<2x512xf32>
    %68 = tpu.matmul %67, %1, %cst_29 {dimension_numbers = #tpu.dot_dimension_numbers<[1], [0], [0], [1], [0, 0, 1, 1], [], []>} : vector<2x128xbf16>, vector<128x512xbf16>, vector<2x512xf32> -> vector<2x512xf32>
    %69 = arith.truncf %24 : vector<2x128xf32> to vector<2x128xbf16>
    %cst_30 = arith.constant dense<0.000000e+00> : vector<2x512xf32>
    %70 = tpu.matmul %69, %2, %cst_30 {dimension_numbers = #tpu.dot_dimension_numbers<[1], [0], [0], [1], [0, 0, 1, 1], [], []>} : vector<2x128xbf16>, vector<128x512xbf16>, vector<2x512xf32> -> vector<2x512xf32>
    %71 = arith.addf %68, %70 : vector<2x512xf32>
    %72 = arith.addf %71, %8 : vector<2x512xf32>
    %73 = vector.extract_strided_slice %72 {offsets = [0, 0], sizes = [2, 384], strides = [1, 1]} : vector<2x512xf32> to vector<2x384xf32>
    %74 = arith.negf %73 : vector<2x384xf32>
    %75 = math.exp %74 : vector<2x384xf32>
    %cst_31 = arith.constant 1.000000e+00 : f32
    %76 = vector.broadcast %cst_31 : f32 to vector<2x384xf32>
    %77 = arith.addf %76, %75 : vector<2x384xf32>
    %78 = arith.divf %76, %77 : vector<2x384xf32>
    %79 = vector.extract_strided_slice %78 {offsets = [0, 0], sizes = [2, 128], strides = [1, 1]} : vector<2x384xf32> to vector<2x128xf32>
    %80 = vector.extract_strided_slice %78 {offsets = [0, 128], sizes = [2, 128], strides = [1, 1]} : vector<2x384xf32> to vector<2x128xf32>
    %81 = vector.extract_strided_slice %78 {offsets = [0, 256], sizes = [2, 128], strides = [1, 1]} : vector<2x384xf32> to vector<2x128xf32>
    %82 = vector.extract_strided_slice %72 {offsets = [0, 384], sizes = [2, 128], strides = [1, 1]} : vector<2x512xf32> to vector<2x128xf32>
    %83 = math.tanh %82 : vector<2x128xf32>
    %84 = arith.mulf %80, %24 : vector<2x128xf32>
    %85 = arith.mulf %79, %83 : vector<2x128xf32>
    %86 = arith.addf %84, %85 : vector<2x128xf32>
    %87 = math.tanh %86 : vector<2x128xf32>
    %88 = arith.mulf %81, %87 : vector<2x128xf32>
    %89 = vector.extract_strided_slice %23 {offsets = [0, 2, 0], sizes = [2, 1, 512], strides = [1, 1, 1]} : vector<2x8x512xf32> to vector<2x1x512xf32>
    %90 = vector.shape_cast %89 : vector<2x1x512xf32> to vector<2x512xf32>
    %91 = arith.truncf %66 : vector<2x128xf32> to vector<2x128xbf16>
    %cst_32 = arith.constant dense<0.000000e+00> : vector<2x512xf32>
    %92 = tpu.matmul %91, %0, %cst_32 {dimension_numbers = #tpu.dot_dimension_numbers<[1], [0], [0], [1], [0, 0, 1, 1], [], []>} : vector<2x128xbf16>, vector<128x512xbf16>, vector<2x512xf32> -> vector<2x512xf32>
    %93 = arith.addf %90, %92 : vector<2x512xf32>
    %94 = vector.extract_strided_slice %93 {offsets = [0, 0], sizes = [2, 384], strides = [1, 1]} : vector<2x512xf32> to vector<2x384xf32>
    %95 = arith.negf %94 : vector<2x384xf32>
    %96 = math.exp %95 : vector<2x384xf32>
    %cst_33 = arith.constant 1.000000e+00 : f32
    %97 = vector.broadcast %cst_33 : f32 to vector<2x384xf32>
    %98 = arith.addf %97, %96 : vector<2x384xf32>
    %99 = arith.divf %97, %98 : vector<2x384xf32>
    %100 = vector.extract_strided_slice %99 {offsets = [0, 0], sizes = [2, 128], strides = [1, 1]} : vector<2x384xf32> to vector<2x128xf32>
    %101 = vector.extract_strided_slice %99 {offsets = [0, 128], sizes = [2, 128], strides = [1, 1]} : vector<2x384xf32> to vector<2x128xf32>
    %102 = vector.extract_strided_slice %99 {offsets = [0, 256], sizes = [2, 128], strides = [1, 1]} : vector<2x384xf32> to vector<2x128xf32>
    %103 = vector.extract_strided_slice %93 {offsets = [0, 384], sizes = [2, 128], strides = [1, 1]} : vector<2x512xf32> to vector<2x128xf32>
    %104 = math.tanh %103 : vector<2x128xf32>
    %105 = arith.mulf %101, %64 : vector<2x128xf32>
    %106 = arith.mulf %100, %104 : vector<2x128xf32>
    %107 = arith.addf %105, %106 : vector<2x128xf32>
    %108 = math.tanh %107 : vector<2x128xf32>
    %109 = arith.mulf %102, %108 : vector<2x128xf32>
    %110 = arith.truncf %66 : vector<2x128xf32> to vector<2x128xbf16>
    %cst_34 = arith.constant dense<0.000000e+00> : vector<2x512xf32>
    %111 = tpu.matmul %110, %1, %cst_34 {dimension_numbers = #tpu.dot_dimension_numbers<[1], [0], [0], [1], [0, 0, 1, 1], [], []>} : vector<2x128xbf16>, vector<128x512xbf16>, vector<2x512xf32> -> vector<2x512xf32>
    %112 = arith.truncf %88 : vector<2x128xf32> to vector<2x128xbf16>
    %cst_35 = arith.constant dense<0.000000e+00> : vector<2x512xf32>
    %113 = tpu.matmul %112, %2, %cst_35 {dimension_numbers = #tpu.dot_dimension_numbers<[1], [0], [0], [1], [0, 0, 1, 1], [], []>} : vector<2x128xbf16>, vector<128x512xbf16>, vector<2x512xf32> -> vector<2x512xf32>
    %114 = arith.addf %111, %113 : vector<2x512xf32>
    %115 = arith.addf %114, %8 : vector<2x512xf32>
    %116 = vector.extract_strided_slice %115 {offsets = [0, 0], sizes = [2, 384], strides = [1, 1]} : vector<2x512xf32> to vector<2x384xf32>
    %117 = arith.negf %116 : vector<2x384xf32>
    %118 = math.exp %117 : vector<2x384xf32>
    %cst_36 = arith.constant 1.000000e+00 : f32
    %119 = vector.broadcast %cst_36 : f32 to vector<2x384xf32>
    %120 = arith.addf %119, %118 : vector<2x384xf32>
    %121 = arith.divf %119, %120 : vector<2x384xf32>
    %122 = vector.extract_strided_slice %121 {offsets = [0, 0], sizes = [2, 128], strides = [1, 1]} : vector<2x384xf32> to vector<2x128xf32>
    %123 = vector.extract_strided_slice %121 {offsets = [0, 128], sizes = [2, 128], strides = [1, 1]} : vector<2x384xf32> to vector<2x128xf32>
    %124 = vector.extract_strided_slice %121 {offsets = [0, 256], sizes = [2, 128], strides = [1, 1]} : vector<2x384xf32> to vector<2x128xf32>
    %125 = vector.extract_strided_slice %115 {offsets = [0, 384], sizes = [2, 128], strides = [1, 1]} : vector<2x512xf32> to vector<2x128xf32>
    %126 = math.tanh %125 : vector<2x128xf32>
    %127 = arith.mulf %123, %86 : vector<2x128xf32>
    %128 = arith.mulf %122, %126 : vector<2x128xf32>
    %129 = arith.addf %127, %128 : vector<2x128xf32>
    %130 = math.tanh %129 : vector<2x128xf32>
    %131 = arith.mulf %124, %130 : vector<2x128xf32>
    %132 = arith.truncf %88 : vector<2x128xf32> to vector<2x128xbf16>
    %cst_37 = arith.constant dense<0.000000e+00> : vector<2x512xf32>
    %133 = tpu.matmul %132, %3, %cst_37 {dimension_numbers = #tpu.dot_dimension_numbers<[1], [0], [0], [1], [0, 0, 1, 1], [], []>} : vector<2x128xbf16>, vector<128x512xbf16>, vector<2x512xf32> -> vector<2x512xf32>
    %134 = arith.truncf %24 : vector<2x128xf32> to vector<2x128xbf16>
    %cst_38 = arith.constant dense<0.000000e+00> : vector<2x512xf32>
    %135 = tpu.matmul %134, %4, %cst_38 {dimension_numbers = #tpu.dot_dimension_numbers<[1], [0], [0], [1], [0, 0, 1, 1], [], []>} : vector<2x128xbf16>, vector<128x512xbf16>, vector<2x512xf32> -> vector<2x512xf32>
    %136 = arith.addf %133, %135 : vector<2x512xf32>
    %137 = arith.addf %136, %11 : vector<2x512xf32>
    %138 = vector.extract_strided_slice %137 {offsets = [0, 0], sizes = [2, 384], strides = [1, 1]} : vector<2x512xf32> to vector<2x384xf32>
    %139 = arith.negf %138 : vector<2x384xf32>
    %140 = math.exp %139 : vector<2x384xf32>
    %cst_39 = arith.constant 1.000000e+00 : f32
    %141 = vector.broadcast %cst_39 : f32 to vector<2x384xf32>
    %142 = arith.addf %141, %140 : vector<2x384xf32>
    %143 = arith.divf %141, %142 : vector<2x384xf32>
    %144 = vector.extract_strided_slice %143 {offsets = [0, 0], sizes = [2, 128], strides = [1, 1]} : vector<2x384xf32> to vector<2x128xf32>
    %145 = vector.extract_strided_slice %143 {offsets = [0, 128], sizes = [2, 128], strides = [1, 1]} : vector<2x384xf32> to vector<2x128xf32>
    %146 = vector.extract_strided_slice %143 {offsets = [0, 256], sizes = [2, 128], strides = [1, 1]} : vector<2x384xf32> to vector<2x128xf32>
    %147 = vector.extract_strided_slice %137 {offsets = [0, 384], sizes = [2, 128], strides = [1, 1]} : vector<2x512xf32> to vector<2x128xf32>
    %148 = math.tanh %147 : vector<2x128xf32>
    %149 = arith.mulf %145, %24 : vector<2x128xf32>
    %150 = arith.mulf %144, %148 : vector<2x128xf32>
    %151 = arith.addf %149, %150 : vector<2x128xf32>
    %152 = math.tanh %151 : vector<2x128xf32>
    %153 = arith.mulf %146, %152 : vector<2x128xf32>
    %154 = arith.truncf %153 : vector<2x128xf32> to vector<2x128xbf16>
    %cst_40 = arith.constant dense<0.000000e+00> : vector<2x128xf32>
    %155 = tpu.matmul %154, %5, %cst_40 {dimension_numbers = #tpu.dot_dimension_numbers<[1], [0], [0], [1], [0, 0, 1, 1], [], []>} : vector<2x128xbf16>, vector<128x128xbf16>, vector<2x128xf32> -> vector<2x128xf32>
    %156 = arith.addf %155, %14 : vector<2x128xf32>
    %157 = vector.shape_cast %156 : vector<2x128xf32> to vector<2x1x128xf32>
    %c0_41 = arith.constant 0 : index
    %c0_42 = arith.constant 0 : index
    %c0_43 = arith.constant 0 : index
    %158 = vector.load %arg13[%c0_41, %c0_42, %c0_43] : memref<2x8x128xf32, #tpu.memory_space<vmem>>, vector<2x1x128xf32>
    tpu.vector_store %arg13[%c0_41, %c0_42, %c0_43], %157 {strides = array<i32>} : memref<2x8x128xf32, #tpu.memory_space<vmem>>, vector<2x1x128xf32>,
    %159 = vector.extract_strided_slice %23 {offsets = [0, 3, 0], sizes = [2, 1, 512], strides = [1, 1, 1]} : vector<2x8x512xf32> to vector<2x1x512xf32>
    %160 = vector.shape_cast %159 : vector<2x1x512xf32> to vector<2x512xf32>
    %161 = arith.truncf %109 : vector<2x128xf32> to vector<2x128xbf16>
    %cst_44 = arith.constant dense<0.000000e+00> : vector<2x512xf32>
    %162 = tpu.matmul %161, %0, %cst_44 {dimension_numbers = #tpu.dot_dimension_numbers<[1], [0], [0], [1], [0, 0, 1, 1], [], []>} : vector<2x128xbf16>, vector<128x512xbf16>, vector<2x512xf32> -> vector<2x512xf32>
    %163 = arith.addf %160, %162 : vector<2x512xf32>
    %164 = vector.extract_strided_slice %163 {offsets = [0, 0], sizes = [2, 384], strides = [1, 1]} : vector<2x512xf32> to vector<2x384xf32>
    %165 = arith.negf %164 : vector<2x384xf32>
    %166 = math.exp %165 : vector<2x384xf32>
    %cst_45 = arith.constant 1.000000e+00 : f32
    %167 = vector.broadcast %cst_45 : f32 to vector<2x384xf32>
    %168 = arith.addf %167, %166 : vector<2x384xf32>
    %169 = arith.divf %167, %168 : vector<2x384xf32>
    %170 = vector.extract_strided_slice %169 {offsets = [0, 0], sizes = [2, 128], strides = [1, 1]} : vector<2x384xf32> to vector<2x128xf32>
    %171 = vector.extract_strided_slice %169 {offsets = [0, 128], sizes = [2, 128], strides = [1, 1]} : vector<2x384xf32> to vector<2x128xf32>
    %172 = vector.extract_strided_slice %169 {offsets = [0, 256], sizes = [2, 128], strides = [1, 1]} : vector<2x384xf32> to vector<2x128xf32>
    %173 = vector.extract_strided_slice %163 {offsets = [0, 384], sizes = [2, 128], strides = [1, 1]} : vector<2x512xf32> to vector<2x128xf32>
    %174 = math.tanh %173 : vector<2x128xf32>
    %175 = arith.mulf %171, %107 : vector<2x128xf32>
    %176 = arith.mulf %170, %174 : vector<2x128xf32>
    %177 = arith.addf %175, %176 : vector<2x128xf32>
    %178 = math.tanh %177 : vector<2x128xf32>
    %179 = arith.mulf %172, %178 : vector<2x128xf32>
    %180 = arith.truncf %109 : vector<2x128xf32> to vector<2x128xbf16>
    %cst_46 = arith.constant dense<0.000000e+00> : vector<2x512xf32>
    %181 = tpu.matmul %180, %1, %cst_46 {dimension_numbers = #tpu.dot_dimension_numbers<[1], [0], [0], [1], [0, 0, 1, 1], [], []>} : vector<2x128xbf16>, vector<128x512xbf16>, vector<2x512xf32> -> vector<2x512xf32>
    %182 = arith.truncf %131 : vector<2x128xf32> to vector<2x128xbf16>
    %cst_47 = arith.constant dense<0.000000e+00> : vector<2x512xf32>
    %183 = tpu.matmul %182, %2, %cst_47 {dimension_numbers = #tpu.dot_dimension_numbers<[1], [0], [0], [1], [0, 0, 1, 1], [], []>} : vector<2x128xbf16>, vector<128x512xbf16>, vector<2x512xf32> -> vector<2x512xf32>
    %184 = arith.addf %181, %183 : vector<2x512xf32>
    %185 = arith.addf %184, %8 : vector<2x512xf32>
    %186 = vector.extract_strided_slice %185 {offsets = [0, 0], sizes = [2, 384], strides = [1, 1]} : vector<2x512xf32> to vector<2x384xf32>
    %187 = arith.negf %186 : vector<2x384xf32>
    %188 = math.exp %187 : vector<2x384xf32>
    %cst_48 = arith.constant 1.000000e+00 : f32
    %189 = vector.broadcast %cst_48 : f32 to vector<2x384xf32>
    %190 = arith.addf %189, %188 : vector<2x384xf32>
    %191 = arith.divf %189, %190 : vector<2x384xf32>
    %192 = vector.extract_strided_slice %191 {offsets = [0, 0], sizes = [2, 128], strides = [1, 1]} : vector<2x384xf32> to vector<2x128xf32>
    %193 = vector.extract_strided_slice %191 {offsets = [0, 128], sizes = [2, 128], strides = [1, 1]} : vector<2x384xf32> to vector<2x128xf32>
    %194 = vector.extract_strided_slice %191 {offsets = [0, 256], sizes = [2, 128], strides = [1, 1]} : vector<2x384xf32> to vector<2x128xf32>
    %195 = vector.extract_strided_slice %185 {offsets = [0, 384], sizes = [2, 128], strides = [1, 1]} : vector<2x512xf32> to vector<2x128xf32>
    %196 = math.tanh %195 : vector<2x128xf32>
    %197 = arith.mulf %193, %129 : vector<2x128xf32>
    %198 = arith.mulf %192, %196 : vector<2x128xf32>
    %199 = arith.addf %197, %198 : vector<2x128xf32>
    %200 = math.tanh %199 : vector<2x128xf32>
    %201 = arith.mulf %194, %200 : vector<2x128xf32>
    %202 = arith.truncf %131 : vector<2x128xf32> to vector<2x128xbf16>
    %cst_49 = arith.constant dense<0.000000e+00> : vector<2x512xf32>
    %203 = tpu.matmul %202, %3, %cst_49 {dimension_numbers = #tpu.dot_dimension_numbers<[1], [0], [0], [1], [0, 0, 1, 1], [], []>} : vector<2x128xbf16>, vector<128x512xbf16>, vector<2x512xf32> -> vector<2x512xf32>
    %204 = arith.truncf %153 : vector<2x128xf32> to vector<2x128xbf16>
    %cst_50 = arith.constant dense<0.000000e+00> : vector<2x512xf32>
    %205 = tpu.matmul %204, %4, %cst_50 {dimension_numbers = #tpu.dot_dimension_numbers<[1], [0], [0], [1], [0, 0, 1, 1], [], []>} : vector<2x128xbf16>, vector<128x512xbf16>, vector<2x512xf32> -> vector<2x512xf32>
    %206 = arith.addf %203, %205 : vector<2x512xf32>
    %207 = arith.addf %206, %11 : vector<2x512xf32>
    %208 = vector.extract_strided_slice %207 {offsets = [0, 0], sizes = [2, 384], strides = [1, 1]} : vector<2x512xf32> to vector<2x384xf32>
    %209 = arith.negf %208 : vector<2x384xf32>
    %210 = math.exp %209 : vector<2x384xf32>
    %cst_51 = arith.constant 1.000000e+00 : f32
    %211 = vector.broadcast %cst_51 : f32 to vector<2x384xf32>
    %212 = arith.addf %211, %210 : vector<2x384xf32>
    %213 = arith.divf %211, %212 : vector<2x384xf32>
    %214 = vector.extract_strided_slice %213 {offsets = [0, 0], sizes = [2, 128], strides = [1, 1]} : vector<2x384xf32> to vector<2x128xf32>
    %215 = vector.extract_strided_slice %213 {offsets = [0, 128], sizes = [2, 128], strides = [1, 1]} : vector<2x384xf32> to vector<2x128xf32>
    %216 = vector.extract_strided_slice %213 {offsets = [0, 256], sizes = [2, 128], strides = [1, 1]} : vector<2x384xf32> to vector<2x128xf32>
    %217 = vector.extract_strided_slice %207 {offsets = [0, 384], sizes = [2, 128], strides = [1, 1]} : vector<2x512xf32> to vector<2x128xf32>
    %218 = math.tanh %217 : vector<2x128xf32>
    %219 = arith.mulf %215, %151 : vector<2x128xf32>
    %220 = arith.mulf %214, %218 : vector<2x128xf32>
    %221 = arith.addf %219, %220 : vector<2x128xf32>
    %222 = math.tanh %221 : vector<2x128xf32>
    %223 = arith.mulf %216, %222 : vector<2x128xf32>
    %224 = arith.truncf %223 : vector<2x128xf32> to vector<2x128xbf16>
    %cst_52 = arith.constant dense<0.000000e+00> : vector<2x128xf32>
    %225 = tpu.matmul %224, %5, %cst_52 {dimension_numbers = #tpu.dot_dimension_numbers<[1], [0], [0], [1], [0, 0, 1, 1], [], []>} : vector<2x128xbf16>, vector<128x128xbf16>, vector<2x128xf32> -> vector<2x128xf32>
    %226 = arith.addf %225, %14 : vector<2x128xf32>
    %227 = vector.shape_cast %226 : vector<2x128xf32> to vector<2x1x128xf32>
    %c0_53 = arith.constant 0 : index
    %c1 = arith.constant 1 : index
    %c0_54 = arith.constant 0 : index
    %228 = vector.load %arg13[%c0_53, %c1, %c0_54] : memref<2x8x128xf32, #tpu.memory_space<vmem>>, vector<2x1x128xf32>
    tpu.vector_store %arg13[%c0_53, %c1, %c0_54], %227 {strides = array<i32>} : memref<2x8x128xf32, #tpu.memory_space<vmem>>, vector<2x1x128xf32>,
    %229 = vector.extract_strided_slice %23 {offsets = [0, 4, 0], sizes = [2, 1, 512], strides = [1, 1, 1]} : vector<2x8x512xf32> to vector<2x1x512xf32>
    %230 = vector.shape_cast %229 : vector<2x1x512xf32> to vector<2x512xf32>
    %231 = arith.truncf %179 : vector<2x128xf32> to vector<2x128xbf16>
    %cst_55 = arith.constant dense<0.000000e+00> : vector<2x512xf32>
    %232 = tpu.matmul %231, %0, %cst_55 {dimension_numbers = #tpu.dot_dimension_numbers<[1], [0], [0], [1], [0, 0, 1, 1], [], []>} : vector<2x128xbf16>, vector<128x512xbf16>, vector<2x512xf32> -> vector<2x512xf32>
    %233 = arith.addf %230, %232 : vector<2x512xf32>
    %234 = vector.extract_strided_slice %233 {offsets = [0, 0], sizes = [2, 384], strides = [1, 1]} : vector<2x512xf32> to vector<2x384xf32>
    %235 = arith.negf %234 : vector<2x384xf32>
    %236 = math.exp %235 : vector<2x384xf32>
    %cst_56 = arith.constant 1.000000e+00 : f32
    %237 = vector.broadcast %cst_56 : f32 to vector<2x384xf32>
    %238 = arith.addf %237, %236 : vector<2x384xf32>
    %239 = arith.divf %237, %238 : vector<2x384xf32>
    %240 = vector.extract_strided_slice %239 {offsets = [0, 0], sizes = [2, 128], strides = [1, 1]} : vector<2x384xf32> to vector<2x128xf32>
    %241 = vector.extract_strided_slice %239 {offsets = [0, 128], sizes = [2, 128], strides = [1, 1]} : vector<2x384xf32> to vector<2x128xf32>
    %242 = vector.extract_strided_slice %239 {offsets = [0, 256], sizes = [2, 128], strides = [1, 1]} : vector<2x384xf32> to vector<2x128xf32>
    %243 = vector.extract_strided_slice %233 {offsets = [0, 384], sizes = [2, 128], strides = [1, 1]} : vector<2x512xf32> to vector<2x128xf32>
    %244 = math.tanh %243 : vector<2x128xf32>
    %245 = arith.mulf %241, %177 : vector<2x128xf32>
    %246 = arith.mulf %240, %244 : vector<2x128xf32>
    %247 = arith.addf %245, %246 : vector<2x128xf32>
    %248 = math.tanh %247 : vector<2x128xf32>
    %249 = arith.mulf %242, %248 : vector<2x128xf32>
    %250 = arith.truncf %179 : vector<2x128xf32> to vector<2x128xbf16>
    %cst_57 = arith.constant dense<0.000000e+00> : vector<2x512xf32>
    %251 = tpu.matmul %250, %1, %cst_57 {dimension_numbers = #tpu.dot_dimension_numbers<[1], [0], [0], [1], [0, 0, 1, 1], [], []>} : vector<2x128xbf16>, vector<128x512xbf16>, vector<2x512xf32> -> vector<2x512xf32>
    %252 = arith.truncf %201 : vector<2x128xf32> to vector<2x128xbf16>
    %cst_58 = arith.constant dense<0.000000e+00> : vector<2x512xf32>
    %253 = tpu.matmul %252, %2, %cst_58 {dimension_numbers = #tpu.dot_dimension_numbers<[1], [0], [0], [1], [0, 0, 1, 1], [], []>} : vector<2x128xbf16>, vector<128x512xbf16>, vector<2x512xf32> -> vector<2x512xf32>
    %254 = arith.addf %251, %253 : vector<2x512xf32>
    %255 = arith.addf %254, %8 : vector<2x512xf32>
    %256 = vector.extract_strided_slice %255 {offsets = [0, 0], sizes = [2, 384], strides = [1, 1]} : vector<2x512xf32> to vector<2x384xf32>
    %257 = arith.negf %256 : vector<2x384xf32>
    %258 = math.exp %257 : vector<2x384xf32>
    %cst_59 = arith.constant 1.000000e+00 : f32
    %259 = vector.broadcast %cst_59 : f32 to vector<2x384xf32>
    %260 = arith.addf %259, %258 : vector<2x384xf32>
    %261 = arith.divf %259, %260 : vector<2x384xf32>
    %262 = vector.extract_strided_slice %261 {offsets = [0, 0], sizes = [2, 128], strides = [1, 1]} : vector<2x384xf32> to vector<2x128xf32>
    %263 = vector.extract_strided_slice %261 {offsets = [0, 128], sizes = [2, 128], strides = [1, 1]} : vector<2x384xf32> to vector<2x128xf32>
    %264 = vector.extract_strided_slice %261 {offsets = [0, 256], sizes = [2, 128], strides = [1, 1]} : vector<2x384xf32> to vector<2x128xf32>
    %265 = vector.extract_strided_slice %255 {offsets = [0, 384], sizes = [2, 128], strides = [1, 1]} : vector<2x512xf32> to vector<2x128xf32>
    %266 = math.tanh %265 : vector<2x128xf32>
    %267 = arith.mulf %263, %199 : vector<2x128xf32>
    %268 = arith.mulf %262, %266 : vector<2x128xf32>
    %269 = arith.addf %267, %268 : vector<2x128xf32>
    %270 = math.tanh %269 : vector<2x128xf32>
    %271 = arith.mulf %264, %270 : vector<2x128xf32>
    %272 = arith.truncf %201 : vector<2x128xf32> to vector<2x128xbf16>
    %cst_60 = arith.constant dense<0.000000e+00> : vector<2x512xf32>
    %273 = tpu.matmul %272, %3, %cst_60 {dimension_numbers = #tpu.dot_dimension_numbers<[1], [0], [0], [1], [0, 0, 1, 1], [], []>} : vector<2x128xbf16>, vector<128x512xbf16>, vector<2x512xf32> -> vector<2x512xf32>
    %274 = arith.truncf %223 : vector<2x128xf32> to vector<2x128xbf16>
    %cst_61 = arith.constant dense<0.000000e+00> : vector<2x512xf32>
    %275 = tpu.matmul %274, %4, %cst_61 {dimension_numbers = #tpu.dot_dimension_numbers<[1], [0], [0], [1], [0, 0, 1, 1], [], []>} : vector<2x128xbf16>, vector<128x512xbf16>, vector<2x512xf32> -> vector<2x512xf32>
    %276 = arith.addf %273, %275 : vector<2x512xf32>
    %277 = arith.addf %276, %11 : vector<2x512xf32>
    %278 = vector.extract_strided_slice %277 {offsets = [0, 0], sizes = [2, 384], strides = [1, 1]} : vector<2x512xf32> to vector<2x384xf32>
    %279 = arith.negf %278 : vector<2x384xf32>
    %280 = math.exp %279 : vector<2x384xf32>
    %cst_62 = arith.constant 1.000000e+00 : f32
    %281 = vector.broadcast %cst_62 : f32 to vector<2x384xf32>
    %282 = arith.addf %281, %280 : vector<2x384xf32>
    %283 = arith.divf %281, %282 : vector<2x384xf32>
    %284 = vector.extract_strided_slice %283 {offsets = [0, 0], sizes = [2, 128], strides = [1, 1]} : vector<2x384xf32> to vector<2x128xf32>
    %285 = vector.extract_strided_slice %283 {offsets = [0, 128], sizes = [2, 128], strides = [1, 1]} : vector<2x384xf32> to vector<2x128xf32>
    %286 = vector.extract_strided_slice %283 {offsets = [0, 256], sizes = [2, 128], strides = [1, 1]} : vector<2x384xf32> to vector<2x128xf32>
    %287 = vector.extract_strided_slice %277 {offsets = [0, 384], sizes = [2, 128], strides = [1, 1]} : vector<2x512xf32> to vector<2x128xf32>
    %288 = math.tanh %287 : vector<2x128xf32>
    %289 = arith.mulf %285, %221 : vector<2x128xf32>
    %290 = arith.mulf %284, %288 : vector<2x128xf32>
    %291 = arith.addf %289, %290 : vector<2x128xf32>
    %292 = math.tanh %291 : vector<2x128xf32>
    %293 = arith.mulf %286, %292 : vector<2x128xf32>
    %294 = arith.truncf %293 : vector<2x128xf32> to vector<2x128xbf16>
    %cst_63 = arith.constant dense<0.000000e+00> : vector<2x128xf32>
    %295 = tpu.matmul %294, %5, %cst_63 {dimension_numbers = #tpu.dot_dimension_numbers<[1], [0], [0], [1], [0, 0, 1, 1], [], []>} : vector<2x128xbf16>, vector<128x128xbf16>, vector<2x128xf32> -> vector<2x128xf32>
    %296 = arith.addf %295, %14 : vector<2x128xf32>
    %297 = vector.shape_cast %296 : vector<2x128xf32> to vector<2x1x128xf32>
    %c0_64 = arith.constant 0 : index
    %c2 = arith.constant 2 : index
    %c0_65 = arith.constant 0 : index
    %298 = vector.load %arg13[%c0_64, %c2, %c0_65] : memref<2x8x128xf32, #tpu.memory_space<vmem>>, vector<2x1x128xf32>
    tpu.vector_store %arg13[%c0_64, %c2, %c0_65], %297 {strides = array<i32>} : memref<2x8x128xf32, #tpu.memory_space<vmem>>, vector<2x1x128xf32>,
    %299 = vector.extract_strided_slice %23 {offsets = [0, 5, 0], sizes = [2, 1, 512], strides = [1, 1, 1]} : vector<2x8x512xf32> to vector<2x1x512xf32>
    %300 = vector.shape_cast %299 : vector<2x1x512xf32> to vector<2x512xf32>
    %301 = arith.truncf %249 : vector<2x128xf32> to vector<2x128xbf16>
    %cst_66 = arith.constant dense<0.000000e+00> : vector<2x512xf32>
    %302 = tpu.matmul %301, %0, %cst_66 {dimension_numbers = #tpu.dot_dimension_numbers<[1], [0], [0], [1], [0, 0, 1, 1], [], []>} : vector<2x128xbf16>, vector<128x512xbf16>, vector<2x512xf32> -> vector<2x512xf32>
    %303 = arith.addf %300, %302 : vector<2x512xf32>
    %304 = vector.extract_strided_slice %303 {offsets = [0, 0], sizes = [2, 384], strides = [1, 1]} : vector<2x512xf32> to vector<2x384xf32>
    %305 = arith.negf %304 : vector<2x384xf32>
    %306 = math.exp %305 : vector<2x384xf32>
    %cst_67 = arith.constant 1.000000e+00 : f32
    %307 = vector.broadcast %cst_67 : f32 to vector<2x384xf32>
    %308 = arith.addf %307, %306 : vector<2x384xf32>
    %309 = arith.divf %307, %308 : vector<2x384xf32>
    %310 = vector.extract_strided_slice %309 {offsets = [0, 0], sizes = [2, 128], strides = [1, 1]} : vector<2x384xf32> to vector<2x128xf32>
    %311 = vector.extract_strided_slice %309 {offsets = [0, 128], sizes = [2, 128], strides = [1, 1]} : vector<2x384xf32> to vector<2x128xf32>
    %312 = vector.extract_strided_slice %309 {offsets = [0, 256], sizes = [2, 128], strides = [1, 1]} : vector<2x384xf32> to vector<2x128xf32>
    %313 = vector.extract_strided_slice %303 {offsets = [0, 384], sizes = [2, 128], strides = [1, 1]} : vector<2x512xf32> to vector<2x128xf32>
    %314 = math.tanh %313 : vector<2x128xf32>
    %315 = arith.mulf %311, %247 : vector<2x128xf32>
    %316 = arith.mulf %310, %314 : vector<2x128xf32>
    %317 = arith.addf %315, %316 : vector<2x128xf32>
    %318 = math.tanh %317 : vector<2x128xf32>
    %319 = arith.mulf %312, %318 : vector<2x128xf32>
    %320 = arith.truncf %249 : vector<2x128xf32> to vector<2x128xbf16>
    %cst_68 = arith.constant dense<0.000000e+00> : vector<2x512xf32>
    %321 = tpu.matmul %320, %1, %cst_68 {dimension_numbers = #tpu.dot_dimension_numbers<[1], [0], [0], [1], [0, 0, 1, 1], [], []>} : vector<2x128xbf16>, vector<128x512xbf16>, vector<2x512xf32> -> vector<2x512xf32>
    %322 = arith.truncf %271 : vector<2x128xf32> to vector<2x128xbf16>
    %cst_69 = arith.constant dense<0.000000e+00> : vector<2x512xf32>
    %323 = tpu.matmul %322, %2, %cst_69 {dimension_numbers = #tpu.dot_dimension_numbers<[1], [0], [0], [1], [0, 0, 1, 1], [], []>} : vector<2x128xbf16>, vector<128x512xbf16>, vector<2x512xf32> -> vector<2x512xf32>
    %324 = arith.addf %321, %323 : vector<2x512xf32>
    %325 = arith.addf %324, %8 : vector<2x512xf32>
    %326 = vector.extract_strided_slice %325 {offsets = [0, 0], sizes = [2, 384], strides = [1, 1]} : vector<2x512xf32> to vector<2x384xf32>
    %327 = arith.negf %326 : vector<2x384xf32>
    %328 = math.exp %327 : vector<2x384xf32>
    %cst_70 = arith.constant 1.000000e+00 : f32
    %329 = vector.broadcast %cst_70 : f32 to vector<2x384xf32>
    %330 = arith.addf %329, %328 : vector<2x384xf32>
    %331 = arith.divf %329, %330 : vector<2x384xf32>
    %332 = vector.extract_strided_slice %331 {offsets = [0, 0], sizes = [2, 128], strides = [1, 1]} : vector<2x384xf32> to vector<2x128xf32>
    %333 = vector.extract_strided_slice %331 {offsets = [0, 128], sizes = [2, 128], strides = [1, 1]} : vector<2x384xf32> to vector<2x128xf32>
    %334 = vector.extract_strided_slice %331 {offsets = [0, 256], sizes = [2, 128], strides = [1, 1]} : vector<2x384xf32> to vector<2x128xf32>
    %335 = vector.extract_strided_slice %325 {offsets = [0, 384], sizes = [2, 128], strides = [1, 1]} : vector<2x512xf32> to vector<2x128xf32>
    %336 = math.tanh %335 : vector<2x128xf32>
    %337 = arith.mulf %333, %269 : vector<2x128xf32>
    %338 = arith.mulf %332, %336 : vector<2x128xf32>
    %339 = arith.addf %337, %338 : vector<2x128xf32>
    %340 = math.tanh %339 : vector<2x128xf32>
    %341 = arith.mulf %334, %340 : vector<2x128xf32>
    %342 = arith.truncf %271 : vector<2x128xf32> to vector<2x128xbf16>
    %cst_71 = arith.constant dense<0.000000e+00> : vector<2x512xf32>
    %343 = tpu.matmul %342, %3, %cst_71 {dimension_numbers = #tpu.dot_dimension_numbers<[1], [0], [0], [1], [0, 0, 1, 1], [], []>} : vector<2x128xbf16>, vector<128x512xbf16>, vector<2x512xf32> -> vector<2x512xf32>
    %344 = arith.truncf %293 : vector<2x128xf32> to vector<2x128xbf16>
    %cst_72 = arith.constant dense<0.000000e+00> : vector<2x512xf32>
    %345 = tpu.matmul %344, %4, %cst_72 {dimension_numbers = #tpu.dot_dimension_numbers<[1], [0], [0], [1], [0, 0, 1, 1], [], []>} : vector<2x128xbf16>, vector<128x512xbf16>, vector<2x512xf32> -> vector<2x512xf32>
    %346 = arith.addf %343, %345 : vector<2x512xf32>
    %347 = arith.addf %346, %11 : vector<2x512xf32>
    %348 = vector.extract_strided_slice %347 {offsets = [0, 0], sizes = [2, 384], strides = [1, 1]} : vector<2x512xf32> to vector<2x384xf32>
    %349 = arith.negf %348 : vector<2x384xf32>
    %350 = math.exp %349 : vector<2x384xf32>
    %cst_73 = arith.constant 1.000000e+00 : f32
    %351 = vector.broadcast %cst_73 : f32 to vector<2x384xf32>
    %352 = arith.addf %351, %350 : vector<2x384xf32>
    %353 = arith.divf %351, %352 : vector<2x384xf32>
    %354 = vector.extract_strided_slice %353 {offsets = [0, 0], sizes = [2, 128], strides = [1, 1]} : vector<2x384xf32> to vector<2x128xf32>
    %355 = vector.extract_strided_slice %353 {offsets = [0, 128], sizes = [2, 128], strides = [1, 1]} : vector<2x384xf32> to vector<2x128xf32>
    %356 = vector.extract_strided_slice %353 {offsets = [0, 256], sizes = [2, 128], strides = [1, 1]} : vector<2x384xf32> to vector<2x128xf32>
    %357 = vector.extract_strided_slice %347 {offsets = [0, 384], sizes = [2, 128], strides = [1, 1]} : vector<2x512xf32> to vector<2x128xf32>
    %358 = math.tanh %357 : vector<2x128xf32>
    %359 = arith.mulf %355, %291 : vector<2x128xf32>
    %360 = arith.mulf %354, %358 : vector<2x128xf32>
    %361 = arith.addf %359, %360 : vector<2x128xf32>
    %362 = math.tanh %361 : vector<2x128xf32>
    %363 = arith.mulf %356, %362 : vector<2x128xf32>
    %364 = arith.truncf %363 : vector<2x128xf32> to vector<2x128xbf16>
    %cst_74 = arith.constant dense<0.000000e+00> : vector<2x128xf32>
    %365 = tpu.matmul %364, %5, %cst_74 {dimension_numbers = #tpu.dot_dimension_numbers<[1], [0], [0], [1], [0, 0, 1, 1], [], []>} : vector<2x128xbf16>, vector<128x128xbf16>, vector<2x128xf32> -> vector<2x128xf32>
    %366 = arith.addf %365, %14 : vector<2x128xf32>
    %367 = vector.shape_cast %366 : vector<2x128xf32> to vector<2x1x128xf32>
    %c0_75 = arith.constant 0 : index
    %c3 = arith.constant 3 : index
    %c0_76 = arith.constant 0 : index
    %368 = vector.load %arg13[%c0_75, %c3, %c0_76] : memref<2x8x128xf32, #tpu.memory_space<vmem>>, vector<2x1x128xf32>
    tpu.vector_store %arg13[%c0_75, %c3, %c0_76], %367 {strides = array<i32>} : memref<2x8x128xf32, #tpu.memory_space<vmem>>, vector<2x1x128xf32>,
    %369 = vector.extract_strided_slice %23 {offsets = [0, 6, 0], sizes = [2, 1, 512], strides = [1, 1, 1]} : vector<2x8x512xf32> to vector<2x1x512xf32>
    %370 = vector.shape_cast %369 : vector<2x1x512xf32> to vector<2x512xf32>
    %371 = arith.truncf %319 : vector<2x128xf32> to vector<2x128xbf16>
    %cst_77 = arith.constant dense<0.000000e+00> : vector<2x512xf32>
    %372 = tpu.matmul %371, %0, %cst_77 {dimension_numbers = #tpu.dot_dimension_numbers<[1], [0], [0], [1], [0, 0, 1, 1], [], []>} : vector<2x128xbf16>, vector<128x512xbf16>, vector<2x512xf32> -> vector<2x512xf32>
    %373 = arith.addf %370, %372 : vector<2x512xf32>
    %374 = vector.extract_strided_slice %373 {offsets = [0, 0], sizes = [2, 384], strides = [1, 1]} : vector<2x512xf32> to vector<2x384xf32>
    %375 = arith.negf %374 : vector<2x384xf32>
    %376 = math.exp %375 : vector<2x384xf32>
    %cst_78 = arith.constant 1.000000e+00 : f32
    %377 = vector.broadcast %cst_78 : f32 to vector<2x384xf32>
    %378 = arith.addf %377, %376 : vector<2x384xf32>
    %379 = arith.divf %377, %378 : vector<2x384xf32>
    %380 = vector.extract_strided_slice %379 {offsets = [0, 0], sizes = [2, 128], strides = [1, 1]} : vector<2x384xf32> to vector<2x128xf32>
    %381 = vector.extract_strided_slice %379 {offsets = [0, 128], sizes = [2, 128], strides = [1, 1]} : vector<2x384xf32> to vector<2x128xf32>
    %382 = vector.extract_strided_slice %379 {offsets = [0, 256], sizes = [2, 128], strides = [1, 1]} : vector<2x384xf32> to vector<2x128xf32>
    %383 = vector.extract_strided_slice %373 {offsets = [0, 384], sizes = [2, 128], strides = [1, 1]} : vector<2x512xf32> to vector<2x128xf32>
    %384 = math.tanh %383 : vector<2x128xf32>
    %385 = arith.mulf %381, %317 : vector<2x128xf32>
    %386 = arith.mulf %380, %384 : vector<2x128xf32>
    %387 = arith.addf %385, %386 : vector<2x128xf32>
    %388 = math.tanh %387 : vector<2x128xf32>
    %389 = arith.mulf %382, %388 : vector<2x128xf32>
    %390 = arith.truncf %319 : vector<2x128xf32> to vector<2x128xbf16>
    %cst_79 = arith.constant dense<0.000000e+00> : vector<2x512xf32>
    %391 = tpu.matmul %390, %1, %cst_79 {dimension_numbers = #tpu.dot_dimension_numbers<[1], [0], [0], [1], [0, 0, 1, 1], [], []>} : vector<2x128xbf16>, vector<128x512xbf16>, vector<2x512xf32> -> vector<2x512xf32>
    %392 = arith.truncf %341 : vector<2x128xf32> to vector<2x128xbf16>
    %cst_80 = arith.constant dense<0.000000e+00> : vector<2x512xf32>
    %393 = tpu.matmul %392, %2, %cst_80 {dimension_numbers = #tpu.dot_dimension_numbers<[1], [0], [0], [1], [0, 0, 1, 1], [], []>} : vector<2x128xbf16>, vector<128x512xbf16>, vector<2x512xf32> -> vector<2x512xf32>
    %394 = arith.addf %391, %393 : vector<2x512xf32>
    %395 = arith.addf %394, %8 : vector<2x512xf32>
    %396 = vector.extract_strided_slice %395 {offsets = [0, 0], sizes = [2, 384], strides = [1, 1]} : vector<2x512xf32> to vector<2x384xf32>
    %397 = arith.negf %396 : vector<2x384xf32>
    %398 = math.exp %397 : vector<2x384xf32>
    %cst_81 = arith.constant 1.000000e+00 : f32
    %399 = vector.broadcast %cst_81 : f32 to vector<2x384xf32>
    %400 = arith.addf %399, %398 : vector<2x384xf32>
    %401 = arith.divf %399, %400 : vector<2x384xf32>
    %402 = vector.extract_strided_slice %401 {offsets = [0, 0], sizes = [2, 128], strides = [1, 1]} : vector<2x384xf32> to vector<2x128xf32>
    %403 = vector.extract_strided_slice %401 {offsets = [0, 128], sizes = [2, 128], strides = [1, 1]} : vector<2x384xf32> to vector<2x128xf32>
    %404 = vector.extract_strided_slice %401 {offsets = [0, 256], sizes = [2, 128], strides = [1, 1]} : vector<2x384xf32> to vector<2x128xf32>
    %405 = vector.extract_strided_slice %395 {offsets = [0, 384], sizes = [2, 128], strides = [1, 1]} : vector<2x512xf32> to vector<2x128xf32>
    %406 = math.tanh %405 : vector<2x128xf32>
    %407 = arith.mulf %403, %339 : vector<2x128xf32>
    %408 = arith.mulf %402, %406 : vector<2x128xf32>
    %409 = arith.addf %407, %408 : vector<2x128xf32>
    %410 = math.tanh %409 : vector<2x128xf32>
    %411 = arith.mulf %404, %410 : vector<2x128xf32>
    %412 = arith.truncf %341 : vector<2x128xf32> to vector<2x128xbf16>
    %cst_82 = arith.constant dense<0.000000e+00> : vector<2x512xf32>
    %413 = tpu.matmul %412, %3, %cst_82 {dimension_numbers = #tpu.dot_dimension_numbers<[1], [0], [0], [1], [0, 0, 1, 1], [], []>} : vector<2x128xbf16>, vector<128x512xbf16>, vector<2x512xf32> -> vector<2x512xf32>
    %414 = arith.truncf %363 : vector<2x128xf32> to vector<2x128xbf16>
    %cst_83 = arith.constant dense<0.000000e+00> : vector<2x512xf32>
    %415 = tpu.matmul %414, %4, %cst_83 {dimension_numbers = #tpu.dot_dimension_numbers<[1], [0], [0], [1], [0, 0, 1, 1], [], []>} : vector<2x128xbf16>, vector<128x512xbf16>, vector<2x512xf32> -> vector<2x512xf32>
    %416 = arith.addf %413, %415 : vector<2x512xf32>
    %417 = arith.addf %416, %11 : vector<2x512xf32>
    %418 = vector.extract_strided_slice %417 {offsets = [0, 0], sizes = [2, 384], strides = [1, 1]} : vector<2x512xf32> to vector<2x384xf32>
    %419 = arith.negf %418 : vector<2x384xf32>
    %420 = math.exp %419 : vector<2x384xf32>
    %cst_84 = arith.constant 1.000000e+00 : f32
    %421 = vector.broadcast %cst_84 : f32 to vector<2x384xf32>
    %422 = arith.addf %421, %420 : vector<2x384xf32>
    %423 = arith.divf %421, %422 : vector<2x384xf32>
    %424 = vector.extract_strided_slice %423 {offsets = [0, 0], sizes = [2, 128], strides = [1, 1]} : vector<2x384xf32> to vector<2x128xf32>
    %425 = vector.extract_strided_slice %423 {offsets = [0, 128], sizes = [2, 128], strides = [1, 1]} : vector<2x384xf32> to vector<2x128xf32>
    %426 = vector.extract_strided_slice %423 {offsets = [0, 256], sizes = [2, 128], strides = [1, 1]} : vector<2x384xf32> to vector<2x128xf32>
    %427 = vector.extract_strided_slice %417 {offsets = [0, 384], sizes = [2, 128], strides = [1, 1]} : vector<2x512xf32> to vector<2x128xf32>
    %428 = math.tanh %427 : vector<2x128xf32>
    %429 = arith.mulf %425, %361 : vector<2x128xf32>
    %430 = arith.mulf %424, %428 : vector<2x128xf32>
    %431 = arith.addf %429, %430 : vector<2x128xf32>
    %432 = math.tanh %431 : vector<2x128xf32>
    %433 = arith.mulf %426, %432 : vector<2x128xf32>
    %434 = arith.truncf %433 : vector<2x128xf32> to vector<2x128xbf16>
    %cst_85 = arith.constant dense<0.000000e+00> : vector<2x128xf32>
    %435 = tpu.matmul %434, %5, %cst_85 {dimension_numbers = #tpu.dot_dimension_numbers<[1], [0], [0], [1], [0, 0, 1, 1], [], []>} : vector<2x128xbf16>, vector<128x128xbf16>, vector<2x128xf32> -> vector<2x128xf32>
    %436 = arith.addf %435, %14 : vector<2x128xf32>
    %437 = vector.shape_cast %436 : vector<2x128xf32> to vector<2x1x128xf32>
    %c0_86 = arith.constant 0 : index
    %c4 = arith.constant 4 : index
    %c0_87 = arith.constant 0 : index
    %438 = vector.load %arg13[%c0_86, %c4, %c0_87] : memref<2x8x128xf32, #tpu.memory_space<vmem>>, vector<2x1x128xf32>
    tpu.vector_store %arg13[%c0_86, %c4, %c0_87], %437 {strides = array<i32>} : memref<2x8x128xf32, #tpu.memory_space<vmem>>, vector<2x1x128xf32>,
    %439 = vector.extract_strided_slice %23 {offsets = [0, 7, 0], sizes = [2, 1, 512], strides = [1, 1, 1]} : vector<2x8x512xf32> to vector<2x1x512xf32>
    %440 = vector.shape_cast %439 : vector<2x1x512xf32> to vector<2x512xf32>
    %441 = arith.truncf %389 : vector<2x128xf32> to vector<2x128xbf16>
    %cst_88 = arith.constant dense<0.000000e+00> : vector<2x512xf32>
    %442 = tpu.matmul %441, %0, %cst_88 {dimension_numbers = #tpu.dot_dimension_numbers<[1], [0], [0], [1], [0, 0, 1, 1], [], []>} : vector<2x128xbf16>, vector<128x512xbf16>, vector<2x512xf32> -> vector<2x512xf32>
    %443 = arith.addf %440, %442 : vector<2x512xf32>
    %444 = vector.extract_strided_slice %443 {offsets = [0, 0], sizes = [2, 384], strides = [1, 1]} : vector<2x512xf32> to vector<2x384xf32>
    %445 = arith.negf %444 : vector<2x384xf32>
    %446 = math.exp %445 : vector<2x384xf32>
    %cst_89 = arith.constant 1.000000e+00 : f32
    %447 = vector.broadcast %cst_89 : f32 to vector<2x384xf32>
    %448 = arith.addf %447, %446 : vector<2x384xf32>
    %449 = arith.divf %447, %448 : vector<2x384xf32>
    %450 = vector.extract_strided_slice %449 {offsets = [0, 0], sizes = [2, 128], strides = [1, 1]} : vector<2x384xf32> to vector<2x128xf32>
    %451 = vector.extract_strided_slice %449 {offsets = [0, 128], sizes = [2, 128], strides = [1, 1]} : vector<2x384xf32> to vector<2x128xf32>
    %452 = vector.extract_strided_slice %449 {offsets = [0, 256], sizes = [2, 128], strides = [1, 1]} : vector<2x384xf32> to vector<2x128xf32>
    %453 = vector.extract_strided_slice %443 {offsets = [0, 384], sizes = [2, 128], strides = [1, 1]} : vector<2x512xf32> to vector<2x128xf32>
    %454 = math.tanh %453 : vector<2x128xf32>
    %455 = arith.mulf %451, %387 : vector<2x128xf32>
    %456 = arith.mulf %450, %454 : vector<2x128xf32>
    %457 = arith.addf %455, %456 : vector<2x128xf32>
    %458 = math.tanh %457 : vector<2x128xf32>
    %459 = arith.mulf %452, %458 : vector<2x128xf32>
    %460 = arith.truncf %389 : vector<2x128xf32> to vector<2x128xbf16>
    %cst_90 = arith.constant dense<0.000000e+00> : vector<2x512xf32>
    %461 = tpu.matmul %460, %1, %cst_90 {dimension_numbers = #tpu.dot_dimension_numbers<[1], [0], [0], [1], [0, 0, 1, 1], [], []>} : vector<2x128xbf16>, vector<128x512xbf16>, vector<2x512xf32> -> vector<2x512xf32>
    %462 = arith.truncf %411 : vector<2x128xf32> to vector<2x128xbf16>
    %cst_91 = arith.constant dense<0.000000e+00> : vector<2x512xf32>
    %463 = tpu.matmul %462, %2, %cst_91 {dimension_numbers = #tpu.dot_dimension_numbers<[1], [0], [0], [1], [0, 0, 1, 1], [], []>} : vector<2x128xbf16>, vector<128x512xbf16>, vector<2x512xf32> -> vector<2x512xf32>
    %464 = arith.addf %461, %463 : vector<2x512xf32>
    %465 = arith.addf %464, %8 : vector<2x512xf32>
    %466 = vector.extract_strided_slice %465 {offsets = [0, 0], sizes = [2, 384], strides = [1, 1]} : vector<2x512xf32> to vector<2x384xf32>
    %467 = arith.negf %466 : vector<2x384xf32>
    %468 = math.exp %467 : vector<2x384xf32>
    %cst_92 = arith.constant 1.000000e+00 : f32
    %469 = vector.broadcast %cst_92 : f32 to vector<2x384xf32>
    %470 = arith.addf %469, %468 : vector<2x384xf32>
    %471 = arith.divf %469, %470 : vector<2x384xf32>
    %472 = vector.extract_strided_slice %471 {offsets = [0, 0], sizes = [2, 128], strides = [1, 1]} : vector<2x384xf32> to vector<2x128xf32>
    %473 = vector.extract_strided_slice %471 {offsets = [0, 128], sizes = [2, 128], strides = [1, 1]} : vector<2x384xf32> to vector<2x128xf32>
    %474 = vector.extract_strided_slice %471 {offsets = [0, 256], sizes = [2, 128], strides = [1, 1]} : vector<2x384xf32> to vector<2x128xf32>
    %475 = vector.extract_strided_slice %465 {offsets = [0, 384], sizes = [2, 128], strides = [1, 1]} : vector<2x512xf32> to vector<2x128xf32>
    %476 = math.tanh %475 : vector<2x128xf32>
    %477 = arith.mulf %473, %409 : vector<2x128xf32>
    %478 = arith.mulf %472, %476 : vector<2x128xf32>
    %479 = arith.addf %477, %478 : vector<2x128xf32>
    %480 = math.tanh %479 : vector<2x128xf32>
    %481 = arith.mulf %474, %480 : vector<2x128xf32>
    %482 = arith.truncf %411 : vector<2x128xf32> to vector<2x128xbf16>
    %cst_93 = arith.constant dense<0.000000e+00> : vector<2x512xf32>
    %483 = tpu.matmul %482, %3, %cst_93 {dimension_numbers = #tpu.dot_dimension_numbers<[1], [0], [0], [1], [0, 0, 1, 1], [], []>} : vector<2x128xbf16>, vector<128x512xbf16>, vector<2x512xf32> -> vector<2x512xf32>
    %484 = arith.truncf %433 : vector<2x128xf32> to vector<2x128xbf16>
    %cst_94 = arith.constant dense<0.000000e+00> : vector<2x512xf32>
    %485 = tpu.matmul %484, %4, %cst_94 {dimension_numbers = #tpu.dot_dimension_numbers<[1], [0], [0], [1], [0, 0, 1, 1], [], []>} : vector<2x128xbf16>, vector<128x512xbf16>, vector<2x512xf32> -> vector<2x512xf32>
    %486 = arith.addf %483, %485 : vector<2x512xf32>
    %487 = arith.addf %486, %11 : vector<2x512xf32>
    %488 = vector.extract_strided_slice %487 {offsets = [0, 0], sizes = [2, 384], strides = [1, 1]} : vector<2x512xf32> to vector<2x384xf32>
    %489 = arith.negf %488 : vector<2x384xf32>
    %490 = math.exp %489 : vector<2x384xf32>
    %cst_95 = arith.constant 1.000000e+00 : f32
    %491 = vector.broadcast %cst_95 : f32 to vector<2x384xf32>
    %492 = arith.addf %491, %490 : vector<2x384xf32>
    %493 = arith.divf %491, %492 : vector<2x384xf32>
    %494 = vector.extract_strided_slice %493 {offsets = [0, 0], sizes = [2, 128], strides = [1, 1]} : vector<2x384xf32> to vector<2x128xf32>
    %495 = vector.extract_strided_slice %493 {offsets = [0, 128], sizes = [2, 128], strides = [1, 1]} : vector<2x384xf32> to vector<2x128xf32>
    %496 = vector.extract_strided_slice %493 {offsets = [0, 256], sizes = [2, 128], strides = [1, 1]} : vector<2x384xf32> to vector<2x128xf32>
    %497 = vector.extract_strided_slice %487 {offsets = [0, 384], sizes = [2, 128], strides = [1, 1]} : vector<2x512xf32> to vector<2x128xf32>
    %498 = math.tanh %497 : vector<2x128xf32>
    %499 = arith.mulf %495, %431 : vector<2x128xf32>
    %500 = arith.mulf %494, %498 : vector<2x128xf32>
    %501 = arith.addf %499, %500 : vector<2x128xf32>
    %502 = math.tanh %501 : vector<2x128xf32>
    %503 = arith.mulf %496, %502 : vector<2x128xf32>
    %504 = arith.truncf %503 : vector<2x128xf32> to vector<2x128xbf16>
    %cst_96 = arith.constant dense<0.000000e+00> : vector<2x128xf32>
    %505 = tpu.matmul %504, %5, %cst_96 {dimension_numbers = #tpu.dot_dimension_numbers<[1], [0], [0], [1], [0, 0, 1, 1], [], []>} : vector<2x128xbf16>, vector<128x128xbf16>, vector<2x128xf32> -> vector<2x128xf32>
    %506 = arith.addf %505, %14 : vector<2x128xf32>
    %507 = vector.shape_cast %506 : vector<2x128xf32> to vector<2x1x128xf32>
    %c0_97 = arith.constant 0 : index
    %c5 = arith.constant 5 : index
    %c0_98 = arith.constant 0 : index
    %508 = vector.load %arg13[%c0_97, %c5, %c0_98] : memref<2x8x128xf32, #tpu.memory_space<vmem>>, vector<2x1x128xf32>
    tpu.vector_store %arg13[%c0_97, %c5, %c0_98], %507 {strides = array<i32>} : memref<2x8x128xf32, #tpu.memory_space<vmem>>, vector<2x1x128xf32>,
    %509 = arith.truncf %459 : vector<2x128xf32> to vector<2x128xbf16>
    %cst_99 = arith.constant dense<0.000000e+00> : vector<2x512xf32>
    %510 = tpu.matmul %509, %1, %cst_99 {dimension_numbers = #tpu.dot_dimension_numbers<[1], [0], [0], [1], [0, 0, 1, 1], [], []>} : vector<2x128xbf16>, vector<128x512xbf16>, vector<2x512xf32> -> vector<2x512xf32>
    %511 = arith.truncf %481 : vector<2x128xf32> to vector<2x128xbf16>
    %cst_100 = arith.constant dense<0.000000e+00> : vector<2x512xf32>
    %512 = tpu.matmul %511, %2, %cst_100 {dimension_numbers = #tpu.dot_dimension_numbers<[1], [0], [0], [1], [0, 0, 1, 1], [], []>} : vector<2x128xbf16>, vector<128x512xbf16>, vector<2x512xf32> -> vector<2x512xf32>
    %513 = arith.addf %510, %512 : vector<2x512xf32>
    %514 = arith.addf %513, %8 : vector<2x512xf32>
    %515 = vector.extract_strided_slice %514 {offsets = [0, 0], sizes = [2, 384], strides = [1, 1]} : vector<2x512xf32> to vector<2x384xf32>
    %516 = arith.negf %515 : vector<2x384xf32>
    %517 = math.exp %516 : vector<2x384xf32>
    %cst_101 = arith.constant 1.000000e+00 : f32
    %518 = vector.broadcast %cst_101 : f32 to vector<2x384xf32>
    %519 = arith.addf %518, %517 : vector<2x384xf32>
    %520 = arith.divf %518, %519 : vector<2x384xf32>
    %521 = vector.extract_strided_slice %520 {offsets = [0, 0], sizes = [2, 128], strides = [1, 1]} : vector<2x384xf32> to vector<2x128xf32>
    %522 = vector.extract_strided_slice %520 {offsets = [0, 128], sizes = [2, 128], strides = [1, 1]} : vector<2x384xf32> to vector<2x128xf32>
    %523 = vector.extract_strided_slice %520 {offsets = [0, 256], sizes = [2, 128], strides = [1, 1]} : vector<2x384xf32> to vector<2x128xf32>
    %524 = vector.extract_strided_slice %514 {offsets = [0, 384], sizes = [2, 128], strides = [1, 1]} : vector<2x512xf32> to vector<2x128xf32>
    %525 = math.tanh %524 : vector<2x128xf32>
    %526 = arith.mulf %522, %479 : vector<2x128xf32>
    %527 = arith.mulf %521, %525 : vector<2x128xf32>
    %528 = arith.addf %526, %527 : vector<2x128xf32>
    %529 = math.tanh %528 : vector<2x128xf32>
    %530 = arith.mulf %523, %529 : vector<2x128xf32>
    %531 = arith.truncf %481 : vector<2x128xf32> to vector<2x128xbf16>
    %cst_102 = arith.constant dense<0.000000e+00> : vector<2x512xf32>
    %532 = tpu.matmul %531, %3, %cst_102 {dimension_numbers = #tpu.dot_dimension_numbers<[1], [0], [0], [1], [0, 0, 1, 1], [], []>} : vector<2x128xbf16>, vector<128x512xbf16>, vector<2x512xf32> -> vector<2x512xf32>
    %533 = arith.truncf %503 : vector<2x128xf32> to vector<2x128xbf16>
    %cst_103 = arith.constant dense<0.000000e+00> : vector<2x512xf32>
    %534 = tpu.matmul %533, %4, %cst_103 {dimension_numbers = #tpu.dot_dimension_numbers<[1], [0], [0], [1], [0, 0, 1, 1], [], []>} : vector<2x128xbf16>, vector<128x512xbf16>, vector<2x512xf32> -> vector<2x512xf32>
    %535 = arith.addf %532, %534 : vector<2x512xf32>
    %536 = arith.addf %535, %11 : vector<2x512xf32>
    %537 = vector.extract_strided_slice %536 {offsets = [0, 0], sizes = [2, 384], strides = [1, 1]} : vector<2x512xf32> to vector<2x384xf32>
    %538 = arith.negf %537 : vector<2x384xf32>
    %539 = math.exp %538 : vector<2x384xf32>
    %cst_104 = arith.constant 1.000000e+00 : f32
    %540 = vector.broadcast %cst_104 : f32 to vector<2x384xf32>
    %541 = arith.addf %540, %539 : vector<2x384xf32>
    %542 = arith.divf %540, %541 : vector<2x384xf32>
    %543 = vector.extract_strided_slice %542 {offsets = [0, 0], sizes = [2, 128], strides = [1, 1]} : vector<2x384xf32> to vector<2x128xf32>
    %544 = vector.extract_strided_slice %542 {offsets = [0, 128], sizes = [2, 128], strides = [1, 1]} : vector<2x384xf32> to vector<2x128xf32>
    %545 = vector.extract_strided_slice %542 {offsets = [0, 256], sizes = [2, 128], strides = [1, 1]} : vector<2x384xf32> to vector<2x128xf32>
    %546 = vector.extract_strided_slice %536 {offsets = [0, 384], sizes = [2, 128], strides = [1, 1]} : vector<2x512xf32> to vector<2x128xf32>
    %547 = math.tanh %546 : vector<2x128xf32>
    %548 = arith.mulf %544, %501 : vector<2x128xf32>
    %549 = arith.mulf %543, %547 : vector<2x128xf32>
    %550 = arith.addf %548, %549 : vector<2x128xf32>
    %551 = math.tanh %550 : vector<2x128xf32>
    %552 = arith.mulf %545, %551 : vector<2x128xf32>
    %553 = arith.truncf %552 : vector<2x128xf32> to vector<2x128xbf16>
    %cst_105 = arith.constant dense<0.000000e+00> : vector<2x128xf32>
    %554 = tpu.matmul %553, %5, %cst_105 {dimension_numbers = #tpu.dot_dimension_numbers<[1], [0], [0], [1], [0, 0, 1, 1], [], []>} : vector<2x128xbf16>, vector<128x128xbf16>, vector<2x128xf32> -> vector<2x128xf32>
    %555 = arith.addf %554, %14 : vector<2x128xf32>
    %556 = vector.shape_cast %555 : vector<2x128xf32> to vector<2x1x128xf32>
    %c0_106 = arith.constant 0 : index
    %c6 = arith.constant 6 : index
    %c0_107 = arith.constant 0 : index
    %557 = vector.load %arg13[%c0_106, %c6, %c0_107] : memref<2x8x128xf32, #tpu.memory_space<vmem>>, vector<2x1x128xf32>
    tpu.vector_store %arg13[%c0_106, %c6, %c0_107], %556 {strides = array<i32>} : memref<2x8x128xf32, #tpu.memory_space<vmem>>, vector<2x1x128xf32>,
    %558 = arith.truncf %530 : vector<2x128xf32> to vector<2x128xbf16>
    %cst_108 = arith.constant dense<0.000000e+00> : vector<2x512xf32>
    %559 = tpu.matmul %558, %3, %cst_108 {dimension_numbers = #tpu.dot_dimension_numbers<[1], [0], [0], [1], [0, 0, 1, 1], [], []>} : vector<2x128xbf16>, vector<128x512xbf16>, vector<2x512xf32> -> vector<2x512xf32>
    %560 = arith.truncf %552 : vector<2x128xf32> to vector<2x128xbf16>
    %cst_109 = arith.constant dense<0.000000e+00> : vector<2x512xf32>
    %561 = tpu.matmul %560, %4, %cst_109 {dimension_numbers = #tpu.dot_dimension_numbers<[1], [0], [0], [1], [0, 0, 1, 1], [], []>} : vector<2x128xbf16>, vector<128x512xbf16>, vector<2x512xf32> -> vector<2x512xf32>
    %562 = arith.addf %559, %561 : vector<2x512xf32>
    %563 = arith.addf %562, %11 : vector<2x512xf32>
    %564 = vector.extract_strided_slice %563 {offsets = [0, 0], sizes = [2, 384], strides = [1, 1]} : vector<2x512xf32> to vector<2x384xf32>
    %565 = arith.negf %564 : vector<2x384xf32>
    %566 = math.exp %565 : vector<2x384xf32>
    %cst_110 = arith.constant 1.000000e+00 : f32
    %567 = vector.broadcast %cst_110 : f32 to vector<2x384xf32>
    %568 = arith.addf %567, %566 : vector<2x384xf32>
    %569 = arith.divf %567, %568 : vector<2x384xf32>
    %570 = vector.extract_strided_slice %569 {offsets = [0, 0], sizes = [2, 128], strides = [1, 1]} : vector<2x384xf32> to vector<2x128xf32>
    %571 = vector.extract_strided_slice %569 {offsets = [0, 128], sizes = [2, 128], strides = [1, 1]} : vector<2x384xf32> to vector<2x128xf32>
    %572 = vector.extract_strided_slice %569 {offsets = [0, 256], sizes = [2, 128], strides = [1, 1]} : vector<2x384xf32> to vector<2x128xf32>
    %573 = vector.extract_strided_slice %563 {offsets = [0, 384], sizes = [2, 128], strides = [1, 1]} : vector<2x512xf32> to vector<2x128xf32>
    %574 = math.tanh %573 : vector<2x128xf32>
    %575 = arith.mulf %571, %550 : vector<2x128xf32>
    %576 = arith.mulf %570, %574 : vector<2x128xf32>
    %577 = arith.addf %575, %576 : vector<2x128xf32>
    %578 = math.tanh %577 : vector<2x128xf32>
    %579 = arith.mulf %572, %578 : vector<2x128xf32>
    %580 = arith.truncf %579 : vector<2x128xf32> to vector<2x128xbf16>
    %cst_111 = arith.constant dense<0.000000e+00> : vector<2x128xf32>
    %581 = tpu.matmul %580, %5, %cst_111 {dimension_numbers = #tpu.dot_dimension_numbers<[1], [0], [0], [1], [0, 0, 1, 1], [], []>} : vector<2x128xbf16>, vector<128x128xbf16>, vector<2x128xf32> -> vector<2x128xf32>
    %582 = arith.addf %581, %14 : vector<2x128xf32>
    %583 = vector.shape_cast %582 : vector<2x128xf32> to vector<2x1x128xf32>
    %c0_112 = arith.constant 0 : index
    %c7 = arith.constant 7 : index
    %c0_113 = arith.constant 0 : index
    %584 = vector.load %arg13[%c0_112, %c7, %c0_113] : memref<2x8x128xf32, #tpu.memory_space<vmem>>, vector<2x1x128xf32>
    tpu.vector_store %arg13[%c0_112, %c7, %c0_113], %583 {strides = array<i32>} : memref<2x8x128xf32, #tpu.memory_space<vmem>>, vector<2x1x128xf32>,
    return
  }
  func.func @transform_0(%arg0: i32) -> (i32, i32, i32) {
    %c0_i32 = arith.constant 0 : i32
    %c0_i32_0 = arith.constant 0 : i32
    %c0_i32_1 = arith.constant 0 : i32
    return %arg0, %c0_i32, %c0_i32_0 : i32, i32, i32
  }
  func.func @transform_1(%arg0: i32) -> (i32, i32) {
    %c0_i32 = arith.constant 0 : i32
    %c0_i32_0 = arith.constant 0 : i32
    %c0_i32_1 = arith.constant 0 : i32
    return %c0_i32, %c0_i32_0 : i32, i32
  }
  func.func @transform_2(%arg0: i32) -> (i32, i32) {
    %c0_i32 = arith.constant 0 : i32
    %c0_i32_0 = arith.constant 0 : i32
    %c0_i32_1 = arith.constant 0 : i32
    return %c0_i32, %c0_i32_0 : i32, i32
  }
  func.func @transform_3(%arg0: i32) -> (i32, i32) {
    %c0_i32 = arith.constant 0 : i32
    %c0_i32_0 = arith.constant 0 : i32
    %c0_i32_1 = arith.constant 0 : i32
    return %c0_i32, %c0_i32_0 : i32, i32
  }
  func.func @transform_4(%arg0: i32) -> (i32, i32) {
    %c0_i32 = arith.constant 0 : i32
    %c0_i32_0 = arith.constant 0 : i32
    %c0_i32_1 = arith.constant 0 : i32
    return %c0_i32, %c0_i32_0 : i32, i32
  }
  func.func @transform_5(%arg0: i32) -> (i32, i32) {
    %c0_i32 = arith.constant 0 : i32
    %c0_i32_0 = arith.constant 0 : i32
    %c0_i32_1 = arith.constant 0 : i32
    return %c0_i32, %c0_i32_0 : i32, i32
  }
  func.func @transform_6(%arg0: i32) -> (i32, i32) {
    %c0_i32 = arith.constant 0 : i32
    %c0_i32_0 = arith.constant 0 : i32
    %c0_i32_1 = arith.constant 0 : i32
    return %c0_i32, %c0_i32_0 : i32, i32
  }
  func.func @transform_7(%arg0: i32) -> (i32, i32) {
    %c0_i32 = arith.constant 0 : i32
    %c0_i32_0 = arith.constant 0 : i32
    %c0_i32_1 = arith.constant 0 : i32
    return %c0_i32, %c0_i32_0 : i32, i32
  }
  func.func @transform_8(%arg0: i32) -> (i32, i32) {
    %c0_i32 = arith.constant 0 : i32
    %c0_i32_0 = arith.constant 0 : i32
    %c0_i32_1 = arith.constant 0 : i32
    return %c0_i32, %c0_i32_0 : i32, i32
  }
  func.func @transform_9(%arg0: i32) -> (i32, i32) {
    %c0_i32 = arith.constant 0 : i32
    %c0_i32_0 = arith.constant 0 : i32
    %c0_i32_1 = arith.constant 0 : i32
    return %c0_i32, %c0_i32_0 : i32, i32
  }
  func.func @transform_10(%arg0: i32) -> (i32, i32) {
    %c0_i32 = arith.constant 0 : i32
    %c0_i32_0 = arith.constant 0 : i32
    %c0_i32_1 = arith.constant 0 : i32
    return %c0_i32, %c0_i32_0 : i32, i32
  }
  func.func @transform_11(%arg0: i32) -> (i32, i32) {
    %c0_i32 = arith.constant 0 : i32
    %c0_i32_0 = arith.constant 0 : i32
    %c0_i32_1 = arith.constant 0 : i32
    return %c0_i32, %c0_i32_0 : i32, i32
  }
  func.func @transform_12(%arg0: i32) -> (i32, i32, i32) {
    %c0_i32 = arith.constant 0 : i32
    %c0_i32_0 = arith.constant 0 : i32
    %c0_i32_1 = arith.constant 0 : i32
    return %arg0, %c0_i32, %c0_i32_0 : i32, i32, i32
  }
}

</mosaic_0001>

<llo_original>
// kernel: text_model_forward.1
$region0: #{text_model_forward.1}
  #allocation0 [shape = 'u32[]', space=smem, size = 0x4, offset = 0x4, fixed_abs, tag = 'smem constant byte address 0x4 - core index']
  #allocation1 [shape = 'u32[144,128]{1,0:T(1,128)}', space=vmem, size = 0x12000, scoped, tag = 'internal scratch']
  %s0 = inlined_call_operand.vmem [shape: f32[2,8,128], index: 0, kind: input, shape index: {}]
  %s1 = inlined_call_operand.vmem [shape: bf16[128,512], index: 1, kind: input, shape index: {}]
  %s2 = inlined_call_operand.vmem [shape: bf16[128,512], index: 2, kind: input, shape index: {}]
  %s3 = inlined_call_operand.vmem [shape: f32[1,512], index: 3, kind: input, shape index: {}]
  %s4 = inlined_call_operand.vmem [shape: bf16[128,512], index: 4, kind: input, shape index: {}]
  %s5 = inlined_call_operand.vmem [shape: bf16[128,512], index: 5, kind: input, shape index: {}]
  %s6 = inlined_call_operand.vmem [shape: f32[1,512], index: 6, kind: input, shape index: {}]
  %s7 = inlined_call_operand.vmem [shape: bf16[128,512], index: 7, kind: input, shape index: {}]
  %s8 = inlined_call_operand.vmem [shape: bf16[128,512], index: 8, kind: input, shape index: {}]
  %s9 = inlined_call_operand.vmem [shape: f32[1,512], index: 9, kind: input, shape index: {}]
  %s10 = inlined_call_operand.vmem [shape: bf16[128,128], index: 10, kind: input, shape index: {}]
  %s11 = inlined_call_operand.vmem [shape: f32[1,128], index: 11, kind: input, shape index: {}]
  %s12 = inlined_call_operand.hbm [shape: f32[2,8,128], index: 12, kind: output, shape index: {}]
  %s13 = sld [smem:[#allocation0]]
  $region58: #{text_model_forward.1} parent=0
    _
  %s15 = ssub.s32 1, %s13
  %s16 = scalar_select 0, %s15, %s13
  $region1: #{text_model_forward.1} parent=0
    #allocation2 [shape = 'u8[8192]{0}', space=vmem, size = 0x2000, scoped, tag = 'output window, operand 0, single buffered']
    #allocation3 [shape = 's32[1]{0}', space=sflag, size = 0x4, scoped, tag = 'scoped memory for text_model_forward.1']
    %17 = vsyncpa [#allocation3], 0
    // Predicated region
    $region2: #{text_model_forward.1} parent=1 // pred_check
      _
    $region3: #{text_model_forward.1} parent=1 // pred_check_branch
      %19 = sbr.rel (0) target = $region5
    $region4: #{text_model_forward.1} parent=1 // pred_region
      _
    $region5: #{text_model_forward.1} parent=1 // pred_fallthru
      _
    // Predicated region
    $region6: #{text_model_forward.1} parent=1 // pred_check
      _
    $region7: #{text_model_forward.1} parent=1 // pred_check_branch
      %21 = sbr.rel (0) target = $region9
    $region8: #{text_model_forward.1} parent=1 // pred_region
      _
    $region9: #{text_model_forward.1} parent=1 // pred_fallthru
      _
    // Predicated region
    $region10: #{text_model_forward.1} parent=1 // pred_check
      _
    $region11: #{text_model_forward.1} parent=1 // pred_check_branch
      %23 = sbr.rel (0) target = $region13
    $region12: #{text_model_forward.1} parent=1 // pred_region
      _
    $region13: #{text_model_forward.1} parent=1 // pred_fallthru
      _
    // Predicated region
    $region14: #{text_model_forward.1} parent=1 // pred_check
      _
    $region15: #{text_model_forward.1} parent=1 // pred_check_branch
      %25 = sbr.rel (0) target = $region17
    $region16: #{text_model_forward.1} parent=1 // pred_region
      _
    $region17: #{text_model_forward.1} parent=1 // pred_fallthru
      _
    // Predicated region
    $region18: #{text_model_forward.1} parent=1 // pred_check
      _
    $region19: #{text_model_forward.1} parent=1 // pred_check_branch
      %27 = sbr.rel (0) target = $region21
    $region20: #{text_model_forward.1} parent=1 // pred_region
      _
    $region21: #{text_model_forward.1} parent=1 // pred_fallthru
      _
    // Predicated region
    $region22: #{text_model_forward.1} parent=1 // pred_check
      _
    $region23: #{text_model_forward.1} parent=1 // pred_check_branch
      %29 = sbr.rel (0) target = $region25
    $region24: #{text_model_forward.1} parent=1 // pred_region
      _
    $region25: #{text_model_forward.1} parent=1 // pred_fallthru
      _
    // Predicated region
    $region26: #{text_model_forward.1} parent=1 // pred_check
      _
    $region27: #{text_model_forward.1} parent=1 // pred_check_branch
      %31 = sbr.rel (0) target = $region29
    $region28: #{text_model_forward.1} parent=1 // pred_region
      _
    $region29: #{text_model_forward.1} parent=1 // pred_fallthru
      _
    // Predicated region
    $region30: #{text_model_forward.1} parent=1 // pred_check
      _
    $region31: #{text_model_forward.1} parent=1 // pred_check_branch
      %33 = sbr.rel (0) target = $region33
    $region32: #{text_model_forward.1} parent=1 // pred_region
      _
    $region33: #{text_model_forward.1} parent=1 // pred_fallthru
      _
    // Predicated region
    $region34: #{text_model_forward.1} parent=1 // pred_check
      _
    $region35: #{text_model_forward.1} parent=1 // pred_check_branch
      %35 = sbr.rel (0) target = $region37
    $region36: #{text_model_forward.1} parent=1 // pred_region
      _
    $region37: #{text_model_forward.1} parent=1 // pred_fallthru
      _
    // Predicated region
    $region38: #{text_model_forward.1} parent=1 // pred_check
      _
    $region39: #{text_model_forward.1} parent=1 // pred_check_branch
      %37 = sbr.rel (0) target = $region41
    $region40: #{text_model_forward.1} parent=1 // pred_region
      _
    $region41: #{text_model_forward.1} parent=1 // pred_fallthru
      _
    // Predicated region
    $region42: #{text_model_forward.1} parent=1 // pred_check
      _
    $region43: #{text_model_forward.1} parent=1 // pred_check_branch
      %39 = sbr.rel (0) target = $region45
    $region44: #{text_model_forward.1} parent=1 // pred_region
      _
    $region45: #{text_model_forward.1} parent=1 // pred_fallthru
      _
    // Predicated region
    $region46: #{text_model_forward.1} parent=1 // pred_check
      _
    $region47: #{text_model_forward.1} parent=1 // pred_check_branch
      %41 = sbr.rel (0) target = $region49
    $region48: #{text_model_forward.1} parent=1 // pred_region
      _
    $region49: #{text_model_forward.1} parent=1 // pred_fallthru
      _
    %v43 = vld [vmem:[%s2] sm:$0xff]
    %v44 = vld [vmem:[%s2 + $0x8] sm:$0xff]
    %v45 = vld [vmem:[%s2 + $0x10] sm:$0xff]
    %v46 = vld [vmem:[%s2 + $0x18] sm:$0xff]
    %v47 = vld [vmem:[%s2 + $0x20] sm:$0xff]
    %v48 = vld [vmem:[%s2 + $0x28] sm:$0xff]
    %v49 = vld [vmem:[%s2 + $0x30] sm:$0xff]
    %v50 = vld [vmem:[%s2 + $0x38] sm:$0xff]
    %v51 = vld [vmem:[%s2 + $0x40] sm:$0xff]
    %v52 = vld [vmem:[%s2 + $0x48] sm:$0xff]
    %v53 = vld [vmem:[%s2 + $0x50] sm:$0xff]
    %v54 = vld [vmem:[%s2 + $0x58] sm:$0xff]
    %v55 = vld [vmem:[%s2 + $0x60] sm:$0xff]
    %v56 = vld [vmem:[%s2 + $0x68] sm:$0xff]
    %v57 = vld [vmem:[%s2 + $0x70] sm:$0xff]
    %v58 = vld [vmem:[%s2 + $0x78] sm:$0xff]
    %v59 = vld [vmem:[%s2 + $0x80] sm:$0xff]
    %v60 = vld [vmem:[%s2 + $0x88] sm:$0xff]
    %v61 = vld [vmem:[%s2 + $0x90] sm:$0xff]
    %v62 = vld [vmem:[%s2 + $0x98] sm:$0xff]
    %v63 = vld [vmem:[%s2 + $0xa0] sm:$0xff]
    %v64 = vld [vmem:[%s2 + $0xa8] sm:$0xff]
    %v65 = vld [vmem:[%s2 + $0xb0] sm:$0xff]
    %v66 = vld [vmem:[%s2 + $0xb8] sm:$0xff]
    %v67 = vld [vmem:[%s2 + $0xc0] sm:$0xff]
    %v68 = vld [vmem:[%s2 + $0xc8] sm:$0xff]
    %v69 = vld [vmem:[%s2 + $0xd0] sm:$0xff]
    %v70 = vld [vmem:[%s2 + $0xd8] sm:$0xff]
    %v71 = vld [vmem:[%s2 + $0xe0] sm:$0xff]
    %v72 = vld [vmem:[%s2 + $0xe8] sm:$0xff]
    %v73 = vld [vmem:[%s2 + $0xf0] sm:$0xff]
    %v74 = vld [vmem:[%s2 + $0xf8] sm:$0xff]
    %v75 = vld [vmem:[%s4] sm:$0xff]
    %v76 = vld [vmem:[%s4 + $0x8] sm:$0xff]
    %v77 = vld [vmem:[%s4 + $0x10] sm:$0xff]
    %v78 = vld [vmem:[%s4 + $0x18] sm:$0xff]
    %v79 = vld [vmem:[%s4 + $0x20] sm:$0xff]
    %v80 = vld [vmem:[%s4 + $0x28] sm:$0xff]
    %v81 = vld [vmem:[%s4 + $0x30] sm:$0xff]
    %v82 = vld [vmem:[%s4 + $0x38] sm:$0xff]
    %v83 = vld [vmem:[%s4 + $0x40] sm:$0xff]
    %v84 = vld [vmem:[%s4 + $0x48] sm:$0xff]
    %v85 = vld [vmem:[%s4 + $0x50] sm:$0xff]
    %v86 = vld [vmem:[%s4 + $0x58] sm:$0xff]
    %v87 = vld [vmem:[%s4 + $0x60] sm:$0xff]
    %v88 = vld [vmem:[%s4 + $0x68] sm:$0xff]
    %v89 = vld [vmem:[%s4 + $0x70] sm:$0xff]
    %v90 = vld [vmem:[%s4 + $0x78] sm:$0xff]
    %v91 = vld [vmem:[%s4 + $0x80] sm:$0xff]
    %v92 = vld [vmem:[%s4 + $0x88] sm:$0xff]
    %v93 = vld [vmem:[%s4 + $0x90] sm:$0xff]
    %v94 = vld [vmem:[%s4 + $0x98] sm:$0xff]
    %v95 = vld [vmem:[%s4 + $0xa0] sm:$0xff]
    %v96 = vld [vmem:[%s4 + $0xa8] sm:$0xff]
    %v97 = vld [vmem:[%s4 + $0xb0] sm:$0xff]
    %v98 = vld [vmem:[%s4 + $0xb8] sm:$0xff]
    %v99 = vld [vmem:[%s4 + $0xc0] sm:$0xff]
    %v100 = vld [vmem:[%s4 + $0xc8] sm:$0xff]
    %v101 = vld [vmem:[%s4 + $0xd0] sm:$0xff]
    %v102 = vld [vmem:[%s4 + $0xd8] sm:$0xff]
    %v103 = vld [vmem:[%s4 + $0xe0] sm:$0xff]
    %v104 = vld [vmem:[%s4 + $0xe8] sm:$0xff]
    %v105 = vld [vmem:[%s4 + $0xf0] sm:$0xff]
    %v106 = vld [vmem:[%s4 + $0xf8] sm:$0xff]
    %v107 = vld [vmem:[%s5] sm:$0xff]
    %v108 = vld [vmem:[%s5 + $0x8] sm:$0xff]
    %v109 = vld [vmem:[%s5 + $0x10] sm:$0xff]
    %v110 = vld [vmem:[%s5 + $0x18] sm:$0xff]
    %v111 = vld [vmem:[%s5 + $0x20] sm:$0xff]
    %v112 = vld [vmem:[%s5 + $0x28] sm:$0xff]
    %v113 = vld [vmem:[%s5 + $0x30] sm:$0xff]
    %v114 = vld [vmem:[%s5 + $0x38] sm:$0xff]
    %v115 = vld [vmem:[%s5 + $0x40] sm:$0xff]
    %v116 = vld [vmem:[%s5 + $0x48] sm:$0xff]
    %v117 = vld [vmem:[%s5 + $0x50] sm:$0xff]
    %v118 = vld [vmem:[%s5 + $0x58] sm:$0xff]
    %v119 = vld [vmem:[%s5 + $0x60] sm:$0xff]
    %v120 = vld [vmem:[%s5 + $0x68] sm:$0xff]
    %v121 = vld [vmem:[%s5 + $0x70] sm:$0xff]
    %v122 = vld [vmem:[%s5 + $0x78] sm:$0xff]
    %v123 = vld [vmem:[%s5 + $0x80] sm:$0xff]
    %v124 = vld [vmem:[%s5 + $0x88] sm:$0xff]
    %v125 = vld [vmem:[%s5 + $0x90] sm:$0xff]
    %v126 = vld [vmem:[%s5 + $0x98] sm:$0xff]
    %v127 = vld [vmem:[%s5 + $0xa0] sm:$0xff]
    %v128 = vld [vmem:[%s5 + $0xa8] sm:$0xff]
    %v129 = vld [vmem:[%s5 + $0xb0] sm:$0xff]
    %v130 = vld [vmem:[%s5 + $0xb8] sm:$0xff]
    %v131 = vld [vmem:[%s5 + $0xc0] sm:$0xff]
    %v132 = vld [vmem:[%s5 + $0xc8] sm:$0xff]
    %v133 = vld [vmem:[%s5 + $0xd0] sm:$0xff]
    %v134 = vld [vmem:[%s5 + $0xd8] sm:$0xff]
    %v135 = vld [vmem:[%s5 + $0xe0] sm:$0xff]
    %v136 = vld [vmem:[%s5 + $0xe8] sm:$0xff]
    %v137 = vld [vmem:[%s5 + $0xf0] sm:$0xff]
    %v138 = vld [vmem:[%s5 + $0xf8] sm:$0xff]
    %v139 = vld [vmem:[%s7] sm:$0xff]
    %v140 = vld [vmem:[%s7 + $0x8] sm:$0xff]
    %v141 = vld [vmem:[%s7 + $0x10] sm:$0xff]
    %v142 = vld [vmem:[%s7 + $0x18] sm:$0xff]
    %v143 = vld [vmem:[%s7 + $0x20] sm:$0xff]
    %v144 = vld [vmem:[%s7 + $0x28] sm:$0xff]
    %v145 = vld [vmem:[%s7 + $0x30] sm:$0xff]
    %v146 = vld [vmem:[%s7 + $0x38] sm:$0xff]
    %v147 = vld [vmem:[%s7 + $0x40] sm:$0xff]
    %v148 = vld [vmem:[%s7 + $0x48] sm:$0xff]
    %v149 = vld [vmem:[%s7 + $0x50] sm:$0xff]
    %v150 = vld [vmem:[%s7 + $0x58] sm:$0xff]
    %v151 = vld [vmem:[%s7 + $0x60] sm:$0xff]
    %v152 = vld [vmem:[%s7 + $0x68] sm:$0xff]
    %v153 = vld [vmem:[%s7 + $0x70] sm:$0xff]
    %v154 = vld [vmem:[%s7 + $0x78] sm:$0xff]
    %v155 = vld [vmem:[%s7 + $0x80] sm:$0xff]
    %v156 = vld [vmem:[%s7 + $0x88] sm:$0xff]
    %v157 = vld [vmem:[%s7 + $0x90] sm:$0xff]
    %v158 = vld [vmem:[%s7 + $0x98] sm:$0xff]
    %v159 = vld [vmem:[%s7 + $0xa0] sm:$0xff]
    %v160 = vld [vmem:[%s7 + $0xa8] sm:$0xff]
    %v161 = vld [vmem:[%s7 + $0xb0] sm:$0xff]
    %v162 = vld [vmem:[%s7 + $0xb8] sm:$0xff]
    %v163 = vld [vmem:[%s7 + $0xc0] sm:$0xff]
    %v164 = vld [vmem:[%s7 + $0xc8] sm:$0xff]
    %v165 = vld [vmem:[%s7 + $0xd0] sm:$0xff]
    %v166 = vld [vmem:[%s7 + $0xd8] sm:$0xff]
    %v167 = vld [vmem:[%s7 + $0xe0] sm:$0xff]
    %v168 = vld [vmem:[%s7 + $0xe8] sm:$0xff]
    %v169 = vld [vmem:[%s7 + $0xf0] sm:$0xff]
    %v170 = vld [vmem:[%s7 + $0xf8] sm:$0xff]
    %v171 = vld [vmem:[%s8] sm:$0xff]
    %v172 = vld [vmem:[%s8 + $0x8] sm:$0xff]
    %v173 = vld [vmem:[%s8 + $0x10] sm:$0xff]
    %v174 = vld [vmem:[%s8 + $0x18] sm:$0xff]
    %v175 = vld [vmem:[%s8 + $0x20] sm:$0xff]
    %v176 = vld [vmem:[%s8 + $0x28] sm:$0xff]
    %v177 = vld [vmem:[%s8 + $0x30] sm:$0xff]
    %v178 = vld [vmem:[%s8 + $0x38] sm:$0xff]
    %v179 = vld [vmem:[%s8 + $0x40] sm:$0xff]
    %v180 = vld [vmem:[%s8 + $0x48] sm:$0xff]
    %v181 = vld [vmem:[%s8 + $0x50] sm:$0xff]
    %v182 = vld [vmem:[%s8 + $0x58] sm:$0xff]
    %v183 = vld [vmem:[%s8 + $0x60] sm:$0xff]
    %v184 = vld [vmem:[%s8 + $0x68] sm:$0xff]
    %v185 = vld [vmem:[%s8 + $0x70] sm:$0xff]
    %v186 = vld [vmem:[%s8 + $0x78] sm:$0xff]
    %v187 = vld [vmem:[%s8 + $0x80] sm:$0xff]
    %v188 = vld [vmem:[%s8 + $0x88] sm:$0xff]
    %v189 = vld [vmem:[%s8 + $0x90] sm:$0xff]
    %v190 = vld [vmem:[%s8 + $0x98] sm:$0xff]
    %v191 = vld [vmem:[%s8 + $0xa0] sm:$0xff]
    %v192 = vld [vmem:[%s8 + $0xa8] sm:$0xff]
    %v193 = vld [vmem:[%s8 + $0xb0] sm:$0xff]
    %v194 = vld [vmem:[%s8 + $0xb8] sm:$0xff]
    %v195 = vld [vmem:[%s8 + $0xc0] sm:$0xff]
    %v196 = vld [vmem:[%s8 + $0xc8] sm:$0xff]
    %v197 = vld [vmem:[%s8 + $0xd0] sm:$0xff]
    %v198 = vld [vmem:[%s8 + $0xd8] sm:$0xff]
    %v199 = vld [vmem:[%s8 + $0xe0] sm:$0xff]
    %v200 = vld [vmem:[%s8 + $0xe8] sm:$0xff]
    %v201 = vld [vmem:[%s8 + $0xf0] sm:$0xff]
    %v202 = vld [vmem:[%s8 + $0xf8] sm:$0xff]
    %v203 = vld [vmem:[%s10] sm:$0xf]
    %v204 = vld [vmem:[%s10 + $0x4] sm:$0xf]
    %v205 = vld [vmem:[%s10 + $0x8] sm:$0xf]
    %v206 = vld [vmem:[%s10 + $0xc] sm:$0xf]
    %v207 = vld [vmem:[%s10 + $0x10] sm:$0xf]
    %v208 = vld [vmem:[%s10 + $0x14] sm:$0xf]
    %v209 = vld [vmem:[%s10 + $0x18] sm:$0xf]
    %v210 = vld [vmem:[%s10 + $0x1c] sm:$0xf]
    %v211 = vld [vmem:[%s10 + $0x20] sm:$0xf]
    %v212 = vld [vmem:[%s10 + $0x24] sm:$0xf]
    %v213 = vld [vmem:[%s10 + $0x28] sm:$0xf]
    %v214 = vld [vmem:[%s10 + $0x2c] sm:$0xf]
    %v215 = vld [vmem:[%s10 + $0x30] sm:$0xf]
    %v216 = vld [vmem:[%s10 + $0x34] sm:$0xf]
    %v217 = vld [vmem:[%s10 + $0x38] sm:$0xf]
    %v218 = vld [vmem:[%s10 + $0x3c] sm:$0xf]
    %v219 = vld [vmem:[%s6] sm:$0xf]
    %v221 = vlaneseq
    %v222 = vshrl.u32 %v221, 7
    %v223 = vsub.s32 0, %v222
    %v224 = vrot.slane %v219, %v223
    %v225 = vlaneseq
    %v226 = vshrl.u32 %v225, 7
    %v227 = vsub.s32 1, %v226
    %v228 = vrot.slane %v219, %v227
    %v229 = vlaneseq
    %v230 = vshrl.u32 %v229, 7
    %v231 = vsub.s32 2, %v230
    %v232 = vrot.slane %v219, %v231
    %v233 = vlaneseq
    %v234 = vshrl.u32 %v233, 7
    %v235 = vsub.s32 3, %v234
    %v236 = vrot.slane %v219, %v235
    %v241 = vld [vmem:[%s9] sm:$0xf]
    %v243 = vlaneseq
    %v244 = vshrl.u32 %v243, 7
    %v245 = vsub.s32 0, %v244
    %v246 = vrot.slane %v241, %v245
    %v247 = vlaneseq
    %v248 = vshrl.u32 %v247, 7
    %v249 = vsub.s32 1, %v248
    %v250 = vrot.slane %v241, %v249
    %v251 = vlaneseq
    %v252 = vshrl.u32 %v251, 7
    %v253 = vsub.s32 2, %v252
    %v254 = vrot.slane %v241, %v253
    %v255 = vlaneseq
    %v256 = vshrl.u32 %v255, 7
    %v257 = vsub.s32 3, %v256
    %v258 = vrot.slane %v241, %v257
    %v263 = vld [vmem:[%s11] sm:$0x1]
    %v265 = vlaneseq
    %v266 = vshrl.u32 %v265, 7
    %v267 = vsub.s32 0, %v266
    %v268 = vrot.slane %v263, %v267
    %v270 = vld [vmem:[%s0] sm:$0xff]
    %v271 = vld [vmem:[%s0 + $0x8] sm:$0xff]
    %v272 = vpack.c.bf16 %v271, %v270
    %v273 = vld [vmem:[%s1] sm:$0xff]
    %v274 = vld [vmem:[%s1 + $0x8] sm:$0xff]
    %v275 = vld [vmem:[%s1 + $0x10] sm:$0xff]
    %v276 = vld [vmem:[%s1 + $0x18] sm:$0xff]
    %v277 = vld [vmem:[%s1 + $0x20] sm:$0xff]
    %v278 = vld [vmem:[%s1 + $0x28] sm:$0xff]
    %v279 = vld [vmem:[%s1 + $0x30] sm:$0xff]
    %v280 = vld [vmem:[%s1 + $0x38] sm:$0xff]
    %v281 = vld [vmem:[%s1 + $0x40] sm:$0xff]
    %v282 = vld [vmem:[%s1 + $0x48] sm:$0xff]
    %v283 = vld [vmem:[%s1 + $0x50] sm:$0xff]
    %v284 = vld [vmem:[%s1 + $0x58] sm:$0xff]
    %v285 = vld [vmem:[%s1 + $0x60] sm:$0xff]
    %v286 = vld [vmem:[%s1 + $0x68] sm:$0xff]
    %v287 = vld [vmem:[%s1 + $0x70] sm:$0xff]
    %v288 = vld [vmem:[%s1 + $0x78] sm:$0xff]
    %v289 = vld [vmem:[%s1 + $0x80] sm:$0xff]
    %v290 = vld [vmem:[%s1 + $0x88] sm:$0xff]
    %v291 = vld [vmem:[%s1 + $0x90] sm:$0xff]
    %v292 = vld [vmem:[%s1 + $0x98] sm:$0xff]
    %v293 = vld [vmem:[%s1 + $0xa0] sm:$0xff]
    %v294 = vld [vmem:[%s1 + $0xa8] sm:$0xff]
    %v295 = vld [vmem:[%s1 + $0xb0] sm:$0xff]
    %v296 = vld [vmem:[%s1 + $0xb8] sm:$0xff]
    %v297 = vld [vmem:[%s1 + $0xc0] sm:$0xff]
    %v298 = vld [vmem:[%s1 + $0xc8] sm:$0xff]
    %v299 = vld [vmem:[%s1 + $0xd0] sm:$0xff]
    %v300 = vld [vmem:[%s1 + $0xd8] sm:$0xff]
    %v301 = vld [vmem:[%s1 + $0xe0] sm:$0xff]
    %v302 = vld [vmem:[%s1 + $0xe8] sm:$0xff]
    %v303 = vld [vmem:[%s1 + $0xf0] sm:$0xff]
    %v304 = vld [vmem:[%s1 + $0xf8] sm:$0xff]
    %v305 = vld [vmem:[%s3] sm:$0xf]
    %v307 = vlaneseq
    %v308 = vshrl.u32 %v307, 7
    %v309 = vsub.s32 0, %v308
    %v310 = vrot.slane %v305, %v309
    %v311 = vlaneseq
    %v312 = vshrl.u32 %v311, 7
    %v313 = vsub.s32 1, %v312
    %v314 = vrot.slane %v305, %v313
    %v315 = vlaneseq
    %v316 = vshrl.u32 %v315, 7
    %v317 = vsub.s32 2, %v316
    %v318 = vrot.slane %v305, %v317
    %v319 = vlaneseq
    %v320 = vshrl.u32 %v319, 7
    %v321 = vsub.s32 3, %v320
    %v322 = vrot.slane %v305, %v321
    %v359 = vunpack.c.l.b16 %v273
    %v360 = vunpack.c.h.b16 %v273
    %v361 = vunpack.c.l.b16 %v274
    %v362 = vunpack.c.h.b16 %v274
    %v363 = vunpack.c.l.b16 %v275
    %v364 = vunpack.c.h.b16 %v275
    %v365 = vunpack.c.l.b16 %v276
    %v366 = vunpack.c.h.b16 %v276
    %v367 = vunpack.c.l.b16 %v277
    %v368 = vunpack.c.h.b16 %v277
    %v369 = vunpack.c.l.b16 %v278
    %v370 = vunpack.c.h.b16 %v278
    %v371 = vunpack.c.l.b16 %v279
    %v372 = vunpack.c.h.b16 %v279
    %v373 = vunpack.c.l.b16 %v280
    %v374 = vunpack.c.h.b16 %v280
    %v375 = vunpack.c.l.b16 %v281
    %v376 = vunpack.c.h.b16 %v281
    %v377 = vunpack.c.l.b16 %v282
    %v378 = vunpack.c.h.b16 %v282
    %v379 = vunpack.c.l.b16 %v283
    %v380 = vunpack.c.h.b16 %v283
    %v381 = vunpack.c.l.b16 %v284
    %v382 = vunpack.c.h.b16 %v284
    %v383 = vunpack.c.l.b16 %v285
    %v384 = vunpack.c.h.b16 %v285
    %v385 = vunpack.c.l.b16 %v286
    %v386 = vunpack.c.h.b16 %v286
    %v387 = vunpack.c.l.b16 %v287
    %v388 = vunpack.c.h.b16 %v287
    %v389 = vunpack.c.l.b16 %v288
    %v390 = vunpack.c.h.b16 %v288
    %v391 = vunpack.c.l.b16 %v289
    %v392 = vunpack.c.h.b16 %v289
    %v393 = vunpack.c.l.b16 %v290
    %v394 = vunpack.c.h.b16 %v290
    %v395 = vunpack.c.l.b16 %v291
    %v396 = vunpack.c.h.b16 %v291
    %v397 = vunpack.c.l.b16 %v292
    %v398 = vunpack.c.h.b16 %v292
    %v399 = vunpack.c.l.b16 %v293
    %v400 = vunpack.c.h.b16 %v293
    %v401 = vunpack.c.l.b16 %v294
    %v402 = vunpack.c.h.b16 %v294
    %v403 = vunpack.c.l.b16 %v295
    %v404 = vunpack.c.h.b16 %v295
    %v405 = vunpack.c.l.b16 %v296
    %v406 = vunpack.c.h.b16 %v296
    %v407 = vunpack.c.l.b16 %v297
    %v408 = vunpack.c.h.b16 %v297
    %v409 = vunpack.c.l.b16 %v298
    %v410 = vunpack.c.h.b16 %v298
    %v411 = vunpack.c.l.b16 %v299
    %v412 = vunpack.c.h.b16 %v299
    %v413 = vunpack.c.l.b16 %v300
    %v414 = vunpack.c.h.b16 %v300
    %v415 = vunpack.c.l.b16 %v301
    %v416 = vunpack.c.h.b16 %v301
    %v417 = vunpack.c.l.b16 %v302
    %v418 = vunpack.c.h.b16 %v302
    %v419 = vunpack.c.l.b16 %v303
    %v420 = vunpack.c.h.b16 %v303
    %v421 = vunpack.c.l.b16 %v304
    %v422 = vunpack.c.h.b16 %v304
    %v423 = vpack.c.b16 %v363, %v359
    %v424 = vpack.c.b16 %v364, %v360
    %v425 = vpack.c.b16 %v365, %v361
    %v426 = vpack.c.b16 %v366, %v362
    %v427 = vpack.c.b16 %v371, %v367
    %v428 = vpack.c.b16 %v372, %v368
    %v429 = vpack.c.b16 %v373, %v369
    %v430 = vpack.c.b16 %v374, %v370
    %v431 = vpack.c.b16 %v379, %v375
    %v432 = vpack.c.b16 %v380, %v376
    %v433 = vpack.c.b16 %v381, %v377
    %v434 = vpack.c.b16 %v382, %v378
    %v435 = vpack.c.b16 %v387, %v383
    %v436 = vpack.c.b16 %v388, %v384
    %v437 = vpack.c.b16 %v389, %v385
    %v438 = vpack.c.b16 %v390, %v386
    %v439 = vpack.c.b16 %v395, %v391
    %v440 = vpack.c.b16 %v396, %v392
    %v441 = vpack.c.b16 %v397, %v393
    %v442 = vpack.c.b16 %v398, %v394
    %v443 = vpack.c.b16 %v403, %v399
    %v444 = vpack.c.b16 %v404, %v400
    %v445 = vpack.c.b16 %v405, %v401
    %v446 = vpack.c.b16 %v406, %v402
    %v447 = vpack.c.b16 %v411, %v407
    %v448 = vpack.c.b16 %v412, %v408
    %v449 = vpack.c.b16 %v413, %v409
    %v450 = vpack.c.b16 %v414, %v410
    %v451 = vpack.c.b16 %v419, %v415
    %v452 = vpack.c.b16 %v420, %v416
    %v453 = vpack.c.b16 %v421, %v417
    %v454 = vpack.c.b16 %v422, %v418
    %487 = vmatprep.subr.bf16.mxu0 %v424
    %488 = vmatpush1.bf16.msra.mxu0 %v423
    %489 = vmatprep.subr.bf16.mxu0 %v428
    %490 = vmatpush1.bf16.msra.mxu0 %v427
    %491 = vmatprep.subr.bf16.mxu0 %v432
    %492 = vmatpush1.bf16.msra.mxu0 %v431
    %493 = vmatprep.subr.bf16.mxu0 %v436
    %494 = vmatpush1.bf16.msra.mxu0 %v435
    %495 = vmatprep.subr.bf16.mxu0 %v440
    %496 = vmatpush1.bf16.msra.mxu0 %v439
    %497 = vmatprep.subr.bf16.mxu0 %v444
    %498 = vmatpush1.bf16.msra.mxu0 %v443
    %499 = vmatprep.subr.bf16.mxu0 %v448
    %500 = vmatpush1.bf16.msra.mxu0 %v447
    %501 = vmatprep.subr.bf16.mxu0 %v452
    %502 = vmatpush1.bf16.msra.mxu0 %v451
    %503 = vmatprep.subr.bf16.mxu0 0
    %504 = vmatpush1.bf16.msra.mxu0 0
    %505 = vmatprep.subr.bf16.mxu0 0
    %506 = vmatpush1.bf16.msra.mxu0 0
    %507 = vmatprep.subr.bf16.mxu0 0
    %508 = vmatpush1.bf16.msra.mxu0 0
    %509 = vmatprep.subr.bf16.mxu0 0
    %510 = vmatpush1.bf16.msra.mxu0 0
    %511 = vmatprep.subr.bf16.mxu0 0
    %512 = vmatpush1.bf16.msra.mxu0 0
    %513 = vmatprep.subr.bf16.mxu0 0
    %514 = vmatpush1.bf16.msra.mxu0 0
    %515 = vmatprep.subr.bf16.mxu0 0
    %516 = vmatpush1.bf16.msra.mxu0 0
    %517 = vmatprep.subr.bf16.mxu0 0
    %518 = vmatpush1.bf16.msra.mxu0 0
    %519 = vmatprep.mubr.bf16.mxu0 0
    %520 = vmatmul.mubr.bf16.gmra.mrb[0].mxu0 %v272
    %v521 = vpop.f32.mrb[0].mxu0
    %v522 = vadd.f32 %v310, %v521
    %v523 = vpop.f32.mrb[0].mxu0
    %v524 = vadd.f32 %v314, %v523
    %v525 = vpop.f32.mrb[0].mxu0
    %v526 = vadd.f32 %v310, %v525
    %v527 = vpop.f32.mrb[0].mxu0
    %v528 = vadd.f32 %v314, %v527
    %529 = vdwg.mxu0
    %530 = vmatprep.subr.bf16.mxu0 %v426
    %531 = vmatpush1.bf16.msra.mxu0 %v425
    %532 = vmatprep.subr.bf16.mxu0 %v430
    %533 = vmatpush1.bf16.msra.mxu0 %v429
    %534 = vmatprep.subr.bf16.mxu0 %v434
    %535 = vmatpush1.bf16.msra.mxu0 %v433
    %536 = vmatprep.subr.bf16.mxu0 %v438
    %537 = vmatpush1.bf16.msra.mxu0 %v437
    %538 = vmatprep.subr.bf16.mxu0 %v442
    %539 = vmatpush1.bf16.msra.mxu0 %v441
    %540 = vmatprep.subr.bf16.mxu0 %v446
    %541 = vmatpush1.bf16.msra.mxu0 %v445
    %542 = vmatprep.subr.bf16.mxu0 %v450
    %543 = vmatpush1.bf16.msra.mxu0 %v449
    %544 = vmatprep.subr.bf16.mxu0 %v454
    %545 = vmatpush1.bf16.msra.mxu0 %v453
    %546 = vmatprep.subr.bf16.mxu0 0
    %547 = vmatpush1.bf16.msra.mxu0 0
    %548 = vmatprep.subr.bf16.mxu0 0
    %549 = vmatpush1.bf16.msra.mxu0 0
    %550 = vmatprep.subr.bf16.mxu0 0
    %551 = vmatpush1.bf16.msra.mxu0 0
    %552 = vmatprep.subr.bf16.mxu0 0
    %553 = vmatpush1.bf16.msra.mxu0 0
    %554 = vmatprep.subr.bf16.mxu0 0
    %555 = vmatpush1.bf16.msra.mxu0 0
    %556 = vmatprep.subr.bf16.mxu0 0
    %557 = vmatpush1.bf16.msra.mxu0 0
    %558 = vmatprep.subr.bf16.mxu0 0
    %559 = vmatpush1.bf16.msra.mxu0 0
    %560 = vmatprep.subr.bf16.mxu0 0
    %561 = vmatpush1.bf16.msra.mxu0 0
    %562 = vmatprep.mubr.bf16.mxu0 0
    %563 = vmatmul.mubr.bf16.gmra.mrb[0].mxu0 %v272
    %v564 = vpop.f32.mrb[0].mxu0
    %v565 = vadd.f32 %v318, %v564
    %v566 = vpop.f32.mrb[0].mxu0
    %v567 = vadd.f32 %v322, %v566
    %v568 = vpop.f32.mrb[0].mxu0
    %v569 = vadd.f32 %v318, %v568
    %v570 = vpop.f32.mrb[0].mxu0
    %v571 = vadd.f32 %v322, %v570
    %572 = vdwg.mxu0
    %v605 = vunpack.c.l.b16 %v43
    %v606 = vunpack.c.h.b16 %v43
    %v607 = vunpack.c.l.b16 %v44
    %v608 = vunpack.c.h.b16 %v44
    %v609 = vunpack.c.l.b16 %v45
    %v610 = vunpack.c.h.b16 %v45
    %v611 = vunpack.c.l.b16 %v46
    %v612 = vunpack.c.h.b16 %v46
    %v613 = vunpack.c.l.b16 %v47
    %v614 = vunpack.c.h.b16 %v47
    %v615 = vunpack.c.l.b16 %v48
    %v616 = vunpack.c.h.b16 %v48
    %v617 = vunpack.c.l.b16 %v49
    %v618 = vunpack.c.h.b16 %v49
    %v619 = vunpack.c.l.b16 %v50
    %v620 = vunpack.c.h.b16 %v50
    %v621 = vunpack.c.l.b16 %v51
    %v622 = vunpack.c.h.b16 %v51
    %v623 = vunpack.c.l.b16 %v52
    %v624 = vunpack.c.h.b16 %v52
    %v625 = vunpack.c.l.b16 %v53
    %v626 = vunpack.c.h.b16 %v53
    %v627 = vunpack.c.l.b16 %v54
    %v628 = vunpack.c.h.b16 %v54
    %v629 = vunpack.c.l.b16 %v55
    %v630 = vunpack.c.h.b16 %v55
    %v631 = vunpack.c.l.b16 %v56
    %v632 = vunpack.c.h.b16 %v56
    %v633 = vunpack.c.l.b16 %v57
    %v634 = vunpack.c.h.b16 %v57
    %v635 = vunpack.c.l.b16 %v58
    %v636 = vunpack.c.h.b16 %v58
    %v637 = vunpack.c.l.b16 %v59
    %v638 = vunpack.c.h.b16 %v59
    %v639 = vunpack.c.l.b16 %v60
    %v640 = vunpack.c.h.b16 %v60
    %v641 = vunpack.c.l.b16 %v61
    %v642 = vunpack.c.h.b16 %v61
    %v643 = vunpack.c.l.b16 %v62
    %v644 = vunpack.c.h.b16 %v62
    %v645 = vunpack.c.l.b16 %v63
    %v646 = vunpack.c.h.b16 %v63
    %v647 = vunpack.c.l.b16 %v64
    %v648 = vunpack.c.h.b16 %v64
    %v649 = vunpack.c.l.b16 %v65
    %v650 = vunpack.c.h.b16 %v65
    %v651 = vunpack.c.l.b16 %v66
    %v652 = vunpack.c.h.b16 %v66
    %v653 = vunpack.c.l.b16 %v67
    %v654 = vunpack.c.h.b16 %v67
    %v655 = vunpack.c.l.b16 %v68
    %v656 = vunpack.c.h.b16 %v68
    %v657 = vunpack.c.l.b16 %v69
    %v658 = vunpack.c.h.b16 %v69
    %v659 = vunpack.c.l.b16 %v70
    %v660 = vunpack.c.h.b16 %v70
    %v661 = vunpack.c.l.b16 %v71
    %v662 = vunpack.c.h.b16 %v71
    %v663 = vunpack.c.l.b16 %v72
    %v664 = vunpack.c.h.b16 %v72
    %v665 = vunpack.c.l.b16 %v73
    %v666 = vunpack.c.h.b16 %v73
    %v667 = vunpack.c.l.b16 %v74
    %v668 = vunpack.c.h.b16 %v74
    %v669 = vpack.c.b16 %v609, %v605
    %v670 = vpack.c.b16 %v610, %v606
    %v671 = vpack.c.b16 %v611, %v607
    %v672 = vpack.c.b16 %v612, %v608
    %v673 = vpack.c.b16 %v617, %v613
    %v674 = vpack.c.b16 %v618, %v614
    %v675 = vpack.c.b16 %v619, %v615
    %v676 = vpack.c.b16 %v620, %v616
    %v677 = vpack.c.b16 %v625, %v621
    %v678 = vpack.c.b16 %v626, %v622
    %v679 = vpack.c.b16 %v627, %v623
    %v680 = vpack.c.b16 %v628, %v624
    %v681 = vpack.c.b16 %v633, %v629
    %v682 = vpack.c.b16 %v634, %v630
    %v683 = vpack.c.b16 %v635, %v631
    %v684 = vpack.c.b16 %v636, %v632
    %v685 = vpack.c.b16 %v641, %v637
    %v686 = vpack.c.b16 %v642, %v638
    %v687 = vpack.c.b16 %v643, %v639
    %v688 = vpack.c.b16 %v644, %v640
    %v689 = vpack.c.b16 %v649, %v645
    %v690 = vpack.c.b16 %v650, %v646
    %v691 = vpack.c.b16 %v651, %v647
    %v692 = vpack.c.b16 %v652, %v648
    %v693 = vpack.c.b16 %v657, %v653
    %v694 = vpack.c.b16 %v658, %v654
    %v695 = vpack.c.b16 %v659, %v655
    %v696 = vpack.c.b16 %v660, %v656
    %v697 = vpack.c.b16 %v665, %v661
    %v698 = vpack.c.b16 %v666, %v662
    %v699 = vpack.c.b16 %v667, %v663
    %v700 = vpack.c.b16 %v668, %v664
    %733 = vmatprep.subr.bf16.mxu0 %v670
    %734 = vmatpush1.bf16.msra.mxu0 %v669
    %735 = vmatprep.subr.bf16.mxu0 %v674
    %736 = vmatpush1.bf16.msra.mxu0 %v673
    %737 = vmatprep.subr.bf16.mxu0 %v678
    %738 = vmatpush1.bf16.msra.mxu0 %v677
    %739 = vmatprep.subr.bf16.mxu0 %v682
    %740 = vmatpush1.bf16.msra.mxu0 %v681
    %741 = vmatprep.subr.bf16.mxu0 %v686
    %742 = vmatpush1.bf16.msra.mxu0 %v685
    %743 = vmatprep.subr.bf16.mxu0 %v690
    %744 = vmatpush1.bf16.msra.mxu0 %v689
    %745 = vmatprep.subr.bf16.mxu0 %v694
    %746 = vmatpush1.bf16.msra.mxu0 %v693
    %747 = vmatprep.subr.bf16.mxu0 %v698
    %748 = vmatpush1.bf16.msra.mxu0 %v697
    %749 = vmatprep.subr.bf16.mxu0 0
    %750 = vmatpush1.bf16.msra.mxu0 0
    %751 = vmatprep.subr.bf16.mxu0 0
    %752 = vmatpush1.bf16.msra.mxu0 0
    %753 = vmatprep.subr.bf16.mxu0 0
    %754 = vmatpush1.bf16.msra.mxu0 0
    %755 = vmatprep.subr.bf16.mxu0 0
    %756 = vmatpush1.bf16.msra.mxu0 0
    %757 = vmatprep.subr.bf16.mxu0 0
    %758 = vmatpush1.bf16.msra.mxu0 0
    %759 = vmatprep.subr.bf16.mxu0 0
    %760 = vmatpush1.bf16.msra.mxu0 0
    %761 = vmatprep.subr.bf16.mxu0 0
    %762 = vmatpush1.bf16.msra.mxu0 0
    %763 = vmatprep.subr.bf16.mxu0 0
    %764 = vmatpush1.bf16.msra.mxu0 0
    %765 = vmatprep.mubr.bf16.mxu0 0
    %766 = vmatmul.mubr.bf16.gmra.mrb[0].mxu0 0
    %v767 = vpop.f32.mrb[0].mxu0
    %v768 = vadd.f32 0.0, %v767
    %v769 = vpop.f32.mrb[0].mxu0
    %v770 = vadd.f32 0.0, %v769
    %v771 = vpop.f32.mrb[0].mxu0
    %v772 = vpop.f32.mrb[0].mxu0
    %773 = vdwg.mxu0
    %774 = vmatprep.subr.bf16.mxu0 %v672
    %775 = vmatpush1.bf16.msra.mxu0 %v671
    %776 = vmatprep.subr.bf16.mxu0 %v676
    %777 = vmatpush1.bf16.msra.mxu0 %v675
    %778 = vmatprep.subr.bf16.mxu0 %v680
    %779 = vmatpush1.bf16.msra.mxu0 %v679
    %780 = vmatprep.subr.bf16.mxu0 %v684
    %781 = vmatpush1.bf16.msra.mxu0 %v683
    %782 = vmatprep.subr.bf16.mxu0 %v688
    %783 = vmatpush1.bf16.msra.mxu0 %v687
    %784 = vmatprep.subr.bf16.mxu0 %v692
    %785 = vmatpush1.bf16.msra.mxu0 %v691
    %786 = vmatprep.subr.bf16.mxu0 %v696
    %787 = vmatpush1.bf16.msra.mxu0 %v695
    %788 = vmatprep.subr.bf16.mxu0 %v700
    %789 = vmatpush1.bf16.msra.mxu0 %v699
    %790 = vmatprep.subr.bf16.mxu0 0
    %791 = vmatpush1.bf16.msra.mxu0 0
    %792 = vmatprep.subr.bf16.mxu0 0
    %793 = vmatpush1.bf16.msra.mxu0 0
    %794 = vmatprep.subr.bf16.mxu0 0
    %795 = vmatpush1.bf16.msra.mxu0 0
    %796 = vmatprep.subr.bf16.mxu0 0
    %797 = vmatpush1.bf16.msra.mxu0 0
    %798 = vmatprep.subr.bf16.mxu0 0
    %799 = vmatpush1.bf16.msra.mxu0 0
    %800 = vmatprep.subr.bf16.mxu0 0
    %801 = vmatpush1.bf16.msra.mxu0 0
    %802 = vmatprep.subr.bf16.mxu0 0
    %803 = vmatpush1.bf16.msra.mxu0 0
    %804 = vmatprep.subr.bf16.mxu0 0
    %805 = vmatpush1.bf16.msra.mxu0 0
    %806 = vmatprep.mubr.bf16.mxu0 0
    %807 = vmatmul.mubr.bf16.gmra.mrb[0].mxu0 0
    %v808 = vpop.f32.mrb[0].mxu0
    %v809 = vadd.f32 0.0, %v808
    %v810 = vpop.f32.mrb[0].mxu0
    %v811 = vadd.f32 0.0, %v810
    %v812 = vpop.f32.mrb[0].mxu0
    %v813 = vpop.f32.mrb[0].mxu0
    %814 = vdwg.mxu0
    %v819 = vrot.slane %v768, 1
    %v820 = vrot.slane %v770, 1
    %v821 = vrot.slane %v809, 1
    %v822 = vrot.slane %v811, 1
    %v831 = vadd.f32 %v522, %v768
    %v832 = vadd.f32 %v524, %v770
    %v833 = vadd.f32 %v565, %v809
    %v834 = vadd.f32 %v567, %v811
    %v835 = vadd.f32 %v526, %v819
    %v836 = vadd.f32 %v528, %v820
    %v837 = vadd.f32 %v569, %v821
    %v838 = vadd.f32 %v571, %v822
    %v839 = vxor.u32 %v831, 2147483648
    %v840 = vxor.u32 %v832, 2147483648
    %v841 = vxor.u32 %v833, 2147483648
    %v842 = vxor.u32 %v835, 2147483648
    %v843 = vxor.u32 %v836, 2147483648
    %v844 = vxor.u32 %v837, 2147483648
    %v845 = vmul.f32 %v839, 1.442695
    %v846 = vpow.pop %v845
    %v847 = vmul.f32 %v840, 1.442695
    %v848 = vpow.pop %v847
    %v849 = vmul.f32 %v841, 1.442695
    %v850 = vpow.pop %v849
    %v851 = vmul.f32 %v842, 1.442695
    %v852 = vpow.pop %v851
    %v853 = vmul.f32 %v843, 1.442695
    %v854 = vpow.pop %v853
    %v855 = vmul.f32 %v844, 1.442695
    %v856 = vpow.pop %v855
    %v857 = vadd.f32 %v846, 1.0
    %v858 = vadd.f32 %v848, 1.0
    %v859 = vadd.f32 %v850, 1.0
    %v860 = vadd.f32 %v852, 1.0
    %v861 = vadd.f32 %v854, 1.0
    %v862 = vadd.f32 %v856, 1.0
    %v863 = vrcp.pop %v857
    %v864 = vmul.f32 1.0, %v863
    %v865 = vrcp.pop %v858
    %v866 = vmul.f32 1.0, %v865
    %v867 = vrcp.pop %v859
    %v868 = vmul.f32 1.0, %v867
    %v869 = vrcp.pop %v860
    %v870 = vmul.f32 1.0, %v869
    %v871 = vrcp.pop %v861
    %v872 = vmul.f32 1.0, %v871
    %v873 = vrcp.pop %v862
    %v874 = vmul.f32 1.0, %v873
    %v875 = vtanh.pop %v834
    %v876 = vtanh.pop %v838
    %v877 = vmul.f32 %v866, 0.0
    %v878 = vmul.f32 %v872, 0.0
    %v879 = vmul.f32 %v864, %v875
    %v880 = vmul.f32 %v870, %v876
    %v881 = vadd.f32 %v877, %v879
    %v882 = vadd.f32 %v878, %v880
    %v883 = vtanh.pop %v881
    %v884 = vtanh.pop %v882
    %v885 = vmul.f32 %v868, %v883
    %v886 = vmul.f32 %v874, %v884
    %v887 = vpack.c.bf16 %v885, %v885
    %v888 = vpack.c.bf16 %v886, %v886
    %v891 = vunpack.c.l.b16 %v887
    %v892 = vunpack.c.l.b16 %v888
    %v893 = vrot.slane %v892, 7
    %vm894 = vcmask 1041409
    %v895 = vsel %vm894, %v893, %v891
    %v896 = vpack.c.b16 %v895, %v895
    %898 = vmatprep.subr.bf16.mxu0 %v670
    %899 = vmatpush1.bf16.msra.mxu0 %v669
    %900 = vmatprep.subr.bf16.mxu0 %v674
    %901 = vmatpush1.bf16.msra.mxu0 %v673
    %902 = vmatprep.subr.bf16.mxu0 %v678
    %903 = vmatpush1.bf16.msra.mxu0 %v677
    %904 = vmatprep.subr.bf16.mxu0 %v682
    %905 = vmatpush1.bf16.msra.mxu0 %v681
    %906 = vmatprep.subr.bf16.mxu0 %v686
    %907 = vmatpush1.bf16.msra.mxu0 %v685
    %908 = vmatprep.subr.bf16.mxu0 %v690
    %909 = vmatpush1.bf16.msra.mxu0 %v689
    %910 = vmatprep.subr.bf16.mxu0 %v694
    %911 = vmatpush1.bf16.msra.mxu0 %v693
    %912 = vmatprep.subr.bf16.mxu0 %v698
    %913 = vmatpush1.bf16.msra.mxu0 %v697
    %914 = vmatprep.subr.bf16.mxu0 0
    %915 = vmatpush1.bf16.msra.mxu0 0
    %916 = vmatprep.subr.bf16.mxu0 0
    %917 = vmatpush1.bf16.msra.mxu0 0
    %918 = vmatprep.subr.bf16.mxu0 0
    %919 = vmatpush1.bf16.msra.mxu0 0
    %920 = vmatprep.subr.bf16.mxu0 0
    %921 = vmatpush1.bf16.msra.mxu0 0
    %922 = vmatprep.subr.bf16.mxu0 0
    %923 = vmatpush1.bf16.msra.mxu0 0
    %924 = vmatprep.subr.bf16.mxu0 0
    %925 = vmatpush1.bf16.msra.mxu0 0
    %926 = vmatprep.subr.bf16.mxu0 0
    %927 = vmatpush1.bf16.msra.mxu0 0
    %928 = vmatprep.subr.bf16.mxu0 0
    %929 = vmatpush1.bf16.msra.mxu0 0
    %930 = vmatprep.mubr.bf16.mxu0 0
    %931 = vmatmul.mubr.bf16.gmra.mrb[0].mxu0 %v896
    %v932 = vpop.f32.mrb[0].mxu0
    %v933 = vadd.f32 0.0, %v932
    %v934 = vpop.f32.mrb[0].mxu0
    %v935 = vadd.f32 0.0, %v934
    %v936 = vpop.f32.mrb[0].mxu0
    %v937 = vpop.f32.mrb[0].mxu0
    %938 = vdwg.mxu0
    %939 = vmatprep.subr.bf16.mxu0 %v672
    %940 = vmatpush1.bf16.msra.mxu0 %v671
    %941 = vmatprep.subr.bf16.mxu0 %v676
    %942 = vmatpush1.bf16.msra.mxu0 %v675
    %943 = vmatprep.subr.bf16.mxu0 %v680
    %944 = vmatpush1.bf16.msra.mxu0 %v679
    %945 = vmatprep.subr.bf16.mxu0 %v684
    %946 = vmatpush1.bf16.msra.mxu0 %v683
    %947 = vmatprep.subr.bf16.mxu0 %v688
    %948 = vmatpush1.bf16.msra.mxu0 %v687
    %949 = vmatprep.subr.bf16.mxu0 %v692
    %950 = vmatpush1.bf16.msra.mxu0 %v691
    %951 = vmatprep.subr.bf16.mxu0 %v696
    %952 = vmatpush1.bf16.msra.mxu0 %v695
    %953 = vmatprep.subr.bf16.mxu0 %v700
    %954 = vmatpush1.bf16.msra.mxu0 %v699
    %955 = vmatprep.subr.bf16.mxu0 0
    %956 = vmatpush1.bf16.msra.mxu0 0
    %957 = vmatprep.subr.bf16.mxu0 0
    %958 = vmatpush1.bf16.msra.mxu0 0
    %959 = vmatprep.subr.bf16.mxu0 0
    %960 = vmatpush1.bf16.msra.mxu0 0
    %961 = vmatprep.subr.bf16.mxu0 0
    %962 = vmatpush1.bf16.msra.mxu0 0
    %963 = vmatprep.subr.bf16.mxu0 0
    %964 = vmatpush1.bf16.msra.mxu0 0
    %965 = vmatprep.subr.bf16.mxu0 0
    %966 = vmatpush1.bf16.msra.mxu0 0
    %967 = vmatprep.subr.bf16.mxu0 0
    %968 = vmatpush1.bf16.msra.mxu0 0
    %969 = vmatprep.subr.bf16.mxu0 0
    %970 = vmatpush1.bf16.msra.mxu0 0
    %971 = vmatprep.mubr.bf16.mxu0 0
    %972 = vmatmul.mubr.bf16.gmra.mrb[0].mxu0 %v896
    %v973 = vpop.f32.mrb[0].mxu0
    %v974 = vadd.f32 0.0, %v973
    %v975 = vpop.f32.mrb[0].mxu0
    %v976 = vadd.f32 0.0, %v975
    %v977 = vpop.f32.mrb[0].mxu0
    %v978 = vpop.f32.mrb[0].mxu0
    %979 = vdwg.mxu0
    %v984 = vrot.slane %v933, 7
    %v985 = vrot.slane %v935, 7
    %v986 = vrot.slane %v974, 7
    %v987 = vrot.slane %v976, 7
    %v996 = vadd.f32 %v522, %v984
    %v997 = vadd.f32 %v524, %v985
    %v998 = vadd.f32 %v565, %v986
    %v999 = vadd.f32 %v567, %v987
    %v1000 = vadd.f32 %v526, %v933
    %v1001 = vadd.f32 %v528, %v935
    %v1002 = vadd.f32 %v569, %v974
    %v1003 = vadd.f32 %v571, %v976
    %v1004 = vxor.u32 %v996, 2147483648
    %v1005 = vxor.u32 %v997, 2147483648
    %v1006 = vxor.u32 %v998, 2147483648
    %v1007 = vxor.u32 %v1000, 2147483648
    %v1008 = vxor.u32 %v1001, 2147483648
    %v1009 = vxor.u32 %v1002, 2147483648
    %v1010 = vmul.f32 %v1004, 1.442695
    %v1011 = vpow.pop %v1010
    %v1012 = vmul.f32 %v1005, 1.442695
    %v1013 = vpow.pop %v1012
    %v1014 = vmul.f32 %v1006, 1.442695
    %v1015 = vpow.pop %v1014
    %v1016 = vmul.f32 %v1007, 1.442695
    %v1017 = vpow.pop %v1016
    %v1018 = vmul.f32 %v1008, 1.442695
    %v1019 = vpow.pop %v1018
    %v1020 = vmul.f32 %v1009, 1.442695
    %v1021 = vpow.pop %v1020
    %v1022 = vadd.f32 %v1011, 1.0
    %v1023 = vadd.f32 %v1013, 1.0
    %v1024 = vadd.f32 %v1015, 1.0
    %v1025 = vadd.f32 %v1017, 1.0
    %v1026 = vadd.f32 %v1019, 1.0
    %v1027 = vadd.f32 %v1021, 1.0
    %v1028 = vrcp.pop %v1022
    %v1029 = vmul.f32 1.0, %v1028
    %v1030 = vrcp.pop %v1023
    %v1031 = vmul.f32 1.0, %v1030
    %v1032 = vrcp.pop %v1024
    %v1033 = vmul.f32 1.0, %v1032
    %v1034 = vrcp.pop %v1025
    %v1035 = vmul.f32 1.0, %v1034
    %v1036 = vrcp.pop %v1026
    %v1037 = vmul.f32 1.0, %v1036
    %v1038 = vrcp.pop %v1027
    %v1039 = vmul.f32 1.0, %v1038
    %v1040 = vtanh.pop %v999
    %v1041 = vtanh.pop %v1003
    %v1044 = vrot.slane %v881, 7
    %v1045 = vrot.slane %v882, 7
    %v1048 = vmul.f32 %v1031, %v1044
    %v1049 = vmul.f32 %v1037, %v1045
    %v1050 = vmul.f32 %v1029, %v1040
    %v1051 = vmul.f32 %v1035, %v1041
    %v1052 = vadd.f32 %v1048, %v1050
    %v1053 = vadd.f32 %v1049, %v1051
    %v1054 = vtanh.pop %v1052
    %v1055 = vtanh.pop %v1053
    %v1056 = vmul.f32 %v1033, %v1054
    %v1057 = vmul.f32 %v1039, %v1055
    %v1090 = vunpack.c.l.b16 %v107
    %v1091 = vunpack.c.h.b16 %v107
    %v1092 = vunpack.c.l.b16 %v108
    %v1093 = vunpack.c.h.b16 %v108
    %v1094 = vunpack.c.l.b16 %v109
    %v1095 = vunpack.c.h.b16 %v109
    %v1096 = vunpack.c.l.b16 %v110
    %v1097 = vunpack.c.h.b16 %v110
    %v1098 = vunpack.c.l.b16 %v111
    %v1099 = vunpack.c.h.b16 %v111
    %v1100 = vunpack.c.l.b16 %v112
    %v1101 = vunpack.c.h.b16 %v112
    %v1102 = vunpack.c.l.b16 %v113
    %v1103 = vunpack.c.h.b16 %v113
    %v1104 = vunpack.c.l.b16 %v114
    %v1105 = vunpack.c.h.b16 %v114
    %v1106 = vunpack.c.l.b16 %v115
    %v1107 = vunpack.c.h.b16 %v115
    %v1108 = vunpack.c.l.b16 %v116
    %v1109 = vunpack.c.h.b16 %v116
    %v1110 = vunpack.c.l.b16 %v117
    %v1111 = vunpack.c.h.b16 %v117
    %v1112 = vunpack.c.l.b16 %v118
    %v1113 = vunpack.c.h.b16 %v118
    %v1114 = vunpack.c.l.b16 %v119
    %v1115 = vunpack.c.h.b16 %v119
    %v1116 = vunpack.c.l.b16 %v120
    %v1117 = vunpack.c.h.b16 %v120
    %v1118 = vunpack.c.l.b16 %v121
    %v1119 = vunpack.c.h.b16 %v121
    %v1120 = vunpack.c.l.b16 %v122
    %v1121 = vunpack.c.h.b16 %v122
    %v1122 = vunpack.c.l.b16 %v123
    %v1123 = vunpack.c.h.b16 %v123
    %v1124 = vunpack.c.l.b16 %v124
    %v1125 = vunpack.c.h.b16 %v124
    %v1126 = vunpack.c.l.b16 %v125
    %v1127 = vunpack.c.h.b16 %v125
    %v1128 = vunpack.c.l.b16 %v126
    %v1129 = vunpack.c.h.b16 %v126
    %v1130 = vunpack.c.l.b16 %v127
    %v1131 = vunpack.c.h.b16 %v127
    %v1132 = vunpack.c.l.b16 %v128
    %v1133 = vunpack.c.h.b16 %v128
    %v1134 = vunpack.c.l.b16 %v129
    %v1135 = vunpack.c.h.b16 %v129
    %v1136 = vunpack.c.l.b16 %v130
    %v1137 = vunpack.c.h.b16 %v130
    %v1138 = vunpack.c.l.b16 %v131
    %v1139 = vunpack.c.h.b16 %v131
    %v1140 = vunpack.c.l.b16 %v132
    %v1141 = vunpack.c.h.b16 %v132
    %v1142 = vunpack.c.l.b16 %v133
    %v1143 = vunpack.c.h.b16 %v133
    %v1144 = vunpack.c.l.b16 %v134
    %v1145 = vunpack.c.h.b16 %v134
    %v1146 = vunpack.c.l.b16 %v135
    %v1147 = vunpack.c.h.b16 %v135
    %v1148 = vunpack.c.l.b16 %v136
    %v1149 = vunpack.c.h.b16 %v136
    %v1150 = vunpack.c.l.b16 %v137
    %v1151 = vunpack.c.h.b16 %v137
    %v1152 = vunpack.c.l.b16 %v138
    %v1153 = vunpack.c.h.b16 %v138
    %v1154 = vpack.c.b16 %v1094, %v1090
    %v1155 = vpack.c.b16 %v1095, %v1091
    %v1156 = vpack.c.b16 %v1096, %v1092
    %v1157 = vpack.c.b16 %v1097, %v1093
    %v1158 = vpack.c.b16 %v1102, %v1098
    %v1159 = vpack.c.b16 %v1103, %v1099
    %v1160 = vpack.c.b16 %v1104, %v1100
    %v1161 = vpack.c.b16 %v1105, %v1101
    %v1162 = vpack.c.b16 %v1110, %v1106
    %v1163 = vpack.c.b16 %v1111, %v1107
    %v1164 = vpack.c.b16 %v1112, %v1108
    %v1165 = vpack.c.b16 %v1113, %v1109
    %v1166 = vpack.c.b16 %v1118, %v1114
    %v1167 = vpack.c.b16 %v1119, %v1115
    %v1168 = vpack.c.b16 %v1120, %v1116
    %v1169 = vpack.c.b16 %v1121, %v1117
    %v1170 = vpack.c.b16 %v1126, %v1122
    %v1171 = vpack.c.b16 %v1127, %v1123
    %v1172 = vpack.c.b16 %v1128, %v1124
    %v1173 = vpack.c.b16 %v1129, %v1125
    %v1174 = vpack.c.b16 %v1134, %v1130
    %v1175 = vpack.c.b16 %v1135, %v1131
    %v1176 = vpack.c.b16 %v1136, %v1132
    %v1177 = vpack.c.b16 %v1137, %v1133
    %v1178 = vpack.c.b16 %v1142, %v1138
    %v1179 = vpack.c.b16 %v1143, %v1139
    %v1180 = vpack.c.b16 %v1144, %v1140
    %v1181 = vpack.c.b16 %v1145, %v1141
    %v1182 = vpack.c.b16 %v1150, %v1146
    %v1183 = vpack.c.b16 %v1151, %v1147
    %v1184 = vpack.c.b16 %v1152, %v1148
    %v1185 = vpack.c.b16 %v1153, %v1149
    %1218 = vmatprep.subr.bf16.mxu0 %v1155
    %1219 = vmatpush1.bf16.msra.mxu0 %v1154
    %1220 = vmatprep.subr.bf16.mxu0 %v1159
    %1221 = vmatpush1.bf16.msra.mxu0 %v1158
    %1222 = vmatprep.subr.bf16.mxu0 %v1163
    %1223 = vmatpush1.bf16.msra.mxu0 %v1162
    %1224 = vmatprep.subr.bf16.mxu0 %v1167
    %1225 = vmatpush1.bf16.msra.mxu0 %v1166
    %1226 = vmatprep.subr.bf16.mxu0 %v1171
    %1227 = vmatpush1.bf16.msra.mxu0 %v1170
    %1228 = vmatprep.subr.bf16.mxu0 %v1175
    %1229 = vmatpush1.bf16.msra.mxu0 %v1174
    %1230 = vmatprep.subr.bf16.mxu0 %v1179
    %1231 = vmatpush1.bf16.msra.mxu0 %v1178
    %1232 = vmatprep.subr.bf16.mxu0 %v1183
    %1233 = vmatpush1.bf16.msra.mxu0 %v1182
    %1234 = vmatprep.subr.bf16.mxu0 0
    %1235 = vmatpush1.bf16.msra.mxu0 0
    %1236 = vmatprep.subr.bf16.mxu0 0
    %1237 = vmatpush1.bf16.msra.mxu0 0
    %1238 = vmatprep.subr.bf16.mxu0 0
    %1239 = vmatpush1.bf16.msra.mxu0 0
    %1240 = vmatprep.subr.bf16.mxu0 0
    %1241 = vmatpush1.bf16.msra.mxu0 0
    %1242 = vmatprep.subr.bf16.mxu0 0
    %1243 = vmatpush1.bf16.msra.mxu0 0
    %1244 = vmatprep.subr.bf16.mxu0 0
    %1245 = vmatpush1.bf16.msra.mxu0 0
    %1246 = vmatprep.subr.bf16.mxu0 0
    %1247 = vmatpush1.bf16.msra.mxu0 0
    %1248 = vmatprep.subr.bf16.mxu0 0
    %1249 = vmatpush1.bf16.msra.mxu0 0
    %1250 = vmatprep.mubr.bf16.mxu0 0
    %1251 = vmatmul.mubr.bf16.gmra.mrb[0].mxu0 0
    %v1252 = vpop.f32.mrb[0].mxu0
    %v1253 = vadd.f32 0.0, %v1252
    %v1254 = vpop.f32.mrb[0].mxu0
    %v1255 = vadd.f32 0.0, %v1254
    %v1256 = vpop.f32.mrb[0].mxu0
    %v1257 = vpop.f32.mrb[0].mxu0
    %1258 = vdwg.mxu0
    %1259 = vmatprep.subr.bf16.mxu0 %v1157
    %1260 = vmatpush1.bf16.msra.mxu0 %v1156
    %1261 = vmatprep.subr.bf16.mxu0 %v1161
    %1262 = vmatpush1.bf16.msra.mxu0 %v1160
    %1263 = vmatprep.subr.bf16.mxu0 %v1165
    %1264 = vmatpush1.bf16.msra.mxu0 %v1164
    %1265 = vmatprep.subr.bf16.mxu0 %v1169
    %1266 = vmatpush1.bf16.msra.mxu0 %v1168
    %1267 = vmatprep.subr.bf16.mxu0 %v1173
    %1268 = vmatpush1.bf16.msra.mxu0 %v1172
    %1269 = vmatprep.subr.bf16.mxu0 %v1177
    %1270 = vmatpush1.bf16.msra.mxu0 %v1176
    %1271 = vmatprep.subr.bf16.mxu0 %v1181
    %1272 = vmatpush1.bf16.msra.mxu0 %v1180
    %1273 = vmatprep.subr.bf16.mxu0 %v1185
    %1274 = vmatpush1.bf16.msra.mxu0 %v1184
    %1275 = vmatprep.subr.bf16.mxu0 0
    %1276 = vmatpush1.bf16.msra.mxu0 0
    %1277 = vmatprep.subr.bf16.mxu0 0
    %1278 = vmatpush1.bf16.msra.mxu0 0
    %1279 = vmatprep.subr.bf16.mxu0 0
    %1280 = vmatpush1.bf16.msra.mxu0 0
    %1281 = vmatprep.subr.bf16.mxu0 0
    %1282 = vmatpush1.bf16.msra.mxu0 0
    %1283 = vmatprep.subr.bf16.mxu0 0
    %1284 = vmatpush1.bf16.msra.mxu0 0
    %1285 = vmatprep.subr.bf16.mxu0 0
    %1286 = vmatpush1.bf16.msra.mxu0 0
    %1287 = vmatprep.subr.bf16.mxu0 0
    %1288 = vmatpush1.bf16.msra.mxu0 0
    %1289 = vmatprep.subr.bf16.mxu0 0
    %1290 = vmatpush1.bf16.msra.mxu0 0
    %1291 = vmatprep.mubr.bf16.mxu0 0
    %1292 = vmatmul.mubr.bf16.gmra.mrb[0].mxu0 0
    %v1293 = vpop.f32.mrb[0].mxu0
    %v1294 = vadd.f32 0.0, %v1293
    %v1295 = vpop.f32.mrb[0].mxu0
    %v1296 = vadd.f32 0.0, %v1295
    %v1297 = vpop.f32.mrb[0].mxu0
    %v1298 = vpop.f32.mrb[0].mxu0
    %1299 = vdwg.mxu0
    %v1332 = vunpack.c.l.b16 %v75
    %v1333 = vunpack.c.h.b16 %v75
    %v1334 = vunpack.c.l.b16 %v76
    %v1335 = vunpack.c.h.b16 %v76
    %v1336 = vunpack.c.l.b16 %v77
    %v1337 = vunpack.c.h.b16 %v77
    %v1338 = vunpack.c.l.b16 %v78
    %v1339 = vunpack.c.h.b16 %v78
    %v1340 = vunpack.c.l.b16 %v79
    %v1341 = vunpack.c.h.b16 %v79
    %v1342 = vunpack.c.l.b16 %v80
    %v1343 = vunpack.c.h.b16 %v80
    %v1344 = vunpack.c.l.b16 %v81
    %v1345 = vunpack.c.h.b16 %v81
    %v1346 = vunpack.c.l.b16 %v82
    %v1347 = vunpack.c.h.b16 %v82
    %v1348 = vunpack.c.l.b16 %v83
    %v1349 = vunpack.c.h.b16 %v83
    %v1350 = vunpack.c.l.b16 %v84
    %v1351 = vunpack.c.h.b16 %v84
    %v1352 = vunpack.c.l.b16 %v85
    %v1353 = vunpack.c.h.b16 %v85
    %v1354 = vunpack.c.l.b16 %v86
    %v1355 = vunpack.c.h.b16 %v86
    %v1356 = vunpack.c.l.b16 %v87
    %v1357 = vunpack.c.h.b16 %v87
    %v1358 = vunpack.c.l.b16 %v88
    %v1359 = vunpack.c.h.b16 %v88
    %v1360 = vunpack.c.l.b16 %v89
    %v1361 = vunpack.c.h.b16 %v89
    %v1362 = vunpack.c.l.b16 %v90
    %v1363 = vunpack.c.h.b16 %v90
    %v1364 = vunpack.c.l.b16 %v91
    %v1365 = vunpack.c.h.b16 %v91
    %v1366 = vunpack.c.l.b16 %v92
    %v1367 = vunpack.c.h.b16 %v92
    %v1368 = vunpack.c.l.b16 %v93
    %v1369 = vunpack.c.h.b16 %v93
    %v1370 = vunpack.c.l.b16 %v94
    %v1371 = vunpack.c.h.b16 %v94
    %v1372 = vunpack.c.l.b16 %v95
    %v1373 = vunpack.c.h.b16 %v95
    %v1374 = vunpack.c.l.b16 %v96
    %v1375 = vunpack.c.h.b16 %v96
    %v1376 = vunpack.c.l.b16 %v97
    %v1377 = vunpack.c.h.b16 %v97
    %v1378 = vunpack.c.l.b16 %v98
    %v1379 = vunpack.c.h.b16 %v98
    %v1380 = vunpack.c.l.b16 %v99
    %v1381 = vunpack.c.h.b16 %v99
    %v1382 = vunpack.c.l.b16 %v100
    %v1383 = vunpack.c.h.b16 %v100
    %v1384 = vunpack.c.l.b16 %v101
    %v1385 = vunpack.c.h.b16 %v101
    %v1386 = vunpack.c.l.b16 %v102
    %v1387 = vunpack.c.h.b16 %v102
    %v1388 = vunpack.c.l.b16 %v103
    %v1389 = vunpack.c.h.b16 %v103
    %v1390 = vunpack.c.l.b16 %v104
    %v1391 = vunpack.c.h.b16 %v104
    %v1392 = vunpack.c.l.b16 %v105
    %v1393 = vunpack.c.h.b16 %v105
    %v1394 = vunpack.c.l.b16 %v106
    %v1395 = vunpack.c.h.b16 %v106
    %v1396 = vpack.c.b16 %v1336, %v1332
    %v1397 = vpack.c.b16 %v1337, %v1333
    %v1398 = vpack.c.b16 %v1338, %v1334
    %v1399 = vpack.c.b16 %v1339, %v1335
    %v1400 = vpack.c.b16 %v1344, %v1340
    %v1401 = vpack.c.b16 %v1345, %v1341
    %v1402 = vpack.c.b16 %v1346, %v1342
    %v1403 = vpack.c.b16 %v1347, %v1343
    %v1404 = vpack.c.b16 %v1352, %v1348
    %v1405 = vpack.c.b16 %v1353, %v1349
    %v1406 = vpack.c.b16 %v1354, %v1350
    %v1407 = vpack.c.b16 %v1355, %v1351
    %v1408 = vpack.c.b16 %v1360, %v1356
    %v1409 = vpack.c.b16 %v1361, %v1357
    %v1410 = vpack.c.b16 %v1362, %v1358
    %v1411 = vpack.c.b16 %v1363, %v1359
    %v1412 = vpack.c.b16 %v1368, %v1364
    %v1413 = vpack.c.b16 %v1369, %v1365
    %v1414 = vpack.c.b16 %v1370, %v1366
    %v1415 = vpack.c.b16 %v1371, %v1367
    %v1416 = vpack.c.b16 %v1376, %v1372
    %v1417 = vpack.c.b16 %v1377, %v1373
    %v1418 = vpack.c.b16 %v1378, %v1374
    %v1419 = vpack.c.b16 %v1379, %v1375
    %v1420 = vpack.c.b16 %v1384, %v1380
    %v1421 = vpack.c.b16 %v1385, %v1381
    %v1422 = vpack.c.b16 %v1386, %v1382
    %v1423 = vpack.c.b16 %v1387, %v1383
    %v1424 = vpack.c.b16 %v1392, %v1388
    %v1425 = vpack.c.b16 %v1393, %v1389
    %v1426 = vpack.c.b16 %v1394, %v1390
    %v1427 = vpack.c.b16 %v1395, %v1391
    %1460 = vmatprep.subr.bf16.mxu0 %v1397
    %1461 = vmatpush1.bf16.msra.mxu0 %v1396
    %1462 = vmatprep.subr.bf16.mxu0 %v1401
    %1463 = vmatpush1.bf16.msra.mxu0 %v1400
    %1464 = vmatprep.subr.bf16.mxu0 %v1405
    %1465 = vmatpush1.bf16.msra.mxu0 %v1404
    %1466 = vmatprep.subr.bf16.mxu0 %v1409
    %1467 = vmatpush1.bf16.msra.mxu0 %v1408
    %1468 = vmatprep.subr.bf16.mxu0 %v1413
    %1469 = vmatpush1.bf16.msra.mxu0 %v1412
    %1470 = vmatprep.subr.bf16.mxu0 %v1417
    %1471 = vmatpush1.bf16.msra.mxu0 %v1416
    %1472 = vmatprep.subr.bf16.mxu0 %v1421
    %1473 = vmatpush1.bf16.msra.mxu0 %v1420
    %1474 = vmatprep.subr.bf16.mxu0 %v1425
    %1475 = vmatpush1.bf16.msra.mxu0 %v1424
    %1476 = vmatprep.subr.bf16.mxu0 0
    %1477 = vmatpush1.bf16.msra.mxu0 0
    %1478 = vmatprep.subr.bf16.mxu0 0
    %1479 = vmatpush1.bf16.msra.mxu0 0
    %1480 = vmatprep.subr.bf16.mxu0 0
    %1481 = vmatpush1.bf16.msra.mxu0 0
    %1482 = vmatprep.subr.bf16.mxu0 0
    %1483 = vmatpush1.bf16.msra.mxu0 0
    %1484 = vmatprep.subr.bf16.mxu0 0
    %1485 = vmatpush1.bf16.msra.mxu0 0
    %1486 = vmatprep.subr.bf16.mxu0 0
    %1487 = vmatpush1.bf16.msra.mxu0 0
    %1488 = vmatprep.subr.bf16.mxu0 0
    %1489 = vmatpush1.bf16.msra.mxu0 0
    %1490 = vmatprep.subr.bf16.mxu0 0
    %1491 = vmatpush1.bf16.msra.mxu0 0
    %1492 = vmatprep.mubr.bf16.mxu0 0
    %1493 = vmatmul.mubr.bf16.gmra.mrb[0].mxu0 %v896
    %v1494 = vpop.f32.mrb[0].mxu0
    %v1495 = vadd.f32 %v1253, %v1494
    %v1496 = vpop.f32.mrb[0].mxu0
    %v1497 = vadd.f32 %v1255, %v1496
    %v1498 = vpop.f32.mrb[0].mxu0
    %v1499 = vpop.f32.mrb[0].mxu0
    %1500 = vdwg.mxu0
    %1501 = vmatprep.subr.bf16.mxu0 %v1399
    %1502 = vmatpush1.bf16.msra.mxu0 %v1398
    %1503 = vmatprep.subr.bf16.mxu0 %v1403
    %1504 = vmatpush1.bf16.msra.mxu0 %v1402
    %1505 = vmatprep.subr.bf16.mxu0 %v1407
    %1506 = vmatpush1.bf16.msra.mxu0 %v1406
    %1507 = vmatprep.subr.bf16.mxu0 %v1411
    %1508 = vmatpush1.bf16.msra.mxu0 %v1410
    %1509 = vmatprep.subr.bf16.mxu0 %v1415
    %1510 = vmatpush1.bf16.msra.mxu0 %v1414
    %1511 = vmatprep.subr.bf16.mxu0 %v1419
    %1512 = vmatpush1.bf16.msra.mxu0 %v1418
    %1513 = vmatprep.subr.bf16.mxu0 %v1423
    %1514 = vmatpush1.bf16.msra.mxu0 %v1422
    %1515 = vmatprep.subr.bf16.mxu0 %v1427
    %1516 = vmatpush1.bf16.msra.mxu0 %v1426
    %1517 = vmatprep.subr.bf16.mxu0 0
    %1518 = vmatpush1.bf16.msra.mxu0 0
    %1519 = vmatprep.subr.bf16.mxu0 0
    %1520 = vmatpush1.bf16.msra.mxu0 0
    %1521 = vmatprep.subr.bf16.mxu0 0
    %1522 = vmatpush1.bf16.msra.mxu0 0
    %1523 = vmatprep.subr.bf16.mxu0 0
    %1524 = vmatpush1.bf16.msra.mxu0 0
    %1525 = vmatprep.subr.bf16.mxu0 0
    %1526 = vmatpush1.bf16.msra.mxu0 0
    %1527 = vmatprep.subr.bf16.mxu0 0
    %1528 = vmatpush1.bf16.msra.mxu0 0
    %1529 = vmatprep.subr.bf16.mxu0 0
    %1530 = vmatpush1.bf16.msra.mxu0 0
    %1531 = vmatprep.subr.bf16.mxu0 0
    %1532 = vmatpush1.bf16.msra.mxu0 0
    %1533 = vmatprep.mubr.bf16.mxu0 0
    %1534 = vmatmul.mubr.bf16.gmra.mrb[0].mxu0 %v896
    %v1535 = vpop.f32.mrb[0].mxu0
    %v1536 = vadd.f32 %v1294, %v1535
    %v1537 = vpop.f32.mrb[0].mxu0
    %v1538 = vadd.f32 %v1296, %v1537
    %v1539 = vpop.f32.mrb[0].mxu0
    %v1540 = vpop.f32.mrb[0].mxu0
    %1541 = vdwg.mxu0
    %v1542 = vadd.f32 %v1495, %v224
    %v1543 = vadd.f32 %v1497, %v228
    %v1544 = vadd.f32 %v1536, %v232
    %v1545 = vadd.f32 %v1538, %v236
    %v1546 = vxor.u32 %v1542, 2147483648
    %v1547 = vxor.u32 %v1543, 2147483648
    %v1548 = vxor.u32 %v1544, 2147483648
    %v1549 = vmul.f32 %v1546, 1.442695
    %v1550 = vpow.pop %v1549
    %v1551 = vmul.f32 %v1547, 1.442695
    %v1552 = vpow.pop %v1551
    %v1553 = vmul.f32 %v1548, 1.442695
    %v1554 = vpow.pop %v1553
    %v1555 = vadd.f32 %v1550, 1.0
    %v1556 = vadd.f32 %v1552, 1.0
    %v1557 = vadd.f32 %v1554, 1.0
    %v1558 = vrcp.pop %v1555
    %v1559 = vmul.f32 1.0, %v1558
    %v1560 = vrcp.pop %v1556
    %v1561 = vmul.f32 1.0, %v1560
    %v1562 = vrcp.pop %v1557
    %v1563 = vmul.f32 1.0, %v1562
    %v1564 = vtanh.pop %v1545
    %v1565 = vmul.f32 %v1561, 0.0
    %v1566 = vmul.f32 %v1559, %v1564
    %v1567 = vadd.f32 %v1565, %v1566
    %v1568 = vtanh.pop %v1567
    %v1569 = vmul.f32 %v1563, %v1568
    %v1570 = vpack.c.bf16 %v1056, %v1056
    %v1571 = vpack.c.bf16 %v1057, %v1057
    %v1574 = vunpack.c.l.b16 %v1570
    %v1575 = vunpack.c.l.b16 %v1571
    %v1576 = vrot.slane %v1574, 1
    %v1577 = vsel %vm894, %v1575, %v1576
    %v1578 = vpack.c.b16 %v1577, %v1577
    %1580 = vmatprep.subr.bf16.mxu0 %v670
    %1581 = vmatpush1.bf16.msra.mxu0 %v669
    %1582 = vmatprep.subr.bf16.mxu0 %v674
    %1583 = vmatpush1.bf16.msra.mxu0 %v673
    %1584 = vmatprep.subr.bf16.mxu0 %v678
    %1585 = vmatpush1.bf16.msra.mxu0 %v677
    %1586 = vmatprep.subr.bf16.mxu0 %v682
    %1587 = vmatpush1.bf16.msra.mxu0 %v681
    %1588 = vmatprep.subr.bf16.mxu0 %v686
    %1589 = vmatpush1.bf16.msra.mxu0 %v685
    %1590 = vmatprep.subr.bf16.mxu0 %v690
    %1591 = vmatpush1.bf16.msra.mxu0 %v689
    %1592 = vmatprep.subr.bf16.mxu0 %v694
    %1593 = vmatpush1.bf16.msra.mxu0 %v693
    %1594 = vmatprep.subr.bf16.mxu0 %v698
    %1595 = vmatpush1.bf16.msra.mxu0 %v697
    %1596 = vmatprep.subr.bf16.mxu0 0
    %1597 = vmatpush1.bf16.msra.mxu0 0
    %1598 = vmatprep.subr.bf16.mxu0 0
    %1599 = vmatpush1.bf16.msra.mxu0 0
    %1600 = vmatprep.subr.bf16.mxu0 0
    %1601 = vmatpush1.bf16.msra.mxu0 0
    %1602 = vmatprep.subr.bf16.mxu0 0
    %1603 = vmatpush1.bf16.msra.mxu0 0
    %1604 = vmatprep.subr.bf16.mxu0 0
    %1605 = vmatpush1.bf16.msra.mxu0 0
    %1606 = vmatprep.subr.bf16.mxu0 0
    %1607 = vmatpush1.bf16.msra.mxu0 0
    %1608 = vmatprep.subr.bf16.mxu0 0
    %1609 = vmatpush1.bf16.msra.mxu0 0
    %1610 = vmatprep.subr.bf16.mxu0 0
    %1611 = vmatpush1.bf16.msra.mxu0 0
    %1612 = vmatprep.mubr.bf16.mxu0 0
    %1613 = vmatmul.mubr.bf16.gmra.mrb[0].mxu0 %v1578
    %v1614 = vpop.f32.mrb[0].mxu0
    %v1615 = vadd.f32 0.0, %v1614
    %v1616 = vpop.f32.mrb[0].mxu0
    %v1617 = vadd.f32 0.0, %v1616
    %v1618 = vpop.f32.mrb[0].mxu0
    %v1619 = vpop.f32.mrb[0].mxu0
    %1620 = vdwg.mxu0
    %1621 = vmatprep.subr.bf16.mxu0 %v672
    %1622 = vmatpush1.bf16.msra.mxu0 %v671
    %1623 = vmatprep.subr.bf16.mxu0 %v676
    %1624 = vmatpush1.bf16.msra.mxu0 %v675
    %1625 = vmatprep.subr.bf16.mxu0 %v680
    %1626 = vmatpush1.bf16.msra.mxu0 %v679
    %1627 = vmatprep.subr.bf16.mxu0 %v684
    %1628 = vmatpush1.bf16.msra.mxu0 %v683
    %1629 = vmatprep.subr.bf16.mxu0 %v688
    %1630 = vmatpush1.bf16.msra.mxu0 %v687
    %1631 = vmatprep.subr.bf16.mxu0 %v692
    %1632 = vmatpush1.bf16.msra.mxu0 %v691
    %1633 = vmatprep.subr.bf16.mxu0 %v696
    %1634 = vmatpush1.bf16.msra.mxu0 %v695
    %1635 = vmatprep.subr.bf16.mxu0 %v700
    %1636 = vmatpush1.bf16.msra.mxu0 %v699
    %1637 = vmatprep.subr.bf16.mxu0 0
    %1638 = vmatpush1.bf16.msra.mxu0 0
    %1639 = vmatprep.subr.bf16.mxu0 0
    %1640 = vmatpush1.bf16.msra.mxu0 0
    %1641 = vmatprep.subr.bf16.mxu0 0
    %1642 = vmatpush1.bf16.msra.mxu0 0
    %1643 = vmatprep.subr.bf16.mxu0 0
    %1644 = vmatpush1.bf16.msra.mxu0 0
    %1645 = vmatprep.subr.bf16.mxu0 0
    %1646 = vmatpush1.bf16.msra.mxu0 0
    %1647 = vmatprep.subr.bf16.mxu0 0
    %1648 = vmatpush1.bf16.msra.mxu0 0
    %1649 = vmatprep.subr.bf16.mxu0 0
    %1650 = vmatpush1.bf16.msra.mxu0 0
    %1651 = vmatprep.subr.bf16.mxu0 0
    %1652 = vmatpush1.bf16.msra.mxu0 0
    %1653 = vmatprep.mubr.bf16.mxu0 0
    %1654 = vmatmul.mubr.bf16.gmra.mrb[0].mxu0 %v1578
    %v1655 = vpop.f32.mrb[0].mxu0
    %v1656 = vadd.f32 0.0, %v1655
    %v1657 = vpop.f32.mrb[0].mxu0
    %v1658 = vadd.f32 0.0, %v1657
    %v1659 = vpop.f32.mrb[0].mxu0
    %v1660 = vpop.f32.mrb[0].mxu0
    %1661 = vdwg.mxu0
    %v1666 = vrot.slane %v1615, 6
    %v1667 = vrot.slane %v1617, 6
    %v1668 = vrot.slane %v1656, 6
    %v1669 = vrot.slane %v1658, 6
    %v1670 = vrot.slane %v1615, 7
    %v1671 = vrot.slane %v1617, 7
    %v1672 = vrot.slane %v1656, 7
    %v1673 = vrot.slane %v1658, 7
    %v1682 = vadd.f32 %v522, %v1666
    %v1683 = vadd.f32 %v524, %v1667
    %v1684 = vadd.f32 %v565, %v1668
    %v1685 = vadd.f32 %v567, %v1669
    %v1686 = vadd.f32 %v526, %v1670
    %v1687 = vadd.f32 %v528, %v1671
    %v1688 = vadd.f32 %v569, %v1672
    %v1689 = vadd.f32 %v571, %v1673
    %v1690 = vxor.u32 %v1682, 2147483648
    %v1691 = vxor.u32 %v1683, 2147483648
    %v1692 = vxor.u32 %v1684, 2147483648
    %v1693 = vxor.u32 %v1686, 2147483648
    %v1694 = vxor.u32 %v1687, 2147483648
    %v1695 = vxor.u32 %v1688, 2147483648
    %v1696 = vmul.f32 %v1690, 1.442695
    %v1697 = vpow.pop %v1696
    %v1698 = vmul.f32 %v1691, 1.442695
    %v1699 = vpow.pop %v1698
    %v1700 = vmul.f32 %v1692, 1.442695
    %v1701 = vpow.pop %v1700
    %v1702 = vmul.f32 %v1693, 1.442695
    %v1703 = vpow.pop %v1702
    %v1704 = vmul.f32 %v1694, 1.442695
    %v1705 = vpow.pop %v1704
    %v1706 = vmul.f32 %v1695, 1.442695
    %v1707 = vpow.pop %v1706
    %v1708 = vadd.f32 %v1697, 1.0
    %v1709 = vadd.f32 %v1699, 1.0
    %v1710 = vadd.f32 %v1701, 1.0
    %v1711 = vadd.f32 %v1703, 1.0
    %v1712 = vadd.f32 %v1705, 1.0
    %v1713 = vadd.f32 %v1707, 1.0
    %v1714 = vrcp.pop %v1708
    %v1715 = vmul.f32 1.0, %v1714
    %v1716 = vrcp.pop %v1709
    %v1717 = vmul.f32 1.0, %v1716
    %v1718 = vrcp.pop %v1710
    %v1719 = vmul.f32 1.0, %v1718
    %v1720 = vrcp.pop %v1711
    %v1721 = vmul.f32 1.0, %v1720
    %v1722 = vrcp.pop %v1712
    %v1723 = vmul.f32 1.0, %v1722
    %v1724 = vrcp.pop %v1713
    %v1725 = vmul.f32 1.0, %v1724
    %v1726 = vtanh.pop %v1685
    %v1727 = vtanh.pop %v1689
    %v1730 = vrot.slane %v1052, 7
    %v1731 = vrot.slane %v1053, 7
    %v1734 = vmul.f32 %v1717, %v1730
    %v1735 = vmul.f32 %v1723, %v1731
    %v1736 = vmul.f32 %v1715, %v1726
    %v1737 = vmul.f32 %v1721, %v1727
    %v1738 = vadd.f32 %v1734, %v1736
    %v1739 = vadd.f32 %v1735, %v1737
    %v1740 = vtanh.pop %v1738
    %v1741 = vtanh.pop %v1739
    %v1742 = vmul.f32 %v1719, %v1740
    %v1743 = vmul.f32 %v1725, %v1741
    %v1744 = vpack.c.bf16 %v1569, %v1569
    %1745 = vmatprep.subr.bf16.mxu0 %v1155
    %1746 = vmatpush1.bf16.msra.mxu0 %v1154
    %1747 = vmatprep.subr.bf16.mxu0 %v1159
    %1748 = vmatpush1.bf16.msra.mxu0 %v1158
    %1749 = vmatprep.subr.bf16.mxu0 %v1163
    %1750 = vmatpush1.bf16.msra.mxu0 %v1162
    %1751 = vmatprep.subr.bf16.mxu0 %v1167
    %1752 = vmatpush1.bf16.msra.mxu0 %v1166
    %1753 = vmatprep.subr.bf16.mxu0 %v1171
    %1754 = vmatpush1.bf16.msra.mxu0 %v1170
    %1755 = vmatprep.subr.bf16.mxu0 %v1175
    %1756 = vmatpush1.bf16.msra.mxu0 %v1174
    %1757 = vmatprep.subr.bf16.mxu0 %v1179
    %1758 = vmatpush1.bf16.msra.mxu0 %v1178
    %1759 = vmatprep.subr.bf16.mxu0 %v1183
    %1760 = vmatpush1.bf16.msra.mxu0 %v1182
    %1761 = vmatprep.subr.bf16.mxu0 0
    %1762 = vmatpush1.bf16.msra.mxu0 0
    %1763 = vmatprep.subr.bf16.mxu0 0
    %1764 = vmatpush1.bf16.msra.mxu0 0
    %1765 = vmatprep.subr.bf16.mxu0 0
    %1766 = vmatpush1.bf16.msra.mxu0 0
    %1767 = vmatprep.subr.bf16.mxu0 0
    %1768 = vmatpush1.bf16.msra.mxu0 0
    %1769 = vmatprep.subr.bf16.mxu0 0
    %1770 = vmatpush1.bf16.msra.mxu0 0
    %1771 = vmatprep.subr.bf16.mxu0 0
    %1772 = vmatpush1.bf16.msra.mxu0 0
    %1773 = vmatprep.subr.bf16.mxu0 0
    %1774 = vmatpush1.bf16.msra.mxu0 0
    %1775 = vmatprep.subr.bf16.mxu0 0
    %1776 = vmatpush1.bf16.msra.mxu0 0
    %1777 = vmatprep.mubr.bf16.mxu0 0
    %1778 = vmatmul.mubr.bf16.gmra.mrb[0].mxu0 %v1744
    %v1779 = vpop.f32.mrb[0].mxu0
    %v1780 = vadd.f32 0.0, %v1779
    %v1781 = vpop.f32.mrb[0].mxu0
    %v1782 = vadd.f32 0.0, %v1781
    %v1783 = vpop.f32.mrb[0].mxu0
    %v1784 = vpop.f32.mrb[0].mxu0
    %1785 = vdwg.mxu0
    %1786 = vmatprep.subr.bf16.mxu0 %v1157
    %1787 = vmatpush1.bf16.msra.mxu0 %v1156
    %1788 = vmatprep.subr.bf16.mxu0 %v1161
    %1789 = vmatpush1.bf16.msra.mxu0 %v1160
    %1790 = vmatprep.subr.bf16.mxu0 %v1165
    %1791 = vmatpush1.bf16.msra.mxu0 %v1164
    %1792 = vmatprep.subr.bf16.mxu0 %v1169
    %1793 = vmatpush1.bf16.msra.mxu0 %v1168
    %1794 = vmatprep.subr.bf16.mxu0 %v1173
    %1795 = vmatpush1.bf16.msra.mxu0 %v1172
    %1796 = vmatprep.subr.bf16.mxu0 %v1177
    %1797 = vmatpush1.bf16.msra.mxu0 %v1176
    %1798 = vmatprep.subr.bf16.mxu0 %v1181
    %1799 = vmatpush1.bf16.msra.mxu0 %v1180
    %1800 = vmatprep.subr.bf16.mxu0 %v1185
    %1801 = vmatpush1.bf16.msra.mxu0 %v1184
    %1802 = vmatprep.subr.bf16.mxu0 0
    %1803 = vmatpush1.bf16.msra.mxu0 0
    %1804 = vmatprep.subr.bf16.mxu0 0
    %1805 = vmatpush1.bf16.msra.mxu0 0
    %1806 = vmatprep.subr.bf16.mxu0 0
    %1807 = vmatpush1.bf16.msra.mxu0 0
    %1808 = vmatprep.subr.bf16.mxu0 0
    %1809 = vmatpush1.bf16.msra.mxu0 0
    %1810 = vmatprep.subr.bf16.mxu0 0
    %1811 = vmatpush1.bf16.msra.mxu0 0
    %1812 = vmatprep.subr.bf16.mxu0 0
    %1813 = vmatpush1.bf16.msra.mxu0 0
    %1814 = vmatprep.subr.bf16.mxu0 0
    %1815 = vmatpush1.bf16.msra.mxu0 0
    %1816 = vmatprep.subr.bf16.mxu0 0
    %1817 = vmatpush1.bf16.msra.mxu0 0
    %1818 = vmatprep.mubr.bf16.mxu0 0
    %1819 = vmatmul.mubr.bf16.gmra.mrb[0].mxu0 %v1744
    %v1820 = vpop.f32.mrb[0].mxu0
    %v1821 = vadd.f32 0.0, %v1820
    %v1822 = vpop.f32.mrb[0].mxu0
    %v1823 = vadd.f32 0.0, %v1822
    %v1824 = vpop.f32.mrb[0].mxu0
    %v1825 = vpop.f32.mrb[0].mxu0
    %1826 = vdwg.mxu0
    %1827 = vmatprep.subr.bf16.mxu0 %v1397
    %1828 = vmatpush1.bf16.msra.mxu0 %v1396
    %1829 = vmatprep.subr.bf16.mxu0 %v1401
    %1830 = vmatpush1.bf16.msra.mxu0 %v1400
    %1831 = vmatprep.subr.bf16.mxu0 %v1405
    %1832 = vmatpush1.bf16.msra.mxu0 %v1404
    %1833 = vmatprep.subr.bf16.mxu0 %v1409
    %1834 = vmatpush1.bf16.msra.mxu0 %v1408
    %1835 = vmatprep.subr.bf16.mxu0 %v1413
    %1836 = vmatpush1.bf16.msra.mxu0 %v1412
    %1837 = vmatprep.subr.bf16.mxu0 %v1417
    %1838 = vmatpush1.bf16.msra.mxu0 %v1416
    %1839 = vmatprep.subr.bf16.mxu0 %v1421
    %1840 = vmatpush1.bf16.msra.mxu0 %v1420
    %1841 = vmatprep.subr.bf16.mxu0 %v1425
    %1842 = vmatpush1.bf16.msra.mxu0 %v1424
    %1843 = vmatprep.subr.bf16.mxu0 0
    %1844 = vmatpush1.bf16.msra.mxu0 0
    %1845 = vmatprep.subr.bf16.mxu0 0
    %1846 = vmatpush1.bf16.msra.mxu0 0
    %1847 = vmatprep.subr.bf16.mxu0 0
    %1848 = vmatpush1.bf16.msra.mxu0 0
    %1849 = vmatprep.subr.bf16.mxu0 0
    %1850 = vmatpush1.bf16.msra.mxu0 0
    %1851 = vmatprep.subr.bf16.mxu0 0
    %1852 = vmatpush1.bf16.msra.mxu0 0
    %1853 = vmatprep.subr.bf16.mxu0 0
    %1854 = vmatpush1.bf16.msra.mxu0 0
    %1855 = vmatprep.subr.bf16.mxu0 0
    %1856 = vmatpush1.bf16.msra.mxu0 0
    %1857 = vmatprep.subr.bf16.mxu0 0
    %1858 = vmatpush1.bf16.msra.mxu0 0
    %1859 = vmatprep.mubr.bf16.mxu0 0
    %1860 = vmatmul.mubr.bf16.gmra.mrb[0].mxu0 %v1578
    %v1861 = vpop.f32.mrb[0].mxu0
    %v1862 = vadd.f32 %v1780, %v1861
    %v1863 = vpop.f32.mrb[0].mxu0
    %v1864 = vadd.f32 %v1782, %v1863
    %v1865 = vpop.f32.mrb[0].mxu0
    %v1866 = vpop.f32.mrb[0].mxu0
    %1867 = vdwg.mxu0
    %1868 = vmatprep.subr.bf16.mxu0 %v1399
    %1869 = vmatpush1.bf16.msra.mxu0 %v1398
    %1870 = vmatprep.subr.bf16.mxu0 %v1403
    %1871 = vmatpush1.bf16.msra.mxu0 %v1402
    %1872 = vmatprep.subr.bf16.mxu0 %v1407
    %1873 = vmatpush1.bf16.msra.mxu0 %v1406
    %1874 = vmatprep.subr.bf16.mxu0 %v1411
    %1875 = vmatpush1.bf16.msra.mxu0 %v1410
    %1876 = vmatprep.subr.bf16.mxu0 %v1415
    %1877 = vmatpush1.bf16.msra.mxu0 %v1414
    %1878 = vmatprep.subr.bf16.mxu0 %v1419
    %1879 = vmatpush1.bf16.msra.mxu0 %v1418
    %1880 = vmatprep.subr.bf16.mxu0 %v1423
    %1881 = vmatpush1.bf16.msra.mxu0 %v1422
    %1882 = vmatprep.subr.bf16.mxu0 %v1427
    %1883 = vmatpush1.bf16.msra.mxu0 %v1426
    %1884 = vmatprep.subr.bf16.mxu0 0
    %1885 = vmatpush1.bf16.msra.mxu0 0
    %1886 = vmatprep.subr.bf16.mxu0 0
    %1887 = vmatpush1.bf16.msra.mxu0 0
    %1888 = vmatprep.subr.bf16.mxu0 0
    %1889 = vmatpush1.bf16.msra.mxu0 0
    %1890 = vmatprep.subr.bf16.mxu0 0
    %1891 = vmatpush1.bf16.msra.mxu0 0
    %1892 = vmatprep.subr.bf16.mxu0 0
    %1893 = vmatpush1.bf16.msra.mxu0 0
    %1894 = vmatprep.subr.bf16.mxu0 0
    %1895 = vmatpush1.bf16.msra.mxu0 0
    %1896 = vmatprep.subr.bf16.mxu0 0
    %1897 = vmatpush1.bf16.msra.mxu0 0
    %1898 = vmatprep.subr.bf16.mxu0 0
    %1899 = vmatpush1.bf16.msra.mxu0 0
    %1900 = vmatprep.mubr.bf16.mxu0 0
    %1901 = vmatmul.mubr.bf16.gmra.mrb[0].mxu0 %v1578
    %v1902 = vpop.f32.mrb[0].mxu0
    %v1903 = vadd.f32 %v1821, %v1902
    %v1904 = vpop.f32.mrb[0].mxu0
    %v1905 = vadd.f32 %v1823, %v1904
    %v1906 = vpop.f32.mrb[0].mxu0
    %v1907 = vpop.f32.mrb[0].mxu0
    %1908 = vdwg.mxu0
    %v1909 = vadd.f32 %v1862, %v224
    %v1910 = vadd.f32 %v1864, %v228
    %v1911 = vadd.f32 %v1903, %v232
    %v1912 = vadd.f32 %v1905, %v236
    %v1913 = vxor.u32 %v1909, 2147483648
    %v1914 = vxor.u32 %v1910, 2147483648
    %v1915 = vxor.u32 %v1911, 2147483648
    %v1916 = vmul.f32 %v1913, 1.442695
    %v1917 = vpow.pop %v1916
    %v1918 = vmul.f32 %v1914, 1.442695
    %v1919 = vpow.pop %v1918
    %v1920 = vmul.f32 %v1915, 1.442695
    %v1921 = vpow.pop %v1920
    %v1922 = vadd.f32 %v1917, 1.0
    %v1923 = vadd.f32 %v1919, 1.0
    %v1924 = vadd.f32 %v1921, 1.0
    %v1925 = vrcp.pop %v1922
    %v1926 = vmul.f32 1.0, %v1925
    %v1927 = vrcp.pop %v1923
    %v1928 = vmul.f32 1.0, %v1927
    %v1929 = vrcp.pop %v1924
    %v1930 = vmul.f32 1.0, %v1929
    %v1931 = vtanh.pop %v1912
    %v1932 = vmul.f32 %v1928, %v1567
    %v1933 = vmul.f32 %v1926, %v1931
    %v1934 = vadd.f32 %v1932, %v1933
    %v1935 = vtanh.pop %v1934
    %v1936 = vmul.f32 %v1930, %v1935
    %v1969 = vunpack.c.l.b16 %v171
    %v1970 = vunpack.c.h.b16 %v171
    %v1971 = vunpack.c.l.b16 %v172
    %v1972 = vunpack.c.h.b16 %v172
    %v1973 = vunpack.c.l.b16 %v173
    %v1974 = vunpack.c.h.b16 %v173
    %v1975 = vunpack.c.l.b16 %v174
    %v1976 = vunpack.c.h.b16 %v174
    %v1977 = vunpack.c.l.b16 %v175
    %v1978 = vunpack.c.h.b16 %v175
    %v1979 = vunpack.c.l.b16 %v176
    %v1980 = vunpack.c.h.b16 %v176
    %v1981 = vunpack.c.l.b16 %v177
    %v1982 = vunpack.c.h.b16 %v177
    %v1983 = vunpack.c.l.b16 %v178
    %v1984 = vunpack.c.h.b16 %v178
    %v1985 = vunpack.c.l.b16 %v179
    %v1986 = vunpack.c.h.b16 %v179
    %v1987 = vunpack.c.l.b16 %v180
    %v1988 = vunpack.c.h.b16 %v180
    %v1989 = vunpack.c.l.b16 %v181
    %v1990 = vunpack.c.h.b16 %v181
    %v1991 = vunpack.c.l.b16 %v182
    %v1992 = vunpack.c.h.b16 %v182
    %v1993 = vunpack.c.l.b16 %v183
    %v1994 = vunpack.c.h.b16 %v183
    %v1995 = vunpack.c.l.b16 %v184
    %v1996 = vunpack.c.h.b16 %v184
    %v1997 = vunpack.c.l.b16 %v185
    %v1998 = vunpack.c.h.b16 %v185
    %v1999 = vunpack.c.l.b16 %v186
    %v2000 = vunpack.c.h.b16 %v186
    %v2001 = vunpack.c.l.b16 %v187
    %v2002 = vunpack.c.h.b16 %v187
    %v2003 = vunpack.c.l.b16 %v188
    %v2004 = vunpack.c.h.b16 %v188
    %v2005 = vunpack.c.l.b16 %v189
    %v2006 = vunpack.c.h.b16 %v189
    %v2007 = vunpack.c.l.b16 %v190
    %v2008 = vunpack.c.h.b16 %v190
    %v2009 = vunpack.c.l.b16 %v191
    %v2010 = vunpack.c.h.b16 %v191
    %v2011 = vunpack.c.l.b16 %v192
    %v2012 = vunpack.c.h.b16 %v192
    %v2013 = vunpack.c.l.b16 %v193
    %v2014 = vunpack.c.h.b16 %v193
    %v2015 = vunpack.c.l.b16 %v194
    %v2016 = vunpack.c.h.b16 %v194
    %v2017 = vunpack.c.l.b16 %v195
    %v2018 = vunpack.c.h.b16 %v195
    %v2019 = vunpack.c.l.b16 %v196
    %v2020 = vunpack.c.h.b16 %v196
    %v2021 = vunpack.c.l.b16 %v197
    %v2022 = vunpack.c.h.b16 %v197
    %v2023 = vunpack.c.l.b16 %v198
    %v2024 = vunpack.c.h.b16 %v198
    %v2025 = vunpack.c.l.b16 %v199
    %v2026 = vunpack.c.h.b16 %v199
    %v2027 = vunpack.c.l.b16 %v200
    %v2028 = vunpack.c.h.b16 %v200
    %v2029 = vunpack.c.l.b16 %v201
    %v2030 = vunpack.c.h.b16 %v201
    %v2031 = vunpack.c.l.b16 %v202
    %v2032 = vunpack.c.h.b16 %v202
    %v2033 = vpack.c.b16 %v1973, %v1969
    %v2034 = vpack.c.b16 %v1974, %v1970
    %v2035 = vpack.c.b16 %v1975, %v1971
    %v2036 = vpack.c.b16 %v1976, %v1972
    %v2037 = vpack.c.b16 %v1981, %v1977
    %v2038 = vpack.c.b16 %v1982, %v1978
    %v2039 = vpack.c.b16 %v1983, %v1979
    %v2040 = vpack.c.b16 %v1984, %v1980
    %v2041 = vpack.c.b16 %v1989, %v1985
    %v2042 = vpack.c.b16 %v1990, %v1986
    %v2043 = vpack.c.b16 %v1991, %v1987
    %v2044 = vpack.c.b16 %v1992, %v1988
    %v2045 = vpack.c.b16 %v1997, %v1993
    %v2046 = vpack.c.b16 %v1998, %v1994
    %v2047 = vpack.c.b16 %v1999, %v1995
    %v2048 = vpack.c.b16 %v2000, %v1996
    %v2049 = vpack.c.b16 %v2005, %v2001
    %v2050 = vpack.c.b16 %v2006, %v2002
    %v2051 = vpack.c.b16 %v2007, %v2003
    %v2052 = vpack.c.b16 %v2008, %v2004
    %v2053 = vpack.c.b16 %v2013, %v2009
    %v2054 = vpack.c.b16 %v2014, %v2010
    %v2055 = vpack.c.b16 %v2015, %v2011
    %v2056 = vpack.c.b16 %v2016, %v2012
    %v2057 = vpack.c.b16 %v2021, %v2017
    %v2058 = vpack.c.b16 %v2022, %v2018
    %v2059 = vpack.c.b16 %v2023, %v2019
    %v2060 = vpack.c.b16 %v2024, %v2020
    %v2061 = vpack.c.b16 %v2029, %v2025
    %v2062 = vpack.c.b16 %v2030, %v2026
    %v2063 = vpack.c.b16 %v2031, %v2027
    %v2064 = vpack.c.b16 %v2032, %v2028
    %2097 = vmatprep.subr.bf16.mxu0 %v2034
    %2098 = vmatpush1.bf16.msra.mxu0 %v2033
    %2099 = vmatprep.subr.bf16.mxu0 %v2038
    %2100 = vmatpush1.bf16.msra.mxu0 %v2037
    %2101 = vmatprep.subr.bf16.mxu0 %v2042
    %2102 = vmatpush1.bf16.msra.mxu0 %v2041
    %2103 = vmatprep.subr.bf16.mxu0 %v2046
    %2104 = vmatpush1.bf16.msra.mxu0 %v2045
    %2105 = vmatprep.subr.bf16.mxu0 %v2050
    %2106 = vmatpush1.bf16.msra.mxu0 %v2049
    %2107 = vmatprep.subr.bf16.mxu0 %v2054
    %2108 = vmatpush1.bf16.msra.mxu0 %v2053
    %2109 = vmatprep.subr.bf16.mxu0 %v2058
    %2110 = vmatpush1.bf16.msra.mxu0 %v2057
    %2111 = vmatprep.subr.bf16.mxu0 %v2062
    %2112 = vmatpush1.bf16.msra.mxu0 %v2061
    %2113 = vmatprep.subr.bf16.mxu0 0
    %2114 = vmatpush1.bf16.msra.mxu0 0
    %2115 = vmatprep.subr.bf16.mxu0 0
    %2116 = vmatpush1.bf16.msra.mxu0 0
    %2117 = vmatprep.subr.bf16.mxu0 0
    %2118 = vmatpush1.bf16.msra.mxu0 0
    %2119 = vmatprep.subr.bf16.mxu0 0
    %2120 = vmatpush1.bf16.msra.mxu0 0
    %2121 = vmatprep.subr.bf16.mxu0 0
    %2122 = vmatpush1.bf16.msra.mxu0 0
    %2123 = vmatprep.subr.bf16.mxu0 0
    %2124 = vmatpush1.bf16.msra.mxu0 0
    %2125 = vmatprep.subr.bf16.mxu0 0
    %2126 = vmatpush1.bf16.msra.mxu0 0
    %2127 = vmatprep.subr.bf16.mxu0 0
    %2128 = vmatpush1.bf16.msra.mxu0 0
    %2129 = vmatprep.mubr.bf16.mxu0 0
    %2130 = vmatmul.mubr.bf16.gmra.mrb[0].mxu0 0
    %v2131 = vpop.f32.mrb[0].mxu0
    %v2132 = vadd.f32 0.0, %v2131
    %v2133 = vpop.f32.mrb[0].mxu0
    %v2134 = vadd.f32 0.0, %v2133
    %v2135 = vpop.f32.mrb[0].mxu0
    %v2136 = vpop.f32.mrb[0].mxu0
    %2137 = vdwg.mxu0
    %2138 = vmatprep.subr.bf16.mxu0 %v2036
    %2139 = vmatpush1.bf16.msra.mxu0 %v2035
    %2140 = vmatprep.subr.bf16.mxu0 %v2040
    %2141 = vmatpush1.bf16.msra.mxu0 %v2039
    %2142 = vmatprep.subr.bf16.mxu0 %v2044
    %2143 = vmatpush1.bf16.msra.mxu0 %v2043
    %2144 = vmatprep.subr.bf16.mxu0 %v2048
    %2145 = vmatpush1.bf16.msra.mxu0 %v2047
    %2146 = vmatprep.subr.bf16.mxu0 %v2052
    %2147 = vmatpush1.bf16.msra.mxu0 %v2051
    %2148 = vmatprep.subr.bf16.mxu0 %v2056
    %2149 = vmatpush1.bf16.msra.mxu0 %v2055
    %2150 = vmatprep.subr.bf16.mxu0 %v2060
    %2151 = vmatpush1.bf16.msra.mxu0 %v2059
    %2152 = vmatprep.subr.bf16.mxu0 %v2064
    %2153 = vmatpush1.bf16.msra.mxu0 %v2063
    %2154 = vmatprep.subr.bf16.mxu0 0
    %2155 = vmatpush1.bf16.msra.mxu0 0
    %2156 = vmatprep.subr.bf16.mxu0 0
    %2157 = vmatpush1.bf16.msra.mxu0 0
    %2158 = vmatprep.subr.bf16.mxu0 0
    %2159 = vmatpush1.bf16.msra.mxu0 0
    %2160 = vmatprep.subr.bf16.mxu0 0
    %2161 = vmatpush1.bf16.msra.mxu0 0
    %2162 = vmatprep.subr.bf16.mxu0 0
    %2163 = vmatpush1.bf16.msra.mxu0 0
    %2164 = vmatprep.subr.bf16.mxu0 0
    %2165 = vmatpush1.bf16.msra.mxu0 0
    %2166 = vmatprep.subr.bf16.mxu0 0
    %2167 = vmatpush1.bf16.msra.mxu0 0
    %2168 = vmatprep.subr.bf16.mxu0 0
    %2169 = vmatpush1.bf16.msra.mxu0 0
    %2170 = vmatprep.mubr.bf16.mxu0 0
    %2171 = vmatmul.mubr.bf16.gmra.mrb[0].mxu0 0
    %v2172 = vpop.f32.mrb[0].mxu0
    %v2173 = vadd.f32 0.0, %v2172
    %v2174 = vpop.f32.mrb[0].mxu0
    %v2175 = vadd.f32 0.0, %v2174
    %v2176 = vpop.f32.mrb[0].mxu0
    %v2177 = vpop.f32.mrb[0].mxu0
    %2178 = vdwg.mxu0
    %v2211 = vunpack.c.l.b16 %v139
    %v2212 = vunpack.c.h.b16 %v139
    %v2213 = vunpack.c.l.b16 %v140
    %v2214 = vunpack.c.h.b16 %v140
    %v2215 = vunpack.c.l.b16 %v141
    %v2216 = vunpack.c.h.b16 %v141
    %v2217 = vunpack.c.l.b16 %v142
    %v2218 = vunpack.c.h.b16 %v142
    %v2219 = vunpack.c.l.b16 %v143
    %v2220 = vunpack.c.h.b16 %v143
    %v2221 = vunpack.c.l.b16 %v144
    %v2222 = vunpack.c.h.b16 %v144
    %v2223 = vunpack.c.l.b16 %v145
    %v2224 = vunpack.c.h.b16 %v145
    %v2225 = vunpack.c.l.b16 %v146
    %v2226 = vunpack.c.h.b16 %v146
    %v2227 = vunpack.c.l.b16 %v147
    %v2228 = vunpack.c.h.b16 %v147
    %v2229 = vunpack.c.l.b16 %v148
    %v2230 = vunpack.c.h.b16 %v148
    %v2231 = vunpack.c.l.b16 %v149
    %v2232 = vunpack.c.h.b16 %v149
    %v2233 = vunpack.c.l.b16 %v150
    %v2234 = vunpack.c.h.b16 %v150
    %v2235 = vunpack.c.l.b16 %v151
    %v2236 = vunpack.c.h.b16 %v151
    %v2237 = vunpack.c.l.b16 %v152
    %v2238 = vunpack.c.h.b16 %v152
    %v2239 = vunpack.c.l.b16 %v153
    %v2240 = vunpack.c.h.b16 %v153
    %v2241 = vunpack.c.l.b16 %v154
    %v2242 = vunpack.c.h.b16 %v154
    %v2243 = vunpack.c.l.b16 %v155
    %v2244 = vunpack.c.h.b16 %v155
    %v2245 = vunpack.c.l.b16 %v156
    %v2246 = vunpack.c.h.b16 %v156
    %v2247 = vunpack.c.l.b16 %v157
    %v2248 = vunpack.c.h.b16 %v157
    %v2249 = vunpack.c.l.b16 %v158
    %v2250 = vunpack.c.h.b16 %v158
    %v2251 = vunpack.c.l.b16 %v159
    %v2252 = vunpack.c.h.b16 %v159
    %v2253 = vunpack.c.l.b16 %v160
    %v2254 = vunpack.c.h.b16 %v160
    %v2255 = vunpack.c.l.b16 %v161
    %v2256 = vunpack.c.h.b16 %v161
    %v2257 = vunpack.c.l.b16 %v162
    %v2258 = vunpack.c.h.b16 %v162
    %v2259 = vunpack.c.l.b16 %v163
    %v2260 = vunpack.c.h.b16 %v163
    %v2261 = vunpack.c.l.b16 %v164
    %v2262 = vunpack.c.h.b16 %v164
    %v2263 = vunpack.c.l.b16 %v165
    %v2264 = vunpack.c.h.b16 %v165
    %v2265 = vunpack.c.l.b16 %v166
    %v2266 = vunpack.c.h.b16 %v166
    %v2267 = vunpack.c.l.b16 %v167
    %v2268 = vunpack.c.h.b16 %v167
    %v2269 = vunpack.c.l.b16 %v168
    %v2270 = vunpack.c.h.b16 %v168
    %v2271 = vunpack.c.l.b16 %v169
    %v2272 = vunpack.c.h.b16 %v169
    %v2273 = vunpack.c.l.b16 %v170
    %v2274 = vunpack.c.h.b16 %v170
    %v2275 = vpack.c.b16 %v2215, %v2211
    %v2276 = vpack.c.b16 %v2216, %v2212
    %v2277 = vpack.c.b16 %v2217, %v2213
    %v2278 = vpack.c.b16 %v2218, %v2214
    %v2279 = vpack.c.b16 %v2223, %v2219
    %v2280 = vpack.c.b16 %v2224, %v2220
    %v2281 = vpack.c.b16 %v2225, %v2221
    %v2282 = vpack.c.b16 %v2226, %v2222
    %v2283 = vpack.c.b16 %v2231, %v2227
    %v2284 = vpack.c.b16 %v2232, %v2228
    %v2285 = vpack.c.b16 %v2233, %v2229
    %v2286 = vpack.c.b16 %v2234, %v2230
    %v2287 = vpack.c.b16 %v2239, %v2235
    %v2288 = vpack.c.b16 %v2240, %v2236
    %v2289 = vpack.c.b16 %v2241, %v2237
    %v2290 = vpack.c.b16 %v2242, %v2238
    %v2291 = vpack.c.b16 %v2247, %v2243
    %v2292 = vpack.c.b16 %v2248, %v2244
    %v2293 = vpack.c.b16 %v2249, %v2245
    %v2294 = vpack.c.b16 %v2250, %v2246
    %v2295 = vpack.c.b16 %v2255, %v2251
    %v2296 = vpack.c.b16 %v2256, %v2252
    %v2297 = vpack.c.b16 %v2257, %v2253
    %v2298 = vpack.c.b16 %v2258, %v2254
    %v2299 = vpack.c.b16 %v2263, %v2259
    %v2300 = vpack.c.b16 %v2264, %v2260
    %v2301 = vpack.c.b16 %v2265, %v2261
    %v2302 = vpack.c.b16 %v2266, %v2262
    %v2303 = vpack.c.b16 %v2271, %v2267
    %v2304 = vpack.c.b16 %v2272, %v2268
    %v2305 = vpack.c.b16 %v2273, %v2269
    %v2306 = vpack.c.b16 %v2274, %v2270
    %2339 = vmatprep.subr.bf16.mxu0 %v2276
    %2340 = vmatpush1.bf16.msra.mxu0 %v2275
    %2341 = vmatprep.subr.bf16.mxu0 %v2280
    %2342 = vmatpush1.bf16.msra.mxu0 %v2279
    %2343 = vmatprep.subr.bf16.mxu0 %v2284
    %2344 = vmatpush1.bf16.msra.mxu0 %v2283
    %2345 = vmatprep.subr.bf16.mxu0 %v2288
    %2346 = vmatpush1.bf16.msra.mxu0 %v2287
    %2347 = vmatprep.subr.bf16.mxu0 %v2292
    %2348 = vmatpush1.bf16.msra.mxu0 %v2291
    %2349 = vmatprep.subr.bf16.mxu0 %v2296
    %2350 = vmatpush1.bf16.msra.mxu0 %v2295
    %2351 = vmatprep.subr.bf16.mxu0 %v2300
    %2352 = vmatpush1.bf16.msra.mxu0 %v2299
    %2353 = vmatprep.subr.bf16.mxu0 %v2304
    %2354 = vmatpush1.bf16.msra.mxu0 %v2303
    %2355 = vmatprep.subr.bf16.mxu0 0
    %2356 = vmatpush1.bf16.msra.mxu0 0
    %2357 = vmatprep.subr.bf16.mxu0 0
    %2358 = vmatpush1.bf16.msra.mxu0 0
    %2359 = vmatprep.subr.bf16.mxu0 0
    %2360 = vmatpush1.bf16.msra.mxu0 0
    %2361 = vmatprep.subr.bf16.mxu0 0
    %2362 = vmatpush1.bf16.msra.mxu0 0
    %2363 = vmatprep.subr.bf16.mxu0 0
    %2364 = vmatpush1.bf16.msra.mxu0 0
    %2365 = vmatprep.subr.bf16.mxu0 0
    %2366 = vmatpush1.bf16.msra.mxu0 0
    %2367 = vmatprep.subr.bf16.mxu0 0
    %2368 = vmatpush1.bf16.msra.mxu0 0
    %2369 = vmatprep.subr.bf16.mxu0 0
    %2370 = vmatpush1.bf16.msra.mxu0 0
    %2371 = vmatprep.mubr.bf16.mxu0 0
    %2372 = vmatmul.mubr.bf16.gmra.mrb[0].mxu0 %v1744
    %v2373 = vpop.f32.mrb[0].mxu0
    %v2374 = vadd.f32 %v2132, %v2373
    %v2375 = vpop.f32.mrb[0].mxu0
    %v2376 = vadd.f32 %v2134, %v2375
    %v2377 = vpop.f32.mrb[0].mxu0
    %v2378 = vpop.f32.mrb[0].mxu0
    %2379 = vdwg.mxu0
    %2380 = vmatprep.subr.bf16.mxu0 %v2278
    %2381 = vmatpush1.bf16.msra.mxu0 %v2277
    %2382 = vmatprep.subr.bf16.mxu0 %v2282
    %2383 = vmatpush1.bf16.msra.mxu0 %v2281
    %2384 = vmatprep.subr.bf16.mxu0 %v2286
    %2385 = vmatpush1.bf16.msra.mxu0 %v2285
    %2386 = vmatprep.subr.bf16.mxu0 %v2290
    %2387 = vmatpush1.bf16.msra.mxu0 %v2289
    %2388 = vmatprep.subr.bf16.mxu0 %v2294
    %2389 = vmatpush1.bf16.msra.mxu0 %v2293
    %2390 = vmatprep.subr.bf16.mxu0 %v2298
    %2391 = vmatpush1.bf16.msra.mxu0 %v2297
    %2392 = vmatprep.subr.bf16.mxu0 %v2302
    %2393 = vmatpush1.bf16.msra.mxu0 %v2301
    %2394 = vmatprep.subr.bf16.mxu0 %v2306
    %2395 = vmatpush1.bf16.msra.mxu0 %v2305
    %2396 = vmatprep.subr.bf16.mxu0 0
    %2397 = vmatpush1.bf16.msra.mxu0 0
    %2398 = vmatprep.subr.bf16.mxu0 0
    %2399 = vmatpush1.bf16.msra.mxu0 0
    %2400 = vmatprep.subr.bf16.mxu0 0
    %2401 = vmatpush1.bf16.msra.mxu0 0
    %2402 = vmatprep.subr.bf16.mxu0 0
    %2403 = vmatpush1.bf16.msra.mxu0 0
    %2404 = vmatprep.subr.bf16.mxu0 0
    %2405 = vmatpush1.bf16.msra.mxu0 0
    %2406 = vmatprep.subr.bf16.mxu0 0
    %2407 = vmatpush1.bf16.msra.mxu0 0
    %2408 = vmatprep.subr.bf16.mxu0 0
    %2409 = vmatpush1.bf16.msra.mxu0 0
    %2410 = vmatprep.subr.bf16.mxu0 0
    %2411 = vmatpush1.bf16.msra.mxu0 0
    %2412 = vmatprep.mubr.bf16.mxu0 0
    %2413 = vmatmul.mubr.bf16.gmra.mrb[0].mxu0 %v1744
    %v2414 = vpop.f32.mrb[0].mxu0
    %v2415 = vadd.f32 %v2173, %v2414
    %v2416 = vpop.f32.mrb[0].mxu0
    %v2417 = vadd.f32 %v2175, %v2416
    %v2418 = vpop.f32.mrb[0].mxu0
    %v2419 = vpop.f32.mrb[0].mxu0
    %2420 = vdwg.mxu0
    %v2421 = vadd.f32 %v2374, %v246
    %v2422 = vadd.f32 %v2376, %v250
    %v2423 = vadd.f32 %v2415, %v254
    %v2424 = vadd.f32 %v2417, %v258
    %v2425 = vxor.u32 %v2421, 2147483648
    %v2426 = vxor.u32 %v2422, 2147483648
    %v2427 = vxor.u32 %v2423, 2147483648
    %v2428 = vmul.f32 %v2425, 1.442695
    %v2429 = vpow.pop %v2428
    %v2430 = vmul.f32 %v2426, 1.442695
    %v2431 = vpow.pop %v2430
    %v2432 = vmul.f32 %v2427, 1.442695
    %v2433 = vpow.pop %v2432
    %v2434 = vadd.f32 %v2429, 1.0
    %v2435 = vadd.f32 %v2431, 1.0
    %v2436 = vadd.f32 %v2433, 1.0
    %v2437 = vrcp.pop %v2434
    %v2438 = vmul.f32 1.0, %v2437
    %v2439 = vrcp.pop %v2435
    %v2440 = vmul.f32 1.0, %v2439
    %v2441 = vrcp.pop %v2436
    %v2442 = vmul.f32 1.0, %v2441
    %v2443 = vtanh.pop %v2424
    %v2444 = vmul.f32 %v2440, 0.0
    %v2445 = vmul.f32 %v2438, %v2443
    %v2446 = vadd.f32 %v2444, %v2445
    %v2447 = vtanh.pop %v2446
    %v2448 = vmul.f32 %v2442, %v2447
    %v2449 = vpack.c.bf16 %v2448, %v2448
    %v2466 = vunpack.c.l.b16 %v203
    %v2467 = vunpack.c.l.b16 %v204
    %v2468 = vunpack.c.l.b16 %v205
    %v2469 = vunpack.c.l.b16 %v206
    %v2470 = vunpack.c.l.b16 %v207
    %v2471 = vunpack.c.l.b16 %v208
    %v2472 = vunpack.c.l.b16 %v209
    %v2473 = vunpack.c.l.b16 %v210
    %v2474 = vunpack.c.l.b16 %v211
    %v2475 = vunpack.c.l.b16 %v212
    %v2476 = vunpack.c.l.b16 %v213
    %v2477 = vunpack.c.l.b16 %v214
    %v2478 = vunpack.c.l.b16 %v215
    %v2479 = vunpack.c.l.b16 %v216
    %v2480 = vunpack.c.l.b16 %v217
    %v2481 = vunpack.c.l.b16 %v218
    %v2482 = vpack.c.b16 %v2467, %v2466
    %v2483 = vpack.c.b16 %v2469, %v2468
    %v2484 = vpack.c.b16 %v2471, %v2470
    %v2485 = vpack.c.b16 %v2473, %v2472
    %v2486 = vpack.c.b16 %v2475, %v2474
    %v2487 = vpack.c.b16 %v2477, %v2476
    %v2488 = vpack.c.b16 %v2479, %v2478
    %v2489 = vpack.c.b16 %v2481, %v2480
    %2498 = vmatprep.subr.bf16.mxu0 0
    %2499 = vmatpush1.bf16.msra.mxu0 %v2482
    %2500 = vmatprep.subr.bf16.mxu0 0
    %2501 = vmatpush1.bf16.msra.mxu0 %v2483
    %2502 = vmatprep.subr.bf16.mxu0 0
    %2503 = vmatpush1.bf16.msra.mxu0 %v2484
    %2504 = vmatprep.subr.bf16.mxu0 0
    %2505 = vmatpush1.bf16.msra.mxu0 %v2485
    %2506 = vmatprep.subr.bf16.mxu0 0
    %2507 = vmatpush1.bf16.msra.mxu0 %v2486
    %2508 = vmatprep.subr.bf16.mxu0 0
    %2509 = vmatpush1.bf16.msra.mxu0 %v2487
    %2510 = vmatprep.subr.bf16.mxu0 0
    %2511 = vmatpush1.bf16.msra.mxu0 %v2488
    %2512 = vmatprep.subr.bf16.mxu0 0
    %2513 = vmatpush1.bf16.msra.mxu0 %v2489
    %2514 = vmatprep.subr.bf16.mxu0 0
    %2515 = vmatpush1.bf16.msra.mxu0 0
    %2516 = vmatprep.subr.bf16.mxu0 0
    %2517 = vmatpush1.bf16.msra.mxu0 0
    %2518 = vmatprep.subr.bf16.mxu0 0
    %2519 = vmatpush1.bf16.msra.mxu0 0
    %2520 = vmatprep.subr.bf16.mxu0 0
    %2521 = vmatpush1.bf16.msra.mxu0 0
    %2522 = vmatprep.subr.bf16.mxu0 0
    %2523 = vmatpush1.bf16.msra.mxu0 0
    %2524 = vmatprep.subr.bf16.mxu0 0
    %2525 = vmatpush1.bf16.msra.mxu0 0
    %2526 = vmatprep.subr.bf16.mxu0 0
    %2527 = vmatpush1.bf16.msra.mxu0 0
    %2528 = vmatprep.subr.bf16.mxu0 0
    %2529 = vmatpush1.bf16.msra.mxu0 0
    %2530 = vmatprep.mubr.bf16.mxu0 0
    %2531 = vmatmul.mubr.bf16.gmra.mrb[0].mxu0 %v2449
    %v2532 = vpop.f32.mrb[0].mxu0
    %v2533 = vadd.f32 %v268, %v2532
    %v2534 = vpop.f32.mrb[0].mxu0
    %v2535 = vpop.f32.mrb[0].mxu0
    %v2536 = vpop.f32.mrb[0].mxu0
    %2537 = vdwg.mxu0
    %v2540 = vunpack.c.l.s4 1966171168
    %v2541 = vunpack.c.0.s8 %v2540
    %v2542 = vlaneseq
    %v2543 = vshrl.u32 %v2542, 7
    %v2544 = vsub.s32 %v2541, %v2543
    %v2545 = vrot.slane %v2533, %v2544
    %v2546 = vcombine.high %v2545, %v2545
    %v2548 = vunpack.c.l.s4 1966171168
    %v2549 = vunpack.c.0.s8 %v2548
    %v2550 = vlaneseq
    %v2551 = vshrl.u32 %v2550, 7
    %v2552 = vsub.s32 %v2549, %v2551
    %v2553 = vrot.slane %v2545, %v2552
    %v2555 = vunpack.c.l.s4 1966171168
    %v2556 = vunpack.c.0.s8 %v2555
    %v2557 = vlaneseq
    %v2558 = vshrl.u32 %v2557, 7
    %v2559 = vsub.s32 %v2556, %v2558
    %v2560 = vrot.slane %v2546, %v2559
    %2563 = vst [vmem:[#allocation2] sm:$0x1] %v2553
    %2564 = vst [vmem:[#allocation2 + $0x8] sm:$0x1] %v2560
    %v2565 = vpack.c.bf16 %v1742, %v1742
    %v2566 = vpack.c.bf16 %v1743, %v1743
    %v2569 = vunpack.c.l.b16 %v2565
    %v2570 = vunpack.c.l.b16 %v2566
    %v2571 = vrot.slane %v2569, 2
    %v2572 = vrot.slane %v2570, 1
    %v2573 = vsel %vm894, %v2572, %v2571
    %v2574 = vpack.c.b16 %v2573, %v2573
    %2576 = vmatprep.subr.bf16.mxu0 %v670
    %2577 = vmatpush1.bf16.msra.mxu0 %v669
    %2578 = vmatprep.subr.bf16.mxu0 %v674
    %2579 = vmatpush1.bf16.msra.mxu0 %v673
    %2580 = vmatprep.subr.bf16.mxu0 %v678
    %2581 = vmatpush1.bf16.msra.mxu0 %v677
    %2582 = vmatprep.subr.bf16.mxu0 %v682
    %2583 = vmatpush1.bf16.msra.mxu0 %v681
    %2584 = vmatprep.subr.bf16.mxu0 %v686
    %2585 = vmatpush1.bf16.msra.mxu0 %v685
    %2586 = vmatprep.subr.bf16.mxu0 %v690
    %2587 = vmatpush1.bf16.msra.mxu0 %v689
    %2588 = vmatprep.subr.bf16.mxu0 %v694
    %2589 = vmatpush1.bf16.msra.mxu0 %v693
    %2590 = vmatprep.subr.bf16.mxu0 %v698
    %2591 = vmatpush1.bf16.msra.mxu0 %v697
    %2592 = vmatprep.subr.bf16.mxu0 0
    %2593 = vmatpush1.bf16.msra.mxu0 0
    %2594 = vmatprep.subr.bf16.mxu0 0
    %2595 = vmatpush1.bf16.msra.mxu0 0
    %2596 = vmatprep.subr.bf16.mxu0 0
    %2597 = vmatpush1.bf16.msra.mxu0 0
    %2598 = vmatprep.subr.bf16.mxu0 0
    %2599 = vmatpush1.bf16.msra.mxu0 0
    %2600 = vmatprep.subr.bf16.mxu0 0
    %2601 = vmatpush1.bf16.msra.mxu0 0
    %2602 = vmatprep.subr.bf16.mxu0 0
    %2603 = vmatpush1.bf16.msra.mxu0 0
    %2604 = vmatprep.subr.bf16.mxu0 0
    %2605 = vmatpush1.bf16.msra.mxu0 0
    %2606 = vmatprep.subr.bf16.mxu0 0
    %2607 = vmatpush1.bf16.msra.mxu0 0
    %2608 = vmatprep.mubr.bf16.mxu0 0
    %2609 = vmatmul.mubr.bf16.gmra.mrb[0].mxu0 %v2574
    %v2610 = vpop.f32.mrb[0].mxu0
    %v2611 = vadd.f32 0.0, %v2610
    %v2612 = vpop.f32.mrb[0].mxu0
    %v2613 = vadd.f32 0.0, %v2612
    %v2614 = vpop.f32.mrb[0].mxu0
    %v2615 = vpop.f32.mrb[0].mxu0
    %2616 = vdwg.mxu0
    %2617 = vmatprep.subr.bf16.mxu0 %v672
    %2618 = vmatpush1.bf16.msra.mxu0 %v671
    %2619 = vmatprep.subr.bf16.mxu0 %v676
    %2620 = vmatpush1.bf16.msra.mxu0 %v675
    %2621 = vmatprep.subr.bf16.mxu0 %v680
    %2622 = vmatpush1.bf16.msra.mxu0 %v679
    %2623 = vmatprep.subr.bf16.mxu0 %v684
    %2624 = vmatpush1.bf16.msra.mxu0 %v683
    %2625 = vmatprep.subr.bf16.mxu0 %v688
    %2626 = vmatpush1.bf16.msra.mxu0 %v687
    %2627 = vmatprep.subr.bf16.mxu0 %v692
    %2628 = vmatpush1.bf16.msra.mxu0 %v691
    %2629 = vmatprep.subr.bf16.mxu0 %v696
    %2630 = vmatpush1.bf16.msra.mxu0 %v695
    %2631 = vmatprep.subr.bf16.mxu0 %v700
    %2632 = vmatpush1.bf16.msra.mxu0 %v699
    %2633 = vmatprep.subr.bf16.mxu0 0
    %2634 = vmatpush1.bf16.msra.mxu0 0
    %2635 = vmatprep.subr.bf16.mxu0 0
    %2636 = vmatpush1.bf16.msra.mxu0 0
    %2637 = vmatprep.subr.bf16.mxu0 0
    %2638 = vmatpush1.bf16.msra.mxu0 0
    %2639 = vmatprep.subr.bf16.mxu0 0
    %2640 = vmatpush1.bf16.msra.mxu0 0
    %2641 = vmatprep.subr.bf16.mxu0 0
    %2642 = vmatpush1.bf16.msra.mxu0 0
    %2643 = vmatprep.subr.bf16.mxu0 0
    %2644 = vmatpush1.bf16.msra.mxu0 0
    %2645 = vmatprep.subr.bf16.mxu0 0
    %2646 = vmatpush1.bf16.msra.mxu0 0
    %2647 = vmatprep.subr.bf16.mxu0 0
    %2648 = vmatpush1.bf16.msra.mxu0 0
    %2649 = vmatprep.mubr.bf16.mxu0 0
    %2650 = vmatmul.mubr.bf16.gmra.mrb[0].mxu0 %v2574
    %v2651 = vpop.f32.mrb[0].mxu0
    %v2652 = vadd.f32 0.0, %v2651
    %v2653 = vpop.f32.mrb[0].mxu0
    %v2654 = vadd.f32 0.0, %v2653
    %v2655 = vpop.f32.mrb[0].mxu0
    %v2656 = vpop.f32.mrb[0].mxu0
    %2657 = vdwg.mxu0
    %v2662 = vrot.slane %v2611, 5
    %v2663 = vrot.slane %v2613, 5
    %v2664 = vrot.slane %v2652, 5
    %v2665 = vrot.slane %v2654, 5
    %v2666 = vrot.slane %v2611, 6
    %v2667 = vrot.slane %v2613, 6
    %v2668 = vrot.slane %v2652, 6
    %v2669 = vrot.slane %v2654, 6
    %v2678 = vadd.f32 %v522, %v2662
    %v2679 = vadd.f32 %v524, %v2663
    %v2680 = vadd.f32 %v565, %v2664
    %v2681 = vadd.f32 %v567, %v2665
    %v2682 = vadd.f32 %v526, %v2666
    %v2683 = vadd.f32 %v528, %v2667
    %v2684 = vadd.f32 %v569, %v2668
    %v2685 = vadd.f32 %v571, %v2669
    %v2686 = vxor.u32 %v2678, 2147483648
    %v2687 = vxor.u32 %v2679, 2147483648
    %v2688 = vxor.u32 %v2680, 2147483648
    %v2689 = vxor.u32 %v2682, 2147483648
    %v2690 = vxor.u32 %v2683, 2147483648
    %v2691 = vxor.u32 %v2684, 2147483648
    %v2692 = vmul.f32 %v2686, 1.442695
    %v2693 = vpow.pop %v2692
    %v2694 = vmul.f32 %v2687, 1.442695
    %v2695 = vpow.pop %v2694
    %v2696 = vmul.f32 %v2688, 1.442695
    %v2697 = vpow.pop %v2696
    %v2698 = vmul.f32 %v2689, 1.442695
    %v2699 = vpow.pop %v2698
    %v2700 = vmul.f32 %v2690, 1.442695
    %v2701 = vpow.pop %v2700
    %v2702 = vmul.f32 %v2691, 1.442695
    %v2703 = vpow.pop %v2702
    %v2704 = vadd.f32 %v2693, 1.0
    %v2705 = vadd.f32 %v2695, 1.0
    %v2706 = vadd.f32 %v2697, 1.0
    %v2707 = vadd.f32 %v2699, 1.0
    %v2708 = vadd.f32 %v2701, 1.0
    %v2709 = vadd.f32 %v2703, 1.0
    %v2710 = vrcp.pop %v2704
    %v2711 = vmul.f32 1.0, %v2710
    %v2712 = vrcp.pop %v2705
    %v2713 = vmul.f32 1.0, %v2712
    %v2714 = vrcp.pop %v2706
    %v2715 = vmul.f32 1.0, %v2714
    %v2716 = vrcp.pop %v2707
    %v2717 = vmul.f32 1.0, %v2716
    %v2718 = vrcp.pop %v2708
    %v2719 = vmul.f32 1.0, %v2718
    %v2720 = vrcp.pop %v2709
    %v2721 = vmul.f32 1.0, %v2720
    %v2722 = vtanh.pop %v2681
    %v2723 = vtanh.pop %v2685
    %v2726 = vrot.slane %v1738, 7
    %v2727 = vrot.slane %v1739, 7
    %v2730 = vmul.f32 %v2713, %v2726
    %v2731 = vmul.f32 %v2719, %v2727
    %v2732 = vmul.f32 %v2711, %v2722
    %v2733 = vmul.f32 %v2717, %v2723
    %v2734 = vadd.f32 %v2730, %v2732
    %v2735 = vadd.f32 %v2731, %v2733
    %v2736 = vtanh.pop %v2734
    %v2737 = vtanh.pop %v2735
    %v2738 = vmul.f32 %v2715, %v2736
    %v2739 = vmul.f32 %v2721, %v2737
    %v2740 = vpack.c.bf16 %v1936, %v1936
    %2741 = vmatprep.subr.bf16.mxu0 %v1155
    %2742 = vmatpush1.bf16.msra.mxu0 %v1154
    %2743 = vmatprep.subr.bf16.mxu0 %v1159
    %2744 = vmatpush1.bf16.msra.mxu0 %v1158
    %2745 = vmatprep.subr.bf16.mxu0 %v1163
    %2746 = vmatpush1.bf16.msra.mxu0 %v1162
    %2747 = vmatprep.subr.bf16.mxu0 %v1167
    %2748 = vmatpush1.bf16.msra.mxu0 %v1166
    %2749 = vmatprep.subr.bf16.mxu0 %v1171
    %2750 = vmatpush1.bf16.msra.mxu0 %v1170
    %2751 = vmatprep.subr.bf16.mxu0 %v1175
    %2752 = vmatpush1.bf16.msra.mxu0 %v1174
    %2753 = vmatprep.subr.bf16.mxu0 %v1179
    %2754 = vmatpush1.bf16.msra.mxu0 %v1178
    %2755 = vmatprep.subr.bf16.mxu0 %v1183
    %2756 = vmatpush1.bf16.msra.mxu0 %v1182
    %2757 = vmatprep.subr.bf16.mxu0 0
    %2758 = vmatpush1.bf16.msra.mxu0 0
    %2759 = vmatprep.subr.bf16.mxu0 0
    %2760 = vmatpush1.bf16.msra.mxu0 0
    %2761 = vmatprep.subr.bf16.mxu0 0
    %2762 = vmatpush1.bf16.msra.mxu0 0
    %2763 = vmatprep.subr.bf16.mxu0 0
    %2764 = vmatpush1.bf16.msra.mxu0 0
    %2765 = vmatprep.subr.bf16.mxu0 0
    %2766 = vmatpush1.bf16.msra.mxu0 0
    %2767 = vmatprep.subr.bf16.mxu0 0
    %2768 = vmatpush1.bf16.msra.mxu0 0
    %2769 = vmatprep.subr.bf16.mxu0 0
    %2770 = vmatpush1.bf16.msra.mxu0 0
    %2771 = vmatprep.subr.bf16.mxu0 0
    %2772 = vmatpush1.bf16.msra.mxu0 0
    %2773 = vmatprep.mubr.bf16.mxu0 0
    %2774 = vmatmul.mubr.bf16.gmra.mrb[0].mxu0 %v2740
    %v2775 = vpop.f32.mrb[0].mxu0
    %v2776 = vadd.f32 0.0, %v2775
    %v2777 = vpop.f32.mrb[0].mxu0
    %v2778 = vadd.f32 0.0, %v2777
    %v2779 = vpop.f32.mrb[0].mxu0
    %v2780 = vpop.f32.mrb[0].mxu0
    %2781 = vdwg.mxu0
    %2782 = vmatprep.subr.bf16.mxu0 %v1157
    %2783 = vmatpush1.bf16.msra.mxu0 %v1156
    %2784 = vmatprep.subr.bf16.mxu0 %v1161
    %2785 = vmatpush1.bf16.msra.mxu0 %v1160
    %2786 = vmatprep.subr.bf16.mxu0 %v1165
    %2787 = vmatpush1.bf16.msra.mxu0 %v1164
    %2788 = vmatprep.subr.bf16.mxu0 %v1169
    %2789 = vmatpush1.bf16.msra.mxu0 %v1168
    %2790 = vmatprep.subr.bf16.mxu0 %v1173
    %2791 = vmatpush1.bf16.msra.mxu0 %v1172
    %2792 = vmatprep.subr.bf16.mxu0 %v1177
    %2793 = vmatpush1.bf16.msra.mxu0 %v1176
    %2794 = vmatprep.subr.bf16.mxu0 %v1181
    %2795 = vmatpush1.bf16.msra.mxu0 %v1180
    %2796 = vmatprep.subr.bf16.mxu0 %v1185
    %2797 = vmatpush1.bf16.msra.mxu0 %v1184
    %2798 = vmatprep.subr.bf16.mxu0 0
    %2799 = vmatpush1.bf16.msra.mxu0 0
    %2800 = vmatprep.subr.bf16.mxu0 0
    %2801 = vmatpush1.bf16.msra.mxu0 0
    %2802 = vmatprep.subr.bf16.mxu0 0
    %2803 = vmatpush1.bf16.msra.mxu0 0
    %2804 = vmatprep.subr.bf16.mxu0 0
    %2805 = vmatpush1.bf16.msra.mxu0 0
    %2806 = vmatprep.subr.bf16.mxu0 0
    %2807 = vmatpush1.bf16.msra.mxu0 0
    %2808 = vmatprep.subr.bf16.mxu0 0
    %2809 = vmatpush1.bf16.msra.mxu0 0
    %2810 = vmatprep.subr.bf16.mxu0 0
    %2811 = vmatpush1.bf16.msra.mxu0 0
    %2812 = vmatprep.subr.bf16.mxu0 0
    %2813 = vmatpush1.bf16.msra.mxu0 0
    %2814 = vmatprep.mubr.bf16.mxu0 0
    %2815 = vmatmul.mubr.bf16.gmra.mrb[0].mxu0 %v2740
    %v2816 = vpop.f32.mrb[0].mxu0
    %v2817 = vadd.f32 0.0, %v2816
    %v2818 = vpop.f32.mrb[0].mxu0
    %v2819 = vadd.f32 0.0, %v2818
    %v2820 = vpop.f32.mrb[0].mxu0
    %v2821 = vpop.f32.mrb[0].mxu0
    %2822 = vdwg.mxu0
    %2823 = vmatprep.subr.bf16.mxu0 %v1397
    %2824 = vmatpush1.bf16.msra.mxu0 %v1396
    %2825 = vmatprep.subr.bf16.mxu0 %v1401
    %2826 = vmatpush1.bf16.msra.mxu0 %v1400
    %2827 = vmatprep.subr.bf16.mxu0 %v1405
    %2828 = vmatpush1.bf16.msra.mxu0 %v1404
    %2829 = vmatprep.subr.bf16.mxu0 %v1409
    %2830 = vmatpush1.bf16.msra.mxu0 %v1408
    %2831 = vmatprep.subr.bf16.mxu0 %v1413
    %2832 = vmatpush1.bf16.msra.mxu0 %v1412
    %2833 = vmatprep.subr.bf16.mxu0 %v1417
    %2834 = vmatpush1.bf16.msra.mxu0 %v1416
    %2835 = vmatprep.subr.bf16.mxu0 %v1421
    %2836 = vmatpush1.bf16.msra.mxu0 %v1420
    %2837 = vmatprep.subr.bf16.mxu0 %v1425
    %2838 = vmatpush1.bf16.msra.mxu0 %v1424
    %2839 = vmatprep.subr.bf16.mxu0 0
    %2840 = vmatpush1.bf16.msra.mxu0 0
    %2841 = vmatprep.subr.bf16.mxu0 0
    %2842 = vmatpush1.bf16.msra.mxu0 0
    %2843 = vmatprep.subr.bf16.mxu0 0
    %2844 = vmatpush1.bf16.msra.mxu0 0
    %2845 = vmatprep.subr.bf16.mxu0 0
    %2846 = vmatpush1.bf16.msra.mxu0 0
    %2847 = vmatprep.subr.bf16.mxu0 0
    %2848 = vmatpush1.bf16.msra.mxu0 0
    %2849 = vmatprep.subr.bf16.mxu0 0
    %2850 = vmatpush1.bf16.msra.mxu0 0
    %2851 = vmatprep.subr.bf16.mxu0 0
    %2852 = vmatpush1.bf16.msra.mxu0 0
    %2853 = vmatprep.subr.bf16.mxu0 0
    %2854 = vmatpush1.bf16.msra.mxu0 0
    %2855 = vmatprep.mubr.bf16.mxu0 0
    %2856 = vmatmul.mubr.bf16.gmra.mrb[0].mxu0 %v2574
    %v2857 = vpop.f32.mrb[0].mxu0
    %v2858 = vadd.f32 %v2776, %v2857
    %v2859 = vpop.f32.mrb[0].mxu0
    %v2860 = vadd.f32 %v2778, %v2859
    %v2861 = vpop.f32.mrb[0].mxu0
    %v2862 = vpop.f32.mrb[0].mxu0
    %2863 = vdwg.mxu0
    %2864 = vmatprep.subr.bf16.mxu0 %v1399
    %2865 = vmatpush1.bf16.msra.mxu0 %v1398
    %2866 = vmatprep.subr.bf16.mxu0 %v1403
    %2867 = vmatpush1.bf16.msra.mxu0 %v1402
    %2868 = vmatprep.subr.bf16.mxu0 %v1407
    %2869 = vmatpush1.bf16.msra.mxu0 %v1406
    %2870 = vmatprep.subr.bf16.mxu0 %v1411
    %2871 = vmatpush1.bf16.msra.mxu0 %v1410
    %2872 = vmatprep.subr.bf16.mxu0 %v1415
    %2873 = vmatpush1.bf16.msra.mxu0 %v1414
    %2874 = vmatprep.subr.bf16.mxu0 %v1419
    %2875 = vmatpush1.bf16.msra.mxu0 %v1418
    %2876 = vmatprep.subr.bf16.mxu0 %v1423
    %2877 = vmatpush1.bf16.msra.mxu0 %v1422
    %2878 = vmatprep.subr.bf16.mxu0 %v1427
    %2879 = vmatpush1.bf16.msra.mxu0 %v1426
    %2880 = vmatprep.subr.bf16.mxu0 0
    %2881 = vmatpush1.bf16.msra.mxu0 0
    %2882 = vmatprep.subr.bf16.mxu0 0
    %2883 = vmatpush1.bf16.msra.mxu0 0
    %2884 = vmatprep.subr.bf16.mxu0 0
    %2885 = vmatpush1.bf16.msra.mxu0 0
    %2886 = vmatprep.subr.bf16.mxu0 0
    %2887 = vmatpush1.bf16.msra.mxu0 0
    %2888 = vmatprep.subr.bf16.mxu0 0
    %2889 = vmatpush1.bf16.msra.mxu0 0
    %2890 = vmatprep.subr.bf16.mxu0 0
    %2891 = vmatpush1.bf16.msra.mxu0 0
    %2892 = vmatprep.subr.bf16.mxu0 0
    %2893 = vmatpush1.bf16.msra.mxu0 0
    %2894 = vmatprep.subr.bf16.mxu0 0
    %2895 = vmatpush1.bf16.msra.mxu0 0
    %2896 = vmatprep.mubr.bf16.mxu0 0
    %2897 = vmatmul.mubr.bf16.gmra.mrb[0].mxu0 %v2574
    %v2898 = vpop.f32.mrb[0].mxu0
    %v2899 = vadd.f32 %v2817, %v2898
    %v2900 = vpop.f32.mrb[0].mxu0
    %v2901 = vadd.f32 %v2819, %v2900
    %v2902 = vpop.f32.mrb[0].mxu0
    %v2903 = vpop.f32.mrb[0].mxu0
    %2904 = vdwg.mxu0
    %v2905 = vadd.f32 %v2858, %v224
    %v2906 = vadd.f32 %v2860, %v228
    %v2907 = vadd.f32 %v2899, %v232
    %v2908 = vadd.f32 %v2901, %v236
    %v2909 = vxor.u32 %v2905, 2147483648
    %v2910 = vxor.u32 %v2906, 2147483648
    %v2911 = vxor.u32 %v2907, 2147483648
    %v2912 = vmul.f32 %v2909, 1.442695
    %v2913 = vpow.pop %v2912
    %v2914 = vmul.f32 %v2910, 1.442695
    %v2915 = vpow.pop %v2914
    %v2916 = vmul.f32 %v2911, 1.442695
    %v2917 = vpow.pop %v2916
    %v2918 = vadd.f32 %v2913, 1.0
    %v2919 = vadd.f32 %v2915, 1.0
    %v2920 = vadd.f32 %v2917, 1.0
    %v2921 = vrcp.pop %v2918
    %v2922 = vmul.f32 1.0, %v2921
    %v2923 = vrcp.pop %v2919
    %v2924 = vmul.f32 1.0, %v2923
    %v2925 = vrcp.pop %v2920
    %v2926 = vmul.f32 1.0, %v2925
    %v2927 = vtanh.pop %v2908
    %v2928 = vmul.f32 %v2924, %v1934
    %v2929 = vmul.f32 %v2922, %v2927
    %v2930 = vadd.f32 %v2928, %v2929
    %v2931 = vtanh.pop %v2930
    %v2932 = vmul.f32 %v2926, %v2931
    %2933 = vmatprep.subr.bf16.mxu0 %v2034
    %2934 = vmatpush1.bf16.msra.mxu0 %v2033
    %2935 = vmatprep.subr.bf16.mxu0 %v2038
    %2936 = vmatpush1.bf16.msra.mxu0 %v2037
    %2937 = vmatprep.subr.bf16.mxu0 %v2042
    %2938 = vmatpush1.bf16.msra.mxu0 %v2041
    %2939 = vmatprep.subr.bf16.mxu0 %v2046
    %2940 = vmatpush1.bf16.msra.mxu0 %v2045
    %2941 = vmatprep.subr.bf16.mxu0 %v2050
    %2942 = vmatpush1.bf16.msra.mxu0 %v2049
    %2943 = vmatprep.subr.bf16.mxu0 %v2054
    %2944 = vmatpush1.bf16.msra.mxu0 %v2053
    %2945 = vmatprep.subr.bf16.mxu0 %v2058
    %2946 = vmatpush1.bf16.msra.mxu0 %v2057
    %2947 = vmatprep.subr.bf16.mxu0 %v2062
    %2948 = vmatpush1.bf16.msra.mxu0 %v2061
    %2949 = vmatprep.subr.bf16.mxu0 0
    %2950 = vmatpush1.bf16.msra.mxu0 0
    %2951 = vmatprep.subr.bf16.mxu0 0
    %2952 = vmatpush1.bf16.msra.mxu0 0
    %2953 = vmatprep.subr.bf16.mxu0 0
    %2954 = vmatpush1.bf16.msra.mxu0 0
    %2955 = vmatprep.subr.bf16.mxu0 0
    %2956 = vmatpush1.bf16.msra.mxu0 0
    %2957 = vmatprep.subr.bf16.mxu0 0
    %2958 = vmatpush1.bf16.msra.mxu0 0
    %2959 = vmatprep.subr.bf16.mxu0 0
    %2960 = vmatpush1.bf16.msra.mxu0 0
    %2961 = vmatprep.subr.bf16.mxu0 0
    %2962 = vmatpush1.bf16.msra.mxu0 0
    %2963 = vmatprep.subr.bf16.mxu0 0
    %2964 = vmatpush1.bf16.msra.mxu0 0
    %2965 = vmatprep.mubr.bf16.mxu0 0
    %2966 = vmatmul.mubr.bf16.gmra.mrb[0].mxu0 %v2449
    %v2967 = vpop.f32.mrb[0].mxu0
    %v2968 = vadd.f32 0.0, %v2967
    %v2969 = vpop.f32.mrb[0].mxu0
    %v2970 = vadd.f32 0.0, %v2969
    %v2971 = vpop.f32.mrb[0].mxu0
    %v2972 = vpop.f32.mrb[0].mxu0
    %2973 = vdwg.mxu0
    %2974 = vmatprep.subr.bf16.mxu0 %v2036
    %2975 = vmatpush1.bf16.msra.mxu0 %v2035
    %2976 = vmatprep.subr.bf16.mxu0 %v2040
    %2977 = vmatpush1.bf16.msra.mxu0 %v2039
    %2978 = vmatprep.subr.bf16.mxu0 %v2044
    %2979 = vmatpush1.bf16.msra.mxu0 %v2043
    %2980 = vmatprep.subr.bf16.mxu0 %v2048
    %2981 = vmatpush1.bf16.msra.mxu0 %v2047
    %2982 = vmatprep.subr.bf16.mxu0 %v2052
    %2983 = vmatpush1.bf16.msra.mxu0 %v2051
    %2984 = vmatprep.subr.bf16.mxu0 %v2056
    %2985 = vmatpush1.bf16.msra.mxu0 %v2055
    %2986 = vmatprep.subr.bf16.mxu0 %v2060
    %2987 = vmatpush1.bf16.msra.mxu0 %v2059
    %2988 = vmatprep.subr.bf16.mxu0 %v2064
    %2989 = vmatpush1.bf16.msra.mxu0 %v2063
    %2990 = vmatprep.subr.bf16.mxu0 0
    %2991 = vmatpush1.bf16.msra.mxu0 0
    %2992 = vmatprep.subr.bf16.mxu0 0
    %2993 = vmatpush1.bf16.msra.mxu0 0
    %2994 = vmatprep.subr.bf16.mxu0 0
    %2995 = vmatpush1.bf16.msra.mxu0 0
    %2996 = vmatprep.subr.bf16.mxu0 0
    %2997 = vmatpush1.bf16.msra.mxu0 0
    %2998 = vmatprep.subr.bf16.mxu0 0
    %2999 = vmatpush1.bf16.msra.mxu0 0
    %3000 = vmatprep.subr.bf16.mxu0 0
    %3001 = vmatpush1.bf16.msra.mxu0 0
    %3002 = vmatprep.subr.bf16.mxu0 0
    %3003 = vmatpush1.bf16.msra.mxu0 0
    %3004 = vmatprep.subr.bf16.mxu0 0
    %3005 = vmatpush1.bf16.msra.mxu0 0
    %3006 = vmatprep.mubr.bf16.mxu0 0
    %3007 = vmatmul.mubr.bf16.gmra.mrb[0].mxu0 %v2449
    %v3008 = vpop.f32.mrb[0].mxu0
    %v3009 = vadd.f32 0.0, %v3008
    %v3010 = vpop.f32.mrb[0].mxu0
    %v3011 = vadd.f32 0.0, %v3010
    %v3012 = vpop.f32.mrb[0].mxu0
    %v3013 = vpop.f32.mrb[0].mxu0
    %3014 = vdwg.mxu0
    %3015 = vmatprep.subr.bf16.mxu0 %v2276
    %3016 = vmatpush1.bf16.msra.mxu0 %v2275
    %3017 = vmatprep.subr.bf16.mxu0 %v2280
    %3018 = vmatpush1.bf16.msra.mxu0 %v2279
    %3019 = vmatprep.subr.bf16.mxu0 %v2284
    %3020 = vmatpush1.bf16.msra.mxu0 %v2283
    %3021 = vmatprep.subr.bf16.mxu0 %v2288
    %3022 = vmatpush1.bf16.msra.mxu0 %v2287
    %3023 = vmatprep.subr.bf16.mxu0 %v2292
    %3024 = vmatpush1.bf16.msra.mxu0 %v2291
    %3025 = vmatprep.subr.bf16.mxu0 %v2296
    %3026 = vmatpush1.bf16.msra.mxu0 %v2295
    %3027 = vmatprep.subr.bf16.mxu0 %v2300
    %3028 = vmatpush1.bf16.msra.mxu0 %v2299
    %3029 = vmatprep.subr.bf16.mxu0 %v2304
    %3030 = vmatpush1.bf16.msra.mxu0 %v2303
    %3031 = vmatprep.subr.bf16.mxu0 0
    %3032 = vmatpush1.bf16.msra.mxu0 0
    %3033 = vmatprep.subr.bf16.mxu0 0
    %3034 = vmatpush1.bf16.msra.mxu0 0
    %3035 = vmatprep.subr.bf16.mxu0 0
    %3036 = vmatpush1.bf16.msra.mxu0 0
    %3037 = vmatprep.subr.bf16.mxu0 0
    %3038 = vmatpush1.bf16.msra.mxu0 0
    %3039 = vmatprep.subr.bf16.mxu0 0
    %3040 = vmatpush1.bf16.msra.mxu0 0
    %3041 = vmatprep.subr.bf16.mxu0 0
    %3042 = vmatpush1.bf16.msra.mxu0 0
    %3043 = vmatprep.subr.bf16.mxu0 0
    %3044 = vmatpush1.bf16.msra.mxu0 0
    %3045 = vmatprep.subr.bf16.mxu0 0
    %3046 = vmatpush1.bf16.msra.mxu0 0
    %3047 = vmatprep.mubr.bf16.mxu0 0
    %3048 = vmatmul.mubr.bf16.gmra.mrb[0].mxu0 %v2740
    %v3049 = vpop.f32.mrb[0].mxu0
    %v3050 = vadd.f32 %v2968, %v3049
    %v3051 = vpop.f32.mrb[0].mxu0
    %v3052 = vadd.f32 %v2970, %v3051
    %v3053 = vpop.f32.mrb[0].mxu0
    %v3054 = vpop.f32.mrb[0].mxu0
    %3055 = vdwg.mxu0
    %3056 = vmatprep.subr.bf16.mxu0 %v2278
    %3057 = vmatpush1.bf16.msra.mxu0 %v2277
    %3058 = vmatprep.subr.bf16.mxu0 %v2282
    %3059 = vmatpush1.bf16.msra.mxu0 %v2281
    %3060 = vmatprep.subr.bf16.mxu0 %v2286
    %3061 = vmatpush1.bf16.msra.mxu0 %v2285
    %3062 = vmatprep.subr.bf16.mxu0 %v2290
    %3063 = vmatpush1.bf16.msra.mxu0 %v2289
    %3064 = vmatprep.subr.bf16.mxu0 %v2294
    %3065 = vmatpush1.bf16.msra.mxu0 %v2293
    %3066 = vmatprep.subr.bf16.mxu0 %v2298
    %3067 = vmatpush1.bf16.msra.mxu0 %v2297
    %3068 = vmatprep.subr.bf16.mxu0 %v2302
    %3069 = vmatpush1.bf16.msra.mxu0 %v2301
    %3070 = vmatprep.subr.bf16.mxu0 %v2306
    %3071 = vmatpush1.bf16.msra.mxu0 %v2305
    %3072 = vmatprep.subr.bf16.mxu0 0
    %3073 = vmatpush1.bf16.msra.mxu0 0
    %3074 = vmatprep.subr.bf16.mxu0 0
    %3075 = vmatpush1.bf16.msra.mxu0 0
    %3076 = vmatprep.subr.bf16.mxu0 0
    %3077 = vmatpush1.bf16.msra.mxu0 0
    %3078 = vmatprep.subr.bf16.mxu0 0
    %3079 = vmatpush1.bf16.msra.mxu0 0
    %3080 = vmatprep.subr.bf16.mxu0 0
    %3081 = vmatpush1.bf16.msra.mxu0 0
    %3082 = vmatprep.subr.bf16.mxu0 0
    %3083 = vmatpush1.bf16.msra.mxu0 0
    %3084 = vmatprep.subr.bf16.mxu0 0
    %3085 = vmatpush1.bf16.msra.mxu0 0
    %3086 = vmatprep.subr.bf16.mxu0 0
    %3087 = vmatpush1.bf16.msra.mxu0 0
    %3088 = vmatprep.mubr.bf16.mxu0 0
    %3089 = vmatmul.mubr.bf16.gmra.mrb[0].mxu0 %v2740
    %v3090 = vpop.f32.mrb[0].mxu0
    %v3091 = vadd.f32 %v3009, %v3090
    %v3092 = vpop.f32.mrb[0].mxu0
    %v3093 = vadd.f32 %v3011, %v3092
    %v3094 = vpop.f32.mrb[0].mxu0
    %v3095 = vpop.f32.mrb[0].mxu0
    %3096 = vdwg.mxu0
    %v3097 = vadd.f32 %v3050, %v246
    %v3098 = vadd.f32 %v3052, %v250
    %v3099 = vadd.f32 %v3091, %v254
    %v3100 = vadd.f32 %v3093, %v258
    %v3101 = vxor.u32 %v3097, 2147483648
    %v3102 = vxor.u32 %v3098, 2147483648
    %v3103 = vxor.u32 %v3099, 2147483648
    %v3104 = vmul.f32 %v3101, 1.442695
    %v3105 = vpow.pop %v3104
    %v3106 = vmul.f32 %v3102, 1.442695
    %v3107 = vpow.pop %v3106
    %v3108 = vmul.f32 %v3103, 1.442695
    %v3109 = vpow.pop %v3108
    %v3110 = vadd.f32 %v3105, 1.0
    %v3111 = vadd.f32 %v3107, 1.0
    %v3112 = vadd.f32 %v3109, 1.0
    %v3113 = vrcp.pop %v3110
    %v3114 = vmul.f32 1.0, %v3113
    %v3115 = vrcp.pop %v3111
    %v3116 = vmul.f32 1.0, %v3115
    %v3117 = vrcp.pop %v3112
    %v3118 = vmul.f32 1.0, %v3117
    %v3119 = vtanh.pop %v3100
    %v3120 = vmul.f32 %v3116, %v2446
    %v3121 = vmul.f32 %v3114, %v3119
    %v3122 = vadd.f32 %v3120, %v3121
    %v3123 = vtanh.pop %v3122
    %v3124 = vmul.f32 %v3118, %v3123
    %v3125 = vpack.c.bf16 %v3124, %v3124
    %3126 = vmatprep.subr.bf16.mxu0 0
    %3127 = vmatpush1.bf16.msra.mxu0 %v2482
    %3128 = vmatprep.subr.bf16.mxu0 0
    %3129 = vmatpush1.bf16.msra.mxu0 %v2483
    %3130 = vmatprep.subr.bf16.mxu0 0
    %3131 = vmatpush1.bf16.msra.mxu0 %v2484
    %3132 = vmatprep.subr.bf16.mxu0 0
    %3133 = vmatpush1.bf16.msra.mxu0 %v2485
    %3134 = vmatprep.subr.bf16.mxu0 0
    %3135 = vmatpush1.bf16.msra.mxu0 %v2486
    %3136 = vmatprep.subr.bf16.mxu0 0
    %3137 = vmatpush1.bf16.msra.mxu0 %v2487
    %3138 = vmatprep.subr.bf16.mxu0 0
    %3139 = vmatpush1.bf16.msra.mxu0 %v2488
    %3140 = vmatprep.subr.bf16.mxu0 0
    %3141 = vmatpush1.bf16.msra.mxu0 %v2489
    %3142 = vmatprep.subr.bf16.mxu0 0
    %3143 = vmatpush1.bf16.msra.mxu0 0
    %3144 = vmatprep.subr.bf16.mxu0 0
    %3145 = vmatpush1.bf16.msra.mxu0 0
    %3146 = vmatprep.subr.bf16.mxu0 0
    %3147 = vmatpush1.bf16.msra.mxu0 0
    %3148 = vmatprep.subr.bf16.mxu0 0
    %3149 = vmatpush1.bf16.msra.mxu0 0
    %3150 = vmatprep.subr.bf16.mxu0 0
    %3151 = vmatpush1.bf16.msra.mxu0 0
    %3152 = vmatprep.subr.bf16.mxu0 0
    %3153 = vmatpush1.bf16.msra.mxu0 0
    %3154 = vmatprep.subr.bf16.mxu0 0
    %3155 = vmatpush1.bf16.msra.mxu0 0
    %3156 = vmatprep.subr.bf16.mxu0 0
    %3157 = vmatpush1.bf16.msra.mxu0 0
    %3158 = vmatprep.mubr.bf16.mxu0 0
    %3159 = vmatmul.mubr.bf16.gmra.mrb[0].mxu0 %v3125
    %v3160 = vpop.f32.mrb[0].mxu0
    %v3161 = vadd.f32 %v268, %v3160
    %v3162 = vpop.f32.mrb[0].mxu0
    %v3163 = vpop.f32.mrb[0].mxu0
    %v3164 = vpop.f32.mrb[0].mxu0
    %3165 = vdwg.mxu0
    %v3168 = vunpack.c.l.s4 1966171168
    %v3169 = vunpack.c.0.s8 %v3168
    %v3170 = vlaneseq
    %v3171 = vshrl.u32 %v3170, 7
    %v3172 = vsub.s32 %v3169, %v3171
    %v3173 = vrot.slane %v3161, %v3172
    %v3174 = vcombine.high %v3173, %v3173
    %v3176 = vunpack.c.l.s4 1966171168
    %v3177 = vunpack.c.0.s8 %v3176
    %v3178 = vlaneseq
    %v3179 = vshrl.u32 %v3178, 7
    %v3180 = vsub.s32 %v3177, %v3179
    %v3181 = vrot.slane %v3173, %v3180
    %v3183 = vunpack.c.l.s4 1966171168
    %v3184 = vunpack.c.0.s8 %v3183
    %v3185 = vlaneseq
    %v3186 = vshrl.u32 %v3185, 7
    %v3187 = vsub.s32 %v3184, %v3186
    %v3188 = vrot.slane %v3174, %v3187
    %3191 = vst [vmem:[#allocation2 + $0x1] sm:$0x1] %v3181
    %3192 = vst [vmem:[#allocation2 + $0x9] sm:$0x1] %v3188
    %v3193 = vpack.c.bf16 %v2738, %v2738
    %v3194 = vpack.c.bf16 %v2739, %v2739
    %v3197 = vunpack.c.l.b16 %v3193
    %v3198 = vunpack.c.l.b16 %v3194
    %v3199 = vrot.slane %v3197, 3
    %v3200 = vrot.slane %v3198, 2
    %v3201 = vsel %vm894, %v3200, %v3199
    %v3202 = vpack.c.b16 %v3201, %v3201
    %3204 = vmatprep.subr.bf16.mxu0 %v670
    %3205 = vmatpush1.bf16.msra.mxu0 %v669
    %3206 = vmatprep.subr.bf16.mxu0 %v674
    %3207 = vmatpush1.bf16.msra.mxu0 %v673
    %3208 = vmatprep.subr.bf16.mxu0 %v678
    %3209 = vmatpush1.bf16.msra.mxu0 %v677
    %3210 = vmatprep.subr.bf16.mxu0 %v682
    %3211 = vmatpush1.bf16.msra.mxu0 %v681
    %3212 = vmatprep.subr.bf16.mxu0 %v686
    %3213 = vmatpush1.bf16.msra.mxu0 %v685
    %3214 = vmatprep.subr.bf16.mxu0 %v690
    %3215 = vmatpush1.bf16.msra.mxu0 %v689
    %3216 = vmatprep.subr.bf16.mxu0 %v694
    %3217 = vmatpush1.bf16.msra.mxu0 %v693
    %3218 = vmatprep.subr.bf16.mxu0 %v698
    %3219 = vmatpush1.bf16.msra.mxu0 %v697
    %3220 = vmatprep.subr.bf16.mxu0 0
    %3221 = vmatpush1.bf16.msra.mxu0 0
    %3222 = vmatprep.subr.bf16.mxu0 0
    %3223 = vmatpush1.bf16.msra.mxu0 0
    %3224 = vmatprep.subr.bf16.mxu0 0
    %3225 = vmatpush1.bf16.msra.mxu0 0
    %3226 = vmatprep.subr.bf16.mxu0 0
    %3227 = vmatpush1.bf16.msra.mxu0 0
    %3228 = vmatprep.subr.bf16.mxu0 0
    %3229 = vmatpush1.bf16.msra.mxu0 0
    %3230 = vmatprep.subr.bf16.mxu0 0
    %3231 = vmatpush1.bf16.msra.mxu0 0
    %3232 = vmatprep.subr.bf16.mxu0 0
    %3233 = vmatpush1.bf16.msra.mxu0 0
    %3234 = vmatprep.subr.bf16.mxu0 0
    %3235 = vmatpush1.bf16.msra.mxu0 0
    %3236 = vmatprep.mubr.bf16.mxu0 0
    %3237 = vmatmul.mubr.bf16.gmra.mrb[0].mxu0 %v3202
    %v3238 = vpop.f32.mrb[0].mxu0
    %v3239 = vadd.f32 0.0, %v3238
    %v3240 = vpop.f32.mrb[0].mxu0
    %v3241 = vadd.f32 0.0, %v3240
    %v3242 = vpop.f32.mrb[0].mxu0
    %v3243 = vpop.f32.mrb[0].mxu0
    %3244 = vdwg.mxu0
    %3245 = vmatprep.subr.bf16.mxu0 %v672
    %3246 = vmatpush1.bf16.msra.mxu0 %v671
    %3247 = vmatprep.subr.bf16.mxu0 %v676
    %3248 = vmatpush1.bf16.msra.mxu0 %v675
    %3249 = vmatprep.subr.bf16.mxu0 %v680
    %3250 = vmatpush1.bf16.msra.mxu0 %v679
    %3251 = vmatprep.subr.bf16.mxu0 %v684
    %3252 = vmatpush1.bf16.msra.mxu0 %v683
    %3253 = vmatprep.subr.bf16.mxu0 %v688
    %3254 = vmatpush1.bf16.msra.mxu0 %v687
    %3255 = vmatprep.subr.bf16.mxu0 %v692
    %3256 = vmatpush1.bf16.msra.mxu0 %v691
    %3257 = vmatprep.subr.bf16.mxu0 %v696
    %3258 = vmatpush1.bf16.msra.mxu0 %v695
    %3259 = vmatprep.subr.bf16.mxu0 %v700
    %3260 = vmatpush1.bf16.msra.mxu0 %v699
    %3261 = vmatprep.subr.bf16.mxu0 0
    %3262 = vmatpush1.bf16.msra.mxu0 0
    %3263 = vmatprep.subr.bf16.mxu0 0
    %3264 = vmatpush1.bf16.msra.mxu0 0
    %3265 = vmatprep.subr.bf16.mxu0 0
    %3266 = vmatpush1.bf16.msra.mxu0 0
    %3267 = vmatprep.subr.bf16.mxu0 0
    %3268 = vmatpush1.bf16.msra.mxu0 0
    %3269 = vmatprep.subr.bf16.mxu0 0
    %3270 = vmatpush1.bf16.msra.mxu0 0
    %3271 = vmatprep.subr.bf16.mxu0 0
    %3272 = vmatpush1.bf16.msra.mxu0 0
    %3273 = vmatprep.subr.bf16.mxu0 0
    %3274 = vmatpush1.bf16.msra.mxu0 0
    %3275 = vmatprep.subr.bf16.mxu0 0
    %3276 = vmatpush1.bf16.msra.mxu0 0
    %3277 = vmatprep.mubr.bf16.mxu0 0
    %3278 = vmatmul.mubr.bf16.gmra.mrb[0].mxu0 %v3202
    %v3279 = vpop.f32.mrb[0].mxu0
    %v3280 = vadd.f32 0.0, %v3279
    %v3281 = vpop.f32.mrb[0].mxu0
    %v3282 = vadd.f32 0.0, %v3281
    %v3283 = vpop.f32.mrb[0].mxu0
    %v3284 = vpop.f32.mrb[0].mxu0
    %3285 = vdwg.mxu0
    %v3290 = vrot.slane %v3239, 4
    %v3291 = vrot.slane %v3241, 4
    %v3292 = vrot.slane %v3280, 4
    %v3293 = vrot.slane %v3282, 4
    %v3294 = vrot.slane %v3239, 5
    %v3295 = vrot.slane %v3241, 5
    %v3296 = vrot.slane %v3280, 5
    %v3297 = vrot.slane %v3282, 5
    %v3306 = vadd.f32 %v522, %v3290
    %v3307 = vadd.f32 %v524, %v3291
    %v3308 = vadd.f32 %v565, %v3292
    %v3309 = vadd.f32 %v567, %v3293
    %v3310 = vadd.f32 %v526, %v3294
    %v3311 = vadd.f32 %v528, %v3295
    %v3312 = vadd.f32 %v569, %v3296
    %v3313 = vadd.f32 %v571, %v3297
    %v3314 = vxor.u32 %v3306, 2147483648
    %v3315 = vxor.u32 %v3307, 2147483648
    %v3316 = vxor.u32 %v3308, 2147483648
    %v3317 = vxor.u32 %v3310, 2147483648
    %v3318 = vxor.u32 %v3311, 2147483648
    %v3319 = vxor.u32 %v3312, 2147483648
    %v3320 = vmul.f32 %v3314, 1.442695
    %v3321 = vpow.pop %v3320
    %v3322 = vmul.f32 %v3315, 1.442695
    %v3323 = vpow.pop %v3322
    %v3324 = vmul.f32 %v3316, 1.442695
    %v3325 = vpow.pop %v3324
    %v3326 = vmul.f32 %v3317, 1.442695
    %v3327 = vpow.pop %v3326
    %v3328 = vmul.f32 %v3318, 1.442695
    %v3329 = vpow.pop %v3328
    %v3330 = vmul.f32 %v3319, 1.442695
    %v3331 = vpow.pop %v3330
    %v3332 = vadd.f32 %v3321, 1.0
    %v3333 = vadd.f32 %v3323, 1.0
    %v3334 = vadd.f32 %v3325, 1.0
    %v3335 = vadd.f32 %v3327, 1.0
    %v3336 = vadd.f32 %v3329, 1.0
    %v3337 = vadd.f32 %v3331, 1.0
    %v3338 = vrcp.pop %v3332
    %v3339 = vmul.f32 1.0, %v3338
    %v3340 = vrcp.pop %v3333
    %v3341 = vmul.f32 1.0, %v3340
    %v3342 = vrcp.pop %v3334
    %v3343 = vmul.f32 1.0, %v3342
    %v3344 = vrcp.pop %v3335
    %v3345 = vmul.f32 1.0, %v3344
    %v3346 = vrcp.pop %v3336
    %v3347 = vmul.f32 1.0, %v3346
    %v3348 = vrcp.pop %v3337
    %v3349 = vmul.f32 1.0, %v3348
    %v3350 = vtanh.pop %v3309
    %v3351 = vtanh.pop %v3313
    %v3354 = vrot.slane %v2734, 7
    %v3355 = vrot.slane %v2735, 7
    %v3358 = vmul.f32 %v3341, %v3354
    %v3359 = vmul.f32 %v3347, %v3355
    %v3360 = vmul.f32 %v3339, %v3350
    %v3361 = vmul.f32 %v3345, %v3351
    %v3362 = vadd.f32 %v3358, %v3360
    %v3363 = vadd.f32 %v3359, %v3361
    %v3364 = vtanh.pop %v3362
    %v3365 = vtanh.pop %v3363
    %v3366 = vmul.f32 %v3343, %v3364
    %v3367 = vmul.f32 %v3349, %v3365
    %v3368 = vpack.c.bf16 %v2932, %v2932
    %3369 = vmatprep.subr.bf16.mxu0 %v1155
    %3370 = vmatpush1.bf16.msra.mxu0 %v1154
    %3371 = vmatprep.subr.bf16.mxu0 %v1159
    %3372 = vmatpush1.bf16.msra.mxu0 %v1158
    %3373 = vmatprep.subr.bf16.mxu0 %v1163
    %3374 = vmatpush1.bf16.msra.mxu0 %v1162
    %3375 = vmatprep.subr.bf16.mxu0 %v1167
    %3376 = vmatpush1.bf16.msra.mxu0 %v1166
    %3377 = vmatprep.subr.bf16.mxu0 %v1171
    %3378 = vmatpush1.bf16.msra.mxu0 %v1170
    %3379 = vmatprep.subr.bf16.mxu0 %v1175
    %3380 = vmatpush1.bf16.msra.mxu0 %v1174
    %3381 = vmatprep.subr.bf16.mxu0 %v1179
    %3382 = vmatpush1.bf16.msra.mxu0 %v1178
    %3383 = vmatprep.subr.bf16.mxu0 %v1183
    %3384 = vmatpush1.bf16.msra.mxu0 %v1182
    %3385 = vmatprep.subr.bf16.mxu0 0
    %3386 = vmatpush1.bf16.msra.mxu0 0
    %3387 = vmatprep.subr.bf16.mxu0 0
    %3388 = vmatpush1.bf16.msra.mxu0 0
    %3389 = vmatprep.subr.bf16.mxu0 0
    %3390 = vmatpush1.bf16.msra.mxu0 0
    %3391 = vmatprep.subr.bf16.mxu0 0
    %3392 = vmatpush1.bf16.msra.mxu0 0
    %3393 = vmatprep.subr.bf16.mxu0 0
    %3394 = vmatpush1.bf16.msra.mxu0 0
    %3395 = vmatprep.subr.bf16.mxu0 0
    %3396 = vmatpush1.bf16.msra.mxu0 0
    %3397 = vmatprep.subr.bf16.mxu0 0
    %3398 = vmatpush1.bf16.msra.mxu0 0
    %3399 = vmatprep.subr.bf16.mxu0 0
    %3400 = vmatpush1.bf16.msra.mxu0 0
    %3401 = vmatprep.mubr.bf16.mxu0 0
    %3402 = vmatmul.mubr.bf16.gmra.mrb[0].mxu0 %v3368
    %v3403 = vpop.f32.mrb[0].mxu0
    %v3404 = vadd.f32 0.0, %v3403
    %v3405 = vpop.f32.mrb[0].mxu0
    %v3406 = vadd.f32 0.0, %v3405
    %v3407 = vpop.f32.mrb[0].mxu0
    %v3408 = vpop.f32.mrb[0].mxu0
    %3409 = vdwg.mxu0
    %3410 = vmatprep.subr.bf16.mxu0 %v1157
    %3411 = vmatpush1.bf16.msra.mxu0 %v1156
    %3412 = vmatprep.subr.bf16.mxu0 %v1161
    %3413 = vmatpush1.bf16.msra.mxu0 %v1160
    %3414 = vmatprep.subr.bf16.mxu0 %v1165
    %3415 = vmatpush1.bf16.msra.mxu0 %v1164
    %3416 = vmatprep.subr.bf16.mxu0 %v1169
    %3417 = vmatpush1.bf16.msra.mxu0 %v1168
    %3418 = vmatprep.subr.bf16.mxu0 %v1173
    %3419 = vmatpush1.bf16.msra.mxu0 %v1172
    %3420 = vmatprep.subr.bf16.mxu0 %v1177
    %3421 = vmatpush1.bf16.msra.mxu0 %v1176
    %3422 = vmatprep.subr.bf16.mxu0 %v1181
    %3423 = vmatpush1.bf16.msra.mxu0 %v1180
    %3424 = vmatprep.subr.bf16.mxu0 %v1185
    %3425 = vmatpush1.bf16.msra.mxu0 %v1184
    %3426 = vmatprep.subr.bf16.mxu0 0
    %3427 = vmatpush1.bf16.msra.mxu0 0
    %3428 = vmatprep.subr.bf16.mxu0 0
    %3429 = vmatpush1.bf16.msra.mxu0 0
    %3430 = vmatprep.subr.bf16.mxu0 0
    %3431 = vmatpush1.bf16.msra.mxu0 0
    %3432 = vmatprep.subr.bf16.mxu0 0
    %3433 = vmatpush1.bf16.msra.mxu0 0
    %3434 = vmatprep.subr.bf16.mxu0 0
    %3435 = vmatpush1.bf16.msra.mxu0 0
    %3436 = vmatprep.subr.bf16.mxu0 0
    %3437 = vmatpush1.bf16.msra.mxu0 0
    %3438 = vmatprep.subr.bf16.mxu0 0
    %3439 = vmatpush1.bf16.msra.mxu0 0
    %3440 = vmatprep.subr.bf16.mxu0 0
    %3441 = vmatpush1.bf16.msra.mxu0 0
    %3442 = vmatprep.mubr.bf16.mxu0 0
    %3443 = vmatmul.mubr.bf16.gmra.mrb[0].mxu0 %v3368
    %v3444 = vpop.f32.mrb[0].mxu0
    %v3445 = vadd.f32 0.0, %v3444
    %v3446 = vpop.f32.mrb[0].mxu0
    %v3447 = vadd.f32 0.0, %v3446
    %v3448 = vpop.f32.mrb[0].mxu0
    %v3449 = vpop.f32.mrb[0].mxu0
    %3450 = vdwg.mxu0
    %3451 = vmatprep.subr.bf16.mxu0 %v1397
    %3452 = vmatpush1.bf16.msra.mxu0 %v1396
    %3453 = vmatprep.subr.bf16.mxu0 %v1401
    %3454 = vmatpush1.bf16.msra.mxu0 %v1400
    %3455 = vmatprep.subr.bf16.mxu0 %v1405
    %3456 = vmatpush1.bf16.msra.mxu0 %v1404
    %3457 = vmatprep.subr.bf16.mxu0 %v1409
    %3458 = vmatpush1.bf16.msra.mxu0 %v1408
    %3459 = vmatprep.subr.bf16.mxu0 %v1413
    %3460 = vmatpush1.bf16.msra.mxu0 %v1412
    %3461 = vmatprep.subr.bf16.mxu0 %v1417
    %3462 = vmatpush1.bf16.msra.mxu0 %v1416
    %3463 = vmatprep.subr.bf16.mxu0 %v1421
    %3464 = vmatpush1.bf16.msra.mxu0 %v1420
    %3465 = vmatprep.subr.bf16.mxu0 %v1425
    %3466 = vmatpush1.bf16.msra.mxu0 %v1424
    %3467 = vmatprep.subr.bf16.mxu0 0
    %3468 = vmatpush1.bf16.msra.mxu0 0
    %3469 = vmatprep.subr.bf16.mxu0 0
    %3470 = vmatpush1.bf16.msra.mxu0 0
    %3471 = vmatprep.subr.bf16.mxu0 0
    %3472 = vmatpush1.bf16.msra.mxu0 0
    %3473 = vmatprep.subr.bf16.mxu0 0
    %3474 = vmatpush1.bf16.msra.mxu0 0
    %3475 = vmatprep.subr.bf16.mxu0 0
    %3476 = vmatpush1.bf16.msra.mxu0 0
    %3477 = vmatprep.subr.bf16.mxu0 0
    %3478 = vmatpush1.bf16.msra.mxu0 0
    %3479 = vmatprep.subr.bf16.mxu0 0
    %3480 = vmatpush1.bf16.msra.mxu0 0
    %3481 = vmatprep.subr.bf16.mxu0 0
    %3482 = vmatpush1.bf16.msra.mxu0 0
    %3483 = vmatprep.mubr.bf16.mxu0 0
    %3484 = vmatmul.mubr.bf16.gmra.mrb[0].mxu0 %v3202
    %v3485 = vpop.f32.mrb[0].mxu0
    %v3486 = vadd.f32 %v3404, %v3485
    %v3487 = vpop.f32.mrb[0].mxu0
    %v3488 = vadd.f32 %v3406, %v3487
    %v3489 = vpop.f32.mrb[0].mxu0
    %v3490 = vpop.f32.mrb[0].mxu0
    %3491 = vdwg.mxu0
    %3492 = vmatprep.subr.bf16.mxu0 %v1399
    %3493 = vmatpush1.bf16.msra.mxu0 %v1398
    %3494 = vmatprep.subr.bf16.mxu0 %v1403
    %3495 = vmatpush1.bf16.msra.mxu0 %v1402
    %3496 = vmatprep.subr.bf16.mxu0 %v1407
    %3497 = vmatpush1.bf16.msra.mxu0 %v1406
    %3498 = vmatprep.subr.bf16.mxu0 %v1411
    %3499 = vmatpush1.bf16.msra.mxu0 %v1410
    %3500 = vmatprep.subr.bf16.mxu0 %v1415
    %3501 = vmatpush1.bf16.msra.mxu0 %v1414
    %3502 = vmatprep.subr.bf16.mxu0 %v1419
    %3503 = vmatpush1.bf16.msra.mxu0 %v1418
    %3504 = vmatprep.subr.bf16.mxu0 %v1423
    %3505 = vmatpush1.bf16.msra.mxu0 %v1422
    %3506 = vmatprep.subr.bf16.mxu0 %v1427
    %3507 = vmatpush1.bf16.msra.mxu0 %v1426
    %3508 = vmatprep.subr.bf16.mxu0 0
    %3509 = vmatpush1.bf16.msra.mxu0 0
    %3510 = vmatprep.subr.bf16.mxu0 0
    %3511 = vmatpush1.bf16.msra.mxu0 0
    %3512 = vmatprep.subr.bf16.mxu0 0
    %3513 = vmatpush1.bf16.msra.mxu0 0
    %3514 = vmatprep.subr.bf16.mxu0 0
    %3515 = vmatpush1.bf16.msra.mxu0 0
    %3516 = vmatprep.subr.bf16.mxu0 0
    %3517 = vmatpush1.bf16.msra.mxu0 0
    %3518 = vmatprep.subr.bf16.mxu0 0
    %3519 = vmatpush1.bf16.msra.mxu0 0
    %3520 = vmatprep.subr.bf16.mxu0 0
    %3521 = vmatpush1.bf16.msra.mxu0 0
    %3522 = vmatprep.subr.bf16.mxu0 0
    %3523 = vmatpush1.bf16.msra.mxu0 0
    %3524 = vmatprep.mubr.bf16.mxu0 0
    %3525 = vmatmul.mubr.bf16.gmra.mrb[0].mxu0 %v3202
    %v3526 = vpop.f32.mrb[0].mxu0
    %v3527 = vadd.f32 %v3445, %v3526
    %v3528 = vpop.f32.mrb[0].mxu0
    %v3529 = vadd.f32 %v3447, %v3528
    %v3530 = vpop.f32.mrb[0].mxu0
    %v3531 = vpop.f32.mrb[0].mxu0
    %3532 = vdwg.mxu0
    %v3533 = vadd.f32 %v3486, %v224
    %v3534 = vadd.f32 %v3488, %v228
    %v3535 = vadd.f32 %v3527, %v232
    %v3536 = vadd.f32 %v3529, %v236
    %v3537 = vxor.u32 %v3533, 2147483648
    %v3538 = vxor.u32 %v3534, 2147483648
    %v3539 = vxor.u32 %v3535, 2147483648
    %v3540 = vmul.f32 %v3537, 1.442695
    %v3541 = vpow.pop %v3540
    %v3542 = vmul.f32 %v3538, 1.442695
    %v3543 = vpow.pop %v3542
    %v3544 = vmul.f32 %v3539, 1.442695
    %v3545 = vpow.pop %v3544
    %v3546 = vadd.f32 %v3541, 1.0
    %v3547 = vadd.f32 %v3543, 1.0
    %v3548 = vadd.f32 %v3545, 1.0
    %v3549 = vrcp.pop %v3546
    %v3550 = vmul.f32 1.0, %v3549
    %v3551 = vrcp.pop %v3547
    %v3552 = vmul.f32 1.0, %v3551
    %v3553 = vrcp.pop %v3548
    %v3554 = vmul.f32 1.0, %v3553
    %v3555 = vtanh.pop %v3536
    %v3556 = vmul.f32 %v3552, %v2930
    %v3557 = vmul.f32 %v3550, %v3555
    %v3558 = vadd.f32 %v3556, %v3557
    %v3559 = vtanh.pop %v3558
    %v3560 = vmul.f32 %v3554, %v3559
    %3561 = vmatprep.subr.bf16.mxu0 %v2034
    %3562 = vmatpush1.bf16.msra.mxu0 %v2033
    %3563 = vmatprep.subr.bf16.mxu0 %v2038
    %3564 = vmatpush1.bf16.msra.mxu0 %v2037
    %3565 = vmatprep.subr.bf16.mxu0 %v2042
    %3566 = vmatpush1.bf16.msra.mxu0 %v2041
    %3567 = vmatprep.subr.bf16.mxu0 %v2046
    %3568 = vmatpush1.bf16.msra.mxu0 %v2045
    %3569 = vmatprep.subr.bf16.mxu0 %v2050
    %3570 = vmatpush1.bf16.msra.mxu0 %v2049
    %3571 = vmatprep.subr.bf16.mxu0 %v2054
    %3572 = vmatpush1.bf16.msra.mxu0 %v2053
    %3573 = vmatprep.subr.bf16.mxu0 %v2058
    %3574 = vmatpush1.bf16.msra.mxu0 %v2057
    %3575 = vmatprep.subr.bf16.mxu0 %v2062
    %3576 = vmatpush1.bf16.msra.mxu0 %v2061
    %3577 = vmatprep.subr.bf16.mxu0 0
    %3578 = vmatpush1.bf16.msra.mxu0 0
    %3579 = vmatprep.subr.bf16.mxu0 0
    %3580 = vmatpush1.bf16.msra.mxu0 0
    %3581 = vmatprep.subr.bf16.mxu0 0
    %3582 = vmatpush1.bf16.msra.mxu0 0
    %3583 = vmatprep.subr.bf16.mxu0 0
    %3584 = vmatpush1.bf16.msra.mxu0 0
    %3585 = vmatprep.subr.bf16.mxu0 0
    %3586 = vmatpush1.bf16.msra.mxu0 0
    %3587 = vmatprep.subr.bf16.mxu0 0
    %3588 = vmatpush1.bf16.msra.mxu0 0
    %3589 = vmatprep.subr.bf16.mxu0 0
    %3590 = vmatpush1.bf16.msra.mxu0 0
    %3591 = vmatprep.subr.bf16.mxu0 0
    %3592 = vmatpush1.bf16.msra.mxu0 0
    %3593 = vmatprep.mubr.bf16.mxu0 0
    %3594 = vmatmul.mubr.bf16.gmra.mrb[0].mxu0 %v3125
    %v3595 = vpop.f32.mrb[0].mxu0
    %v3596 = vadd.f32 0.0, %v3595
    %v3597 = vpop.f32.mrb[0].mxu0
    %v3598 = vadd.f32 0.0, %v3597
    %v3599 = vpop.f32.mrb[0].mxu0
    %v3600 = vpop.f32.mrb[0].mxu0
    %3601 = vdwg.mxu0
    %3602 = vmatprep.subr.bf16.mxu0 %v2036
    %3603 = vmatpush1.bf16.msra.mxu0 %v2035
    %3604 = vmatprep.subr.bf16.mxu0 %v2040
    %3605 = vmatpush1.bf16.msra.mxu0 %v2039
    %3606 = vmatprep.subr.bf16.mxu0 %v2044
    %3607 = vmatpush1.bf16.msra.mxu0 %v2043
    %3608 = vmatprep.subr.bf16.mxu0 %v2048
    %3609 = vmatpush1.bf16.msra.mxu0 %v2047
    %3610 = vmatprep.subr.bf16.mxu0 %v2052
    %3611 = vmatpush1.bf16.msra.mxu0 %v2051
    %3612 = vmatprep.subr.bf16.mxu0 %v2056
    %3613 = vmatpush1.bf16.msra.mxu0 %v2055
    %3614 = vmatprep.subr.bf16.mxu0 %v2060
    %3615 = vmatpush1.bf16.msra.mxu0 %v2059
    %3616 = vmatprep.subr.bf16.mxu0 %v2064
    %3617 = vmatpush1.bf16.msra.mxu0 %v2063
    %3618 = vmatprep.subr.bf16.mxu0 0
    %3619 = vmatpush1.bf16.msra.mxu0 0
    %3620 = vmatprep.subr.bf16.mxu0 0
    %3621 = vmatpush1.bf16.msra.mxu0 0
    %3622 = vmatprep.subr.bf16.mxu0 0
    %3623 = vmatpush1.bf16.msra.mxu0 0
    %3624 = vmatprep.subr.bf16.mxu0 0
    %3625 = vmatpush1.bf16.msra.mxu0 0
    %3626 = vmatprep.subr.bf16.mxu0 0
    %3627 = vmatpush1.bf16.msra.mxu0 0
    %3628 = vmatprep.subr.bf16.mxu0 0
    %3629 = vmatpush1.bf16.msra.mxu0 0
    %3630 = vmatprep.subr.bf16.mxu0 0
    %3631 = vmatpush1.bf16.msra.mxu0 0
    %3632 = vmatprep.subr.bf16.mxu0 0
    %3633 = vmatpush1.bf16.msra.mxu0 0
    %3634 = vmatprep.mubr.bf16.mxu0 0
    %3635 = vmatmul.mubr.bf16.gmra.mrb[0].mxu0 %v3125
    %v3636 = vpop.f32.mrb[0].mxu0
    %v3637 = vadd.f32 0.0, %v3636
    %v3638 = vpop.f32.mrb[0].mxu0
    %v3639 = vadd.f32 0.0, %v3638
    %v3640 = vpop.f32.mrb[0].mxu0
    %v3641 = vpop.f32.mrb[0].mxu0
    %3642 = vdwg.mxu0
    %3643 = vmatprep.subr.bf16.mxu0 %v2276
    %3644 = vmatpush1.bf16.msra.mxu0 %v2275
    %3645 = vmatprep.subr.bf16.mxu0 %v2280
    %3646 = vmatpush1.bf16.msra.mxu0 %v2279
    %3647 = vmatprep.subr.bf16.mxu0 %v2284
    %3648 = vmatpush1.bf16.msra.mxu0 %v2283
    %3649 = vmatprep.subr.bf16.mxu0 %v2288
    %3650 = vmatpush1.bf16.msra.mxu0 %v2287
    %3651 = vmatprep.subr.bf16.mxu0 %v2292
    %3652 = vmatpush1.bf16.msra.mxu0 %v2291
    %3653 = vmatprep.subr.bf16.mxu0 %v2296
    %3654 = vmatpush1.bf16.msra.mxu0 %v2295
    %3655 = vmatprep.subr.bf16.mxu0 %v2300
    %3656 = vmatpush1.bf16.msra.mxu0 %v2299
    %3657 = vmatprep.subr.bf16.mxu0 %v2304
    %3658 = vmatpush1.bf16.msra.mxu0 %v2303
    %3659 = vmatprep.subr.bf16.mxu0 0
    %3660 = vmatpush1.bf16.msra.mxu0 0
    %3661 = vmatprep.subr.bf16.mxu0 0
    %3662 = vmatpush1.bf16.msra.mxu0 0
    %3663 = vmatprep.subr.bf16.mxu0 0
    %3664 = vmatpush1.bf16.msra.mxu0 0
    %3665 = vmatprep.subr.bf16.mxu0 0
    %3666 = vmatpush1.bf16.msra.mxu0 0
    %3667 = vmatprep.subr.bf16.mxu0 0
    %3668 = vmatpush1.bf16.msra.mxu0 0
    %3669 = vmatprep.subr.bf16.mxu0 0
    %3670 = vmatpush1.bf16.msra.mxu0 0
    %3671 = vmatprep.subr.bf16.mxu0 0
    %3672 = vmatpush1.bf16.msra.mxu0 0
    %3673 = vmatprep.subr.bf16.mxu0 0
    %3674 = vmatpush1.bf16.msra.mxu0 0
    %3675 = vmatprep.mubr.bf16.mxu0 0
    %3676 = vmatmul.mubr.bf16.gmra.mrb[0].mxu0 %v3368
    %v3677 = vpop.f32.mrb[0].mxu0
    %v3678 = vadd.f32 %v3596, %v3677
    %v3679 = vpop.f32.mrb[0].mxu0
    %v3680 = vadd.f32 %v3598, %v3679
    %v3681 = vpop.f32.mrb[0].mxu0
    %v3682 = vpop.f32.mrb[0].mxu0
    %3683 = vdwg.mxu0
    %3684 = vmatprep.subr.bf16.mxu0 %v2278
    %3685 = vmatpush1.bf16.msra.mxu0 %v2277
    %3686 = vmatprep.subr.bf16.mxu0 %v2282
    %3687 = vmatpush1.bf16.msra.mxu0 %v2281
    %3688 = vmatprep.subr.bf16.mxu0 %v2286
    %3689 = vmatpush1.bf16.msra.mxu0 %v2285
    %3690 = vmatprep.subr.bf16.mxu0 %v2290
    %3691 = vmatpush1.bf16.msra.mxu0 %v2289
    %3692 = vmatprep.subr.bf16.mxu0 %v2294
    %3693 = vmatpush1.bf16.msra.mxu0 %v2293
    %3694 = vmatprep.subr.bf16.mxu0 %v2298
    %3695 = vmatpush1.bf16.msra.mxu0 %v2297
    %3696 = vmatprep.subr.bf16.mxu0 %v2302
    %3697 = vmatpush1.bf16.msra.mxu0 %v2301
    %3698 = vmatprep.subr.bf16.mxu0 %v2306
    %3699 = vmatpush1.bf16.msra.mxu0 %v2305
    %3700 = vmatprep.subr.bf16.mxu0 0
    %3701 = vmatpush1.bf16.msra.mxu0 0
    %3702 = vmatprep.subr.bf16.mxu0 0
    %3703 = vmatpush1.bf16.msra.mxu0 0
    %3704 = vmatprep.subr.bf16.mxu0 0
    %3705 = vmatpush1.bf16.msra.mxu0 0
    %3706 = vmatprep.subr.bf16.mxu0 0
    %3707 = vmatpush1.bf16.msra.mxu0 0
    %3708 = vmatprep.subr.bf16.mxu0 0
    %3709 = vmatpush1.bf16.msra.mxu0 0
    %3710 = vmatprep.subr.bf16.mxu0 0
    %3711 = vmatpush1.bf16.msra.mxu0 0
    %3712 = vmatprep.subr.bf16.mxu0 0
    %3713 = vmatpush1.bf16.msra.mxu0 0
    %3714 = vmatprep.subr.bf16.mxu0 0
    %3715 = vmatpush1.bf16.msra.mxu0 0
    %3716 = vmatprep.mubr.bf16.mxu0 0
    %3717 = vmatmul.mubr.bf16.gmra.mrb[0].mxu0 %v3368
    %v3718 = vpop.f32.mrb[0].mxu0
    %v3719 = vadd.f32 %v3637, %v3718
    %v3720 = vpop.f32.mrb[0].mxu0
    %v3721 = vadd.f32 %v3639, %v3720
    %v3722 = vpop.f32.mrb[0].mxu0
    %v3723 = vpop.f32.mrb[0].mxu0
    %3724 = vdwg.mxu0
    %v3725 = vadd.f32 %v3678, %v246
    %v3726 = vadd.f32 %v3680, %v250
    %v3727 = vadd.f32 %v3719, %v254
    %v3728 = vadd.f32 %v3721, %v258
    %v3729 = vxor.u32 %v3725, 2147483648
    %v3730 = vxor.u32 %v3726, 2147483648
    %v3731 = vxor.u32 %v3727, 2147483648
    %v3732 = vmul.f32 %v3729, 1.442695
    %v3733 = vpow.pop %v3732
    %v3734 = vmul.f32 %v3730, 1.442695
    %v3735 = vpow.pop %v3734
    %v3736 = vmul.f32 %v3731, 1.442695
    %v3737 = vpow.pop %v3736
    %v3738 = vadd.f32 %v3733, 1.0
    %v3739 = vadd.f32 %v3735, 1.0
    %v3740 = vadd.f32 %v3737, 1.0
    %v3741 = vrcp.pop %v3738
    %v3742 = vmul.f32 1.0, %v3741
    %v3743 = vrcp.pop %v3739
    %v3744 = vmul.f32 1.0, %v3743
    %v3745 = vrcp.pop %v3740
    %v3746 = vmul.f32 1.0, %v3745
    %v3747 = vtanh.pop %v3728
    %v3748 = vmul.f32 %v3744, %v3122
    %v3749 = vmul.f32 %v3742, %v3747
    %v3750 = vadd.f32 %v3748, %v3749
    %v3751 = vtanh.pop %v3750
    %v3752 = vmul.f32 %v3746, %v3751
    %v3753 = vpack.c.bf16 %v3752, %v3752
    %3754 = vmatprep.subr.bf16.mxu0 0
    %3755 = vmatpush1.bf16.msra.mxu0 %v2482
    %3756 = vmatprep.subr.bf16.mxu0 0
    %3757 = vmatpush1.bf16.msra.mxu0 %v2483
    %3758 = vmatprep.subr.bf16.mxu0 0
    %3759 = vmatpush1.bf16.msra.mxu0 %v2484
    %3760 = vmatprep.subr.bf16.mxu0 0
    %3761 = vmatpush1.bf16.msra.mxu0 %v2485
    %3762 = vmatprep.subr.bf16.mxu0 0
    %3763 = vmatpush1.bf16.msra.mxu0 %v2486
    %3764 = vmatprep.subr.bf16.mxu0 0
    %3765 = vmatpush1.bf16.msra.mxu0 %v2487
    %3766 = vmatprep.subr.bf16.mxu0 0
    %3767 = vmatpush1.bf16.msra.mxu0 %v2488
    %3768 = vmatprep.subr.bf16.mxu0 0
    %3769 = vmatpush1.bf16.msra.mxu0 %v2489
    %3770 = vmatprep.subr.bf16.mxu0 0
    %3771 = vmatpush1.bf16.msra.mxu0 0
    %3772 = vmatprep.subr.bf16.mxu0 0
    %3773 = vmatpush1.bf16.msra.mxu0 0
    %3774 = vmatprep.subr.bf16.mxu0 0
    %3775 = vmatpush1.bf16.msra.mxu0 0
    %3776 = vmatprep.subr.bf16.mxu0 0
    %3777 = vmatpush1.bf16.msra.mxu0 0
    %3778 = vmatprep.subr.bf16.mxu0 0
    %3779 = vmatpush1.bf16.msra.mxu0 0
    %3780 = vmatprep.subr.bf16.mxu0 0
    %3781 = vmatpush1.bf16.msra.mxu0 0
    %3782 = vmatprep.subr.bf16.mxu0 0
    %3783 = vmatpush1.bf16.msra.mxu0 0
    %3784 = vmatprep.subr.bf16.mxu0 0
    %3785 = vmatpush1.bf16.msra.mxu0 0
    %3786 = vmatprep.mubr.bf16.mxu0 0
    %3787 = vmatmul.mubr.bf16.gmra.mrb[0].mxu0 %v3753
    %v3788 = vpop.f32.mrb[0].mxu0
    %v3789 = vadd.f32 %v268, %v3788
    %v3790 = vpop.f32.mrb[0].mxu0
    %v3791 = vpop.f32.mrb[0].mxu0
    %v3792 = vpop.f32.mrb[0].mxu0
    %3793 = vdwg.mxu0
    %v3796 = vunpack.c.l.s4 1966171168
    %v3797 = vunpack.c.0.s8 %v3796
    %v3798 = vlaneseq
    %v3799 = vshrl.u32 %v3798, 7
    %v3800 = vsub.s32 %v3797, %v3799
    %v3801 = vrot.slane %v3789, %v3800
    %v3802 = vcombine.high %v3801, %v3801
    %v3804 = vunpack.c.l.s4 1966171168
    %v3805 = vunpack.c.0.s8 %v3804
    %v3806 = vlaneseq
    %v3807 = vshrl.u32 %v3806, 7
    %v3808 = vsub.s32 %v3805, %v3807
    %v3809 = vrot.slane %v3801, %v3808
    %v3811 = vunpack.c.l.s4 1966171168
    %v3812 = vunpack.c.0.s8 %v3811
    %v3813 = vlaneseq
    %v3814 = vshrl.u32 %v3813, 7
    %v3815 = vsub.s32 %v3812, %v3814
    %v3816 = vrot.slane %v3802, %v3815
    %3819 = vst [vmem:[#allocation2 + $0x2] sm:$0x1] %v3809
    %3820 = vst [vmem:[#allocation2 + $0xa] sm:$0x1] %v3816
    %v3821 = vpack.c.bf16 %v3366, %v3366
    %v3822 = vpack.c.bf16 %v3367, %v3367
    %v3825 = vunpack.c.l.b16 %v3821
    %v3826 = vunpack.c.l.b16 %v3822
    %v3827 = vrot.slane %v3825, 4
    %v3828 = vrot.slane %v3826, 3
    %v3829 = vsel %vm894, %v3828, %v3827
    %v3830 = vpack.c.b16 %v3829, %v3829
    %3832 = vmatprep.subr.bf16.mxu0 %v670
    %3833 = vmatpush1.bf16.msra.mxu0 %v669
    %3834 = vmatprep.subr.bf16.mxu0 %v674
    %3835 = vmatpush1.bf16.msra.mxu0 %v673
    %3836 = vmatprep.subr.bf16.mxu0 %v678
    %3837 = vmatpush1.bf16.msra.mxu0 %v677
    %3838 = vmatprep.subr.bf16.mxu0 %v682
    %3839 = vmatpush1.bf16.msra.mxu0 %v681
    %3840 = vmatprep.subr.bf16.mxu0 %v686
    %3841 = vmatpush1.bf16.msra.mxu0 %v685
    %3842 = vmatprep.subr.bf16.mxu0 %v690
    %3843 = vmatpush1.bf16.msra.mxu0 %v689
    %3844 = vmatprep.subr.bf16.mxu0 %v694
    %3845 = vmatpush1.bf16.msra.mxu0 %v693
    %3846 = vmatprep.subr.bf16.mxu0 %v698
    %3847 = vmatpush1.bf16.msra.mxu0 %v697
    %3848 = vmatprep.subr.bf16.mxu0 0
    %3849 = vmatpush1.bf16.msra.mxu0 0
    %3850 = vmatprep.subr.bf16.mxu0 0
    %3851 = vmatpush1.bf16.msra.mxu0 0
    %3852 = vmatprep.subr.bf16.mxu0 0
    %3853 = vmatpush1.bf16.msra.mxu0 0
    %3854 = vmatprep.subr.bf16.mxu0 0
    %3855 = vmatpush1.bf16.msra.mxu0 0
    %3856 = vmatprep.subr.bf16.mxu0 0
    %3857 = vmatpush1.bf16.msra.mxu0 0
    %3858 = vmatprep.subr.bf16.mxu0 0
    %3859 = vmatpush1.bf16.msra.mxu0 0
    %3860 = vmatprep.subr.bf16.mxu0 0
    %3861 = vmatpush1.bf16.msra.mxu0 0
    %3862 = vmatprep.subr.bf16.mxu0 0
    %3863 = vmatpush1.bf16.msra.mxu0 0
    %3864 = vmatprep.mubr.bf16.mxu0 0
    %3865 = vmatmul.mubr.bf16.gmra.mrb[0].mxu0 %v3830
    %v3866 = vpop.f32.mrb[0].mxu0
    %v3867 = vadd.f32 0.0, %v3866
    %v3868 = vpop.f32.mrb[0].mxu0
    %v3869 = vadd.f32 0.0, %v3868
    %v3870 = vpop.f32.mrb[0].mxu0
    %v3871 = vpop.f32.mrb[0].mxu0
    %3872 = vdwg.mxu0
    %3873 = vmatprep.subr.bf16.mxu0 %v672
    %3874 = vmatpush1.bf16.msra.mxu0 %v671
    %3875 = vmatprep.subr.bf16.mxu0 %v676
    %3876 = vmatpush1.bf16.msra.mxu0 %v675
    %3877 = vmatprep.subr.bf16.mxu0 %v680
    %3878 = vmatpush1.bf16.msra.mxu0 %v679
    %3879 = vmatprep.subr.bf16.mxu0 %v684
    %3880 = vmatpush1.bf16.msra.mxu0 %v683
    %3881 = vmatprep.subr.bf16.mxu0 %v688
    %3882 = vmatpush1.bf16.msra.mxu0 %v687
    %3883 = vmatprep.subr.bf16.mxu0 %v692
    %3884 = vmatpush1.bf16.msra.mxu0 %v691
    %3885 = vmatprep.subr.bf16.mxu0 %v696
    %3886 = vmatpush1.bf16.msra.mxu0 %v695
    %3887 = vmatprep.subr.bf16.mxu0 %v700
    %3888 = vmatpush1.bf16.msra.mxu0 %v699
    %3889 = vmatprep.subr.bf16.mxu0 0
    %3890 = vmatpush1.bf16.msra.mxu0 0
    %3891 = vmatprep.subr.bf16.mxu0 0
    %3892 = vmatpush1.bf16.msra.mxu0 0
    %3893 = vmatprep.subr.bf16.mxu0 0
    %3894 = vmatpush1.bf16.msra.mxu0 0
    %3895 = vmatprep.subr.bf16.mxu0 0
    %3896 = vmatpush1.bf16.msra.mxu0 0
    %3897 = vmatprep.subr.bf16.mxu0 0
    %3898 = vmatpush1.bf16.msra.mxu0 0
    %3899 = vmatprep.subr.bf16.mxu0 0
    %3900 = vmatpush1.bf16.msra.mxu0 0
    %3901 = vmatprep.subr.bf16.mxu0 0
    %3902 = vmatpush1.bf16.msra.mxu0 0
    %3903 = vmatprep.subr.bf16.mxu0 0
    %3904 = vmatpush1.bf16.msra.mxu0 0
    %3905 = vmatprep.mubr.bf16.mxu0 0
    %3906 = vmatmul.mubr.bf16.gmra.mrb[0].mxu0 %v3830
    %v3907 = vpop.f32.mrb[0].mxu0
    %v3908 = vadd.f32 0.0, %v3907
    %v3909 = vpop.f32.mrb[0].mxu0
    %v3910 = vadd.f32 0.0, %v3909
    %v3911 = vpop.f32.mrb[0].mxu0
    %v3912 = vpop.f32.mrb[0].mxu0
    %3913 = vdwg.mxu0
    %v3918 = vrot.slane %v3867, 3
    %v3919 = vrot.slane %v3869, 3
    %v3920 = vrot.slane %v3908, 3
    %v3921 = vrot.slane %v3910, 3
    %v3922 = vrot.slane %v3867, 4
    %v3923 = vrot.slane %v3869, 4
    %v3924 = vrot.slane %v3908, 4
    %v3925 = vrot.slane %v3910, 4
    %v3934 = vadd.f32 %v522, %v3918
    %v3935 = vadd.f32 %v524, %v3919
    %v3936 = vadd.f32 %v565, %v3920
    %v3937 = vadd.f32 %v567, %v3921
    %v3938 = vadd.f32 %v526, %v3922
    %v3939 = vadd.f32 %v528, %v3923
    %v3940 = vadd.f32 %v569, %v3924
    %v3941 = vadd.f32 %v571, %v3925
    %v3942 = vxor.u32 %v3934, 2147483648
    %v3943 = vxor.u32 %v3935, 2147483648
    %v3944 = vxor.u32 %v3936, 2147483648
    %v3945 = vxor.u32 %v3938, 2147483648
    %v3946 = vxor.u32 %v3939, 2147483648
    %v3947 = vxor.u32 %v3940, 2147483648
    %v3948 = vmul.f32 %v3942, 1.442695
    %v3949 = vpow.pop %v3948
    %v3950 = vmul.f32 %v3943, 1.442695
    %v3951 = vpow.pop %v3950
    %v3952 = vmul.f32 %v3944, 1.442695
    %v3953 = vpow.pop %v3952
    %v3954 = vmul.f32 %v3945, 1.442695
    %v3955 = vpow.pop %v3954
    %v3956 = vmul.f32 %v3946, 1.442695
    %v3957 = vpow.pop %v3956
    %v3958 = vmul.f32 %v3947, 1.442695
    %v3959 = vpow.pop %v3958
    %v3960 = vadd.f32 %v3949, 1.0
    %v3961 = vadd.f32 %v3951, 1.0
    %v3962 = vadd.f32 %v3953, 1.0
    %v3963 = vadd.f32 %v3955, 1.0
    %v3964 = vadd.f32 %v3957, 1.0
    %v3965 = vadd.f32 %v3959, 1.0
    %v3966 = vrcp.pop %v3960
    %v3967 = vmul.f32 1.0, %v3966
    %v3968 = vrcp.pop %v3961
    %v3969 = vmul.f32 1.0, %v3968
    %v3970 = vrcp.pop %v3962
    %v3971 = vmul.f32 1.0, %v3970
    %v3972 = vrcp.pop %v3963
    %v3973 = vmul.f32 1.0, %v3972
    %v3974 = vrcp.pop %v3964
    %v3975 = vmul.f32 1.0, %v3974
    %v3976 = vrcp.pop %v3965
    %v3977 = vmul.f32 1.0, %v3976
    %v3978 = vtanh.pop %v3937
    %v3979 = vtanh.pop %v3941
    %v3982 = vrot.slane %v3362, 7
    %v3983 = vrot.slane %v3363, 7
    %v3986 = vmul.f32 %v3969, %v3982
    %v3987 = vmul.f32 %v3975, %v3983
    %v3988 = vmul.f32 %v3967, %v3978
    %v3989 = vmul.f32 %v3973, %v3979
    %v3990 = vadd.f32 %v3986, %v3988
    %v3991 = vadd.f32 %v3987, %v3989
    %v3992 = vtanh.pop %v3990
    %v3993 = vtanh.pop %v3991
    %v3994 = vmul.f32 %v3971, %v3992
    %v3995 = vmul.f32 %v3977, %v3993
    %v3996 = vpack.c.bf16 %v3560, %v3560
    %3997 = vmatprep.subr.bf16.mxu0 %v1155
    %3998 = vmatpush1.bf16.msra.mxu0 %v1154
    %3999 = vmatprep.subr.bf16.mxu0 %v1159
    %4000 = vmatpush1.bf16.msra.mxu0 %v1158
    %4001 = vmatprep.subr.bf16.mxu0 %v1163
    %4002 = vmatpush1.bf16.msra.mxu0 %v1162
    %4003 = vmatprep.subr.bf16.mxu0 %v1167
    %4004 = vmatpush1.bf16.msra.mxu0 %v1166
    %4005 = vmatprep.subr.bf16.mxu0 %v1171
    %4006 = vmatpush1.bf16.msra.mxu0 %v1170
    %4007 = vmatprep.subr.bf16.mxu0 %v1175
    %4008 = vmatpush1.bf16.msra.mxu0 %v1174
    %4009 = vmatprep.subr.bf16.mxu0 %v1179
    %4010 = vmatpush1.bf16.msra.mxu0 %v1178
    %4011 = vmatprep.subr.bf16.mxu0 %v1183
    %4012 = vmatpush1.bf16.msra.mxu0 %v1182
    %4013 = vmatprep.subr.bf16.mxu0 0
    %4014 = vmatpush1.bf16.msra.mxu0 0
    %4015 = vmatprep.subr.bf16.mxu0 0
    %4016 = vmatpush1.bf16.msra.mxu0 0
    %4017 = vmatprep.subr.bf16.mxu0 0
    %4018 = vmatpush1.bf16.msra.mxu0 0
    %4019 = vmatprep.subr.bf16.mxu0 0
    %4020 = vmatpush1.bf16.msra.mxu0 0
    %4021 = vmatprep.subr.bf16.mxu0 0
    %4022 = vmatpush1.bf16.msra.mxu0 0
    %4023 = vmatprep.subr.bf16.mxu0 0
    %4024 = vmatpush1.bf16.msra.mxu0 0
    %4025 = vmatprep.subr.bf16.mxu0 0
    %4026 = vmatpush1.bf16.msra.mxu0 0
    %4027 = vmatprep.subr.bf16.mxu0 0
    %4028 = vmatpush1.bf16.msra.mxu0 0
    %4029 = vmatprep.mubr.bf16.mxu0 0
    %4030 = vmatmul.mubr.bf16.gmra.mrb[0].mxu0 %v3996
    %v4031 = vpop.f32.mrb[0].mxu0
    %v4032 = vadd.f32 0.0, %v4031
    %v4033 = vpop.f32.mrb[0].mxu0
    %v4034 = vadd.f32 0.0, %v4033
    %v4035 = vpop.f32.mrb[0].mxu0
    %v4036 = vpop.f32.mrb[0].mxu0
    %4037 = vdwg.mxu0
    %4038 = vmatprep.subr.bf16.mxu0 %v1157
    %4039 = vmatpush1.bf16.msra.mxu0 %v1156
    %4040 = vmatprep.subr.bf16.mxu0 %v1161
    %4041 = vmatpush1.bf16.msra.mxu0 %v1160
    %4042 = vmatprep.subr.bf16.mxu0 %v1165
    %4043 = vmatpush1.bf16.msra.mxu0 %v1164
    %4044 = vmatprep.subr.bf16.mxu0 %v1169
    %4045 = vmatpush1.bf16.msra.mxu0 %v1168
    %4046 = vmatprep.subr.bf16.mxu0 %v1173
    %4047 = vmatpush1.bf16.msra.mxu0 %v1172
    %4048 = vmatprep.subr.bf16.mxu0 %v1177
    %4049 = vmatpush1.bf16.msra.mxu0 %v1176
    %4050 = vmatprep.subr.bf16.mxu0 %v1181
    %4051 = vmatpush1.bf16.msra.mxu0 %v1180
    %4052 = vmatprep.subr.bf16.mxu0 %v1185
    %4053 = vmatpush1.bf16.msra.mxu0 %v1184
    %4054 = vmatprep.subr.bf16.mxu0 0
    %4055 = vmatpush1.bf16.msra.mxu0 0
    %4056 = vmatprep.subr.bf16.mxu0 0
    %4057 = vmatpush1.bf16.msra.mxu0 0
    %4058 = vmatprep.subr.bf16.mxu0 0
    %4059 = vmatpush1.bf16.msra.mxu0 0
    %4060 = vmatprep.subr.bf16.mxu0 0
    %4061 = vmatpush1.bf16.msra.mxu0 0
    %4062 = vmatprep.subr.bf16.mxu0 0
    %4063 = vmatpush1.bf16.msra.mxu0 0
    %4064 = vmatprep.subr.bf16.mxu0 0
    %4065 = vmatpush1.bf16.msra.mxu0 0
    %4066 = vmatprep.subr.bf16.mxu0 0
    %4067 = vmatpush1.bf16.msra.mxu0 0
    %4068 = vmatprep.subr.bf16.mxu0 0
    %4069 = vmatpush1.bf16.msra.mxu0 0
    %4070 = vmatprep.mubr.bf16.mxu0 0
    %4071 = vmatmul.mubr.bf16.gmra.mrb[0].mxu0 %v3996
    %v4072 = vpop.f32.mrb[0].mxu0
    %v4073 = vadd.f32 0.0, %v4072
    %v4074 = vpop.f32.mrb[0].mxu0
    %v4075 = vadd.f32 0.0, %v4074
    %v4076 = vpop.f32.mrb[0].mxu0
    %v4077 = vpop.f32.mrb[0].mxu0
    %4078 = vdwg.mxu0
    %4079 = vmatprep.subr.bf16.mxu0 %v1397
    %4080 = vmatpush1.bf16.msra.mxu0 %v1396
    %4081 = vmatprep.subr.bf16.mxu0 %v1401
    %4082 = vmatpush1.bf16.msra.mxu0 %v1400
    %4083 = vmatprep.subr.bf16.mxu0 %v1405
    %4084 = vmatpush1.bf16.msra.mxu0 %v1404
    %4085 = vmatprep.subr.bf16.mxu0 %v1409
    %4086 = vmatpush1.bf16.msra.mxu0 %v1408
    %4087 = vmatprep.subr.bf16.mxu0 %v1413
    %4088 = vmatpush1.bf16.msra.mxu0 %v1412
    %4089 = vmatprep.subr.bf16.mxu0 %v1417
    %4090 = vmatpush1.bf16.msra.mxu0 %v1416
    %4091 = vmatprep.subr.bf16.mxu0 %v1421
    %4092 = vmatpush1.bf16.msra.mxu0 %v1420
    %4093 = vmatprep.subr.bf16.mxu0 %v1425
    %4094 = vmatpush1.bf16.msra.mxu0 %v1424
    %4095 = vmatprep.subr.bf16.mxu0 0
    %4096 = vmatpush1.bf16.msra.mxu0 0
    %4097 = vmatprep.subr.bf16.mxu0 0
    %4098 = vmatpush1.bf16.msra.mxu0 0
    %4099 = vmatprep.subr.bf16.mxu0 0
    %4100 = vmatpush1.bf16.msra.mxu0 0
    %4101 = vmatprep.subr.bf16.mxu0 0
    %4102 = vmatpush1.bf16.msra.mxu0 0
    %4103 = vmatprep.subr.bf16.mxu0 0
    %4104 = vmatpush1.bf16.msra.mxu0 0
    %4105 = vmatprep.subr.bf16.mxu0 0
    %4106 = vmatpush1.bf16.msra.mxu0 0
    %4107 = vmatprep.subr.bf16.mxu0 0
    %4108 = vmatpush1.bf16.msra.mxu0 0
    %4109 = vmatprep.subr.bf16.mxu0 0
    %4110 = vmatpush1.bf16.msra.mxu0 0
    %4111 = vmatprep.mubr.bf16.mxu0 0
    %4112 = vmatmul.mubr.bf16.gmra.mrb[0].mxu0 %v3830
    %v4113 = vpop.f32.mrb[0].mxu0
    %v4114 = vadd.f32 %v4032, %v4113
    %v4115 = vpop.f32.mrb[0].mxu0
    %v4116 = vadd.f32 %v4034, %v4115
    %v4117 = vpop.f32.mrb[0].mxu0
    %v4118 = vpop.f32.mrb[0].mxu0
    %4119 = vdwg.mxu0
    %4120 = vmatprep.subr.bf16.mxu0 %v1399
    %4121 = vmatpush1.bf16.msra.mxu0 %v1398
    %4122 = vmatprep.subr.bf16.mxu0 %v1403
    %4123 = vmatpush1.bf16.msra.mxu0 %v1402
    %4124 = vmatprep.subr.bf16.mxu0 %v1407
    %4125 = vmatpush1.bf16.msra.mxu0 %v1406
    %4126 = vmatprep.subr.bf16.mxu0 %v1411
    %4127 = vmatpush1.bf16.msra.mxu0 %v1410
    %4128 = vmatprep.subr.bf16.mxu0 %v1415
    %4129 = vmatpush1.bf16.msra.mxu0 %v1414
    %4130 = vmatprep.subr.bf16.mxu0 %v1419
    %4131 = vmatpush1.bf16.msra.mxu0 %v1418
    %4132 = vmatprep.subr.bf16.mxu0 %v1423
    %4133 = vmatpush1.bf16.msra.mxu0 %v1422
    %4134 = vmatprep.subr.bf16.mxu0 %v1427
    %4135 = vmatpush1.bf16.msra.mxu0 %v1426
    %4136 = vmatprep.subr.bf16.mxu0 0
    %4137 = vmatpush1.bf16.msra.mxu0 0
    %4138 = vmatprep.subr.bf16.mxu0 0
    %4139 = vmatpush1.bf16.msra.mxu0 0
    %4140 = vmatprep.subr.bf16.mxu0 0
    %4141 = vmatpush1.bf16.msra.mxu0 0
    %4142 = vmatprep.subr.bf16.mxu0 0
    %4143 = vmatpush1.bf16.msra.mxu0 0
    %4144 = vmatprep.subr.bf16.mxu0 0
    %4145 = vmatpush1.bf16.msra.mxu0 0
    %4146 = vmatprep.subr.bf16.mxu0 0
    %4147 = vmatpush1.bf16.msra.mxu0 0
    %4148 = vmatprep.subr.bf16.mxu0 0
    %4149 = vmatpush1.bf16.msra.mxu0 0
    %4150 = vmatprep.subr.bf16.mxu0 0
    %4151 = vmatpush1.bf16.msra.mxu0 0
    %4152 = vmatprep.mubr.bf16.mxu0 0
    %4153 = vmatmul.mubr.bf16.gmra.mrb[0].mxu0 %v3830
    %v4154 = vpop.f32.mrb[0].mxu0
    %v4155 = vadd.f32 %v4073, %v4154
    %v4156 = vpop.f32.mrb[0].mxu0
    %v4157 = vadd.f32 %v4075, %v4156
    %v4158 = vpop.f32.mrb[0].mxu0
    %v4159 = vpop.f32.mrb[0].mxu0
    %4160 = vdwg.mxu0
    %v4161 = vadd.f32 %v4114, %v224
    %v4162 = vadd.f32 %v4116, %v228
    %v4163 = vadd.f32 %v4155, %v232
    %v4164 = vadd.f32 %v4157, %v236
    %v4165 = vxor.u32 %v4161, 2147483648
    %v4166 = vxor.u32 %v4162, 2147483648
    %v4167 = vxor.u32 %v4163, 2147483648
    %v4168 = vmul.f32 %v4165, 1.442695
    %v4169 = vpow.pop %v4168
    %v4170 = vmul.f32 %v4166, 1.442695
    %v4171 = vpow.pop %v4170
    %v4172 = vmul.f32 %v4167, 1.442695
    %v4173 = vpow.pop %v4172
    %v4174 = vadd.f32 %v4169, 1.0
    %v4175 = vadd.f32 %v4171, 1.0
    %v4176 = vadd.f32 %v4173, 1.0
    %v4177 = vrcp.pop %v4174
    %v4178 = vmul.f32 1.0, %v4177
    %v4179 = vrcp.pop %v4175
    %v4180 = vmul.f32 1.0, %v4179
    %v4181 = vrcp.pop %v4176
    %v4182 = vmul.f32 1.0, %v4181
    %v4183 = vtanh.pop %v4164
    %v4184 = vmul.f32 %v4180, %v3558
    %v4185 = vmul.f32 %v4178, %v4183
    %v4186 = vadd.f32 %v4184, %v4185
    %v4187 = vtanh.pop %v4186
    %v4188 = vmul.f32 %v4182, %v4187
    %4189 = vmatprep.subr.bf16.mxu0 %v2034
    %4190 = vmatpush1.bf16.msra.mxu0 %v2033
    %4191 = vmatprep.subr.bf16.mxu0 %v2038
    %4192 = vmatpush1.bf16.msra.mxu0 %v2037
    %4193 = vmatprep.subr.bf16.mxu0 %v2042
    %4194 = vmatpush1.bf16.msra.mxu0 %v2041
    %4195 = vmatprep.subr.bf16.mxu0 %v2046
    %4196 = vmatpush1.bf16.msra.mxu0 %v2045
    %4197 = vmatprep.subr.bf16.mxu0 %v2050
    %4198 = vmatpush1.bf16.msra.mxu0 %v2049
    %4199 = vmatprep.subr.bf16.mxu0 %v2054
    %4200 = vmatpush1.bf16.msra.mxu0 %v2053
    %4201 = vmatprep.subr.bf16.mxu0 %v2058
    %4202 = vmatpush1.bf16.msra.mxu0 %v2057
    %4203 = vmatprep.subr.bf16.mxu0 %v2062
    %4204 = vmatpush1.bf16.msra.mxu0 %v2061
    %4205 = vmatprep.subr.bf16.mxu0 0
    %4206 = vmatpush1.bf16.msra.mxu0 0
    %4207 = vmatprep.subr.bf16.mxu0 0
    %4208 = vmatpush1.bf16.msra.mxu0 0
    %4209 = vmatprep.subr.bf16.mxu0 0
    %4210 = vmatpush1.bf16.msra.mxu0 0
    %4211 = vmatprep.subr.bf16.mxu0 0
    %4212 = vmatpush1.bf16.msra.mxu0 0
    %4213 = vmatprep.subr.bf16.mxu0 0
    %4214 = vmatpush1.bf16.msra.mxu0 0
    %4215 = vmatprep.subr.bf16.mxu0 0
    %4216 = vmatpush1.bf16.msra.mxu0 0
    %4217 = vmatprep.subr.bf16.mxu0 0
    %4218 = vmatpush1.bf16.msra.mxu0 0
    %4219 = vmatprep.subr.bf16.mxu0 0
    %4220 = vmatpush1.bf16.msra.mxu0 0
    %4221 = vmatprep.mubr.bf16.mxu0 0
    %4222 = vmatmul.mubr.bf16.gmra.mrb[0].mxu0 %v3753
    %v4223 = vpop.f32.mrb[0].mxu0
    %v4224 = vadd.f32 0.0, %v4223
    %v4225 = vpop.f32.mrb[0].mxu0
    %v4226 = vadd.f32 0.0, %v4225
    %v4227 = vpop.f32.mrb[0].mxu0
    %v4228 = vpop.f32.mrb[0].mxu0
    %4229 = vdwg.mxu0
    %4230 = vmatprep.subr.bf16.mxu0 %v2036
    %4231 = vmatpush1.bf16.msra.mxu0 %v2035
    %4232 = vmatprep.subr.bf16.mxu0 %v2040
    %4233 = vmatpush1.bf16.msra.mxu0 %v2039
    %4234 = vmatprep.subr.bf16.mxu0 %v2044
    %4235 = vmatpush1.bf16.msra.mxu0 %v2043
    %4236 = vmatprep.subr.bf16.mxu0 %v2048
    %4237 = vmatpush1.bf16.msra.mxu0 %v2047
    %4238 = vmatprep.subr.bf16.mxu0 %v2052
    %4239 = vmatpush1.bf16.msra.mxu0 %v2051
    %4240 = vmatprep.subr.bf16.mxu0 %v2056
    %4241 = vmatpush1.bf16.msra.mxu0 %v2055
    %4242 = vmatprep.subr.bf16.mxu0 %v2060
    %4243 = vmatpush1.bf16.msra.mxu0 %v2059
    %4244 = vmatprep.subr.bf16.mxu0 %v2064
    %4245 = vmatpush1.bf16.msra.mxu0 %v2063
    %4246 = vmatprep.subr.bf16.mxu0 0
    %4247 = vmatpush1.bf16.msra.mxu0 0
    %4248 = vmatprep.subr.bf16.mxu0 0
    %4249 = vmatpush1.bf16.msra.mxu0 0
    %4250 = vmatprep.subr.bf16.mxu0 0
    %4251 = vmatpush1.bf16.msra.mxu0 0
    %4252 = vmatprep.subr.bf16.mxu0 0
    %4253 = vmatpush1.bf16.msra.mxu0 0
    %4254 = vmatprep.subr.bf16.mxu0 0
    %4255 = vmatpush1.bf16.msra.mxu0 0
    %4256 = vmatprep.subr.bf16.mxu0 0
    %4257 = vmatpush1.bf16.msra.mxu0 0
    %4258 = vmatprep.subr.bf16.mxu0 0
    %4259 = vmatpush1.bf16.msra.mxu0 0
    %4260 = vmatprep.subr.bf16.mxu0 0
    %4261 = vmatpush1.bf16.msra.mxu0 0
    %4262 = vmatprep.mubr.bf16.mxu0 0
    %4263 = vmatmul.mubr.bf16.gmra.mrb[0].mxu0 %v3753
    %v4264 = vpop.f32.mrb[0].mxu0
    %v4265 = vadd.f32 0.0, %v4264
    %v4266 = vpop.f32.mrb[0].mxu0
    %v4267 = vadd.f32 0.0, %v4266
    %v4268 = vpop.f32.mrb[0].mxu0
    %v4269 = vpop.f32.mrb[0].mxu0
    %4270 = vdwg.mxu0
    %4271 = vmatprep.subr.bf16.mxu0 %v2276
    %4272 = vmatpush1.bf16.msra.mxu0 %v2275
    %4273 = vmatprep.subr.bf16.mxu0 %v2280
    %4274 = vmatpush1.bf16.msra.mxu0 %v2279
    %4275 = vmatprep.subr.bf16.mxu0 %v2284
    %4276 = vmatpush1.bf16.msra.mxu0 %v2283
    %4277 = vmatprep.subr.bf16.mxu0 %v2288
    %4278 = vmatpush1.bf16.msra.mxu0 %v2287
    %4279 = vmatprep.subr.bf16.mxu0 %v2292
    %4280 = vmatpush1.bf16.msra.mxu0 %v2291
    %4281 = vmatprep.subr.bf16.mxu0 %v2296
    %4282 = vmatpush1.bf16.msra.mxu0 %v2295
    %4283 = vmatprep.subr.bf16.mxu0 %v2300
    %4284 = vmatpush1.bf16.msra.mxu0 %v2299
    %4285 = vmatprep.subr.bf16.mxu0 %v2304
    %4286 = vmatpush1.bf16.msra.mxu0 %v2303
    %4287 = vmatprep.subr.bf16.mxu0 0
    %4288 = vmatpush1.bf16.msra.mxu0 0
    %4289 = vmatprep.subr.bf16.mxu0 0
    %4290 = vmatpush1.bf16.msra.mxu0 0
    %4291 = vmatprep.subr.bf16.mxu0 0
    %4292 = vmatpush1.bf16.msra.mxu0 0
    %4293 = vmatprep.subr.bf16.mxu0 0
    %4294 = vmatpush1.bf16.msra.mxu0 0
    %4295 = vmatprep.subr.bf16.mxu0 0
    %4296 = vmatpush1.bf16.msra.mxu0 0
    %4297 = vmatprep.subr.bf16.mxu0 0
    %4298 = vmatpush1.bf16.msra.mxu0 0
    %4299 = vmatprep.subr.bf16.mxu0 0
    %4300 = vmatpush1.bf16.msra.mxu0 0
    %4301 = vmatprep.subr.bf16.mxu0 0
    %4302 = vmatpush1.bf16.msra.mxu0 0
    %4303 = vmatprep.mubr.bf16.mxu0 0
    %4304 = vmatmul.mubr.bf16.gmra.mrb[0].mxu0 %v3996
    %v4305 = vpop.f32.mrb[0].mxu0
    %v4306 = vadd.f32 %v4224, %v4305
    %v4307 = vpop.f32.mrb[0].mxu0
    %v4308 = vadd.f32 %v4226, %v4307
    %v4309 = vpop.f32.mrb[0].mxu0
    %v4310 = vpop.f32.mrb[0].mxu0
    %4311 = vdwg.mxu0
    %4312 = vmatprep.subr.bf16.mxu0 %v2278
    %4313 = vmatpush1.bf16.msra.mxu0 %v2277
    %4314 = vmatprep.subr.bf16.mxu0 %v2282
    %4315 = vmatpush1.bf16.msra.mxu0 %v2281
    %4316 = vmatprep.subr.bf16.mxu0 %v2286
    %4317 = vmatpush1.bf16.msra.mxu0 %v2285
    %4318 = vmatprep.subr.bf16.mxu0 %v2290
    %4319 = vmatpush1.bf16.msra.mxu0 %v2289
    %4320 = vmatprep.subr.bf16.mxu0 %v2294
    %4321 = vmatpush1.bf16.msra.mxu0 %v2293
    %4322 = vmatprep.subr.bf16.mxu0 %v2298
    %4323 = vmatpush1.bf16.msra.mxu0 %v2297
    %4324 = vmatprep.subr.bf16.mxu0 %v2302
    %4325 = vmatpush1.bf16.msra.mxu0 %v2301
    %4326 = vmatprep.subr.bf16.mxu0 %v2306
    %4327 = vmatpush1.bf16.msra.mxu0 %v2305
    %4328 = vmatprep.subr.bf16.mxu0 0
    %4329 = vmatpush1.bf16.msra.mxu0 0
    %4330 = vmatprep.subr.bf16.mxu0 0
    %4331 = vmatpush1.bf16.msra.mxu0 0
    %4332 = vmatprep.subr.bf16.mxu0 0
    %4333 = vmatpush1.bf16.msra.mxu0 0
    %4334 = vmatprep.subr.bf16.mxu0 0
    %4335 = vmatpush1.bf16.msra.mxu0 0
    %4336 = vmatprep.subr.bf16.mxu0 0
    %4337 = vmatpush1.bf16.msra.mxu0 0
    %4338 = vmatprep.subr.bf16.mxu0 0
    %4339 = vmatpush1.bf16.msra.mxu0 0
    %4340 = vmatprep.subr.bf16.mxu0 0
    %4341 = vmatpush1.bf16.msra.mxu0 0
    %4342 = vmatprep.subr.bf16.mxu0 0
    %4343 = vmatpush1.bf16.msra.mxu0 0
    %4344 = vmatprep.mubr.bf16.mxu0 0
    %4345 = vmatmul.mubr.bf16.gmra.mrb[0].mxu0 %v3996
    %v4346 = vpop.f32.mrb[0].mxu0
    %v4347 = vadd.f32 %v4265, %v4346
    %v4348 = vpop.f32.mrb[0].mxu0
    %v4349 = vadd.f32 %v4267, %v4348
    %v4350 = vpop.f32.mrb[0].mxu0
    %v4351 = vpop.f32.mrb[0].mxu0
    %4352 = vdwg.mxu0
    %v4353 = vadd.f32 %v4306, %v246
    %v4354 = vadd.f32 %v4308, %v250
    %v4355 = vadd.f32 %v4347, %v254
    %v4356 = vadd.f32 %v4349, %v258
    %v4357 = vxor.u32 %v4353, 2147483648
    %v4358 = vxor.u32 %v4354, 2147483648
    %v4359 = vxor.u32 %v4355, 2147483648
    %v4360 = vmul.f32 %v4357, 1.442695
    %v4361 = vpow.pop %v4360
    %v4362 = vmul.f32 %v4358, 1.442695
    %v4363 = vpow.pop %v4362
    %v4364 = vmul.f32 %v4359, 1.442695
    %v4365 = vpow.pop %v4364
    %v4366 = vadd.f32 %v4361, 1.0
    %v4367 = vadd.f32 %v4363, 1.0
    %v4368 = vadd.f32 %v4365, 1.0
    %v4369 = vrcp.pop %v4366
    %v4370 = vmul.f32 1.0, %v4369
    %v4371 = vrcp.pop %v4367
    %v4372 = vmul.f32 1.0, %v4371
    %v4373 = vrcp.pop %v4368
    %v4374 = vmul.f32 1.0, %v4373
    %v4375 = vtanh.pop %v4356
    %v4376 = vmul.f32 %v4372, %v3750
    %v4377 = vmul.f32 %v4370, %v4375
    %v4378 = vadd.f32 %v4376, %v4377
    %v4379 = vtanh.pop %v4378
    %v4380 = vmul.f32 %v4374, %v4379
    %v4381 = vpack.c.bf16 %v4380, %v4380
    %4382 = vmatprep.subr.bf16.mxu0 0
    %4383 = vmatpush1.bf16.msra.mxu0 %v2482
    %4384 = vmatprep.subr.bf16.mxu0 0
    %4385 = vmatpush1.bf16.msra.mxu0 %v2483
    %4386 = vmatprep.subr.bf16.mxu0 0
    %4387 = vmatpush1.bf16.msra.mxu0 %v2484
    %4388 = vmatprep.subr.bf16.mxu0 0
    %4389 = vmatpush1.bf16.msra.mxu0 %v2485
    %4390 = vmatprep.subr.bf16.mxu0 0
    %4391 = vmatpush1.bf16.msra.mxu0 %v2486
    %4392 = vmatprep.subr.bf16.mxu0 0
    %4393 = vmatpush1.bf16.msra.mxu0 %v2487
    %4394 = vmatprep.subr.bf16.mxu0 0
    %4395 = vmatpush1.bf16.msra.mxu0 %v2488
    %4396 = vmatprep.subr.bf16.mxu0 0
    %4397 = vmatpush1.bf16.msra.mxu0 %v2489
    %4398 = vmatprep.subr.bf16.mxu0 0
    %4399 = vmatpush1.bf16.msra.mxu0 0
    %4400 = vmatprep.subr.bf16.mxu0 0
    %4401 = vmatpush1.bf16.msra.mxu0 0
    %4402 = vmatprep.subr.bf16.mxu0 0
    %4403 = vmatpush1.bf16.msra.mxu0 0
    %4404 = vmatprep.subr.bf16.mxu0 0
    %4405 = vmatpush1.bf16.msra.mxu0 0
    %4406 = vmatprep.subr.bf16.mxu0 0
    %4407 = vmatpush1.bf16.msra.mxu0 0
    %4408 = vmatprep.subr.bf16.mxu0 0
    %4409 = vmatpush1.bf16.msra.mxu0 0
    %4410 = vmatprep.subr.bf16.mxu0 0
    %4411 = vmatpush1.bf16.msra.mxu0 0
    %4412 = vmatprep.subr.bf16.mxu0 0
    %4413 = vmatpush1.bf16.msra.mxu0 0
    %4414 = vmatprep.mubr.bf16.mxu0 0
    %4415 = vmatmul.mubr.bf16.gmra.mrb[0].mxu0 %v4381
    %v4416 = vpop.f32.mrb[0].mxu0
    %v4417 = vadd.f32 %v268, %v4416
    %v4418 = vpop.f32.mrb[0].mxu0
    %v4419 = vpop.f32.mrb[0].mxu0
    %v4420 = vpop.f32.mrb[0].mxu0
    %4421 = vdwg.mxu0
    %v4424 = vunpack.c.l.s4 1966171168
    %v4425 = vunpack.c.0.s8 %v4424
    %v4426 = vlaneseq
    %v4427 = vshrl.u32 %v4426, 7
    %v4428 = vsub.s32 %v4425, %v4427
    %v4429 = vrot.slane %v4417, %v4428
    %v4430 = vcombine.high %v4429, %v4429
    %v4432 = vunpack.c.l.s4 1966171168
    %v4433 = vunpack.c.0.s8 %v4432
    %v4434 = vlaneseq
    %v4435 = vshrl.u32 %v4434, 7
    %v4436 = vsub.s32 %v4433, %v4435
    %v4437 = vrot.slane %v4429, %v4436
    %v4439 = vunpack.c.l.s4 1966171168
    %v4440 = vunpack.c.0.s8 %v4439
    %v4441 = vlaneseq
    %v4442 = vshrl.u32 %v4441, 7
    %v4443 = vsub.s32 %v4440, %v4442
    %v4444 = vrot.slane %v4430, %v4443
    %4447 = vst [vmem:[#allocation2 + $0x3] sm:$0x1] %v4437
    %4448 = vst [vmem:[#allocation2 + $0xb] sm:$0x1] %v4444
    %v4449 = vpack.c.bf16 %v3994, %v3994
    %v4450 = vpack.c.bf16 %v3995, %v3995
    %v4453 = vunpack.c.l.b16 %v4449
    %v4454 = vunpack.c.l.b16 %v4450
    %v4455 = vrot.slane %v4453, 5
    %v4456 = vrot.slane %v4454, 4
    %v4457 = vsel %vm894, %v4456, %v4455
    %v4458 = vpack.c.b16 %v4457, %v4457
    %4460 = vmatprep.subr.bf16.mxu0 %v670
    %4461 = vmatpush1.bf16.msra.mxu0 %v669
    %4462 = vmatprep.subr.bf16.mxu0 %v674
    %4463 = vmatpush1.bf16.msra.mxu0 %v673
    %4464 = vmatprep.subr.bf16.mxu0 %v678
    %4465 = vmatpush1.bf16.msra.mxu0 %v677
    %4466 = vmatprep.subr.bf16.mxu0 %v682
    %4467 = vmatpush1.bf16.msra.mxu0 %v681
    %4468 = vmatprep.subr.bf16.mxu0 %v686
    %4469 = vmatpush1.bf16.msra.mxu0 %v685
    %4470 = vmatprep.subr.bf16.mxu0 %v690
    %4471 = vmatpush1.bf16.msra.mxu0 %v689
    %4472 = vmatprep.subr.bf16.mxu0 %v694
    %4473 = vmatpush1.bf16.msra.mxu0 %v693
    %4474 = vmatprep.subr.bf16.mxu0 %v698
    %4475 = vmatpush1.bf16.msra.mxu0 %v697
    %4476 = vmatprep.subr.bf16.mxu0 0
    %4477 = vmatpush1.bf16.msra.mxu0 0
    %4478 = vmatprep.subr.bf16.mxu0 0
    %4479 = vmatpush1.bf16.msra.mxu0 0
    %4480 = vmatprep.subr.bf16.mxu0 0
    %4481 = vmatpush1.bf16.msra.mxu0 0
    %4482 = vmatprep.subr.bf16.mxu0 0
    %4483 = vmatpush1.bf16.msra.mxu0 0
    %4484 = vmatprep.subr.bf16.mxu0 0
    %4485 = vmatpush1.bf16.msra.mxu0 0
    %4486 = vmatprep.subr.bf16.mxu0 0
    %4487 = vmatpush1.bf16.msra.mxu0 0
    %4488 = vmatprep.subr.bf16.mxu0 0
    %4489 = vmatpush1.bf16.msra.mxu0 0
    %4490 = vmatprep.subr.bf16.mxu0 0
    %4491 = vmatpush1.bf16.msra.mxu0 0
    %4492 = vmatprep.mubr.bf16.mxu0 0
    %4493 = vmatmul.mubr.bf16.gmra.mrb[0].mxu0 %v4458
    %v4494 = vpop.f32.mrb[0].mxu0
    %v4495 = vadd.f32 0.0, %v4494
    %v4496 = vpop.f32.mrb[0].mxu0
    %v4497 = vadd.f32 0.0, %v4496
    %v4498 = vpop.f32.mrb[0].mxu0
    %v4499 = vpop.f32.mrb[0].mxu0
    %4500 = vdwg.mxu0
    %4501 = vmatprep.subr.bf16.mxu0 %v672
    %4502 = vmatpush1.bf16.msra.mxu0 %v671
    %4503 = vmatprep.subr.bf16.mxu0 %v676
    %4504 = vmatpush1.bf16.msra.mxu0 %v675
    %4505 = vmatprep.subr.bf16.mxu0 %v680
    %4506 = vmatpush1.bf16.msra.mxu0 %v679
    %4507 = vmatprep.subr.bf16.mxu0 %v684
    %4508 = vmatpush1.bf16.msra.mxu0 %v683
    %4509 = vmatprep.subr.bf16.mxu0 %v688
    %4510 = vmatpush1.bf16.msra.mxu0 %v687
    %4511 = vmatprep.subr.bf16.mxu0 %v692
    %4512 = vmatpush1.bf16.msra.mxu0 %v691
    %4513 = vmatprep.subr.bf16.mxu0 %v696
    %4514 = vmatpush1.bf16.msra.mxu0 %v695
    %4515 = vmatprep.subr.bf16.mxu0 %v700
    %4516 = vmatpush1.bf16.msra.mxu0 %v699
    %4517 = vmatprep.subr.bf16.mxu0 0
    %4518 = vmatpush1.bf16.msra.mxu0 0
    %4519 = vmatprep.subr.bf16.mxu0 0
    %4520 = vmatpush1.bf16.msra.mxu0 0
    %4521 = vmatprep.subr.bf16.mxu0 0
    %4522 = vmatpush1.bf16.msra.mxu0 0
    %4523 = vmatprep.subr.bf16.mxu0 0
    %4524 = vmatpush1.bf16.msra.mxu0 0
    %4525 = vmatprep.subr.bf16.mxu0 0
    %4526 = vmatpush1.bf16.msra.mxu0 0
    %4527 = vmatprep.subr.bf16.mxu0 0
    %4528 = vmatpush1.bf16.msra.mxu0 0
    %4529 = vmatprep.subr.bf16.mxu0 0
    %4530 = vmatpush1.bf16.msra.mxu0 0
    %4531 = vmatprep.subr.bf16.mxu0 0
    %4532 = vmatpush1.bf16.msra.mxu0 0
    %4533 = vmatprep.mubr.bf16.mxu0 0
    %4534 = vmatmul.mubr.bf16.gmra.mrb[0].mxu0 %v4458
    %v4535 = vpop.f32.mrb[0].mxu0
    %v4536 = vadd.f32 0.0, %v4535
    %v4537 = vpop.f32.mrb[0].mxu0
    %v4538 = vadd.f32 0.0, %v4537
    %v4539 = vpop.f32.mrb[0].mxu0
    %v4540 = vpop.f32.mrb[0].mxu0
    %4541 = vdwg.mxu0
    %v4546 = vrot.slane %v4495, 2
    %v4547 = vrot.slane %v4497, 2
    %v4548 = vrot.slane %v4536, 2
    %v4549 = vrot.slane %v4538, 2
    %v4550 = vrot.slane %v4495, 3
    %v4551 = vrot.slane %v4497, 3
    %v4552 = vrot.slane %v4536, 3
    %v4553 = vrot.slane %v4538, 3
    %v4562 = vadd.f32 %v522, %v4546
    %v4563 = vadd.f32 %v524, %v4547
    %v4564 = vadd.f32 %v565, %v4548
    %v4565 = vadd.f32 %v567, %v4549
    %v4566 = vadd.f32 %v526, %v4550
    %v4567 = vadd.f32 %v528, %v4551
    %v4568 = vadd.f32 %v569, %v4552
    %v4569 = vadd.f32 %v571, %v4553
    %v4570 = vxor.u32 %v4562, 2147483648
    %v4571 = vxor.u32 %v4563, 2147483648
    %v4572 = vxor.u32 %v4564, 2147483648
    %v4573 = vxor.u32 %v4566, 2147483648
    %v4574 = vxor.u32 %v4567, 2147483648
    %v4575 = vxor.u32 %v4568, 2147483648
    %v4576 = vmul.f32 %v4570, 1.442695
    %v4577 = vpow.pop %v4576
    %v4578 = vmul.f32 %v4571, 1.442695
    %v4579 = vpow.pop %v4578
    %v4580 = vmul.f32 %v4572, 1.442695
    %v4581 = vpow.pop %v4580
    %v4582 = vmul.f32 %v4573, 1.442695
    %v4583 = vpow.pop %v4582
    %v4584 = vmul.f32 %v4574, 1.442695
    %v4585 = vpow.pop %v4584
    %v4586 = vmul.f32 %v4575, 1.442695
    %v4587 = vpow.pop %v4586
    %v4588 = vadd.f32 %v4577, 1.0
    %v4589 = vadd.f32 %v4579, 1.0
    %v4590 = vadd.f32 %v4581, 1.0
    %v4591 = vadd.f32 %v4583, 1.0
    %v4592 = vadd.f32 %v4585, 1.0
    %v4593 = vadd.f32 %v4587, 1.0
    %v4594 = vrcp.pop %v4588
    %v4595 = vmul.f32 1.0, %v4594
    %v4596 = vrcp.pop %v4589
    %v4597 = vmul.f32 1.0, %v4596
    %v4598 = vrcp.pop %v4590
    %v4599 = vmul.f32 1.0, %v4598
    %v4600 = vrcp.pop %v4591
    %v4601 = vmul.f32 1.0, %v4600
    %v4602 = vrcp.pop %v4592
    %v4603 = vmul.f32 1.0, %v4602
    %v4604 = vrcp.pop %v4593
    %v4605 = vmul.f32 1.0, %v4604
    %v4606 = vtanh.pop %v4565
    %v4607 = vtanh.pop %v4569
    %v4610 = vrot.slane %v3990, 7
    %v4611 = vrot.slane %v3991, 7
    %v4614 = vmul.f32 %v4597, %v4610
    %v4615 = vmul.f32 %v4603, %v4611
    %v4616 = vmul.f32 %v4595, %v4606
    %v4617 = vmul.f32 %v4601, %v4607
    %v4618 = vadd.f32 %v4614, %v4616
    %v4619 = vadd.f32 %v4615, %v4617
    %v4620 = vtanh.pop %v4618
    %v4621 = vtanh.pop %v4619
    %v4622 = vmul.f32 %v4599, %v4620
    %v4623 = vmul.f32 %v4605, %v4621
    %v4624 = vpack.c.bf16 %v4188, %v4188
    %4625 = vmatprep.subr.bf16.mxu0 %v1155
    %4626 = vmatpush1.bf16.msra.mxu0 %v1154
    %4627 = vmatprep.subr.bf16.mxu0 %v1159
    %4628 = vmatpush1.bf16.msra.mxu0 %v1158
    %4629 = vmatprep.subr.bf16.mxu0 %v1163
    %4630 = vmatpush1.bf16.msra.mxu0 %v1162
    %4631 = vmatprep.subr.bf16.mxu0 %v1167
    %4632 = vmatpush1.bf16.msra.mxu0 %v1166
    %4633 = vmatprep.subr.bf16.mxu0 %v1171
    %4634 = vmatpush1.bf16.msra.mxu0 %v1170
    %4635 = vmatprep.subr.bf16.mxu0 %v1175
    %4636 = vmatpush1.bf16.msra.mxu0 %v1174
    %4637 = vmatprep.subr.bf16.mxu0 %v1179
    %4638 = vmatpush1.bf16.msra.mxu0 %v1178
    %4639 = vmatprep.subr.bf16.mxu0 %v1183
    %4640 = vmatpush1.bf16.msra.mxu0 %v1182
    %4641 = vmatprep.subr.bf16.mxu0 0
    %4642 = vmatpush1.bf16.msra.mxu0 0
    %4643 = vmatprep.subr.bf16.mxu0 0
    %4644 = vmatpush1.bf16.msra.mxu0 0
    %4645 = vmatprep.subr.bf16.mxu0 0
    %4646 = vmatpush1.bf16.msra.mxu0 0
    %4647 = vmatprep.subr.bf16.mxu0 0
    %4648 = vmatpush1.bf16.msra.mxu0 0
    %4649 = vmatprep.subr.bf16.mxu0 0
    %4650 = vmatpush1.bf16.msra.mxu0 0
    %4651 = vmatprep.subr.bf16.mxu0 0
    %4652 = vmatpush1.bf16.msra.mxu0 0
    %4653 = vmatprep.subr.bf16.mxu0 0
    %4654 = vmatpush1.bf16.msra.mxu0 0
    %4655 = vmatprep.subr.bf16.mxu0 0
    %4656 = vmatpush1.bf16.msra.mxu0 0
    %4657 = vmatprep.mubr.bf16.mxu0 0
    %4658 = vmatmul.mubr.bf16.gmra.mrb[0].mxu0 %v4624
    %v4659 = vpop.f32.mrb[0].mxu0
    %v4660 = vadd.f32 0.0, %v4659
    %v4661 = vpop.f32.mrb[0].mxu0
    %v4662 = vadd.f32 0.0, %v4661
    %v4663 = vpop.f32.mrb[0].mxu0
    %v4664 = vpop.f32.mrb[0].mxu0
    %4665 = vdwg.mxu0
    %4666 = vmatprep.subr.bf16.mxu0 %v1157
    %4667 = vmatpush1.bf16.msra.mxu0 %v1156
    %4668 = vmatprep.subr.bf16.mxu0 %v1161
    %4669 = vmatpush1.bf16.msra.mxu0 %v1160
    %4670 = vmatprep.subr.bf16.mxu0 %v1165
    %4671 = vmatpush1.bf16.msra.mxu0 %v1164
    %4672 = vmatprep.subr.bf16.mxu0 %v1169
    %4673 = vmatpush1.bf16.msra.mxu0 %v1168
    %4674 = vmatprep.subr.bf16.mxu0 %v1173
    %4675 = vmatpush1.bf16.msra.mxu0 %v1172
    %4676 = vmatprep.subr.bf16.mxu0 %v1177
    %4677 = vmatpush1.bf16.msra.mxu0 %v1176
    %4678 = vmatprep.subr.bf16.mxu0 %v1181
    %4679 = vmatpush1.bf16.msra.mxu0 %v1180
    %4680 = vmatprep.subr.bf16.mxu0 %v1185
    %4681 = vmatpush1.bf16.msra.mxu0 %v1184
    %4682 = vmatprep.subr.bf16.mxu0 0
    %4683 = vmatpush1.bf16.msra.mxu0 0
    %4684 = vmatprep.subr.bf16.mxu0 0
    %4685 = vmatpush1.bf16.msra.mxu0 0
    %4686 = vmatprep.subr.bf16.mxu0 0
    %4687 = vmatpush1.bf16.msra.mxu0 0
    %4688 = vmatprep.subr.bf16.mxu0 0
    %4689 = vmatpush1.bf16.msra.mxu0 0
    %4690 = vmatprep.subr.bf16.mxu0 0
    %4691 = vmatpush1.bf16.msra.mxu0 0
    %4692 = vmatprep.subr.bf16.mxu0 0
    %4693 = vmatpush1.bf16.msra.mxu0 0
    %4694 = vmatprep.subr.bf16.mxu0 0
    %4695 = vmatpush1.bf16.msra.mxu0 0
    %4696 = vmatprep.subr.bf16.mxu0 0
    %4697 = vmatpush1.bf16.msra.mxu0 0
    %4698 = vmatprep.mubr.bf16.mxu0 0
    %4699 = vmatmul.mubr.bf16.gmra.mrb[0].mxu0 %v4624
    %v4700 = vpop.f32.mrb[0].mxu0
    %v4701 = vadd.f32 0.0, %v4700
    %v4702 = vpop.f32.mrb[0].mxu0
    %v4703 = vadd.f32 0.0, %v4702
    %v4704 = vpop.f32.mrb[0].mxu0
    %v4705 = vpop.f32.mrb[0].mxu0
    %4706 = vdwg.mxu0
    %4707 = vmatprep.subr.bf16.mxu0 %v1397
    %4708 = vmatpush1.bf16.msra.mxu0 %v1396
    %4709 = vmatprep.subr.bf16.mxu0 %v1401
    %4710 = vmatpush1.bf16.msra.mxu0 %v1400
    %4711 = vmatprep.subr.bf16.mxu0 %v1405
    %4712 = vmatpush1.bf16.msra.mxu0 %v1404
    %4713 = vmatprep.subr.bf16.mxu0 %v1409
    %4714 = vmatpush1.bf16.msra.mxu0 %v1408
    %4715 = vmatprep.subr.bf16.mxu0 %v1413
    %4716 = vmatpush1.bf16.msra.mxu0 %v1412
    %4717 = vmatprep.subr.bf16.mxu0 %v1417
    %4718 = vmatpush1.bf16.msra.mxu0 %v1416
    %4719 = vmatprep.subr.bf16.mxu0 %v1421
    %4720 = vmatpush1.bf16.msra.mxu0 %v1420
    %4721 = vmatprep.subr.bf16.mxu0 %v1425
    %4722 = vmatpush1.bf16.msra.mxu0 %v1424
    %4723 = vmatprep.subr.bf16.mxu0 0
    %4724 = vmatpush1.bf16.msra.mxu0 0
    %4725 = vmatprep.subr.bf16.mxu0 0
    %4726 = vmatpush1.bf16.msra.mxu0 0
    %4727 = vmatprep.subr.bf16.mxu0 0
    %4728 = vmatpush1.bf16.msra.mxu0 0
    %4729 = vmatprep.subr.bf16.mxu0 0
    %4730 = vmatpush1.bf16.msra.mxu0 0
    %4731 = vmatprep.subr.bf16.mxu0 0
    %4732 = vmatpush1.bf16.msra.mxu0 0
    %4733 = vmatprep.subr.bf16.mxu0 0
    %4734 = vmatpush1.bf16.msra.mxu0 0
    %4735 = vmatprep.subr.bf16.mxu0 0
    %4736 = vmatpush1.bf16.msra.mxu0 0
    %4737 = vmatprep.subr.bf16.mxu0 0
    %4738 = vmatpush1.bf16.msra.mxu0 0
    %4739 = vmatprep.mubr.bf16.mxu0 0
    %4740 = vmatmul.mubr.bf16.gmra.mrb[0].mxu0 %v4458
    %v4741 = vpop.f32.mrb[0].mxu0
    %v4742 = vadd.f32 %v4660, %v4741
    %v4743 = vpop.f32.mrb[0].mxu0
    %v4744 = vadd.f32 %v4662, %v4743
    %v4745 = vpop.f32.mrb[0].mxu0
    %v4746 = vpop.f32.mrb[0].mxu0
    %4747 = vdwg.mxu0
    %4748 = vmatprep.subr.bf16.mxu0 %v1399
    %4749 = vmatpush1.bf16.msra.mxu0 %v1398
    %4750 = vmatprep.subr.bf16.mxu0 %v1403
    %4751 = vmatpush1.bf16.msra.mxu0 %v1402
    %4752 = vmatprep.subr.bf16.mxu0 %v1407
    %4753 = vmatpush1.bf16.msra.mxu0 %v1406
    %4754 = vmatprep.subr.bf16.mxu0 %v1411
    %4755 = vmatpush1.bf16.msra.mxu0 %v1410
    %4756 = vmatprep.subr.bf16.mxu0 %v1415
    %4757 = vmatpush1.bf16.msra.mxu0 %v1414
    %4758 = vmatprep.subr.bf16.mxu0 %v1419
    %4759 = vmatpush1.bf16.msra.mxu0 %v1418
    %4760 = vmatprep.subr.bf16.mxu0 %v1423
    %4761 = vmatpush1.bf16.msra.mxu0 %v1422
    %4762 = vmatprep.subr.bf16.mxu0 %v1427
    %4763 = vmatpush1.bf16.msra.mxu0 %v1426
    %4764 = vmatprep.subr.bf16.mxu0 0
    %4765 = vmatpush1.bf16.msra.mxu0 0
    %4766 = vmatprep.subr.bf16.mxu0 0
    %4767 = vmatpush1.bf16.msra.mxu0 0
    %4768 = vmatprep.subr.bf16.mxu0 0
    %4769 = vmatpush1.bf16.msra.mxu0 0
    %4770 = vmatprep.subr.bf16.mxu0 0
    %4771 = vmatpush1.bf16.msra.mxu0 0
    %4772 = vmatprep.subr.bf16.mxu0 0
    %4773 = vmatpush1.bf16.msra.mxu0 0
    %4774 = vmatprep.subr.bf16.mxu0 0
    %4775 = vmatpush1.bf16.msra.mxu0 0
    %4776 = vmatprep.subr.bf16.mxu0 0
    %4777 = vmatpush1.bf16.msra.mxu0 0
    %4778 = vmatprep.subr.bf16.mxu0 0
    %4779 = vmatpush1.bf16.msra.mxu0 0
    %4780 = vmatprep.mubr.bf16.mxu0 0
    %4781 = vmatmul.mubr.bf16.gmra.mrb[0].mxu0 %v4458
    %v4782 = vpop.f32.mrb[0].mxu0
    %v4783 = vadd.f32 %v4701, %v4782
    %v4784 = vpop.f32.mrb[0].mxu0
    %v4785 = vadd.f32 %v4703, %v4784
    %v4786 = vpop.f32.mrb[0].mxu0
    %v4787 = vpop.f32.mrb[0].mxu0
    %4788 = vdwg.mxu0
    %v4789 = vadd.f32 %v4742, %v224
    %v4790 = vadd.f32 %v4744, %v228
    %v4791 = vadd.f32 %v4783, %v232
    %v4792 = vadd.f32 %v4785, %v236
    %v4793 = vxor.u32 %v4789, 2147483648
    %v4794 = vxor.u32 %v4790, 2147483648
    %v4795 = vxor.u32 %v4791, 2147483648
    %v4796 = vmul.f32 %v4793, 1.442695
    %v4797 = vpow.pop %v4796
    %v4798 = vmul.f32 %v4794, 1.442695
    %v4799 = vpow.pop %v4798
    %v4800 = vmul.f32 %v4795, 1.442695
    %v4801 = vpow.pop %v4800
    %v4802 = vadd.f32 %v4797, 1.0
    %v4803 = vadd.f32 %v4799, 1.0
    %v4804 = vadd.f32 %v4801, 1.0
    %v4805 = vrcp.pop %v4802
    %v4806 = vmul.f32 1.0, %v4805
    %v4807 = vrcp.pop %v4803
    %v4808 = vmul.f32 1.0, %v4807
    %v4809 = vrcp.pop %v4804
    %v4810 = vmul.f32 1.0, %v4809
    %v4811 = vtanh.pop %v4792
    %v4812 = vmul.f32 %v4808, %v4186
    %v4813 = vmul.f32 %v4806, %v4811
    %v4814 = vadd.f32 %v4812, %v4813
    %v4815 = vtanh.pop %v4814
    %v4816 = vmul.f32 %v4810, %v4815
    %4817 = vmatprep.subr.bf16.mxu0 %v2034
    %4818 = vmatpush1.bf16.msra.mxu0 %v2033
    %4819 = vmatprep.subr.bf16.mxu0 %v2038
    %4820 = vmatpush1.bf16.msra.mxu0 %v2037
    %4821 = vmatprep.subr.bf16.mxu0 %v2042
    %4822 = vmatpush1.bf16.msra.mxu0 %v2041
    %4823 = vmatprep.subr.bf16.mxu0 %v2046
    %4824 = vmatpush1.bf16.msra.mxu0 %v2045
    %4825 = vmatprep.subr.bf16.mxu0 %v2050
    %4826 = vmatpush1.bf16.msra.mxu0 %v2049
    %4827 = vmatprep.subr.bf16.mxu0 %v2054
    %4828 = vmatpush1.bf16.msra.mxu0 %v2053
    %4829 = vmatprep.subr.bf16.mxu0 %v2058
    %4830 = vmatpush1.bf16.msra.mxu0 %v2057
    %4831 = vmatprep.subr.bf16.mxu0 %v2062
    %4832 = vmatpush1.bf16.msra.mxu0 %v2061
    %4833 = vmatprep.subr.bf16.mxu0 0
    %4834 = vmatpush1.bf16.msra.mxu0 0
    %4835 = vmatprep.subr.bf16.mxu0 0
    %4836 = vmatpush1.bf16.msra.mxu0 0
    %4837 = vmatprep.subr.bf16.mxu0 0
    %4838 = vmatpush1.bf16.msra.mxu0 0
    %4839 = vmatprep.subr.bf16.mxu0 0
    %4840 = vmatpush1.bf16.msra.mxu0 0
    %4841 = vmatprep.subr.bf16.mxu0 0
    %4842 = vmatpush1.bf16.msra.mxu0 0
    %4843 = vmatprep.subr.bf16.mxu0 0
    %4844 = vmatpush1.bf16.msra.mxu0 0
    %4845 = vmatprep.subr.bf16.mxu0 0
    %4846 = vmatpush1.bf16.msra.mxu0 0
    %4847 = vmatprep.subr.bf16.mxu0 0
    %4848 = vmatpush1.bf16.msra.mxu0 0
    %4849 = vmatprep.mubr.bf16.mxu0 0
    %4850 = vmatmul.mubr.bf16.gmra.mrb[0].mxu0 %v4381
    %v4851 = vpop.f32.mrb[0].mxu0
    %v4852 = vadd.f32 0.0, %v4851
    %v4853 = vpop.f32.mrb[0].mxu0
    %v4854 = vadd.f32 0.0, %v4853
    %v4855 = vpop.f32.mrb[0].mxu0
    %v4856 = vpop.f32.mrb[0].mxu0
    %4857 = vdwg.mxu0
    %4858 = vmatprep.subr.bf16.mxu0 %v2036
    %4859 = vmatpush1.bf16.msra.mxu0 %v2035
    %4860 = vmatprep.subr.bf16.mxu0 %v2040
    %4861 = vmatpush1.bf16.msra.mxu0 %v2039
    %4862 = vmatprep.subr.bf16.mxu0 %v2044
    %4863 = vmatpush1.bf16.msra.mxu0 %v2043
    %4864 = vmatprep.subr.bf16.mxu0 %v2048
    %4865 = vmatpush1.bf16.msra.mxu0 %v2047
    %4866 = vmatprep.subr.bf16.mxu0 %v2052
    %4867 = vmatpush1.bf16.msra.mxu0 %v2051
    %4868 = vmatprep.subr.bf16.mxu0 %v2056
    %4869 = vmatpush1.bf16.msra.mxu0 %v2055
    %4870 = vmatprep.subr.bf16.mxu0 %v2060
    %4871 = vmatpush1.bf16.msra.mxu0 %v2059
    %4872 = vmatprep.subr.bf16.mxu0 %v2064
    %4873 = vmatpush1.bf16.msra.mxu0 %v2063
    %4874 = vmatprep.subr.bf16.mxu0 0
    %4875 = vmatpush1.bf16.msra.mxu0 0
    %4876 = vmatprep.subr.bf16.mxu0 0
    %4877 = vmatpush1.bf16.msra.mxu0 0
    %4878 = vmatprep.subr.bf16.mxu0 0
    %4879 = vmatpush1.bf16.msra.mxu0 0
    %4880 = vmatprep.subr.bf16.mxu0 0
    %4881 = vmatpush1.bf16.msra.mxu0 0
    %4882 = vmatprep.subr.bf16.mxu0 0
    %4883 = vmatpush1.bf16.msra.mxu0 0
    %4884 = vmatprep.subr.bf16.mxu0 0
    %4885 = vmatpush1.bf16.msra.mxu0 0
    %4886 = vmatprep.subr.bf16.mxu0 0
    %4887 = vmatpush1.bf16.msra.mxu0 0
    %4888 = vmatprep.subr.bf16.mxu0 0
    %4889 = vmatpush1.bf16.msra.mxu0 0
    %4890 = vmatprep.mubr.bf16.mxu0 0
    %4891 = vmatmul.mubr.bf16.gmra.mrb[0].mxu0 %v4381
    %v4892 = vpop.f32.mrb[0].mxu0
    %v4893 = vadd.f32 0.0, %v4892
    %v4894 = vpop.f32.mrb[0].mxu0
    %v4895 = vadd.f32 0.0, %v4894
    %v4896 = vpop.f32.mrb[0].mxu0
    %v4897 = vpop.f32.mrb[0].mxu0
    %4898 = vdwg.mxu0
    %4899 = vmatprep.subr.bf16.mxu0 %v2276
    %4900 = vmatpush1.bf16.msra.mxu0 %v2275
    %4901 = vmatprep.subr.bf16.mxu0 %v2280
    %4902 = vmatpush1.bf16.msra.mxu0 %v2279
    %4903 = vmatprep.subr.bf16.mxu0 %v2284
    %4904 = vmatpush1.bf16.msra.mxu0 %v2283
    %4905 = vmatprep.subr.bf16.mxu0 %v2288
    %4906 = vmatpush1.bf16.msra.mxu0 %v2287
    %4907 = vmatprep.subr.bf16.mxu0 %v2292
    %4908 = vmatpush1.bf16.msra.mxu0 %v2291
    %4909 = vmatprep.subr.bf16.mxu0 %v2296
    %4910 = vmatpush1.bf16.msra.mxu0 %v2295
    %4911 = vmatprep.subr.bf16.mxu0 %v2300
    %4912 = vmatpush1.bf16.msra.mxu0 %v2299
    %4913 = vmatprep.subr.bf16.mxu0 %v2304
    %4914 = vmatpush1.bf16.msra.mxu0 %v2303
    %4915 = vmatprep.subr.bf16.mxu0 0
    %4916 = vmatpush1.bf16.msra.mxu0 0
    %4917 = vmatprep.subr.bf16.mxu0 0
    %4918 = vmatpush1.bf16.msra.mxu0 0
    %4919 = vmatprep.subr.bf16.mxu0 0
    %4920 = vmatpush1.bf16.msra.mxu0 0
    %4921 = vmatprep.subr.bf16.mxu0 0
    %4922 = vmatpush1.bf16.msra.mxu0 0
    %4923 = vmatprep.subr.bf16.mxu0 0
    %4924 = vmatpush1.bf16.msra.mxu0 0
    %4925 = vmatprep.subr.bf16.mxu0 0
    %4926 = vmatpush1.bf16.msra.mxu0 0
    %4927 = vmatprep.subr.bf16.mxu0 0
    %4928 = vmatpush1.bf16.msra.mxu0 0
    %4929 = vmatprep.subr.bf16.mxu0 0
    %4930 = vmatpush1.bf16.msra.mxu0 0
    %4931 = vmatprep.mubr.bf16.mxu0 0
    %4932 = vmatmul.mubr.bf16.gmra.mrb[0].mxu0 %v4624
    %v4933 = vpop.f32.mrb[0].mxu0
    %v4934 = vadd.f32 %v4852, %v4933
    %v4935 = vpop.f32.mrb[0].mxu0
    %v4936 = vadd.f32 %v4854, %v4935
    %v4937 = vpop.f32.mrb[0].mxu0
    %v4938 = vpop.f32.mrb[0].mxu0
    %4939 = vdwg.mxu0
    %4940 = vmatprep.subr.bf16.mxu0 %v2278
    %4941 = vmatpush1.bf16.msra.mxu0 %v2277
    %4942 = vmatprep.subr.bf16.mxu0 %v2282
    %4943 = vmatpush1.bf16.msra.mxu0 %v2281
    %4944 = vmatprep.subr.bf16.mxu0 %v2286
    %4945 = vmatpush1.bf16.msra.mxu0 %v2285
    %4946 = vmatprep.subr.bf16.mxu0 %v2290
    %4947 = vmatpush1.bf16.msra.mxu0 %v2289
    %4948 = vmatprep.subr.bf16.mxu0 %v2294
    %4949 = vmatpush1.bf16.msra.mxu0 %v2293
    %4950 = vmatprep.subr.bf16.mxu0 %v2298
    %4951 = vmatpush1.bf16.msra.mxu0 %v2297
    %4952 = vmatprep.subr.bf16.mxu0 %v2302
    %4953 = vmatpush1.bf16.msra.mxu0 %v2301
    %4954 = vmatprep.subr.bf16.mxu0 %v2306
    %4955 = vmatpush1.bf16.msra.mxu0 %v2305
    %4956 = vmatprep.subr.bf16.mxu0 0
    %4957 = vmatpush1.bf16.msra.mxu0 0
    %4958 = vmatprep.subr.bf16.mxu0 0
    %4959 = vmatpush1.bf16.msra.mxu0 0
    %4960 = vmatprep.subr.bf16.mxu0 0
    %4961 = vmatpush1.bf16.msra.mxu0 0
    %4962 = vmatprep.subr.bf16.mxu0 0
    %4963 = vmatpush1.bf16.msra.mxu0 0
    %4964 = vmatprep.subr.bf16.mxu0 0
    %4965 = vmatpush1.bf16.msra.mxu0 0
    %4966 = vmatprep.subr.bf16.mxu0 0
    %4967 = vmatpush1.bf16.msra.mxu0 0
    %4968 = vmatprep.subr.bf16.mxu0 0
    %4969 = vmatpush1.bf16.msra.mxu0 0
    %4970 = vmatprep.subr.bf16.mxu0 0
    %4971 = vmatpush1.bf16.msra.mxu0 0
    %4972 = vmatprep.mubr.bf16.mxu0 0
    %4973 = vmatmul.mubr.bf16.gmra.mrb[0].mxu0 %v4624
    %v4974 = vpop.f32.mrb[0].mxu0
    %v4975 = vadd.f32 %v4893, %v4974
    %v4976 = vpop.f32.mrb[0].mxu0
    %v4977 = vadd.f32 %v4895, %v4976
    %v4978 = vpop.f32.mrb[0].mxu0
    %v4979 = vpop.f32.mrb[0].mxu0
    %4980 = vdwg.mxu0
    %v4981 = vadd.f32 %v4934, %v246
    %v4982 = vadd.f32 %v4936, %v250
    %v4983 = vadd.f32 %v4975, %v254
    %v4984 = vadd.f32 %v4977, %v258
    %v4985 = vxor.u32 %v4981, 2147483648
    %v4986 = vxor.u32 %v4982, 2147483648
    %v4987 = vxor.u32 %v4983, 2147483648
    %v4988 = vmul.f32 %v4985, 1.442695
    %v4989 = vpow.pop %v4988
    %v4990 = vmul.f32 %v4986, 1.442695
    %v4991 = vpow.pop %v4990
    %v4992 = vmul.f32 %v4987, 1.442695
    %v4993 = vpow.pop %v4992
    %v4994 = vadd.f32 %v4989, 1.0
    %v4995 = vadd.f32 %v4991, 1.0
    %v4996 = vadd.f32 %v4993, 1.0
    %v4997 = vrcp.pop %v4994
    %v4998 = vmul.f32 1.0, %v4997
    %v4999 = vrcp.pop %v4995
    %v5000 = vmul.f32 1.0, %v4999
    %v5001 = vrcp.pop %v4996
    %v5002 = vmul.f32 1.0, %v5001
    %v5003 = vtanh.pop %v4984
    %v5004 = vmul.f32 %v5000, %v4378
    %v5005 = vmul.f32 %v4998, %v5003
    %v5006 = vadd.f32 %v5004, %v5005
    %v5007 = vtanh.pop %v5006
    %v5008 = vmul.f32 %v5002, %v5007
    %v5009 = vpack.c.bf16 %v5008, %v5008
    %5010 = vmatprep.subr.bf16.mxu0 0
    %5011 = vmatpush1.bf16.msra.mxu0 %v2482
    %5012 = vmatprep.subr.bf16.mxu0 0
    %5013 = vmatpush1.bf16.msra.mxu0 %v2483
    %5014 = vmatprep.subr.bf16.mxu0 0
    %5015 = vmatpush1.bf16.msra.mxu0 %v2484
    %5016 = vmatprep.subr.bf16.mxu0 0
    %5017 = vmatpush1.bf16.msra.mxu0 %v2485
    %5018 = vmatprep.subr.bf16.mxu0 0
    %5019 = vmatpush1.bf16.msra.mxu0 %v2486
    %5020 = vmatprep.subr.bf16.mxu0 0
    %5021 = vmatpush1.bf16.msra.mxu0 %v2487
    %5022 = vmatprep.subr.bf16.mxu0 0
    %5023 = vmatpush1.bf16.msra.mxu0 %v2488
    %5024 = vmatprep.subr.bf16.mxu0 0
    %5025 = vmatpush1.bf16.msra.mxu0 %v2489
    %5026 = vmatprep.subr.bf16.mxu0 0
    %5027 = vmatpush1.bf16.msra.mxu0 0
    %5028 = vmatprep.subr.bf16.mxu0 0
    %5029 = vmatpush1.bf16.msra.mxu0 0
    %5030 = vmatprep.subr.bf16.mxu0 0
    %5031 = vmatpush1.bf16.msra.mxu0 0
    %5032 = vmatprep.subr.bf16.mxu0 0
    %5033 = vmatpush1.bf16.msra.mxu0 0
    %5034 = vmatprep.subr.bf16.mxu0 0
    %5035 = vmatpush1.bf16.msra.mxu0 0
    %5036 = vmatprep.subr.bf16.mxu0 0
    %5037 = vmatpush1.bf16.msra.mxu0 0
    %5038 = vmatprep.subr.bf16.mxu0 0
    %5039 = vmatpush1.bf16.msra.mxu0 0
    %5040 = vmatprep.subr.bf16.mxu0 0
    %5041 = vmatpush1.bf16.msra.mxu0 0
    %5042 = vmatprep.mubr.bf16.mxu0 0
    %5043 = vmatmul.mubr.bf16.gmra.mrb[0].mxu0 %v5009
    %v5044 = vpop.f32.mrb[0].mxu0
    %v5045 = vadd.f32 %v268, %v5044
    %v5046 = vpop.f32.mrb[0].mxu0
    %v5047 = vpop.f32.mrb[0].mxu0
    %v5048 = vpop.f32.mrb[0].mxu0
    %5049 = vdwg.mxu0
    %v5052 = vunpack.c.l.s4 1966171168
    %v5053 = vunpack.c.0.s8 %v5052
    %v5054 = vlaneseq
    %v5055 = vshrl.u32 %v5054, 7
    %v5056 = vsub.s32 %v5053, %v5055
    %v5057 = vrot.slane %v5045, %v5056
    %v5058 = vcombine.high %v5057, %v5057
    %v5060 = vunpack.c.l.s4 1966171168
    %v5061 = vunpack.c.0.s8 %v5060
    %v5062 = vlaneseq
    %v5063 = vshrl.u32 %v5062, 7
    %v5064 = vsub.s32 %v5061, %v5063
    %v5065 = vrot.slane %v5057, %v5064
    %v5067 = vunpack.c.l.s4 1966171168
    %v5068 = vunpack.c.0.s8 %v5067
    %v5069 = vlaneseq
    %v5070 = vshrl.u32 %v5069, 7
    %v5071 = vsub.s32 %v5068, %v5070
    %v5072 = vrot.slane %v5058, %v5071
    %5075 = vst [vmem:[#allocation2 + $0x4] sm:$0x1] %v5065
    %5076 = vst [vmem:[#allocation2 + $0xc] sm:$0x1] %v5072
    %v5077 = vpack.c.bf16 %v4622, %v4622
    %v5078 = vpack.c.bf16 %v4623, %v4623
    %v5081 = vunpack.c.l.b16 %v5077
    %v5082 = vunpack.c.l.b16 %v5078
    %v5083 = vrot.slane %v5081, 6
    %v5084 = vrot.slane %v5082, 5
    %v5085 = vsel %vm894, %v5084, %v5083
    %v5086 = vpack.c.b16 %v5085, %v5085
    %5088 = vmatprep.subr.bf16.mxu0 %v670
    %5089 = vmatpush1.bf16.msra.mxu0 %v669
    %5090 = vmatprep.subr.bf16.mxu0 %v674
    %5091 = vmatpush1.bf16.msra.mxu0 %v673
    %5092 = vmatprep.subr.bf16.mxu0 %v678
    %5093 = vmatpush1.bf16.msra.mxu0 %v677
    %5094 = vmatprep.subr.bf16.mxu0 %v682
    %5095 = vmatpush1.bf16.msra.mxu0 %v681
    %5096 = vmatprep.subr.bf16.mxu0 %v686
    %5097 = vmatpush1.bf16.msra.mxu0 %v685
    %5098 = vmatprep.subr.bf16.mxu0 %v690
    %5099 = vmatpush1.bf16.msra.mxu0 %v689
    %5100 = vmatprep.subr.bf16.mxu0 %v694
    %5101 = vmatpush1.bf16.msra.mxu0 %v693
    %5102 = vmatprep.subr.bf16.mxu0 %v698
    %5103 = vmatpush1.bf16.msra.mxu0 %v697
    %5104 = vmatprep.subr.bf16.mxu0 0
    %5105 = vmatpush1.bf16.msra.mxu0 0
    %5106 = vmatprep.subr.bf16.mxu0 0
    %5107 = vmatpush1.bf16.msra.mxu0 0
    %5108 = vmatprep.subr.bf16.mxu0 0
    %5109 = vmatpush1.bf16.msra.mxu0 0
    %5110 = vmatprep.subr.bf16.mxu0 0
    %5111 = vmatpush1.bf16.msra.mxu0 0
    %5112 = vmatprep.subr.bf16.mxu0 0
    %5113 = vmatpush1.bf16.msra.mxu0 0
    %5114 = vmatprep.subr.bf16.mxu0 0
    %5115 = vmatpush1.bf16.msra.mxu0 0
    %5116 = vmatprep.subr.bf16.mxu0 0
    %5117 = vmatpush1.bf16.msra.mxu0 0
    %5118 = vmatprep.subr.bf16.mxu0 0
    %5119 = vmatpush1.bf16.msra.mxu0 0
    %5120 = vmatprep.mubr.bf16.mxu0 0
    %5121 = vmatmul.mubr.bf16.gmra.mrb[0].mxu0 %v5086
    %v5122 = vpop.f32.mrb[0].mxu0
    %v5123 = vadd.f32 0.0, %v5122
    %v5124 = vpop.f32.mrb[0].mxu0
    %v5125 = vadd.f32 0.0, %v5124
    %v5126 = vpop.f32.mrb[0].mxu0
    %v5127 = vpop.f32.mrb[0].mxu0
    %5128 = vdwg.mxu0
    %5129 = vmatprep.subr.bf16.mxu0 %v672
    %5130 = vmatpush1.bf16.msra.mxu0 %v671
    %5131 = vmatprep.subr.bf16.mxu0 %v676
    %5132 = vmatpush1.bf16.msra.mxu0 %v675
    %5133 = vmatprep.subr.bf16.mxu0 %v680
    %5134 = vmatpush1.bf16.msra.mxu0 %v679
    %5135 = vmatprep.subr.bf16.mxu0 %v684
    %5136 = vmatpush1.bf16.msra.mxu0 %v683
    %5137 = vmatprep.subr.bf16.mxu0 %v688
    %5138 = vmatpush1.bf16.msra.mxu0 %v687
    %5139 = vmatprep.subr.bf16.mxu0 %v692
    %5140 = vmatpush1.bf16.msra.mxu0 %v691
    %5141 = vmatprep.subr.bf16.mxu0 %v696
    %5142 = vmatpush1.bf16.msra.mxu0 %v695
    %5143 = vmatprep.subr.bf16.mxu0 %v700
    %5144 = vmatpush1.bf16.msra.mxu0 %v699
    %5145 = vmatprep.subr.bf16.mxu0 0
    %5146 = vmatpush1.bf16.msra.mxu0 0
    %5147 = vmatprep.subr.bf16.mxu0 0
    %5148 = vmatpush1.bf16.msra.mxu0 0
    %5149 = vmatprep.subr.bf16.mxu0 0
    %5150 = vmatpush1.bf16.msra.mxu0 0
    %5151 = vmatprep.subr.bf16.mxu0 0
    %5152 = vmatpush1.bf16.msra.mxu0 0
    %5153 = vmatprep.subr.bf16.mxu0 0
    %5154 = vmatpush1.bf16.msra.mxu0 0
    %5155 = vmatprep.subr.bf16.mxu0 0
    %5156 = vmatpush1.bf16.msra.mxu0 0
    %5157 = vmatprep.subr.bf16.mxu0 0
    %5158 = vmatpush1.bf16.msra.mxu0 0
    %5159 = vmatprep.subr.bf16.mxu0 0
    %5160 = vmatpush1.bf16.msra.mxu0 0
    %5161 = vmatprep.mubr.bf16.mxu0 0
    %5162 = vmatmul.mubr.bf16.gmra.mrb[0].mxu0 %v5086
    %v5163 = vpop.f32.mrb[0].mxu0
    %v5164 = vadd.f32 0.0, %v5163
    %v5165 = vpop.f32.mrb[0].mxu0
    %v5166 = vadd.f32 0.0, %v5165
    %v5167 = vpop.f32.mrb[0].mxu0
    %v5168 = vpop.f32.mrb[0].mxu0
    %5169 = vdwg.mxu0
    %v5174 = vrot.slane %v5123, 1
    %v5175 = vrot.slane %v5125, 1
    %v5176 = vrot.slane %v5164, 1
    %v5177 = vrot.slane %v5166, 1
    %v5178 = vrot.slane %v5123, 2
    %v5179 = vrot.slane %v5125, 2
    %v5180 = vrot.slane %v5164, 2
    %v5181 = vrot.slane %v5166, 2
    %v5190 = vadd.f32 %v522, %v5174
    %v5191 = vadd.f32 %v524, %v5175
    %v5192 = vadd.f32 %v565, %v5176
    %v5193 = vadd.f32 %v567, %v5177
    %v5194 = vadd.f32 %v526, %v5178
    %v5195 = vadd.f32 %v528, %v5179
    %v5196 = vadd.f32 %v569, %v5180
    %v5197 = vadd.f32 %v571, %v5181
    %v5198 = vxor.u32 %v5190, 2147483648
    %v5199 = vxor.u32 %v5191, 2147483648
    %v5200 = vxor.u32 %v5192, 2147483648
    %v5201 = vxor.u32 %v5194, 2147483648
    %v5202 = vxor.u32 %v5195, 2147483648
    %v5203 = vxor.u32 %v5196, 2147483648
    %v5204 = vmul.f32 %v5198, 1.442695
    %v5205 = vpow.pop %v5204
    %v5206 = vmul.f32 %v5199, 1.442695
    %v5207 = vpow.pop %v5206
    %v5208 = vmul.f32 %v5200, 1.442695
    %v5209 = vpow.pop %v5208
    %v5210 = vmul.f32 %v5201, 1.442695
    %v5211 = vpow.pop %v5210
    %v5212 = vmul.f32 %v5202, 1.442695
    %v5213 = vpow.pop %v5212
    %v5214 = vmul.f32 %v5203, 1.442695
    %v5215 = vpow.pop %v5214
    %v5216 = vadd.f32 %v5205, 1.0
    %v5217 = vadd.f32 %v5207, 1.0
    %v5218 = vadd.f32 %v5209, 1.0
    %v5219 = vadd.f32 %v5211, 1.0
    %v5220 = vadd.f32 %v5213, 1.0
    %v5221 = vadd.f32 %v5215, 1.0
    %v5222 = vrcp.pop %v5216
    %v5223 = vmul.f32 1.0, %v5222
    %v5224 = vrcp.pop %v5217
    %v5225 = vmul.f32 1.0, %v5224
    %v5226 = vrcp.pop %v5218
    %v5227 = vmul.f32 1.0, %v5226
    %v5228 = vrcp.pop %v5219
    %v5229 = vmul.f32 1.0, %v5228
    %v5230 = vrcp.pop %v5220
    %v5231 = vmul.f32 1.0, %v5230
    %v5232 = vrcp.pop %v5221
    %v5233 = vmul.f32 1.0, %v5232
    %v5234 = vtanh.pop %v5193
    %v5235 = vtanh.pop %v5197
    %v5238 = vrot.slane %v4618, 7
    %v5239 = vrot.slane %v4619, 7
    %v5242 = vmul.f32 %v5225, %v5238
    %v5243 = vmul.f32 %v5231, %v5239
    %v5244 = vmul.f32 %v5223, %v5234
    %v5245 = vmul.f32 %v5229, %v5235
    %v5246 = vadd.f32 %v5242, %v5244
    %v5247 = vadd.f32 %v5243, %v5245
    %v5248 = vtanh.pop %v5246
    %v5249 = vtanh.pop %v5247
    %v5250 = vmul.f32 %v5227, %v5248
    %v5251 = vmul.f32 %v5233, %v5249
    %v5252 = vpack.c.bf16 %v4816, %v4816
    %5253 = vmatprep.subr.bf16.mxu0 %v1155
    %5254 = vmatpush1.bf16.msra.mxu0 %v1154
    %5255 = vmatprep.subr.bf16.mxu0 %v1159
    %5256 = vmatpush1.bf16.msra.mxu0 %v1158
    %5257 = vmatprep.subr.bf16.mxu0 %v1163
    %5258 = vmatpush1.bf16.msra.mxu0 %v1162
    %5259 = vmatprep.subr.bf16.mxu0 %v1167
    %5260 = vmatpush1.bf16.msra.mxu0 %v1166
    %5261 = vmatprep.subr.bf16.mxu0 %v1171
    %5262 = vmatpush1.bf16.msra.mxu0 %v1170
    %5263 = vmatprep.subr.bf16.mxu0 %v1175
    %5264 = vmatpush1.bf16.msra.mxu0 %v1174
    %5265 = vmatprep.subr.bf16.mxu0 %v1179
    %5266 = vmatpush1.bf16.msra.mxu0 %v1178
    %5267 = vmatprep.subr.bf16.mxu0 %v1183
    %5268 = vmatpush1.bf16.msra.mxu0 %v1182
    %5269 = vmatprep.subr.bf16.mxu0 0
    %5270 = vmatpush1.bf16.msra.mxu0 0
    %5271 = vmatprep.subr.bf16.mxu0 0
    %5272 = vmatpush1.bf16.msra.mxu0 0
    %5273 = vmatprep.subr.bf16.mxu0 0
    %5274 = vmatpush1.bf16.msra.mxu0 0
    %5275 = vmatprep.subr.bf16.mxu0 0
    %5276 = vmatpush1.bf16.msra.mxu0 0
    %5277 = vmatprep.subr.bf16.mxu0 0
    %5278 = vmatpush1.bf16.msra.mxu0 0
    %5279 = vmatprep.subr.bf16.mxu0 0
    %5280 = vmatpush1.bf16.msra.mxu0 0
    %5281 = vmatprep.subr.bf16.mxu0 0
    %5282 = vmatpush1.bf16.msra.mxu0 0
    %5283 = vmatprep.subr.bf16.mxu0 0
    %5284 = vmatpush1.bf16.msra.mxu0 0
    %5285 = vmatprep.mubr.bf16.mxu0 0
    %5286 = vmatmul.mubr.bf16.gmra.mrb[0].mxu0 %v5252
    %v5287 = vpop.f32.mrb[0].mxu0
    %v5288 = vadd.f32 0.0, %v5287
    %v5289 = vpop.f32.mrb[0].mxu0
    %v5290 = vadd.f32 0.0, %v5289
    %v5291 = vpop.f32.mrb[0].mxu0
    %v5292 = vpop.f32.mrb[0].mxu0
    %5293 = vdwg.mxu0
    %5294 = vmatprep.subr.bf16.mxu0 %v1157
    %5295 = vmatpush1.bf16.msra.mxu0 %v1156
    %5296 = vmatprep.subr.bf16.mxu0 %v1161
    %5297 = vmatpush1.bf16.msra.mxu0 %v1160
    %5298 = vmatprep.subr.bf16.mxu0 %v1165
    %5299 = vmatpush1.bf16.msra.mxu0 %v1164
    %5300 = vmatprep.subr.bf16.mxu0 %v1169
    %5301 = vmatpush1.bf16.msra.mxu0 %v1168
    %5302 = vmatprep.subr.bf16.mxu0 %v1173
    %5303 = vmatpush1.bf16.msra.mxu0 %v1172
    %5304 = vmatprep.subr.bf16.mxu0 %v1177
    %5305 = vmatpush1.bf16.msra.mxu0 %v1176
    %5306 = vmatprep.subr.bf16.mxu0 %v1181
    %5307 = vmatpush1.bf16.msra.mxu0 %v1180
    %5308 = vmatprep.subr.bf16.mxu0 %v1185
    %5309 = vmatpush1.bf16.msra.mxu0 %v1184
    %5310 = vmatprep.subr.bf16.mxu0 0
    %5311 = vmatpush1.bf16.msra.mxu0 0
    %5312 = vmatprep.subr.bf16.mxu0 0
    %5313 = vmatpush1.bf16.msra.mxu0 0
    %5314 = vmatprep.subr.bf16.mxu0 0
    %5315 = vmatpush1.bf16.msra.mxu0 0
    %5316 = vmatprep.subr.bf16.mxu0 0
    %5317 = vmatpush1.bf16.msra.mxu0 0
    %5318 = vmatprep.subr.bf16.mxu0 0
    %5319 = vmatpush1.bf16.msra.mxu0 0
    %5320 = vmatprep.subr.bf16.mxu0 0
    %5321 = vmatpush1.bf16.msra.mxu0 0
    %5322 = vmatprep.subr.bf16.mxu0 0
    %5323 = vmatpush1.bf16.msra.mxu0 0
    %5324 = vmatprep.subr.bf16.mxu0 0
    %5325 = vmatpush1.bf16.msra.mxu0 0
    %5326 = vmatprep.mubr.bf16.mxu0 0
    %5327 = vmatmul.mubr.bf16.gmra.mrb[0].mxu0 %v5252
    %v5328 = vpop.f32.mrb[0].mxu0
    %v5329 = vadd.f32 0.0, %v5328
    %v5330 = vpop.f32.mrb[0].mxu0
    %v5331 = vadd.f32 0.0, %v5330
    %v5332 = vpop.f32.mrb[0].mxu0
    %v5333 = vpop.f32.mrb[0].mxu0
    %5334 = vdwg.mxu0
    %5335 = vmatprep.subr.bf16.mxu0 %v1397
    %5336 = vmatpush1.bf16.msra.mxu0 %v1396
    %5337 = vmatprep.subr.bf16.mxu0 %v1401
    %5338 = vmatpush1.bf16.msra.mxu0 %v1400
    %5339 = vmatprep.subr.bf16.mxu0 %v1405
    %5340 = vmatpush1.bf16.msra.mxu0 %v1404
    %5341 = vmatprep.subr.bf16.mxu0 %v1409
    %5342 = vmatpush1.bf16.msra.mxu0 %v1408
    %5343 = vmatprep.subr.bf16.mxu0 %v1413
    %5344 = vmatpush1.bf16.msra.mxu0 %v1412
    %5345 = vmatprep.subr.bf16.mxu0 %v1417
    %5346 = vmatpush1.bf16.msra.mxu0 %v1416
    %5347 = vmatprep.subr.bf16.mxu0 %v1421
    %5348 = vmatpush1.bf16.msra.mxu0 %v1420
    %5349 = vmatprep.subr.bf16.mxu0 %v1425
    %5350 = vmatpush1.bf16.msra.mxu0 %v1424
    %5351 = vmatprep.subr.bf16.mxu0 0
    %5352 = vmatpush1.bf16.msra.mxu0 0
    %5353 = vmatprep.subr.bf16.mxu0 0
    %5354 = vmatpush1.bf16.msra.mxu0 0
    %5355 = vmatprep.subr.bf16.mxu0 0
    %5356 = vmatpush1.bf16.msra.mxu0 0
    %5357 = vmatprep.subr.bf16.mxu0 0
    %5358 = vmatpush1.bf16.msra.mxu0 0
    %5359 = vmatprep.subr.bf16.mxu0 0
    %5360 = vmatpush1.bf16.msra.mxu0 0
    %5361 = vmatprep.subr.bf16.mxu0 0
    %5362 = vmatpush1.bf16.msra.mxu0 0
    %5363 = vmatprep.subr.bf16.mxu0 0
    %5364 = vmatpush1.bf16.msra.mxu0 0
    %5365 = vmatprep.subr.bf16.mxu0 0
    %5366 = vmatpush1.bf16.msra.mxu0 0
    %5367 = vmatprep.mubr.bf16.mxu0 0
    %5368 = vmatmul.mubr.bf16.gmra.mrb[0].mxu0 %v5086
    %v5369 = vpop.f32.mrb[0].mxu0
    %v5370 = vadd.f32 %v5288, %v5369
    %v5371 = vpop.f32.mrb[0].mxu0
    %v5372 = vadd.f32 %v5290, %v5371
    %v5373 = vpop.f32.mrb[0].mxu0
    %v5374 = vpop.f32.mrb[0].mxu0
    %5375 = vdwg.mxu0
    %5376 = vmatprep.subr.bf16.mxu0 %v1399
    %5377 = vmatpush1.bf16.msra.mxu0 %v1398
    %5378 = vmatprep.subr.bf16.mxu0 %v1403
    %5379 = vmatpush1.bf16.msra.mxu0 %v1402
    %5380 = vmatprep.subr.bf16.mxu0 %v1407
    %5381 = vmatpush1.bf16.msra.mxu0 %v1406
    %5382 = vmatprep.subr.bf16.mxu0 %v1411
    %5383 = vmatpush1.bf16.msra.mxu0 %v1410
    %5384 = vmatprep.subr.bf16.mxu0 %v1415
    %5385 = vmatpush1.bf16.msra.mxu0 %v1414
    %5386 = vmatprep.subr.bf16.mxu0 %v1419
    %5387 = vmatpush1.bf16.msra.mxu0 %v1418
    %5388 = vmatprep.subr.bf16.mxu0 %v1423
    %5389 = vmatpush1.bf16.msra.mxu0 %v1422
    %5390 = vmatprep.subr.bf16.mxu0 %v1427
    %5391 = vmatpush1.bf16.msra.mxu0 %v1426
    %5392 = vmatprep.subr.bf16.mxu0 0
    %5393 = vmatpush1.bf16.msra.mxu0 0
    %5394 = vmatprep.subr.bf16.mxu0 0
    %5395 = vmatpush1.bf16.msra.mxu0 0
    %5396 = vmatprep.subr.bf16.mxu0 0
    %5397 = vmatpush1.bf16.msra.mxu0 0
    %5398 = vmatprep.subr.bf16.mxu0 0
    %5399 = vmatpush1.bf16.msra.mxu0 0
    %5400 = vmatprep.subr.bf16.mxu0 0
    %5401 = vmatpush1.bf16.msra.mxu0 0
    %5402 = vmatprep.subr.bf16.mxu0 0
    %5403 = vmatpush1.bf16.msra.mxu0 0
    %5404 = vmatprep.subr.bf16.mxu0 0
    %5405 = vmatpush1.bf16.msra.mxu0 0
    %5406 = vmatprep.subr.bf16.mxu0 0
    %5407 = vmatpush1.bf16.msra.mxu0 0
    %5408 = vmatprep.mubr.bf16.mxu0 0
    %5409 = vmatmul.mubr.bf16.gmra.mrb[0].mxu0 %v5086
    %v5410 = vpop.f32.mrb[0].mxu0
    %v5411 = vadd.f32 %v5329, %v5410
    %v5412 = vpop.f32.mrb[0].mxu0
    %v5413 = vadd.f32 %v5331, %v5412
    %v5414 = vpop.f32.mrb[0].mxu0
    %v5415 = vpop.f32.mrb[0].mxu0
    %5416 = vdwg.mxu0
    %v5417 = vadd.f32 %v5370, %v224
    %v5418 = vadd.f32 %v5372, %v228
    %v5419 = vadd.f32 %v5411, %v232
    %v5420 = vadd.f32 %v5413, %v236
    %v5421 = vxor.u32 %v5417, 2147483648
    %v5422 = vxor.u32 %v5418, 2147483648
    %v5423 = vxor.u32 %v5419, 2147483648
    %v5424 = vmul.f32 %v5421, 1.442695
    %v5425 = vpow.pop %v5424
    %v5426 = vmul.f32 %v5422, 1.442695
    %v5427 = vpow.pop %v5426
    %v5428 = vmul.f32 %v5423, 1.442695
    %v5429 = vpow.pop %v5428
    %v5430 = vadd.f32 %v5425, 1.0
    %v5431 = vadd.f32 %v5427, 1.0
    %v5432 = vadd.f32 %v5429, 1.0
    %v5433 = vrcp.pop %v5430
    %v5434 = vmul.f32 1.0, %v5433
    %v5435 = vrcp.pop %v5431
    %v5436 = vmul.f32 1.0, %v5435
    %v5437 = vrcp.pop %v5432
    %v5438 = vmul.f32 1.0, %v5437
    %v5439 = vtanh.pop %v5420
    %v5440 = vmul.f32 %v5436, %v4814
    %v5441 = vmul.f32 %v5434, %v5439
    %v5442 = vadd.f32 %v5440, %v5441
    %v5443 = vtanh.pop %v5442
    %v5444 = vmul.f32 %v5438, %v5443
    %5445 = vmatprep.subr.bf16.mxu0 %v2034
    %5446 = vmatpush1.bf16.msra.mxu0 %v2033
    %5447 = vmatprep.subr.bf16.mxu0 %v2038
    %5448 = vmatpush1.bf16.msra.mxu0 %v2037
    %5449 = vmatprep.subr.bf16.mxu0 %v2042
    %5450 = vmatpush1.bf16.msra.mxu0 %v2041
    %5451 = vmatprep.subr.bf16.mxu0 %v2046
    %5452 = vmatpush1.bf16.msra.mxu0 %v2045
    %5453 = vmatprep.subr.bf16.mxu0 %v2050
    %5454 = vmatpush1.bf16.msra.mxu0 %v2049
    %5455 = vmatprep.subr.bf16.mxu0 %v2054
    %5456 = vmatpush1.bf16.msra.mxu0 %v2053
    %5457 = vmatprep.subr.bf16.mxu0 %v2058
    %5458 = vmatpush1.bf16.msra.mxu0 %v2057
    %5459 = vmatprep.subr.bf16.mxu0 %v2062
    %5460 = vmatpush1.bf16.msra.mxu0 %v2061
    %5461 = vmatprep.subr.bf16.mxu0 0
    %5462 = vmatpush1.bf16.msra.mxu0 0
    %5463 = vmatprep.subr.bf16.mxu0 0
    %5464 = vmatpush1.bf16.msra.mxu0 0
    %5465 = vmatprep.subr.bf16.mxu0 0
    %5466 = vmatpush1.bf16.msra.mxu0 0
    %5467 = vmatprep.subr.bf16.mxu0 0
    %5468 = vmatpush1.bf16.msra.mxu0 0
    %5469 = vmatprep.subr.bf16.mxu0 0
    %5470 = vmatpush1.bf16.msra.mxu0 0
    %5471 = vmatprep.subr.bf16.mxu0 0
    %5472 = vmatpush1.bf16.msra.mxu0 0
    %5473 = vmatprep.subr.bf16.mxu0 0
    %5474 = vmatpush1.bf16.msra.mxu0 0
    %5475 = vmatprep.subr.bf16.mxu0 0
    %5476 = vmatpush1.bf16.msra.mxu0 0
    %5477 = vmatprep.mubr.bf16.mxu0 0
    %5478 = vmatmul.mubr.bf16.gmra.mrb[0].mxu0 %v5009
    %v5479 = vpop.f32.mrb[0].mxu0
    %v5480 = vadd.f32 0.0, %v5479
    %v5481 = vpop.f32.mrb[0].mxu0
    %v5482 = vadd.f32 0.0, %v5481
    %v5483 = vpop.f32.mrb[0].mxu0
    %v5484 = vpop.f32.mrb[0].mxu0
    %5485 = vdwg.mxu0
    %5486 = vmatprep.subr.bf16.mxu0 %v2036
    %5487 = vmatpush1.bf16.msra.mxu0 %v2035
    %5488 = vmatprep.subr.bf16.mxu0 %v2040
    %5489 = vmatpush1.bf16.msra.mxu0 %v2039
    %5490 = vmatprep.subr.bf16.mxu0 %v2044
    %5491 = vmatpush1.bf16.msra.mxu0 %v2043
    %5492 = vmatprep.subr.bf16.mxu0 %v2048
    %5493 = vmatpush1.bf16.msra.mxu0 %v2047
    %5494 = vmatprep.subr.bf16.mxu0 %v2052
    %5495 = vmatpush1.bf16.msra.mxu0 %v2051
    %5496 = vmatprep.subr.bf16.mxu0 %v2056
    %5497 = vmatpush1.bf16.msra.mxu0 %v2055
    %5498 = vmatprep.subr.bf16.mxu0 %v2060
    %5499 = vmatpush1.bf16.msra.mxu0 %v2059
    %5500 = vmatprep.subr.bf16.mxu0 %v2064
    %5501 = vmatpush1.bf16.msra.mxu0 %v2063
    %5502 = vmatprep.subr.bf16.mxu0 0
    %5503 = vmatpush1.bf16.msra.mxu0 0
    %5504 = vmatprep.subr.bf16.mxu0 0
    %5505 = vmatpush1.bf16.msra.mxu0 0
    %5506 = vmatprep.subr.bf16.mxu0 0
    %5507 = vmatpush1.bf16.msra.mxu0 0
    %5508 = vmatprep.subr.bf16.mxu0 0
    %5509 = vmatpush1.bf16.msra.mxu0 0
    %5510 = vmatprep.subr.bf16.mxu0 0
    %5511 = vmatpush1.bf16.msra.mxu0 0
    %5512 = vmatprep.subr.bf16.mxu0 0
    %5513 = vmatpush1.bf16.msra.mxu0 0
    %5514 = vmatprep.subr.bf16.mxu0 0
    %5515 = vmatpush1.bf16.msra.mxu0 0
    %5516 = vmatprep.subr.bf16.mxu0 0
    %5517 = vmatpush1.bf16.msra.mxu0 0
    %5518 = vmatprep.mubr.bf16.mxu0 0
    %5519 = vmatmul.mubr.bf16.gmra.mrb[0].mxu0 %v5009
    %v5520 = vpop.f32.mrb[0].mxu0
    %v5521 = vadd.f32 0.0, %v5520
    %v5522 = vpop.f32.mrb[0].mxu0
    %v5523 = vadd.f32 0.0, %v5522
    %v5524 = vpop.f32.mrb[0].mxu0
    %v5525 = vpop.f32.mrb[0].mxu0
    %5526 = vdwg.mxu0
    %5527 = vmatprep.subr.bf16.mxu0 %v2276
    %5528 = vmatpush1.bf16.msra.mxu0 %v2275
    %5529 = vmatprep.subr.bf16.mxu0 %v2280
    %5530 = vmatpush1.bf16.msra.mxu0 %v2279
    %5531 = vmatprep.subr.bf16.mxu0 %v2284
    %5532 = vmatpush1.bf16.msra.mxu0 %v2283
    %5533 = vmatprep.subr.bf16.mxu0 %v2288
    %5534 = vmatpush1.bf16.msra.mxu0 %v2287
    %5535 = vmatprep.subr.bf16.mxu0 %v2292
    %5536 = vmatpush1.bf16.msra.mxu0 %v2291
    %5537 = vmatprep.subr.bf16.mxu0 %v2296
    %5538 = vmatpush1.bf16.msra.mxu0 %v2295
    %5539 = vmatprep.subr.bf16.mxu0 %v2300
    %5540 = vmatpush1.bf16.msra.mxu0 %v2299
    %5541 = vmatprep.subr.bf16.mxu0 %v2304
    %5542 = vmatpush1.bf16.msra.mxu0 %v2303
    %5543 = vmatprep.subr.bf16.mxu0 0
    %5544 = vmatpush1.bf16.msra.mxu0 0
    %5545 = vmatprep.subr.bf16.mxu0 0
    %5546 = vmatpush1.bf16.msra.mxu0 0
    %5547 = vmatprep.subr.bf16.mxu0 0
    %5548 = vmatpush1.bf16.msra.mxu0 0
    %5549 = vmatprep.subr.bf16.mxu0 0
    %5550 = vmatpush1.bf16.msra.mxu0 0
    %5551 = vmatprep.subr.bf16.mxu0 0
    %5552 = vmatpush1.bf16.msra.mxu0 0
    %5553 = vmatprep.subr.bf16.mxu0 0
    %5554 = vmatpush1.bf16.msra.mxu0 0
    %5555 = vmatprep.subr.bf16.mxu0 0
    %5556 = vmatpush1.bf16.msra.mxu0 0
    %5557 = vmatprep.subr.bf16.mxu0 0
    %5558 = vmatpush1.bf16.msra.mxu0 0
    %5559 = vmatprep.mubr.bf16.mxu0 0
    %5560 = vmatmul.mubr.bf16.gmra.mrb[0].mxu0 %v5252
    %v5561 = vpop.f32.mrb[0].mxu0
    %v5562 = vadd.f32 %v5480, %v5561
    %v5563 = vpop.f32.mrb[0].mxu0
    %v5564 = vadd.f32 %v5482, %v5563
    %v5565 = vpop.f32.mrb[0].mxu0
    %v5566 = vpop.f32.mrb[0].mxu0
    %5567 = vdwg.mxu0
    %5568 = vmatprep.subr.bf16.mxu0 %v2278
    %5569 = vmatpush1.bf16.msra.mxu0 %v2277
    %5570 = vmatprep.subr.bf16.mxu0 %v2282
    %5571 = vmatpush1.bf16.msra.mxu0 %v2281
    %5572 = vmatprep.subr.bf16.mxu0 %v2286
    %5573 = vmatpush1.bf16.msra.mxu0 %v2285
    %5574 = vmatprep.subr.bf16.mxu0 %v2290
    %5575 = vmatpush1.bf16.msra.mxu0 %v2289
    %5576 = vmatprep.subr.bf16.mxu0 %v2294
    %5577 = vmatpush1.bf16.msra.mxu0 %v2293
    %5578 = vmatprep.subr.bf16.mxu0 %v2298
    %5579 = vmatpush1.bf16.msra.mxu0 %v2297
    %5580 = vmatprep.subr.bf16.mxu0 %v2302
    %5581 = vmatpush1.bf16.msra.mxu0 %v2301
    %5582 = vmatprep.subr.bf16.mxu0 %v2306
    %5583 = vmatpush1.bf16.msra.mxu0 %v2305
    %5584 = vmatprep.subr.bf16.mxu0 0
    %5585 = vmatpush1.bf16.msra.mxu0 0
    %5586 = vmatprep.subr.bf16.mxu0 0
    %5587 = vmatpush1.bf16.msra.mxu0 0
    %5588 = vmatprep.subr.bf16.mxu0 0
    %5589 = vmatpush1.bf16.msra.mxu0 0
    %5590 = vmatprep.subr.bf16.mxu0 0
    %5591 = vmatpush1.bf16.msra.mxu0 0
    %5592 = vmatprep.subr.bf16.mxu0 0
    %5593 = vmatpush1.bf16.msra.mxu0 0
    %5594 = vmatprep.subr.bf16.mxu0 0
    %5595 = vmatpush1.bf16.msra.mxu0 0
    %5596 = vmatprep.subr.bf16.mxu0 0
    %5597 = vmatpush1.bf16.msra.mxu0 0
    %5598 = vmatprep.subr.bf16.mxu0 0
    %5599 = vmatpush1.bf16.msra.mxu0 0
    %5600 = vmatprep.mubr.bf16.mxu0 0
    %5601 = vmatmul.mubr.bf16.gmra.mrb[0].mxu0 %v5252
    %v5602 = vpop.f32.mrb[0].mxu0
    %v5603 = vadd.f32 %v5521, %v5602
    %v5604 = vpop.f32.mrb[0].mxu0
    %v5605 = vadd.f32 %v5523, %v5604
    %v5606 = vpop.f32.mrb[0].mxu0
    %v5607 = vpop.f32.mrb[0].mxu0
    %5608 = vdwg.mxu0
    %v5609 = vadd.f32 %v5562, %v246
    %v5610 = vadd.f32 %v5564, %v250
    %v5611 = vadd.f32 %v5603, %v254
    %v5612 = vadd.f32 %v5605, %v258
    %v5613 = vxor.u32 %v5609, 2147483648
    %v5614 = vxor.u32 %v5610, 2147483648
    %v5615 = vxor.u32 %v5611, 2147483648
    %v5616 = vmul.f32 %v5613, 1.442695
    %v5617 = vpow.pop %v5616
    %v5618 = vmul.f32 %v5614, 1.442695
    %v5619 = vpow.pop %v5618
    %v5620 = vmul.f32 %v5615, 1.442695
    %v5621 = vpow.pop %v5620
    %v5622 = vadd.f32 %v5617, 1.0
    %v5623 = vadd.f32 %v5619, 1.0
    %v5624 = vadd.f32 %v5621, 1.0
    %v5625 = vrcp.pop %v5622
    %v5626 = vmul.f32 1.0, %v5625
    %v5627 = vrcp.pop %v5623
    %v5628 = vmul.f32 1.0, %v5627
    %v5629 = vrcp.pop %v5624
    %v5630 = vmul.f32 1.0, %v5629
    %v5631 = vtanh.pop %v5612
    %v5632 = vmul.f32 %v5628, %v5006
    %v5633 = vmul.f32 %v5626, %v5631
    %v5634 = vadd.f32 %v5632, %v5633
    %v5635 = vtanh.pop %v5634
    %v5636 = vmul.f32 %v5630, %v5635
    %v5637 = vpack.c.bf16 %v5636, %v5636
    %5638 = vmatprep.subr.bf16.mxu0 0
    %5639 = vmatpush1.bf16.msra.mxu0 %v2482
    %5640 = vmatprep.subr.bf16.mxu0 0
    %5641 = vmatpush1.bf16.msra.mxu0 %v2483
    %5642 = vmatprep.subr.bf16.mxu0 0
    %5643 = vmatpush1.bf16.msra.mxu0 %v2484
    %5644 = vmatprep.subr.bf16.mxu0 0
    %5645 = vmatpush1.bf16.msra.mxu0 %v2485
    %5646 = vmatprep.subr.bf16.mxu0 0
    %5647 = vmatpush1.bf16.msra.mxu0 %v2486
    %5648 = vmatprep.subr.bf16.mxu0 0
    %5649 = vmatpush1.bf16.msra.mxu0 %v2487
    %5650 = vmatprep.subr.bf16.mxu0 0
    %5651 = vmatpush1.bf16.msra.mxu0 %v2488
    %5652 = vmatprep.subr.bf16.mxu0 0
    %5653 = vmatpush1.bf16.msra.mxu0 %v2489
    %5654 = vmatprep.subr.bf16.mxu0 0
    %5655 = vmatpush1.bf16.msra.mxu0 0
    %5656 = vmatprep.subr.bf16.mxu0 0
    %5657 = vmatpush1.bf16.msra.mxu0 0
    %5658 = vmatprep.subr.bf16.mxu0 0
    %5659 = vmatpush1.bf16.msra.mxu0 0
    %5660 = vmatprep.subr.bf16.mxu0 0
    %5661 = vmatpush1.bf16.msra.mxu0 0
    %5662 = vmatprep.subr.bf16.mxu0 0
    %5663 = vmatpush1.bf16.msra.mxu0 0
    %5664 = vmatprep.subr.bf16.mxu0 0
    %5665 = vmatpush1.bf16.msra.mxu0 0
    %5666 = vmatprep.subr.bf16.mxu0 0
    %5667 = vmatpush1.bf16.msra.mxu0 0
    %5668 = vmatprep.subr.bf16.mxu0 0
    %5669 = vmatpush1.bf16.msra.mxu0 0
    %5670 = vmatprep.mubr.bf16.mxu0 0
    %5671 = vmatmul.mubr.bf16.gmra.mrb[0].mxu0 %v5637
    %v5672 = vpop.f32.mrb[0].mxu0
    %v5673 = vadd.f32 %v268, %v5672
    %v5674 = vpop.f32.mrb[0].mxu0
    %v5675 = vpop.f32.mrb[0].mxu0
    %v5676 = vpop.f32.mrb[0].mxu0
    %5677 = vdwg.mxu0
    %v5680 = vunpack.c.l.s4 1966171168
    %v5681 = vunpack.c.0.s8 %v5680
    %v5682 = vlaneseq
    %v5683 = vshrl.u32 %v5682, 7
    %v5684 = vsub.s32 %v5681, %v5683
    %v5685 = vrot.slane %v5673, %v5684
    %v5686 = vcombine.high %v5685, %v5685
    %v5688 = vunpack.c.l.s4 1966171168
    %v5689 = vunpack.c.0.s8 %v5688
    %v5690 = vlaneseq
    %v5691 = vshrl.u32 %v5690, 7
    %v5692 = vsub.s32 %v5689, %v5691
    %v5693 = vrot.slane %v5685, %v5692
    %v5695 = vunpack.c.l.s4 1966171168
    %v5696 = vunpack.c.0.s8 %v5695
    %v5697 = vlaneseq
    %v5698 = vshrl.u32 %v5697, 7
    %v5699 = vsub.s32 %v5696, %v5698
    %v5700 = vrot.slane %v5686, %v5699
    %5703 = vst [vmem:[#allocation2 + $0x5] sm:$0x1] %v5693
    %5704 = vst [vmem:[#allocation2 + $0xd] sm:$0x1] %v5700
    %v5705 = vpack.c.bf16 %v5250, %v5250
    %v5706 = vpack.c.bf16 %v5251, %v5251
    %v5707 = vpack.c.bf16 %v5444, %v5444
    %5708 = vmatprep.subr.bf16.mxu0 %v1155
    %5709 = vmatpush1.bf16.msra.mxu0 %v1154
    %5710 = vmatprep.subr.bf16.mxu0 %v1159
    %5711 = vmatpush1.bf16.msra.mxu0 %v1158
    %5712 = vmatprep.subr.bf16.mxu0 %v1163
    %5713 = vmatpush1.bf16.msra.mxu0 %v1162
    %5714 = vmatprep.subr.bf16.mxu0 %v1167
    %5715 = vmatpush1.bf16.msra.mxu0 %v1166
    %5716 = vmatprep.subr.bf16.mxu0 %v1171
    %5717 = vmatpush1.bf16.msra.mxu0 %v1170
    %5718 = vmatprep.subr.bf16.mxu0 %v1175
    %5719 = vmatpush1.bf16.msra.mxu0 %v1174
    %5720 = vmatprep.subr.bf16.mxu0 %v1179
    %5721 = vmatpush1.bf16.msra.mxu0 %v1178
    %5722 = vmatprep.subr.bf16.mxu0 %v1183
    %5723 = vmatpush1.bf16.msra.mxu0 %v1182
    %5724 = vmatprep.subr.bf16.mxu0 0
    %5725 = vmatpush1.bf16.msra.mxu0 0
    %5726 = vmatprep.subr.bf16.mxu0 0
    %5727 = vmatpush1.bf16.msra.mxu0 0
    %5728 = vmatprep.subr.bf16.mxu0 0
    %5729 = vmatpush1.bf16.msra.mxu0 0
    %5730 = vmatprep.subr.bf16.mxu0 0
    %5731 = vmatpush1.bf16.msra.mxu0 0
    %5732 = vmatprep.subr.bf16.mxu0 0
    %5733 = vmatpush1.bf16.msra.mxu0 0
    %5734 = vmatprep.subr.bf16.mxu0 0
    %5735 = vmatpush1.bf16.msra.mxu0 0
    %5736 = vmatprep.subr.bf16.mxu0 0
    %5737 = vmatpush1.bf16.msra.mxu0 0
    %5738 = vmatprep.subr.bf16.mxu0 0
    %5739 = vmatpush1.bf16.msra.mxu0 0
    %5740 = vmatprep.mubr.bf16.mxu0 0
    %5741 = vmatmul.mubr.bf16.gmra.mrb[0].mxu0 %v5707
    %v5742 = vpop.f32.mrb[0].mxu0
    %v5743 = vadd.f32 0.0, %v5742
    %v5744 = vpop.f32.mrb[0].mxu0
    %v5745 = vadd.f32 0.0, %v5744
    %v5746 = vpop.f32.mrb[0].mxu0
    %v5747 = vpop.f32.mrb[0].mxu0
    %5748 = vdwg.mxu0
    %5749 = vmatprep.subr.bf16.mxu0 %v1157
    %5750 = vmatpush1.bf16.msra.mxu0 %v1156
    %5751 = vmatprep.subr.bf16.mxu0 %v1161
    %5752 = vmatpush1.bf16.msra.mxu0 %v1160
    %5753 = vmatprep.subr.bf16.mxu0 %v1165
    %5754 = vmatpush1.bf16.msra.mxu0 %v1164
    %5755 = vmatprep.subr.bf16.mxu0 %v1169
    %5756 = vmatpush1.bf16.msra.mxu0 %v1168
    %5757 = vmatprep.subr.bf16.mxu0 %v1173
    %5758 = vmatpush1.bf16.msra.mxu0 %v1172
    %5759 = vmatprep.subr.bf16.mxu0 %v1177
    %5760 = vmatpush1.bf16.msra.mxu0 %v1176
    %5761 = vmatprep.subr.bf16.mxu0 %v1181
    %5762 = vmatpush1.bf16.msra.mxu0 %v1180
    %5763 = vmatprep.subr.bf16.mxu0 %v1185
    %5764 = vmatpush1.bf16.msra.mxu0 %v1184
    %5765 = vmatprep.subr.bf16.mxu0 0
    %5766 = vmatpush1.bf16.msra.mxu0 0
    %5767 = vmatprep.subr.bf16.mxu0 0
    %5768 = vmatpush1.bf16.msra.mxu0 0
    %5769 = vmatprep.subr.bf16.mxu0 0
    %5770 = vmatpush1.bf16.msra.mxu0 0
    %5771 = vmatprep.subr.bf16.mxu0 0
    %5772 = vmatpush1.bf16.msra.mxu0 0
    %5773 = vmatprep.subr.bf16.mxu0 0
    %5774 = vmatpush1.bf16.msra.mxu0 0
    %5775 = vmatprep.subr.bf16.mxu0 0
    %5776 = vmatpush1.bf16.msra.mxu0 0
    %5777 = vmatprep.subr.bf16.mxu0 0
    %5778 = vmatpush1.bf16.msra.mxu0 0
    %5779 = vmatprep.subr.bf16.mxu0 0
    %5780 = vmatpush1.bf16.msra.mxu0 0
    %5781 = vmatprep.mubr.bf16.mxu0 0
    %5782 = vmatmul.mubr.bf16.gmra.mrb[0].mxu0 %v5707
    %v5783 = vpop.f32.mrb[0].mxu0
    %v5784 = vadd.f32 0.0, %v5783
    %v5785 = vpop.f32.mrb[0].mxu0
    %v5786 = vadd.f32 0.0, %v5785
    %v5787 = vpop.f32.mrb[0].mxu0
    %v5788 = vpop.f32.mrb[0].mxu0
    %5789 = vdwg.mxu0
    %v5792 = vunpack.c.l.b16 %v5705
    %v5793 = vunpack.c.l.b16 %v5706
    %v5794 = vrot.slane %v5792, 7
    %v5795 = vrot.slane %v5793, 6
    %v5796 = vsel %vm894, %v5795, %v5794
    %v5797 = vpack.c.b16 %v5796, %v5796
    %5799 = vmatprep.subr.bf16.mxu0 %v1397
    %5800 = vmatpush1.bf16.msra.mxu0 %v1396
    %5801 = vmatprep.subr.bf16.mxu0 %v1401
    %5802 = vmatpush1.bf16.msra.mxu0 %v1400
    %5803 = vmatprep.subr.bf16.mxu0 %v1405
    %5804 = vmatpush1.bf16.msra.mxu0 %v1404
    %5805 = vmatprep.subr.bf16.mxu0 %v1409
    %5806 = vmatpush1.bf16.msra.mxu0 %v1408
    %5807 = vmatprep.subr.bf16.mxu0 %v1413
    %5808 = vmatpush1.bf16.msra.mxu0 %v1412
    %5809 = vmatprep.subr.bf16.mxu0 %v1417
    %5810 = vmatpush1.bf16.msra.mxu0 %v1416
    %5811 = vmatprep.subr.bf16.mxu0 %v1421
    %5812 = vmatpush1.bf16.msra.mxu0 %v1420
    %5813 = vmatprep.subr.bf16.mxu0 %v1425
    %5814 = vmatpush1.bf16.msra.mxu0 %v1424
    %5815 = vmatprep.subr.bf16.mxu0 0
    %5816 = vmatpush1.bf16.msra.mxu0 0
    %5817 = vmatprep.subr.bf16.mxu0 0
    %5818 = vmatpush1.bf16.msra.mxu0 0
    %5819 = vmatprep.subr.bf16.mxu0 0
    %5820 = vmatpush1.bf16.msra.mxu0 0
    %5821 = vmatprep.subr.bf16.mxu0 0
    %5822 = vmatpush1.bf16.msra.mxu0 0
    %5823 = vmatprep.subr.bf16.mxu0 0
    %5824 = vmatpush1.bf16.msra.mxu0 0
    %5825 = vmatprep.subr.bf16.mxu0 0
    %5826 = vmatpush1.bf16.msra.mxu0 0
    %5827 = vmatprep.subr.bf16.mxu0 0
    %5828 = vmatpush1.bf16.msra.mxu0 0
    %5829 = vmatprep.subr.bf16.mxu0 0
    %5830 = vmatpush1.bf16.msra.mxu0 0
    %5831 = vmatprep.mubr.bf16.mxu0 0
    %5832 = vmatmul.mubr.bf16.gmra.mrb[0].mxu0 %v5797
    %v5833 = vpop.f32.mrb[0].mxu0
    %v5834 = vadd.f32 %v5743, %v5833
    %v5835 = vpop.f32.mrb[0].mxu0
    %v5836 = vadd.f32 %v5745, %v5835
    %v5837 = vpop.f32.mrb[0].mxu0
    %v5838 = vpop.f32.mrb[0].mxu0
    %5839 = vdwg.mxu0
    %5840 = vmatprep.subr.bf16.mxu0 %v1399
    %5841 = vmatpush1.bf16.msra.mxu0 %v1398
    %5842 = vmatprep.subr.bf16.mxu0 %v1403
    %5843 = vmatpush1.bf16.msra.mxu0 %v1402
    %5844 = vmatprep.subr.bf16.mxu0 %v1407
    %5845 = vmatpush1.bf16.msra.mxu0 %v1406
    %5846 = vmatprep.subr.bf16.mxu0 %v1411
    %5847 = vmatpush1.bf16.msra.mxu0 %v1410
    %5848 = vmatprep.subr.bf16.mxu0 %v1415
    %5849 = vmatpush1.bf16.msra.mxu0 %v1414
    %5850 = vmatprep.subr.bf16.mxu0 %v1419
    %5851 = vmatpush1.bf16.msra.mxu0 %v1418
    %5852 = vmatprep.subr.bf16.mxu0 %v1423
    %5853 = vmatpush1.bf16.msra.mxu0 %v1422
    %5854 = vmatprep.subr.bf16.mxu0 %v1427
    %5855 = vmatpush1.bf16.msra.mxu0 %v1426
    %5856 = vmatprep.subr.bf16.mxu0 0
    %5857 = vmatpush1.bf16.msra.mxu0 0
    %5858 = vmatprep.subr.bf16.mxu0 0
    %5859 = vmatpush1.bf16.msra.mxu0 0
    %5860 = vmatprep.subr.bf16.mxu0 0
    %5861 = vmatpush1.bf16.msra.mxu0 0
    %5862 = vmatprep.subr.bf16.mxu0 0
    %5863 = vmatpush1.bf16.msra.mxu0 0
    %5864 = vmatprep.subr.bf16.mxu0 0
    %5865 = vmatpush1.bf16.msra.mxu0 0
    %5866 = vmatprep.subr.bf16.mxu0 0
    %5867 = vmatpush1.bf16.msra.mxu0 0
    %5868 = vmatprep.subr.bf16.mxu0 0
    %5869 = vmatpush1.bf16.msra.mxu0 0
    %5870 = vmatprep.subr.bf16.mxu0 0
    %5871 = vmatpush1.bf16.msra.mxu0 0
    %5872 = vmatprep.mubr.bf16.mxu0 0
    %5873 = vmatmul.mubr.bf16.gmra.mrb[0].mxu0 %v5797
    %v5874 = vpop.f32.mrb[0].mxu0
    %v5875 = vadd.f32 %v5784, %v5874
    %v5876 = vpop.f32.mrb[0].mxu0
    %v5877 = vadd.f32 %v5786, %v5876
    %v5878 = vpop.f32.mrb[0].mxu0
    %v5879 = vpop.f32.mrb[0].mxu0
    %5880 = vdwg.mxu0
    %v5881 = vadd.f32 %v5834, %v224
    %v5882 = vadd.f32 %v5836, %v228
    %v5883 = vadd.f32 %v5875, %v232
    %v5884 = vadd.f32 %v5877, %v236
    %v5885 = vxor.u32 %v5881, 2147483648
    %v5886 = vxor.u32 %v5882, 2147483648
    %v5887 = vxor.u32 %v5883, 2147483648
    %v5888 = vmul.f32 %v5885, 1.442695
    %v5889 = vpow.pop %v5888
    %v5890 = vmul.f32 %v5886, 1.442695
    %v5891 = vpow.pop %v5890
    %v5892 = vmul.f32 %v5887, 1.442695
    %v5893 = vpow.pop %v5892
    %v5894 = vadd.f32 %v5889, 1.0
    %v5895 = vadd.f32 %v5891, 1.0
    %v5896 = vadd.f32 %v5893, 1.0
    %v5897 = vrcp.pop %v5894
    %v5898 = vmul.f32 1.0, %v5897
    %v5899 = vrcp.pop %v5895
    %v5900 = vmul.f32 1.0, %v5899
    %v5901 = vrcp.pop %v5896
    %v5902 = vmul.f32 1.0, %v5901
    %v5903 = vtanh.pop %v5884
    %v5904 = vmul.f32 %v5900, %v5442
    %v5905 = vmul.f32 %v5898, %v5903
    %v5906 = vadd.f32 %v5904, %v5905
    %v5907 = vtanh.pop %v5906
    %v5908 = vmul.f32 %v5902, %v5907
    %5909 = vmatprep.subr.bf16.mxu0 %v2034
    %5910 = vmatpush1.bf16.msra.mxu0 %v2033
    %5911 = vmatprep.subr.bf16.mxu0 %v2038
    %5912 = vmatpush1.bf16.msra.mxu0 %v2037
    %5913 = vmatprep.subr.bf16.mxu0 %v2042
    %5914 = vmatpush1.bf16.msra.mxu0 %v2041
    %5915 = vmatprep.subr.bf16.mxu0 %v2046
    %5916 = vmatpush1.bf16.msra.mxu0 %v2045
    %5917 = vmatprep.subr.bf16.mxu0 %v2050
    %5918 = vmatpush1.bf16.msra.mxu0 %v2049
    %5919 = vmatprep.subr.bf16.mxu0 %v2054
    %5920 = vmatpush1.bf16.msra.mxu0 %v2053
    %5921 = vmatprep.subr.bf16.mxu0 %v2058
    %5922 = vmatpush1.bf16.msra.mxu0 %v2057
    %5923 = vmatprep.subr.bf16.mxu0 %v2062
    %5924 = vmatpush1.bf16.msra.mxu0 %v2061
    %5925 = vmatprep.subr.bf16.mxu0 0
    %5926 = vmatpush1.bf16.msra.mxu0 0
    %5927 = vmatprep.subr.bf16.mxu0 0
    %5928 = vmatpush1.bf16.msra.mxu0 0
    %5929 = vmatprep.subr.bf16.mxu0 0
    %5930 = vmatpush1.bf16.msra.mxu0 0
    %5931 = vmatprep.subr.bf16.mxu0 0
    %5932 = vmatpush1.bf16.msra.mxu0 0
    %5933 = vmatprep.subr.bf16.mxu0 0
    %5934 = vmatpush1.bf16.msra.mxu0 0
    %5935 = vmatprep.subr.bf16.mxu0 0
    %5936 = vmatpush1.bf16.msra.mxu0 0
    %5937 = vmatprep.subr.bf16.mxu0 0
    %5938 = vmatpush1.bf16.msra.mxu0 0
    %5939 = vmatprep.subr.bf16.mxu0 0
    %5940 = vmatpush1.bf16.msra.mxu0 0
    %5941 = vmatprep.mubr.bf16.mxu0 0
    %5942 = vmatmul.mubr.bf16.gmra.mrb[0].mxu0 %v5637
    %v5943 = vpop.f32.mrb[0].mxu0
    %v5944 = vadd.f32 0.0, %v5943
    %v5945 = vpop.f32.mrb[0].mxu0
    %v5946 = vadd.f32 0.0, %v5945
    %v5947 = vpop.f32.mrb[0].mxu0
    %v5948 = vpop.f32.mrb[0].mxu0
    %5949 = vdwg.mxu0
    %5950 = vmatprep.subr.bf16.mxu0 %v2036
    %5951 = vmatpush1.bf16.msra.mxu0 %v2035
    %5952 = vmatprep.subr.bf16.mxu0 %v2040
    %5953 = vmatpush1.bf16.msra.mxu0 %v2039
    %5954 = vmatprep.subr.bf16.mxu0 %v2044
    %5955 = vmatpush1.bf16.msra.mxu0 %v2043
    %5956 = vmatprep.subr.bf16.mxu0 %v2048
    %5957 = vmatpush1.bf16.msra.mxu0 %v2047
    %5958 = vmatprep.subr.bf16.mxu0 %v2052
    %5959 = vmatpush1.bf16.msra.mxu0 %v2051
    %5960 = vmatprep.subr.bf16.mxu0 %v2056
    %5961 = vmatpush1.bf16.msra.mxu0 %v2055
    %5962 = vmatprep.subr.bf16.mxu0 %v2060
    %5963 = vmatpush1.bf16.msra.mxu0 %v2059
    %5964 = vmatprep.subr.bf16.mxu0 %v2064
    %5965 = vmatpush1.bf16.msra.mxu0 %v2063
    %5966 = vmatprep.subr.bf16.mxu0 0
    %5967 = vmatpush1.bf16.msra.mxu0 0
    %5968 = vmatprep.subr.bf16.mxu0 0
    %5969 = vmatpush1.bf16.msra.mxu0 0
    %5970 = vmatprep.subr.bf16.mxu0 0
    %5971 = vmatpush1.bf16.msra.mxu0 0
    %5972 = vmatprep.subr.bf16.mxu0 0
    %5973 = vmatpush1.bf16.msra.mxu0 0
    %5974 = vmatprep.subr.bf16.mxu0 0
    %5975 = vmatpush1.bf16.msra.mxu0 0
    %5976 = vmatprep.subr.bf16.mxu0 0
    %5977 = vmatpush1.bf16.msra.mxu0 0
    %5978 = vmatprep.subr.bf16.mxu0 0
    %5979 = vmatpush1.bf16.msra.mxu0 0
    %5980 = vmatprep.subr.bf16.mxu0 0
    %5981 = vmatpush1.bf16.msra.mxu0 0
    %5982 = vmatprep.mubr.bf16.mxu0 0
    %5983 = vmatmul.mubr.bf16.gmra.mrb[0].mxu0 %v5637
    %v5984 = vpop.f32.mrb[0].mxu0
    %v5985 = vadd.f32 0.0, %v5984
    %v5986 = vpop.f32.mrb[0].mxu0
    %v5987 = vadd.f32 0.0, %v5986
    %v5988 = vpop.f32.mrb[0].mxu0
    %v5989 = vpop.f32.mrb[0].mxu0
    %5990 = vdwg.mxu0
    %5991 = vmatprep.subr.bf16.mxu0 %v2276
    %5992 = vmatpush1.bf16.msra.mxu0 %v2275
    %5993 = vmatprep.subr.bf16.mxu0 %v2280
    %5994 = vmatpush1.bf16.msra.mxu0 %v2279
    %5995 = vmatprep.subr.bf16.mxu0 %v2284
    %5996 = vmatpush1.bf16.msra.mxu0 %v2283
    %5997 = vmatprep.subr.bf16.mxu0 %v2288
    %5998 = vmatpush1.bf16.msra.mxu0 %v2287
    %5999 = vmatprep.subr.bf16.mxu0 %v2292
    %6000 = vmatpush1.bf16.msra.mxu0 %v2291
    %6001 = vmatprep.subr.bf16.mxu0 %v2296
    %6002 = vmatpush1.bf16.msra.mxu0 %v2295
    %6003 = vmatprep.subr.bf16.mxu0 %v2300
    %6004 = vmatpush1.bf16.msra.mxu0 %v2299
    %6005 = vmatprep.subr.bf16.mxu0 %v2304
    %6006 = vmatpush1.bf16.msra.mxu0 %v2303
    %6007 = vmatprep.subr.bf16.mxu0 0
    %6008 = vmatpush1.bf16.msra.mxu0 0
    %6009 = vmatprep.subr.bf16.mxu0 0
    %6010 = vmatpush1.bf16.msra.mxu0 0
    %6011 = vmatprep.subr.bf16.mxu0 0
    %6012 = vmatpush1.bf16.msra.mxu0 0
    %6013 = vmatprep.subr.bf16.mxu0 0
    %6014 = vmatpush1.bf16.msra.mxu0 0
    %6015 = vmatprep.subr.bf16.mxu0 0
    %6016 = vmatpush1.bf16.msra.mxu0 0
    %6017 = vmatprep.subr.bf16.mxu0 0
    %6018 = vmatpush1.bf16.msra.mxu0 0
    %6019 = vmatprep.subr.bf16.mxu0 0
    %6020 = vmatpush1.bf16.msra.mxu0 0
    %6021 = vmatprep.subr.bf16.mxu0 0
    %6022 = vmatpush1.bf16.msra.mxu0 0
    %6023 = vmatprep.mubr.bf16.mxu0 0
    %6024 = vmatmul.mubr.bf16.gmra.mrb[0].mxu0 %v5707
    %v6025 = vpop.f32.mrb[0].mxu0
    %v6026 = vadd.f32 %v5944, %v6025
    %v6027 = vpop.f32.mrb[0].mxu0
    %v6028 = vadd.f32 %v5946, %v6027
    %v6029 = vpop.f32.mrb[0].mxu0
    %v6030 = vpop.f32.mrb[0].mxu0
    %6031 = vdwg.mxu0
    %6032 = vmatprep.subr.bf16.mxu0 %v2278
    %6033 = vmatpush1.bf16.msra.mxu0 %v2277
    %6034 = vmatprep.subr.bf16.mxu0 %v2282
    %6035 = vmatpush1.bf16.msra.mxu0 %v2281
    %6036 = vmatprep.subr.bf16.mxu0 %v2286
    %6037 = vmatpush1.bf16.msra.mxu0 %v2285
    %6038 = vmatprep.subr.bf16.mxu0 %v2290
    %6039 = vmatpush1.bf16.msra.mxu0 %v2289
    %6040 = vmatprep.subr.bf16.mxu0 %v2294
    %6041 = vmatpush1.bf16.msra.mxu0 %v2293
    %6042 = vmatprep.subr.bf16.mxu0 %v2298
    %6043 = vmatpush1.bf16.msra.mxu0 %v2297
    %6044 = vmatprep.subr.bf16.mxu0 %v2302
    %6045 = vmatpush1.bf16.msra.mxu0 %v2301
    %6046 = vmatprep.subr.bf16.mxu0 %v2306
    %6047 = vmatpush1.bf16.msra.mxu0 %v2305
    %6048 = vmatprep.subr.bf16.mxu0 0
    %6049 = vmatpush1.bf16.msra.mxu0 0
    %6050 = vmatprep.subr.bf16.mxu0 0
    %6051 = vmatpush1.bf16.msra.mxu0 0
    %6052 = vmatprep.subr.bf16.mxu0 0
    %6053 = vmatpush1.bf16.msra.mxu0 0
    %6054 = vmatprep.subr.bf16.mxu0 0
    %6055 = vmatpush1.bf16.msra.mxu0 0
    %6056 = vmatprep.subr.bf16.mxu0 0
    %6057 = vmatpush1.bf16.msra.mxu0 0
    %6058 = vmatprep.subr.bf16.mxu0 0
    %6059 = vmatpush1.bf16.msra.mxu0 0
    %6060 = vmatprep.subr.bf16.mxu0 0
    %6061 = vmatpush1.bf16.msra.mxu0 0
    %6062 = vmatprep.subr.bf16.mxu0 0
    %6063 = vmatpush1.bf16.msra.mxu0 0
    %6064 = vmatprep.mubr.bf16.mxu0 0
    %6065 = vmatmul.mubr.bf16.gmra.mrb[0].mxu0 %v5707
    %v6066 = vpop.f32.mrb[0].mxu0
    %v6067 = vadd.f32 %v5985, %v6066
    %v6068 = vpop.f32.mrb[0].mxu0
    %v6069 = vadd.f32 %v5987, %v6068
    %v6070 = vpop.f32.mrb[0].mxu0
    %v6071 = vpop.f32.mrb[0].mxu0
    %6072 = vdwg.mxu0
    %v6073 = vadd.f32 %v6026, %v246
    %v6074 = vadd.f32 %v6028, %v250
    %v6075 = vadd.f32 %v6067, %v254
    %v6076 = vadd.f32 %v6069, %v258
    %v6077 = vxor.u32 %v6073, 2147483648
    %v6078 = vxor.u32 %v6074, 2147483648
    %v6079 = vxor.u32 %v6075, 2147483648
    %v6080 = vmul.f32 %v6077, 1.442695
    %v6081 = vpow.pop %v6080
    %v6082 = vmul.f32 %v6078, 1.442695
    %v6083 = vpow.pop %v6082
    %v6084 = vmul.f32 %v6079, 1.442695
    %v6085 = vpow.pop %v6084
    %v6086 = vadd.f32 %v6081, 1.0
    %v6087 = vadd.f32 %v6083, 1.0
    %v6088 = vadd.f32 %v6085, 1.0
    %v6089 = vrcp.pop %v6086
    %v6090 = vmul.f32 1.0, %v6089
    %v6091 = vrcp.pop %v6087
    %v6092 = vmul.f32 1.0, %v6091
    %v6093 = vrcp.pop %v6088
    %v6094 = vmul.f32 1.0, %v6093
    %v6095 = vtanh.pop %v6076
    %v6096 = vmul.f32 %v6092, %v5634
    %v6097 = vmul.f32 %v6090, %v6095
    %v6098 = vadd.f32 %v6096, %v6097
    %v6099 = vtanh.pop %v6098
    %v6100 = vmul.f32 %v6094, %v6099
    %v6101 = vpack.c.bf16 %v6100, %v6100
    %6102 = vmatprep.subr.bf16.mxu0 0
    %6103 = vmatpush1.bf16.msra.mxu0 %v2482
    %6104 = vmatprep.subr.bf16.mxu0 0
    %6105 = vmatpush1.bf16.msra.mxu0 %v2483
    %6106 = vmatprep.subr.bf16.mxu0 0
    %6107 = vmatpush1.bf16.msra.mxu0 %v2484
    %6108 = vmatprep.subr.bf16.mxu0 0
    %6109 = vmatpush1.bf16.msra.mxu0 %v2485
    %6110 = vmatprep.subr.bf16.mxu0 0
    %6111 = vmatpush1.bf16.msra.mxu0 %v2486
    %6112 = vmatprep.subr.bf16.mxu0 0
    %6113 = vmatpush1.bf16.msra.mxu0 %v2487
    %6114 = vmatprep.subr.bf16.mxu0 0
    %6115 = vmatpush1.bf16.msra.mxu0 %v2488
    %6116 = vmatprep.subr.bf16.mxu0 0
    %6117 = vmatpush1.bf16.msra.mxu0 %v2489
    %6118 = vmatprep.subr.bf16.mxu0 0
    %6119 = vmatpush1.bf16.msra.mxu0 0
    %6120 = vmatprep.subr.bf16.mxu0 0
    %6121 = vmatpush1.bf16.msra.mxu0 0
    %6122 = vmatprep.subr.bf16.mxu0 0
    %6123 = vmatpush1.bf16.msra.mxu0 0
    %6124 = vmatprep.subr.bf16.mxu0 0
    %6125 = vmatpush1.bf16.msra.mxu0 0
    %6126 = vmatprep.subr.bf16.mxu0 0
    %6127 = vmatpush1.bf16.msra.mxu0 0
    %6128 = vmatprep.subr.bf16.mxu0 0
    %6129 = vmatpush1.bf16.msra.mxu0 0
    %6130 = vmatprep.subr.bf16.mxu0 0
    %6131 = vmatpush1.bf16.msra.mxu0 0
    %6132 = vmatprep.subr.bf16.mxu0 0
    %6133 = vmatpush1.bf16.msra.mxu0 0
    %6134 = vmatprep.mubr.bf16.mxu0 0
    %6135 = vmatmul.mubr.bf16.gmra.mrb[0].mxu0 %v6101
    %v6136 = vpop.f32.mrb[0].mxu0
    %v6137 = vadd.f32 %v268, %v6136
    %v6138 = vpop.f32.mrb[0].mxu0
    %v6139 = vpop.f32.mrb[0].mxu0
    %v6140 = vpop.f32.mrb[0].mxu0
    %6141 = vdwg.mxu0
    %v6144 = vunpack.c.l.s4 1966171168
    %v6145 = vunpack.c.0.s8 %v6144
    %v6146 = vlaneseq
    %v6147 = vshrl.u32 %v6146, 7
    %v6148 = vsub.s32 %v6145, %v6147
    %v6149 = vrot.slane %v6137, %v6148
    %v6150 = vcombine.high %v6149, %v6149
    %v6152 = vunpack.c.l.s4 1966171168
    %v6153 = vunpack.c.0.s8 %v6152
    %v6154 = vlaneseq
    %v6155 = vshrl.u32 %v6154, 7
    %v6156 = vsub.s32 %v6153, %v6155
    %v6157 = vrot.slane %v6149, %v6156
    %v6159 = vunpack.c.l.s4 1966171168
    %v6160 = vunpack.c.0.s8 %v6159
    %v6161 = vlaneseq
    %v6162 = vshrl.u32 %v6161, 7
    %v6163 = vsub.s32 %v6160, %v6162
    %v6164 = vrot.slane %v6150, %v6163
    %6167 = vst [vmem:[#allocation2 + $0x6] sm:$0x1] %v6157
    %6168 = vst [vmem:[#allocation2 + $0xe] sm:$0x1] %v6164
    %v6169 = vpack.c.bf16 %v5908, %v5908
    %6170 = vmatprep.subr.bf16.mxu0 %v2034
    %6171 = vmatpush1.bf16.msra.mxu0 %v2033
    %6172 = vmatprep.subr.bf16.mxu0 %v2038
    %6173 = vmatpush1.bf16.msra.mxu0 %v2037
    %6174 = vmatprep.subr.bf16.mxu0 %v2042
    %6175 = vmatpush1.bf16.msra.mxu0 %v2041
    %6176 = vmatprep.subr.bf16.mxu0 %v2046
    %6177 = vmatpush1.bf16.msra.mxu0 %v2045
    %6178 = vmatprep.subr.bf16.mxu0 %v2050
    %6179 = vmatpush1.bf16.msra.mxu0 %v2049
    %6180 = vmatprep.subr.bf16.mxu0 %v2054
    %6181 = vmatpush1.bf16.msra.mxu0 %v2053
    %6182 = vmatprep.subr.bf16.mxu0 %v2058
    %6183 = vmatpush1.bf16.msra.mxu0 %v2057
    %6184 = vmatprep.subr.bf16.mxu0 %v2062
    %6185 = vmatpush1.bf16.msra.mxu0 %v2061
    %6186 = vmatprep.subr.bf16.mxu0 0
    %6187 = vmatpush1.bf16.msra.mxu0 0
    %6188 = vmatprep.subr.bf16.mxu0 0
    %6189 = vmatpush1.bf16.msra.mxu0 0
    %6190 = vmatprep.subr.bf16.mxu0 0
    %6191 = vmatpush1.bf16.msra.mxu0 0
    %6192 = vmatprep.subr.bf16.mxu0 0
    %6193 = vmatpush1.bf16.msra.mxu0 0
    %6194 = vmatprep.subr.bf16.mxu0 0
    %6195 = vmatpush1.bf16.msra.mxu0 0
    %6196 = vmatprep.subr.bf16.mxu0 0
    %6197 = vmatpush1.bf16.msra.mxu0 0
    %6198 = vmatprep.subr.bf16.mxu0 0
    %6199 = vmatpush1.bf16.msra.mxu0 0
    %6200 = vmatprep.subr.bf16.mxu0 0
    %6201 = vmatpush1.bf16.msra.mxu0 0
    %6202 = vmatprep.mubr.bf16.mxu0 0
    %6203 = vmatmul.mubr.bf16.gmra.mrb[0].mxu0 %v6101
    %v6204 = vpop.f32.mrb[0].mxu0
    %v6205 = vadd.f32 0.0, %v6204
    %v6206 = vpop.f32.mrb[0].mxu0
    %v6207 = vadd.f32 0.0, %v6206
    %v6208 = vpop.f32.mrb[0].mxu0
    %v6209 = vpop.f32.mrb[0].mxu0
    %6210 = vdwg.mxu0
    %6211 = vmatprep.subr.bf16.mxu0 %v2036
    %6212 = vmatpush1.bf16.msra.mxu0 %v2035
    %6213 = vmatprep.subr.bf16.mxu0 %v2040
    %6214 = vmatpush1.bf16.msra.mxu0 %v2039
    %6215 = vmatprep.subr.bf16.mxu0 %v2044
    %6216 = vmatpush1.bf16.msra.mxu0 %v2043
    %6217 = vmatprep.subr.bf16.mxu0 %v2048
    %6218 = vmatpush1.bf16.msra.mxu0 %v2047
    %6219 = vmatprep.subr.bf16.mxu0 %v2052
    %6220 = vmatpush1.bf16.msra.mxu0 %v2051
    %6221 = vmatprep.subr.bf16.mxu0 %v2056
    %6222 = vmatpush1.bf16.msra.mxu0 %v2055
    %6223 = vmatprep.subr.bf16.mxu0 %v2060
    %6224 = vmatpush1.bf16.msra.mxu0 %v2059
    %6225 = vmatprep.subr.bf16.mxu0 %v2064
    %6226 = vmatpush1.bf16.msra.mxu0 %v2063
    %6227 = vmatprep.subr.bf16.mxu0 0
    %6228 = vmatpush1.bf16.msra.mxu0 0
    %6229 = vmatprep.subr.bf16.mxu0 0
    %6230 = vmatpush1.bf16.msra.mxu0 0
    %6231 = vmatprep.subr.bf16.mxu0 0
    %6232 = vmatpush1.bf16.msra.mxu0 0
    %6233 = vmatprep.subr.bf16.mxu0 0
    %6234 = vmatpush1.bf16.msra.mxu0 0
    %6235 = vmatprep.subr.bf16.mxu0 0
    %6236 = vmatpush1.bf16.msra.mxu0 0
    %6237 = vmatprep.subr.bf16.mxu0 0
    %6238 = vmatpush1.bf16.msra.mxu0 0
    %6239 = vmatprep.subr.bf16.mxu0 0
    %6240 = vmatpush1.bf16.msra.mxu0 0
    %6241 = vmatprep.subr.bf16.mxu0 0
    %6242 = vmatpush1.bf16.msra.mxu0 0
    %6243 = vmatprep.mubr.bf16.mxu0 0
    %6244 = vmatmul.mubr.bf16.gmra.mrb[0].mxu0 %v6101
    %v6245 = vpop.f32.mrb[0].mxu0
    %v6246 = vadd.f32 0.0, %v6245
    %v6247 = vpop.f32.mrb[0].mxu0
    %v6248 = vadd.f32 0.0, %v6247
    %v6249 = vpop.f32.mrb[0].mxu0
    %v6250 = vpop.f32.mrb[0].mxu0
    %6251 = vdwg.mxu0
    %6252 = vmatprep.subr.bf16.mxu0 %v2276
    %6253 = vmatpush1.bf16.msra.mxu0 %v2275
    %6254 = vmatprep.subr.bf16.mxu0 %v2280
    %6255 = vmatpush1.bf16.msra.mxu0 %v2279
    %6256 = vmatprep.subr.bf16.mxu0 %v2284
    %6257 = vmatpush1.bf16.msra.mxu0 %v2283
    %6258 = vmatprep.subr.bf16.mxu0 %v2288
    %6259 = vmatpush1.bf16.msra.mxu0 %v2287
    %6260 = vmatprep.subr.bf16.mxu0 %v2292
    %6261 = vmatpush1.bf16.msra.mxu0 %v2291
    %6262 = vmatprep.subr.bf16.mxu0 %v2296
    %6263 = vmatpush1.bf16.msra.mxu0 %v2295
    %6264 = vmatprep.subr.bf16.mxu0 %v2300
    %6265 = vmatpush1.bf16.msra.mxu0 %v2299
    %6266 = vmatprep.subr.bf16.mxu0 %v2304
    %6267 = vmatpush1.bf16.msra.mxu0 %v2303
    %6268 = vmatprep.subr.bf16.mxu0 0
    %6269 = vmatpush1.bf16.msra.mxu0 0
    %6270 = vmatprep.subr.bf16.mxu0 0
    %6271 = vmatpush1.bf16.msra.mxu0 0
    %6272 = vmatprep.subr.bf16.mxu0 0
    %6273 = vmatpush1.bf16.msra.mxu0 0
    %6274 = vmatprep.subr.bf16.mxu0 0
    %6275 = vmatpush1.bf16.msra.mxu0 0
    %6276 = vmatprep.subr.bf16.mxu0 0
    %6277 = vmatpush1.bf16.msra.mxu0 0
    %6278 = vmatprep.subr.bf16.mxu0 0
    %6279 = vmatpush1.bf16.msra.mxu0 0
    %6280 = vmatprep.subr.bf16.mxu0 0
    %6281 = vmatpush1.bf16.msra.mxu0 0
    %6282 = vmatprep.subr.bf16.mxu0 0
    %6283 = vmatpush1.bf16.msra.mxu0 0
    %6284 = vmatprep.mubr.bf16.mxu0 0
    %6285 = vmatmul.mubr.bf16.gmra.mrb[0].mxu0 %v6169
    %v6286 = vpop.f32.mrb[0].mxu0
    %v6287 = vadd.f32 %v6205, %v6286
    %v6288 = vpop.f32.mrb[0].mxu0
    %v6289 = vadd.f32 %v6207, %v6288
    %v6290 = vpop.f32.mrb[0].mxu0
    %v6291 = vpop.f32.mrb[0].mxu0
    %6292 = vdwg.mxu0
    %6293 = vmatprep.subr.bf16.mxu0 %v2278
    %6294 = vmatpush1.bf16.msra.mxu0 %v2277
    %6295 = vmatprep.subr.bf16.mxu0 %v2282
    %6296 = vmatpush1.bf16.msra.mxu0 %v2281
    %6297 = vmatprep.subr.bf16.mxu0 %v2286
    %6298 = vmatpush1.bf16.msra.mxu0 %v2285
    %6299 = vmatprep.subr.bf16.mxu0 %v2290
    %6300 = vmatpush1.bf16.msra.mxu0 %v2289
    %6301 = vmatprep.subr.bf16.mxu0 %v2294
    %6302 = vmatpush1.bf16.msra.mxu0 %v2293
    %6303 = vmatprep.subr.bf16.mxu0 %v2298
    %6304 = vmatpush1.bf16.msra.mxu0 %v2297
    %6305 = vmatprep.subr.bf16.mxu0 %v2302
    %6306 = vmatpush1.bf16.msra.mxu0 %v2301
    %6307 = vmatprep.subr.bf16.mxu0 %v2306
    %6308 = vmatpush1.bf16.msra.mxu0 %v2305
    %6309 = vmatprep.subr.bf16.mxu0 0
    %6310 = vmatpush1.bf16.msra.mxu0 0
    %6311 = vmatprep.subr.bf16.mxu0 0
    %6312 = vmatpush1.bf16.msra.mxu0 0
    %6313 = vmatprep.subr.bf16.mxu0 0
    %6314 = vmatpush1.bf16.msra.mxu0 0
    %6315 = vmatprep.subr.bf16.mxu0 0
    %6316 = vmatpush1.bf16.msra.mxu0 0
    %6317 = vmatprep.subr.bf16.mxu0 0
    %6318 = vmatpush1.bf16.msra.mxu0 0
    %6319 = vmatprep.subr.bf16.mxu0 0
    %6320 = vmatpush1.bf16.msra.mxu0 0
    %6321 = vmatprep.subr.bf16.mxu0 0
    %6322 = vmatpush1.bf16.msra.mxu0 0
    %6323 = vmatprep.subr.bf16.mxu0 0
    %6324 = vmatpush1.bf16.msra.mxu0 0
    %6325 = vmatprep.mubr.bf16.mxu0 0
    %6326 = vmatmul.mubr.bf16.gmra.mrb[0].mxu0 %v6169
    %v6327 = vpop.f32.mrb[0].mxu0
    %v6328 = vadd.f32 %v6246, %v6327
    %v6329 = vpop.f32.mrb[0].mxu0
    %v6330 = vadd.f32 %v6248, %v6329
    %v6331 = vpop.f32.mrb[0].mxu0
    %v6332 = vpop.f32.mrb[0].mxu0
    %6333 = vdwg.mxu0
    %v6334 = vadd.f32 %v6287, %v246
    %v6335 = vadd.f32 %v6289, %v250
    %v6336 = vadd.f32 %v6328, %v254
    %v6337 = vadd.f32 %v6330, %v258
    %v6338 = vxor.u32 %v6334, 2147483648
    %v6339 = vxor.u32 %v6335, 2147483648
    %v6340 = vxor.u32 %v6336, 2147483648
    %v6341 = vmul.f32 %v6338, 1.442695
    %v6342 = vpow.pop %v6341
    %v6343 = vmul.f32 %v6339, 1.442695
    %v6344 = vpow.pop %v6343
    %v6345 = vmul.f32 %v6340, 1.442695
    %v6346 = vpow.pop %v6345
    %v6347 = vadd.f32 %v6342, 1.0
    %v6348 = vadd.f32 %v6344, 1.0
    %v6349 = vadd.f32 %v6346, 1.0
    %v6350 = vrcp.pop %v6347
    %v6351 = vmul.f32 1.0, %v6350
    %v6352 = vrcp.pop %v6348
    %v6353 = vmul.f32 1.0, %v6352
    %v6354 = vrcp.pop %v6349
    %v6355 = vmul.f32 1.0, %v6354
    %v6356 = vtanh.pop %v6337
    %v6357 = vmul.f32 %v6353, %v6098
    %v6358 = vmul.f32 %v6351, %v6356
    %v6359 = vadd.f32 %v6357, %v6358
    %v6360 = vtanh.pop %v6359
    %v6361 = vmul.f32 %v6355, %v6360
    %v6362 = vpack.c.bf16 %v6361, %v6361
    %6363 = vmatprep.subr.bf16.mxu0 0
    %6364 = vmatpush1.bf16.msra.mxu0 %v2482
    %6365 = vmatprep.subr.bf16.mxu0 0
    %6366 = vmatpush1.bf16.msra.mxu0 %v2483
    %6367 = vmatprep.subr.bf16.mxu0 0
    %6368 = vmatpush1.bf16.msra.mxu0 %v2484
    %6369 = vmatprep.subr.bf16.mxu0 0
    %6370 = vmatpush1.bf16.msra.mxu0 %v2485
    %6371 = vmatprep.subr.bf16.mxu0 0
    %6372 = vmatpush1.bf16.msra.mxu0 %v2486
    %6373 = vmatprep.subr.bf16.mxu0 0
    %6374 = vmatpush1.bf16.msra.mxu0 %v2487
    %6375 = vmatprep.subr.bf16.mxu0 0
    %6376 = vmatpush1.bf16.msra.mxu0 %v2488
    %6377 = vmatprep.subr.bf16.mxu0 0
    %6378 = vmatpush1.bf16.msra.mxu0 %v2489
    %6379 = vmatprep.subr.bf16.mxu0 0
    %6380 = vmatpush1.bf16.msra.mxu0 0
    %6381 = vmatprep.subr.bf16.mxu0 0
    %6382 = vmatpush1.bf16.msra.mxu0 0
    %6383 = vmatprep.subr.bf16.mxu0 0
    %6384 = vmatpush1.bf16.msra.mxu0 0
    %6385 = vmatprep.subr.bf16.mxu0 0
    %6386 = vmatpush1.bf16.msra.mxu0 0
    %6387 = vmatprep.subr.bf16.mxu0 0
    %6388 = vmatpush1.bf16.msra.mxu0 0
    %6389 = vmatprep.subr.bf16.mxu0 0
    %6390 = vmatpush1.bf16.msra.mxu0 0
    %6391 = vmatprep.subr.bf16.mxu0 0
    %6392 = vmatpush1.bf16.msra.mxu0 0
    %6393 = vmatprep.subr.bf16.mxu0 0
    %6394 = vmatpush1.bf16.msra.mxu0 0
    %6395 = vmatprep.mubr.bf16.mxu0 0
    %6396 = vmatmul.mubr.bf16.gmra.mrb[0].mxu0 %v6362
    %v6397 = vpop.f32.mrb[0].mxu0
    %v6398 = vadd.f32 %v268, %v6397
    %v6399 = vpop.f32.mrb[0].mxu0
    %v6400 = vpop.f32.mrb[0].mxu0
    %v6401 = vpop.f32.mrb[0].mxu0
    %6402 = vdwg.mxu0
    %v6405 = vunpack.c.l.s4 1966171168
    %v6406 = vunpack.c.0.s8 %v6405
    %v6407 = vlaneseq
    %v6408 = vshrl.u32 %v6407, 7
    %v6409 = vsub.s32 %v6406, %v6408
    %v6410 = vrot.slane %v6398, %v6409
    %v6411 = vcombine.high %v6410, %v6410
    %v6413 = vunpack.c.l.s4 1966171168
    %v6414 = vunpack.c.0.s8 %v6413
    %v6415 = vlaneseq
    %v6416 = vshrl.u32 %v6415, 7
    %v6417 = vsub.s32 %v6414, %v6416
    %v6418 = vrot.slane %v6410, %v6417
    %v6420 = vunpack.c.l.s4 1966171168
    %v6421 = vunpack.c.0.s8 %v6420
    %v6422 = vlaneseq
    %v6423 = vshrl.u32 %v6422, 7
    %v6424 = vsub.s32 %v6421, %v6423
    %v6425 = vrot.slane %v6411, %v6424
    %6428 = vst [vmem:[#allocation2 + $0x7] sm:$0x1] %v6418
    %6429 = vst [vmem:[#allocation2 + $0xf] sm:$0x1] %v6425
    // Predicated region
    $region50: #{text_model_forward.1} parent=1 // pred_check
      _
    $region51: #{text_model_forward.1} parent=1 // pred_check_branch
      %6431 = sbr.rel (0) target = $region53
    $region52: #{text_model_forward.1} parent=1 // pred_region
      %s6433 = ssub.s32 256, 256
      %6434 = vsyncadd [#allocation3], %s6433
      %s6435 = sshll.u32 [#allocation2], 4
      %s6436 = int_to_ptr.vmem [resolvable:$true] %s6435
      %6441 = dma.vmem_to_hbm [thread:$0]  %s6436, 256, %s12, [#allocation3], 128, 128, 8
    $region53: #{text_model_forward.1} parent=1 // pred_fallthru
      _
    // Predicated region
    $region54: #{text_model_forward.1} parent=1 // pred_check
      _
    $region55: #{text_model_forward.1} parent=1 // pred_check_branch
      %6443 = sbr.rel (0) target = $region57
    $region56: #{text_model_forward.1} parent=1 // pred_region
      %6444 = dma.done [#allocation3], 256
    $region57: #{text_model_forward.1} parent=1 // pred_fallthru
      _
    %6445 = vsyncpa [#allocation3], 1

</llo_original>
